<compile_context>
chip_gen: v7x
topology: tpu7x:2x2x1
jax: 0.10.0
libtpu: 0.0.40
codegen_flags: <defaults>
</compile_context>

<pallas_src>
import jax
import jax.numpy as jnp
from jax import lax
from jax.experimental import pallas as pl
from jax.experimental.pallas import tpu as pltpu

_LANES = 128


def _round_up(x, m):
    return (x + m - 1) // m * m


# ----------------------------- Pallas kernel -------------------------------

def _basic_block_kernel(x_ref, w1_ref, b1_ref, w2_ref, b2_ref, o_ref, h1_ref):
    """Fused BasicBlock forward for one image (one grid step = one batch image).

    x_ref  : (H+2, W+2, Cp) bf16   spatially + channel zero-padded NHWC input
    w1_ref : (3, 3*Cp, Pp)  bf16   conv1 weights (kh, kw*cin, cout), BN1 folded
    b1_ref : (1, Pp)        f32    BN1 folded bias
    w2_ref : (3, 3*Pp, Pp)  bf16   conv2 weights, BN2 folded
    b2_ref : (1, Pp)        f32    BN2 folded bias
    o_ref  : (H, W, Pp)     bf16   output
    h1_ref : (H+2, W+2, Pp) bf16   VMEM scratch: out1 with zero halo border
    """
    hp2, wp2, cp = x_ref.shape
    H, W = hp2 - 2, wp2 - 2
    Pp = w1_ref.shape[-1]

    def conv3x3(src_ref, w_ref):
        # 3x3 conv as 3 matmuls with K = 3*channels: the 3 kw taps are merged
        # into the contraction dim (lane concat at 128-aligned offsets) and the
        # 3 kh taps are accumulated in a traced f32 value (no VMEM accumulator
        # read-modify-write; Mosaic chains MXU accumulation).
        k = src_ref.shape[-1]
        acc = None
        for dh in range(3):
            patch = jnp.concatenate(
                [src_ref[dh:dh + H, dw:dw + W, :].reshape(H * W, k)
                 for dw in range(3)],
                axis=-1)                                    # (H*W, 3*k), bf16
            part = jnp.dot(patch, w_ref[dh],
                           preferred_element_type=jnp.float32)
            acc = part if acc is None else acc + part
        return acc                                          # (H*W, Pp) f32

    # ---- conv1 (3x3, pad 1) + bn1 + relu -----------------------------------
    out1 = jnp.maximum(conv3x3(x_ref, w1_ref) + b1_ref[...], 0.0)

    # out1 with a 1-pixel zero halo (= conv2's zero padding), kept in VMEM.
    # Only the halo border is zeroed; re-zeroed every step so correctness never
    # depends on grid order / core assignment.  Interior fully overwritten.
    zr = jnp.zeros((1, W + 2, Pp), jnp.bfloat16)
    zc = jnp.zeros((H + 2, 1, Pp), jnp.bfloat16)
    h1_ref[0:1, :, :] = zr
    h1_ref[H + 1:H + 2, :, :] = zr
    h1_ref[:, 0:1, :] = zc
    h1_ref[:, W + 1:W + 2, :] = zc
    h1_ref[1:H + 1, 1:W + 1, :] = out1.reshape(H, W, Pp).astype(jnp.bfloat16)

    # ---- conv2 (3x3, pad 1) + bn2 + identity + relu (f32 epilogue) ----------
    acc2 = conv3x3(h1_ref, w2_ref)
    identity = x_ref[1:H + 1, 1:W + 1, :].astype(jnp.float32).reshape(H * W, cp)
    out2 = jnp.maximum(acc2 + b2_ref[...] + identity, 0.0)
    o_ref[...] = out2.reshape(H, W, Pp).astype(o_ref.dtype)


# ------------------------------ host-side glue ------------------------------

def _fold_bn(gamma, beta, mean, var, eps=1e-5):
    scale = gamma / jnp.sqrt(var + eps)
    bias = beta - mean * scale
    return scale, bias


def _prep_weight(w_oihw, bn_scale, cin_p, cout_p):
    """(Cout, Cin, 3, 3) -> (3, 3*cin_p, cout_p) bf16 with BN scale folded in."""
    cout, cin = w_oihw.shape[0], w_oihw.shape[1]
    w = jnp.transpose(w_oihw, (2, 3, 1, 0)).astype(jnp.float32)   # (kh, kw, cin, cout)
    w = w * bn_scale[None, None, None, :]
    w = jnp.pad(w, ((0, 0), (0, 0), (0, cin_p - cin), (0, cout_p - cout)))
    # Flatten (kw, cin) into the contraction dim: matches the in-kernel
    # lane concat order [kw=0 channels | kw=1 channels | kw=2 channels].
    return w.reshape(3, 3 * cin_p, cout_p).astype(jnp.bfloat16)


def _prep_bias(bias, cout_p):
    return jnp.pad(bias, (0, cout_p - bias.shape[0])).reshape(1, cout_p).astype(jnp.float32)


@jax.jit
def basic_block_forward(x_nchw, params):
    """BasicBlock forward (stride=1, downsample=None). NCHW in -> NCHW out (f32)."""
    N, C, H, W = x_nchw.shape
    P = params["conv1_w"].shape[0]
    assert P == C, "stride=1 / downsample=None BasicBlock requires planes == inplanes"

    Cp = _round_up(C, _LANES)
    Pp = _round_up(P, _LANES)

    s1, b1 = _fold_bn(params["bn1_gamma"], params["bn1_beta"],
                      params["bn1_mean"], params["bn1_var"])
    s2, b2 = _fold_bn(params["bn2_gamma"], params["bn2_beta"],
                      params["bn2_mean"], params["bn2_var"])

    w1 = _prep_weight(params["conv1_w"], s1, Cp, Pp)
    w2 = _prep_weight(params["conv2_w"], s2, Pp, Pp)
    b1 = _prep_bias(b1, Pp)
    b2 = _prep_bias(b2, Pp)

    # NCHW -> NHWC, cast to bf16 first so spatial/channel padding round-trips
    # half the bytes; spatial pad of 1 = conv zero padding.
    x = jnp.transpose(x_nchw, (0, 2, 3, 1)).astype(jnp.bfloat16)
    xp = jnp.pad(x, ((0, 0), (1, 1), (1, 1), (0, Cp - C)))

    flops = 2 * (2 * N * H * W * (9 * Cp) * Pp)               # two 3x3 convs
    bytes_accessed = (xp.size * 2 + w1.size * 2 + w2.size * 2
                      + b1.size * 4 + b2.size * 4 + N * H * W * Pp * 2)

    out = pl.pallas_call(
        _basic_block_kernel,
        out_shape=jax.ShapeDtypeStruct((N, H, W, Pp), jnp.bfloat16),
        grid_spec=pltpu.PrefetchScalarGridSpec(
            num_scalar_prefetch=0,
            grid=(N,),
            in_specs=[
                pl.BlockSpec((pl.Squeezed(), H + 2, W + 2, Cp),
                             lambda n: (n, 0, 0, 0)),
                pl.BlockSpec((3, 3 * Cp, Pp), lambda n: (0, 0, 0)),  # constant
                pl.BlockSpec((1, Pp), lambda n: (0, 0)),             # constant
                pl.BlockSpec((3, 3 * Pp, Pp), lambda n: (0, 0, 0)),  # constant
                pl.BlockSpec((1, Pp), lambda n: (0, 0)),             # constant
            ],
            out_specs=pl.BlockSpec((pl.Squeezed(), H, W, Pp),
                                   lambda n: (n, 0, 0, 0)),
            scratch_shapes=[
                pltpu.VMEM((H + 2, W + 2, Pp), jnp.bfloat16),        # out1 + halo
            ],
        ),
        compiler_params=pltpu.CompilerParams(
            # Batch images are independent; kernel is also order-independent
            # (halo border re-zeroed per step), so any grid/core split is safe.
            dimension_semantics=("parallel",),
            vmem_limit_bytes=32 * 1024 * 1024,
        ),
        cost_estimate=pl.CostEstimate(flops=flops, transcendentals=0,
                                      bytes_accessed=bytes_accessed),
    )(xp, w1, b1, w2, b2)

    out = out[..., :P].astype(jnp.float32)           # drop channel padding
    return jnp.transpose(out, (0, 3, 1, 2))          # back to NCHW


# ----------------------------- Reference (JAX) ------------------------------

def basic_block_reference(x_nchw, params, eps=1e-5):
    def conv3x3(x, w):
        return lax.conv_general_dilated(
            x, w, window_strides=(1, 1), padding=((1, 1), (1, 1)),
            dimension_numbers=("NCHW", "OIHW", "NCHW"))

    def bn(x, g, b, m, v):
        g = g.reshape(1, -1, 1, 1); b = b.reshape(1, -1, 1, 1)
        m = m.reshape(1, -1, 1, 1); v = v.reshape(1, -1, 1, 1)
        return (x - m) / jnp.sqrt(v + eps) * g + b

    out = conv3x3(x_nchw, params["conv1_w"])
    out = jnp.maximum(bn(out, params["bn1_gamma"], params["bn1_beta"],
                         params["bn1_mean"], params["bn1_var"]), 0.0)
    out = conv3x3(out, params["conv2_w"])
    out = bn(out, params["bn2_gamma"], params["bn2_beta"],
             params["bn2_mean"], params["bn2_var"])
    out = out + x_nchw
    return jnp.maximum(out, 0.0)


# --------------------------------- main -------------------------------------

if __name__ == "__main__":
    N, C, H, W = 2, 4, 16, 16          # inplanes = planes = 4, stride = 1
    planes = C

    key = jax.random.PRNGKey(0)
    ks = jax.random.split(key, 12)

    params = {
        "conv1_w": 0.1 * jax.random.normal(ks[0], (planes, C, 3, 3), jnp.float32),
        "conv2_w": 0.1 * jax.random.normal(ks[1], (planes, planes, 3, 3), jnp.float32),
        "bn1_gamma": 1.0 + 0.1 * jax.random.normal(ks[2], (planes,), jnp.float32),
        "bn1_beta": 0.1 * jax.random.normal(ks[3], (planes,), jnp.float32),
        "bn1_mean": 0.1 * jax.random.normal(ks[4], (planes,), jnp.float32),
        "bn1_var": 0.5 + jnp.abs(jax.random.normal(ks[5], (planes,), jnp.float32)),
        "bn2_gamma": 1.0 + 0.1 * jax.random.normal(ks[6], (planes,), jnp.float32),
        "bn2_beta": 0.1 * jax.random.normal(ks[7], (planes,), jnp.float32),
        "bn2_mean": 0.1 * jax.random.normal(ks[8], (planes,), jnp.float32),
        "bn2_var": 0.5 + jnp.abs(jax.random.normal(ks[9], (planes,), jnp.float32)),
    }

    x = jax.random.normal(ks[10], (N, C, H, W), jnp.float32)

    out = jax.block_until_ready(basic_block_forward(x, params))
    ref = jax.block_until_ready(basic_block_reference(x, params))

    assert out.shape == (N, C, H, W), out.shape
    max_err = float(jnp.max(jnp.abs(out - ref)))
    # bf16 streamed activations / weights / output with f32 accumulation,
    # bias and residual: expected error is O(1e-2) vs. the pure-f32 reference.
    assert jnp.allclose(out, ref, atol=5e-2, rtol=2e-2), max_err
    print("KERNEL_OK")
</pallas_src>

<mosaic_0001>
module attributes {stable_mosaic.version = 11 : i64} {
  func.func @_basic_block_kernel(%arg0: i32, %arg1: memref<1x18x18x128xbf16, #tpu.memory_space<vmem>>, %arg2: memref<3x384x128xbf16, #tpu.memory_space<vmem>>, %arg3: memref<1x128xf32, #tpu.memory_space<vmem>>, %arg4: memref<3x384x128xbf16, #tpu.memory_space<vmem>>, %arg5: memref<1x128xf32, #tpu.memory_space<vmem>>, %arg6: memref<1x16x16x128xbf16, #tpu.memory_space<vmem>>, %arg7: memref<18x18x128xbf16, #tpu.memory_space<vmem>>) attributes {dimension_semantics = [#tpu.dimension_semantics<parallel>], iteration_bounds = array<i64: 2>, scalar_prefetch = 0 : i64, scratch_operands = 1 : i64, tpu.core_type = #tpu.core_type<tc>, window_params = [{transform_indices = @transform_0, window_bounds = array<i64: 1, 18, 18, 128>}, {pipeline_mode = #tpu.pipeline_mode<synchronous>, transform_indices = @transform_1, window_bounds = array<i64: 3, 384, 128>}, {pipeline_mode = #tpu.pipeline_mode<synchronous>, transform_indices = @transform_2, window_bounds = array<i64: 1, 128>}, {pipeline_mode = #tpu.pipeline_mode<synchronous>, transform_indices = @transform_3, window_bounds = array<i64: 3, 384, 128>}, {pipeline_mode = #tpu.pipeline_mode<synchronous>, transform_indices = @transform_4, window_bounds = array<i64: 1, 128>}, {transform_indices = @transform_5, window_bounds = array<i64: 1, 16, 16, 128>}]} {
    %c0 = arith.constant 0 : index
    %c0_0 = arith.constant 0 : index
    %c0_1 = arith.constant 0 : index
    %c0_2 = arith.constant 0 : index
    %0 = vector.load %arg1[%c0, %c0_0, %c0_1, %c0_2] : memref<1x18x18x128xbf16, #tpu.memory_space<vmem>>, vector<1x16x16x128xbf16>
    %1 = vector.shape_cast %0 : vector<1x16x16x128xbf16> to vector<16x16x128xbf16>
    %2 = vector.shape_cast %1 : vector<16x16x128xbf16> to vector<256x128xbf16>
    %c0_3 = arith.constant 0 : index
    %c0_4 = arith.constant 0 : index
    %c1 = arith.constant 1 : index
    %c0_5 = arith.constant 0 : index
    %3 = vector.load %arg1[%c0_3, %c0_4, %c1, %c0_5] : memref<1x18x18x128xbf16, #tpu.memory_space<vmem>>, vector<1x16x16x128xbf16>
    %4 = vector.shape_cast %3 : vector<1x16x16x128xbf16> to vector<16x16x128xbf16>
    %5 = vector.shape_cast %4 : vector<16x16x128xbf16> to vector<256x128xbf16>
    %c0_6 = arith.constant 0 : index
    %c0_7 = arith.constant 0 : index
    %c2 = arith.constant 2 : index
    %c0_8 = arith.constant 0 : index
    %6 = vector.load %arg1[%c0_6, %c0_7, %c2, %c0_8] : memref<1x18x18x128xbf16, #tpu.memory_space<vmem>>, vector<1x16x16x128xbf16>
    %7 = vector.shape_cast %6 : vector<1x16x16x128xbf16> to vector<16x16x128xbf16>
    %8 = vector.shape_cast %7 : vector<16x16x128xbf16> to vector<256x128xbf16>
    %9 = tpu.concatenate %2, %5, %8 in 1 : vector<256x128xbf16>, vector<256x128xbf16>, vector<256x128xbf16> -> vector<256x384xbf16>
    %c0_9 = arith.constant 0 : index
    %c0_10 = arith.constant 0 : index
    %c0_11 = arith.constant 0 : index
    %10 = vector.load %arg2[%c0_9, %c0_10, %c0_11] : memref<3x384x128xbf16, #tpu.memory_space<vmem>>, vector<1x384x128xbf16>
    %11 = vector.shape_cast %10 : vector<1x384x128xbf16> to vector<384x128xbf16>
    %cst = arith.constant dense<0.000000e+00> : vector<256x128xf32>
    %12 = tpu.matmul %9, %11, %cst {dimension_numbers = #tpu.dot_dimension_numbers<[1], [0], [0], [1], [0, 0, 1, 1], [], []>} : vector<256x384xbf16>, vector<384x128xbf16>, vector<256x128xf32> -> vector<256x128xf32>
    %c0_12 = arith.constant 0 : index
    %c1_13 = arith.constant 1 : index
    %c0_14 = arith.constant 0 : index
    %c0_15 = arith.constant 0 : index
    %13 = vector.load %arg1[%c0_12, %c1_13, %c0_14, %c0_15] : memref<1x18x18x128xbf16, #tpu.memory_space<vmem>>, vector<1x16x16x128xbf16>
    %14 = vector.shape_cast %13 : vector<1x16x16x128xbf16> to vector<16x16x128xbf16>
    %15 = vector.shape_cast %14 : vector<16x16x128xbf16> to vector<256x128xbf16>
    %c0_16 = arith.constant 0 : index
    %c1_17 = arith.constant 1 : index
    %c1_18 = arith.constant 1 : index
    %c0_19 = arith.constant 0 : index
    %16 = vector.load %arg1[%c0_16, %c1_17, %c1_18, %c0_19] : memref<1x18x18x128xbf16, #tpu.memory_space<vmem>>, vector<1x16x16x128xbf16>
    %17 = vector.shape_cast %16 : vector<1x16x16x128xbf16> to vector<16x16x128xbf16>
    %18 = vector.shape_cast %17 : vector<16x16x128xbf16> to vector<256x128xbf16>
    %c0_20 = arith.constant 0 : index
    %c1_21 = arith.constant 1 : index
    %c2_22 = arith.constant 2 : index
    %c0_23 = arith.constant 0 : index
    %19 = vector.load %arg1[%c0_20, %c1_21, %c2_22, %c0_23] : memref<1x18x18x128xbf16, #tpu.memory_space<vmem>>, vector<1x16x16x128xbf16>
    %20 = vector.shape_cast %19 : vector<1x16x16x128xbf16> to vector<16x16x128xbf16>
    %21 = vector.shape_cast %20 : vector<16x16x128xbf16> to vector<256x128xbf16>
    %22 = tpu.concatenate %15, %18, %21 in 1 : vector<256x128xbf16>, vector<256x128xbf16>, vector<256x128xbf16> -> vector<256x384xbf16>
    %c1_24 = arith.constant 1 : index
    %c0_25 = arith.constant 0 : index
    %c0_26 = arith.constant 0 : index
    %23 = vector.load %arg2[%c1_24, %c0_25, %c0_26] : memref<3x384x128xbf16, #tpu.memory_space<vmem>>, vector<1x384x128xbf16>
    %24 = vector.shape_cast %23 : vector<1x384x128xbf16> to vector<384x128xbf16>
    %cst_27 = arith.constant dense<0.000000e+00> : vector<256x128xf32>
    %25 = tpu.matmul %22, %24, %cst_27 {dimension_numbers = #tpu.dot_dimension_numbers<[1], [0], [0], [1], [0, 0, 1, 1], [], []>} : vector<256x384xbf16>, vector<384x128xbf16>, vector<256x128xf32> -> vector<256x128xf32>
    %26 = arith.addf %12, %25 : vector<256x128xf32>
    %c0_28 = arith.constant 0 : index
    %c2_29 = arith.constant 2 : index
    %c0_30 = arith.constant 0 : index
    %c0_31 = arith.constant 0 : index
    %27 = vector.load %arg1[%c0_28, %c2_29, %c0_30, %c0_31] : memref<1x18x18x128xbf16, #tpu.memory_space<vmem>>, vector<1x16x16x128xbf16>
    %28 = vector.shape_cast %27 : vector<1x16x16x128xbf16> to vector<16x16x128xbf16>
    %29 = vector.shape_cast %28 : vector<16x16x128xbf16> to vector<256x128xbf16>
    %c0_32 = arith.constant 0 : index
    %c2_33 = arith.constant 2 : index
    %c1_34 = arith.constant 1 : index
    %c0_35 = arith.constant 0 : index
    %30 = vector.load %arg1[%c0_32, %c2_33, %c1_34, %c0_35] : memref<1x18x18x128xbf16, #tpu.memory_space<vmem>>, vector<1x16x16x128xbf16>
    %31 = vector.shape_cast %30 : vector<1x16x16x128xbf16> to vector<16x16x128xbf16>
    %32 = vector.shape_cast %31 : vector<16x16x128xbf16> to vector<256x128xbf16>
    %c0_36 = arith.constant 0 : index
    %c2_37 = arith.constant 2 : index
    %c2_38 = arith.constant 2 : index
    %c0_39 = arith.constant 0 : index
    %33 = vector.load %arg1[%c0_36, %c2_37, %c2_38, %c0_39] : memref<1x18x18x128xbf16, #tpu.memory_space<vmem>>, vector<1x16x16x128xbf16>
    %34 = vector.shape_cast %33 : vector<1x16x16x128xbf16> to vector<16x16x128xbf16>
    %35 = vector.shape_cast %34 : vector<16x16x128xbf16> to vector<256x128xbf16>
    %36 = tpu.concatenate %29, %32, %35 in 1 : vector<256x128xbf16>, vector<256x128xbf16>, vector<256x128xbf16> -> vector<256x384xbf16>
    %c2_40 = arith.constant 2 : index
    %c0_41 = arith.constant 0 : index
    %c0_42 = arith.constant 0 : index
    %37 = vector.load %arg2[%c2_40, %c0_41, %c0_42] : memref<3x384x128xbf16, #tpu.memory_space<vmem>>, vector<1x384x128xbf16>
    %38 = vector.shape_cast %37 : vector<1x384x128xbf16> to vector<384x128xbf16>
    %cst_43 = arith.constant dense<0.000000e+00> : vector<256x128xf32>
    %39 = tpu.matmul %36, %38, %cst_43 {dimension_numbers = #tpu.dot_dimension_numbers<[1], [0], [0], [1], [0, 0, 1, 1], [], []>} : vector<256x384xbf16>, vector<384x128xbf16>, vector<256x128xf32> -> vector<256x128xf32>
    %40 = arith.addf %26, %39 : vector<256x128xf32>
    %c0_44 = arith.constant 0 : index
    %c0_45 = arith.constant 0 : index
    %41 = vector.load %arg3[%c0_44, %c0_45] : memref<1x128xf32, #tpu.memory_space<vmem>>, vector<1x128xf32>
    %42 = vector.broadcast %41 : vector<1x128xf32> to vector<256x128xf32>
    %43 = arith.addf %40, %42 : vector<256x128xf32>
    %cst_46 = arith.constant 0.000000e+00 : f32
    %44 = vector.broadcast %cst_46 : f32 to vector<256x128xf32>
    %45 = arith.maximumf %43, %44 : vector<256x128xf32>
    %cst_47 = arith.constant 0.000000e+00 : bf16
    %46 = vector.broadcast %cst_47 : bf16 to vector<1x18x128xbf16>
    %cst_48 = arith.constant 0.000000e+00 : bf16
    %47 = vector.broadcast %cst_48 : bf16 to vector<18x1x128xbf16>
    %c0_49 = arith.constant 0 : index
    %c0_50 = arith.constant 0 : index
    %c0_51 = arith.constant 0 : index
    %48 = vector.load %arg7[%c0_49, %c0_50, %c0_51] : memref<18x18x128xbf16, #tpu.memory_space<vmem>>, vector<1x18x128xbf16>
    tpu.vector_store %arg7[%c0_49, %c0_50, %c0_51], %46 {strides = array<i32>} : memref<18x18x128xbf16, #tpu.memory_space<vmem>>, vector<1x18x128xbf16>,
    %c17 = arith.constant 17 : index
    %c0_52 = arith.constant 0 : index
    %c0_53 = arith.constant 0 : index
    %49 = vector.load %arg7[%c17, %c0_52, %c0_53] : memref<18x18x128xbf16, #tpu.memory_space<vmem>>, vector<1x18x128xbf16>
    tpu.vector_store %arg7[%c17, %c0_52, %c0_53], %46 {strides = array<i32>} : memref<18x18x128xbf16, #tpu.memory_space<vmem>>, vector<1x18x128xbf16>,
    %c0_54 = arith.constant 0 : index
    %c0_55 = arith.constant 0 : index
    %c0_56 = arith.constant 0 : index
    %50 = vector.load %arg7[%c0_54, %c0_55, %c0_56] : memref<18x18x128xbf16, #tpu.memory_space<vmem>>, vector<18x1x128xbf16>
    tpu.vector_store %arg7[%c0_54, %c0_55, %c0_56], %47 {strides = array<i32>} : memref<18x18x128xbf16, #tpu.memory_space<vmem>>, vector<18x1x128xbf16>,
    %c0_57 = arith.constant 0 : index
    %c17_58 = arith.constant 17 : index
    %c0_59 = arith.constant 0 : index
    %51 = vector.load %arg7[%c0_57, %c17_58, %c0_59] : memref<18x18x128xbf16, #tpu.memory_space<vmem>>, vector<18x1x128xbf16>
    tpu.vector_store %arg7[%c0_57, %c17_58, %c0_59], %47 {strides = array<i32>} : memref<18x18x128xbf16, #tpu.memory_space<vmem>>, vector<18x1x128xbf16>,
    %52 = vector.shape_cast %45 : vector<256x128xf32> to vector<16x16x128xf32>
    %53 = arith.truncf %52 : vector<16x16x128xf32> to vector<16x16x128xbf16>
    %c1_60 = arith.constant 1 : index
    %c1_61 = arith.constant 1 : index
    %c0_62 = arith.constant 0 : index
    %54 = vector.load %arg7[%c1_60, %c1_61, %c0_62] : memref<18x18x128xbf16, #tpu.memory_space<vmem>>, vector<16x16x128xbf16>
    tpu.vector_store %arg7[%c1_60, %c1_61, %c0_62], %53 {strides = array<i32>} : memref<18x18x128xbf16, #tpu.memory_space<vmem>>, vector<16x16x128xbf16>,
    %c0_63 = arith.constant 0 : index
    %c0_64 = arith.constant 0 : index
    %c0_65 = arith.constant 0 : index
    %55 = vector.load %arg7[%c0_63, %c0_64, %c0_65] : memref<18x18x128xbf16, #tpu.memory_space<vmem>>, vector<16x16x128xbf16>
    %56 = vector.shape_cast %55 : vector<16x16x128xbf16> to vector<256x128xbf16>
    %c0_66 = arith.constant 0 : index
    %c1_67 = arith.constant 1 : index
    %c0_68 = arith.constant 0 : index
    %57 = vector.load %arg7[%c0_66, %c1_67, %c0_68] : memref<18x18x128xbf16, #tpu.memory_space<vmem>>, vector<16x16x128xbf16>
    %58 = vector.shape_cast %57 : vector<16x16x128xbf16> to vector<256x128xbf16>
    %c0_69 = arith.constant 0 : index
    %c2_70 = arith.constant 2 : index
    %c0_71 = arith.constant 0 : index
    %59 = vector.load %arg7[%c0_69, %c2_70, %c0_71] : memref<18x18x128xbf16, #tpu.memory_space<vmem>>, vector<16x16x128xbf16>
    %60 = vector.shape_cast %59 : vector<16x16x128xbf16> to vector<256x128xbf16>
    %61 = tpu.concatenate %56, %58, %60 in 1 : vector<256x128xbf16>, vector<256x128xbf16>, vector<256x128xbf16> -> vector<256x384xbf16>
    %c0_72 = arith.constant 0 : index
    %c0_73 = arith.constant 0 : index
    %c0_74 = arith.constant 0 : index
    %62 = vector.load %arg4[%c0_72, %c0_73, %c0_74] : memref<3x384x128xbf16, #tpu.memory_space<vmem>>, vector<1x384x128xbf16>
    %63 = vector.shape_cast %62 : vector<1x384x128xbf16> to vector<384x128xbf16>
    %cst_75 = arith.constant dense<0.000000e+00> : vector<256x128xf32>
    %64 = tpu.matmul %61, %63, %cst_75 {dimension_numbers = #tpu.dot_dimension_numbers<[1], [0], [0], [1], [0, 0, 1, 1], [], []>} : vector<256x384xbf16>, vector<384x128xbf16>, vector<256x128xf32> -> vector<256x128xf32>
    %c1_76 = arith.constant 1 : index
    %c0_77 = arith.constant 0 : index
    %c0_78 = arith.constant 0 : index
    %65 = vector.load %arg7[%c1_76, %c0_77, %c0_78] : memref<18x18x128xbf16, #tpu.memory_space<vmem>>, vector<16x16x128xbf16>
    %66 = vector.shape_cast %65 : vector<16x16x128xbf16> to vector<256x128xbf16>
    %c1_79 = arith.constant 1 : index
    %c1_80 = arith.constant 1 : index
    %c0_81 = arith.constant 0 : index
    %67 = vector.load %arg7[%c1_79, %c1_80, %c0_81] : memref<18x18x128xbf16, #tpu.memory_space<vmem>>, vector<16x16x128xbf16>
    %68 = vector.shape_cast %67 : vector<16x16x128xbf16> to vector<256x128xbf16>
    %c1_82 = arith.constant 1 : index
    %c2_83 = arith.constant 2 : index
    %c0_84 = arith.constant 0 : index
    %69 = vector.load %arg7[%c1_82, %c2_83, %c0_84] : memref<18x18x128xbf16, #tpu.memory_space<vmem>>, vector<16x16x128xbf16>
    %70 = vector.shape_cast %69 : vector<16x16x128xbf16> to vector<256x128xbf16>
    %71 = tpu.concatenate %66, %68, %70 in 1 : vector<256x128xbf16>, vector<256x128xbf16>, vector<256x128xbf16> -> vector<256x384xbf16>
    %c1_85 = arith.constant 1 : index
    %c0_86 = arith.constant 0 : index
    %c0_87 = arith.constant 0 : index
    %72 = vector.load %arg4[%c1_85, %c0_86, %c0_87] : memref<3x384x128xbf16, #tpu.memory_space<vmem>>, vector<1x384x128xbf16>
    %73 = vector.shape_cast %72 : vector<1x384x128xbf16> to vector<384x128xbf16>
    %cst_88 = arith.constant dense<0.000000e+00> : vector<256x128xf32>
    %74 = tpu.matmul %71, %73, %cst_88 {dimension_numbers = #tpu.dot_dimension_numbers<[1], [0], [0], [1], [0, 0, 1, 1], [], []>} : vector<256x384xbf16>, vector<384x128xbf16>, vector<256x128xf32> -> vector<256x128xf32>
    %75 = arith.addf %64, %74 : vector<256x128xf32>
    %c2_89 = arith.constant 2 : index
    %c0_90 = arith.constant 0 : index
    %c0_91 = arith.constant 0 : index
    %76 = vector.load %arg7[%c2_89, %c0_90, %c0_91] : memref<18x18x128xbf16, #tpu.memory_space<vmem>>, vector<16x16x128xbf16>
    %77 = vector.shape_cast %76 : vector<16x16x128xbf16> to vector<256x128xbf16>
    %c2_92 = arith.constant 2 : index
    %c1_93 = arith.constant 1 : index
    %c0_94 = arith.constant 0 : index
    %78 = vector.load %arg7[%c2_92, %c1_93, %c0_94] : memref<18x18x128xbf16, #tpu.memory_space<vmem>>, vector<16x16x128xbf16>
    %79 = vector.shape_cast %78 : vector<16x16x128xbf16> to vector<256x128xbf16>
    %c2_95 = arith.constant 2 : index
    %c2_96 = arith.constant 2 : index
    %c0_97 = arith.constant 0 : index
    %80 = vector.load %arg7[%c2_95, %c2_96, %c0_97] : memref<18x18x128xbf16, #tpu.memory_space<vmem>>, vector<16x16x128xbf16>
    %81 = vector.shape_cast %80 : vector<16x16x128xbf16> to vector<256x128xbf16>
    %82 = tpu.concatenate %77, %79, %81 in 1 : vector<256x128xbf16>, vector<256x128xbf16>, vector<256x128xbf16> -> vector<256x384xbf16>
    %c2_98 = arith.constant 2 : index
    %c0_99 = arith.constant 0 : index
    %c0_100 = arith.constant 0 : index
    %83 = vector.load %arg4[%c2_98, %c0_99, %c0_100] : memref<3x384x128xbf16, #tpu.memory_space<vmem>>, vector<1x384x128xbf16>
    %84 = vector.shape_cast %83 : vector<1x384x128xbf16> to vector<384x128xbf16>
    %cst_101 = arith.constant dense<0.000000e+00> : vector<256x128xf32>
    %85 = tpu.matmul %82, %84, %cst_101 {dimension_numbers = #tpu.dot_dimension_numbers<[1], [0], [0], [1], [0, 0, 1, 1], [], []>} : vector<256x384xbf16>, vector<384x128xbf16>, vector<256x128xf32> -> vector<256x128xf32>
    %86 = arith.addf %75, %85 : vector<256x128xf32>
    %c0_102 = arith.constant 0 : index
    %c1_103 = arith.constant 1 : index
    %c1_104 = arith.constant 1 : index
    %c0_105 = arith.constant 0 : index
    %87 = vector.load %arg1[%c0_102, %c1_103, %c1_104, %c0_105] : memref<1x18x18x128xbf16, #tpu.memory_space<vmem>>, vector<1x16x16x128xbf16>
    %88 = vector.shape_cast %87 : vector<1x16x16x128xbf16> to vector<16x16x128xbf16>
    %89 = arith.extf %88 : vector<16x16x128xbf16> to vector<16x16x128xf32>
    %90 = vector.shape_cast %89 : vector<16x16x128xf32> to vector<256x128xf32>
    %c0_106 = arith.constant 0 : index
    %c0_107 = arith.constant 0 : index
    %91 = vector.load %arg5[%c0_106, %c0_107] : memref<1x128xf32, #tpu.memory_space<vmem>>, vector<1x128xf32>
    %92 = vector.broadcast %91 : vector<1x128xf32> to vector<256x128xf32>
    %93 = arith.addf %86, %92 : vector<256x128xf32>
    %94 = arith.addf %93, %90 : vector<256x128xf32>
    %cst_108 = arith.constant 0.000000e+00 : f32
    %95 = vector.broadcast %cst_108 : f32 to vector<256x128xf32>
    %96 = arith.maximumf %94, %95 : vector<256x128xf32>
    %97 = vector.shape_cast %96 : vector<256x128xf32> to vector<16x16x128xf32>
    %98 = arith.truncf %97 : vector<16x16x128xf32> to vector<16x16x128xbf16>
    %c0_109 = arith.constant 0 : index
    %c0_110 = arith.constant 0 : index
    %c0_111 = arith.constant 0 : index
    %c0_112 = arith.constant 0 : index
    %99 = vector.load %arg6[%c0_109, %c0_110, %c0_111, %c0_112] : memref<1x16x16x128xbf16, #tpu.memory_space<vmem>>, vector<1x16x16x128xbf16>
    %100 = vector.shape_cast %99 : vector<1x16x16x128xbf16> to vector<16x16x128xbf16>
    %101 = vector.shape_cast %98 : vector<16x16x128xbf16> to vector<1x16x16x128xbf16>
    tpu.vector_store %arg6[%c0_109, %c0_110, %c0_111, %c0_112], %101 {strides = array<i32>} : memref<1x16x16x128xbf16, #tpu.memory_space<vmem>>, vector<1x16x16x128xbf16>,
    return
  }
  func.func @transform_0(%arg0: i32) -> (i32, i32, i32, i32) {
    %c0_i32 = arith.constant 0 : i32
    %c0_i32_0 = arith.constant 0 : i32
    %c0_i32_1 = arith.constant 0 : i32
    %c0_i32_2 = arith.constant 0 : i32
    return %arg0, %c0_i32, %c0_i32_0, %c0_i32_1 : i32, i32, i32, i32
  }
  func.func @transform_1(%arg0: i32) -> (i32, i32, i32) {
    %c0_i32 = arith.constant 0 : i32
    %c0_i32_0 = arith.constant 0 : i32
    %c0_i32_1 = arith.constant 0 : i32
    %c0_i32_2 = arith.constant 0 : i32
    return %c0_i32, %c0_i32_0, %c0_i32_1 : i32, i32, i32
  }
  func.func @transform_2(%arg0: i32) -> (i32, i32) {
    %c0_i32 = arith.constant 0 : i32
    %c0_i32_0 = arith.constant 0 : i32
    %c0_i32_1 = arith.constant 0 : i32
    return %c0_i32, %c0_i32_0 : i32, i32
  }
  func.func @transform_3(%arg0: i32) -> (i32, i32, i32) {
    %c0_i32 = arith.constant 0 : i32
    %c0_i32_0 = arith.constant 0 : i32
    %c0_i32_1 = arith.constant 0 : i32
    %c0_i32_2 = arith.constant 0 : i32
    return %c0_i32, %c0_i32_0, %c0_i32_1 : i32, i32, i32
  }
  func.func @transform_4(%arg0: i32) -> (i32, i32) {
    %c0_i32 = arith.constant 0 : i32
    %c0_i32_0 = arith.constant 0 : i32
    %c0_i32_1 = arith.constant 0 : i32
    return %c0_i32, %c0_i32_0 : i32, i32
  }
  func.func @transform_5(%arg0: i32) -> (i32, i32, i32, i32) {
    %c0_i32 = arith.constant 0 : i32
    %c0_i32_0 = arith.constant 0 : i32
    %c0_i32_1 = arith.constant 0 : i32
    %c0_i32_2 = arith.constant 0 : i32
    return %arg0, %c0_i32, %c0_i32_0, %c0_i32_1 : i32, i32, i32, i32
  }
}

</mosaic_0001>

<llo_original>
// kernel: basic_block_forward.1
$region0: #{basic_block_forward.1}
  #allocation0 [shape = 'u32[]', space=smem, size = 0x4, offset = 0x4, fixed_abs, tag = 'smem constant byte address 0x4 - core index']
  #allocation1 [shape = 'u32[144,128]{1,0:T(1,128)}', space=vmem, size = 0x12000, scoped, tag = 'internal scratch']
  #allocation2 [shape = 'bf16[18,18,128]{2,1,0:T(8,128)(2,1)}', space=vmem, size = 0x1b000, scoped, tag = 'scratch operand']
  %s0 = inlined_call_operand.vmem [shape: bf16[2,18,18,128], index: 0, kind: input, shape index: {}]
  %s1 = inlined_call_operand.vmem [shape: bf16[3,384,128], index: 1, kind: input, shape index: {}]
  %s2 = inlined_call_operand.vmem [shape: f32[1,128], index: 2, kind: input, shape index: {}]
  %s3 = inlined_call_operand.vmem [shape: bf16[3,384,128], index: 3, kind: input, shape index: {}]
  %s4 = inlined_call_operand.vmem [shape: f32[1,128], index: 4, kind: input, shape index: {}]
  %s5 = inlined_call_operand.vmem [shape: bf16[2,16,16,128], index: 5, kind: output, shape index: {}]
  %s6 = sld [smem:[#allocation0]]
  $region53: #{basic_block_forward.1} parent=0
    _
  %s8 = ssub.s32 1, %s6
  %s9 = scalar_select 0, %s8, %s6
  loop: start=0, step=1, limit=4
  $region2: #{basic_block_forward.1} parent=0 // loop_pre_header
    _
  $region3: #{basic_block_forward.1} parent=0 // loop_header
    %s11 = sphi 0, %s15
    %p12 = scmp.ge.s32.totalorder %s11, 4
    %s21 = sphi 0, %s23
    %s24 = sphi 0, %s21
    %s25 = sphi 0, %s24
    %s41 = sphi 0, %s25
    %s45 = sphi 0, %s45
    %s47 = sphi 0, %s45
    %s48 = sphi 0, %s47
    %s62 = sphi 0, %s48
    %s66 = sphi 0, %s66
    %s68 = sphi 0, %s66
    %s69 = sphi 0, %s68
    %s83 = sphi 0, %s69
    %s87 = sphi 0, %s87
    %s89 = sphi 0, %s87
    %s90 = sphi 0, %s89
    %s104 = sphi 0, %s90
    %s108 = sphi 0, %s108
    %s110 = sphi 0, %s108
    %s111 = sphi 0, %s110
    %s125 = sphi 0, %s111
    %s131 = sphi 0, %s133
    %s134 = sphi 0, %s131
    %s135 = sphi 0, %s134
    %s151 = sphi 0, %s135
  $region4: #{basic_block_forward.1} parent=0 // loop_header_branch
    %14 = sbr.rel (%p12) target = $region8
  $region5: #{basic_block_forward.1} parent=0 // loop_body
    %s16 = ssub.s32 %s11, 1
    %s17 = ssub.s32 %s11, 2
    %s18 = sadd.s32 %s11, 1
    %s19 = ssub.s32 %s11, %s18
    %p20 = scmp.eq.s32.totalorder %s19, 0
    %s22 = sadd.s32 %s21, 1
    %s23 = scalar_select %p20, %s21, %s22
    %p26 = pneg %p20
    %p27 = scmp.eq.s32.totalorder %s11, 1
    %p28 = por %p26, %p27
    %p29 = scmp.ne.s32.totalorder %s21, %s24
    %p30 = scmp.eq.s32.totalorder %s11, 0
    %p31 = por %p29, %p30
    %p32 = scmp.ne.s32.totalorder %s21, %s24
    %p33 = scmp.eq.s32.totalorder %s16, 1
    %p34 = por %p32, %p33
    %p35 = scmp.ne.s32.totalorder %s24, %s25
    %p36 = scmp.eq.s32.totalorder %s16, 0
    %p37 = por %p35, %p36
    %p38 = scmp.ne.s32.totalorder %s24, %s25
    %p39 = scmp.eq.s32.totalorder %s17, 1
    %p40 = por %p38, %p39
    %p42 = scmp.ne.s32.totalorder %s25, %s41
    %p43 = scmp.eq.s32.totalorder %s17, 0
    %p44 = por %p42, %p43
    %s46 = sadd.s32 %s45, 1
    %p49 = scmp.eq.s32.totalorder %s11, 1
    %p50 = scmp.ne.s32.totalorder %s45, %s47
    %p51 = scmp.eq.s32.totalorder %s11, 0
    %p52 = por %p50, %p51
    %p53 = scmp.ne.s32.totalorder %s45, %s47
    %p54 = scmp.eq.s32.totalorder %s16, 1
    %p55 = por %p53, %p54
    %p56 = scmp.ne.s32.totalorder %s47, %s48
    %p57 = scmp.eq.s32.totalorder %s16, 0
    %p58 = por %p56, %p57
    %p59 = scmp.ne.s32.totalorder %s47, %s48
    %p60 = scmp.eq.s32.totalorder %s17, 1
    %p61 = por %p59, %p60
    %p63 = scmp.ne.s32.totalorder %s48, %s62
    %p64 = scmp.eq.s32.totalorder %s17, 0
    %p65 = por %p63, %p64
    %s67 = sadd.s32 %s66, 1
    %p70 = scmp.eq.s32.totalorder %s11, 1
    %p71 = scmp.ne.s32.totalorder %s66, %s68
    %p72 = scmp.eq.s32.totalorder %s11, 0
    %p73 = por %p71, %p72
    %p74 = scmp.ne.s32.totalorder %s66, %s68
    %p75 = scmp.eq.s32.totalorder %s16, 1
    %p76 = por %p74, %p75
    %p77 = scmp.ne.s32.totalorder %s68, %s69
    %p78 = scmp.eq.s32.totalorder %s16, 0
    %p79 = por %p77, %p78
    %p80 = scmp.ne.s32.totalorder %s68, %s69
    %p81 = scmp.eq.s32.totalorder %s17, 1
    %p82 = por %p80, %p81
    %p84 = scmp.ne.s32.totalorder %s69, %s83
    %p85 = scmp.eq.s32.totalorder %s17, 0
    %p86 = por %p84, %p85
    %s88 = sadd.s32 %s87, 1
    %p91 = scmp.eq.s32.totalorder %s11, 1
    %p92 = scmp.ne.s32.totalorder %s87, %s89
    %p93 = scmp.eq.s32.totalorder %s11, 0
    %p94 = por %p92, %p93
    %p95 = scmp.ne.s32.totalorder %s87, %s89
    %p96 = scmp.eq.s32.totalorder %s16, 1
    %p97 = por %p95, %p96
    %p98 = scmp.ne.s32.totalorder %s89, %s90
    %p99 = scmp.eq.s32.totalorder %s16, 0
    %p100 = por %p98, %p99
    %p101 = scmp.ne.s32.totalorder %s89, %s90
    %p102 = scmp.eq.s32.totalorder %s17, 1
    %p103 = por %p101, %p102
    %p105 = scmp.ne.s32.totalorder %s90, %s104
    %p106 = scmp.eq.s32.totalorder %s17, 0
    %p107 = por %p105, %p106
    %s109 = sadd.s32 %s108, 1
    %p112 = scmp.eq.s32.totalorder %s11, 1
    %p113 = scmp.ne.s32.totalorder %s108, %s110
    %p114 = scmp.eq.s32.totalorder %s11, 0
    %p115 = por %p113, %p114
    %p116 = scmp.ne.s32.totalorder %s108, %s110
    %p117 = scmp.eq.s32.totalorder %s16, 1
    %p118 = por %p116, %p117
    %p119 = scmp.ne.s32.totalorder %s110, %s111
    %p120 = scmp.eq.s32.totalorder %s16, 0
    %p121 = por %p119, %p120
    %p122 = scmp.ne.s32.totalorder %s110, %s111
    %p123 = scmp.eq.s32.totalorder %s17, 1
    %p124 = por %p122, %p123
    %p126 = scmp.ne.s32.totalorder %s111, %s125
    %p127 = scmp.eq.s32.totalorder %s17, 0
    %p128 = por %p126, %p127
    %s129 = ssub.s32 %s11, %s18
    %p130 = scmp.eq.s32.totalorder %s129, 0
    %s132 = sadd.s32 %s131, 1
    %s133 = scalar_select %p130, %s131, %s132
    %p136 = pneg %p130
    %p137 = scmp.eq.s32.totalorder %s11, 1
    %p138 = por %p136, %p137
    %p139 = scmp.ne.s32.totalorder %s131, %s134
    %p140 = scmp.eq.s32.totalorder %s11, 0
    %p141 = por %p139, %p140
    %p142 = scmp.ne.s32.totalorder %s131, %s134
    %p143 = scmp.eq.s32.totalorder %s16, 1
    %p144 = por %p142, %p143
    %p145 = scmp.ne.s32.totalorder %s134, %s135
    %p146 = scmp.eq.s32.totalorder %s16, 0
    %p147 = por %p145, %p146
    %p148 = scmp.ne.s32.totalorder %s134, %s135
    %p149 = scmp.eq.s32.totalorder %s17, 1
    %p150 = por %p148, %p149
    %p152 = scmp.ne.s32.totalorder %s135, %s151
    %p153 = scmp.eq.s32.totalorder %s17, 0
    %p154 = por %p152, %p153
    %p155 = scmp.le.s32.totalorder 1, %s11
    %p156 = scmp.lt.s32.totalorder %s11, 3
    %p157 = pnand %p155, %p156
    %p158 = pneg %p157
    // Predicated region
    $region9: #{basic_block_forward.1} parent=5 // pred_check
      _
    $region10: #{basic_block_forward.1} parent=5 // pred_check_branch
      %160 = sbr.rel (%p157) target = $region12
    $region11: #{basic_block_forward.1} parent=5 // pred_region
      %s161 = ssub.s32 %s11, 1
      // Predicated region
      $region13: #{basic_block_forward.1} parent=11 // pred_check
        %p162 = pneg %p58
      $region14: #{basic_block_forward.1} parent=11 // pred_check_branch
        %164 = sbr.rel (%p162) target = $region16
      $region15: #{basic_block_forward.1} parent=11 // pred_region
        _
      $region16: #{basic_block_forward.1} parent=11 // pred_fallthru
        _
      // Predicated region
      $region17: #{basic_block_forward.1} parent=11 // pred_check
        %p165 = pneg %p79
      $region18: #{basic_block_forward.1} parent=11 // pred_check_branch
        %167 = sbr.rel (%p165) target = $region20
      $region19: #{basic_block_forward.1} parent=11 // pred_region
        _
      $region20: #{basic_block_forward.1} parent=11 // pred_fallthru
        _
      // Predicated region
      $region21: #{basic_block_forward.1} parent=11 // pred_check
        %p168 = pneg %p100
      $region22: #{basic_block_forward.1} parent=11 // pred_check_branch
        %170 = sbr.rel (%p168) target = $region24
      $region23: #{basic_block_forward.1} parent=11 // pred_region
        _
      $region24: #{basic_block_forward.1} parent=11 // pred_fallthru
        _
      // Predicated region
      $region25: #{basic_block_forward.1} parent=11 // pred_check
        %p171 = pneg %p121
      $region26: #{basic_block_forward.1} parent=11 // pred_check_branch
        %173 = sbr.rel (%p171) target = $region28
      $region27: #{basic_block_forward.1} parent=11 // pred_region
        _
      $region28: #{basic_block_forward.1} parent=11 // pred_fallthru
        _
    $region12: #{basic_block_forward.1} parent=5 // pred_fallthru
      _
    %p174 = scmp.lt.s32.totalorder %s11, 2
    // Predicated region
    $region29: #{basic_block_forward.1} parent=5 // pred_check
      %p175 = pneg %p174
    $region30: #{basic_block_forward.1} parent=5 // pred_check_branch
      %177 = sbr.rel (%p175) target = $region32
    $region31: #{basic_block_forward.1} parent=5 // pred_region
      // Predicated region
      $region33: #{basic_block_forward.1} parent=31 // pred_check
        %p178 = pneg %p31
      $region34: #{basic_block_forward.1} parent=31 // pred_check_branch
        %180 = sbr.rel (%p178) target = $region36
      $region35: #{basic_block_forward.1} parent=31 // pred_region
        %p181 = scmp.lt.s32.totalorder %s11, 1
        %s182 = scalar_select %p181, %s11, 1
        %s183 = smul.addr %s182, 54
        %s184 = smul.addr %s183, 4
        %s185 = scalar_lea.vmem %s0, %s184
      $region36: #{basic_block_forward.1} parent=31 // pred_fallthru
        _
    $region32: #{basic_block_forward.1} parent=5 // pred_fallthru
      _
    %p186 = scmp.le.s32.totalorder 1, %s11
    %p187 = scmp.lt.s32.totalorder %s11, 3
    %p188 = pnand %p186, %p187
    %p189 = pneg %p188
    // Predicated region
    $region37: #{basic_block_forward.1} parent=5 // pred_check
      _
    $region38: #{basic_block_forward.1} parent=5 // pred_check_branch
      %191 = sbr.rel (%p188) target = $region40
    $region39: #{basic_block_forward.1} parent=5 // pred_region
      %s192 = ssub.s32 %s11, 1
      %p193 = scmp.lt.s32.totalorder %s16, 1
      %s194 = scalar_select %p193, %s16, 1
      %s195 = smul.addr %s194, 54
      %s196 = smul.addr %s195, 4
      %s197 = scalar_lea.vmem %s0, %s196
      %p198 = pneg %p37
      %p199 = pneg %p34
      %p200 = pneg %p58
      %p201 = pneg %p55
      %p202 = pneg %p79
      %p203 = pneg %p76
      %p204 = pneg %p100
      %p205 = pneg %p97
      %p206 = pneg %p121
      %p207 = pneg %p118
      %p208 = pneg %p147
      %p209 = pneg %p144
      %p210 = scmp.lt.s32.totalorder %s16, 1
      %s211 = scalar_select %p210, %s16, 1
      %s212 = smul.addr %s211, 32
      %s213 = smul.addr %s212, 4
      %s214 = scalar_lea.vmem %s5, %s213
      %p215 = scmp.lt.s32.totalorder %s16, 1
      %s216 = scalar_select %p215, %s16, 1
      %s217 = smul.addr %s216, 54
      %s218 = smul.addr %s217, 4
      %s219 = scalar_lea.vmem %s0, %s218
      %p220 = scmp.lt.s32.totalorder %s16, 1
      %s221 = scalar_select %p220, %s16, 1
      %s222 = smul.addr %s221, 32
      %s223 = smul.addr %s222, 4
      %s224 = scalar_lea.vmem %s5, %s223
      %v226 = vld [vmem:[%s219] sm:$0xf]
      %v227 = vld [vmem:[%s219 + $0x4] sm:$0xf]
      %v228 = vld [vmem:[%s219 + $0xc] sm:$0xf]
      %v229 = vld [vmem:[%s219 + $0x10] sm:$0xf]
      %v230 = vld [vmem:[%s219 + $0x18] sm:$0xf]
      %v231 = vld [vmem:[%s219 + $0x1c] sm:$0xf]
      %v232 = vld [vmem:[%s219 + $0x24] sm:$0xf]
      %v233 = vld [vmem:[%s219 + $0x28] sm:$0xf]
      %v234 = vld [vmem:[%s219 + $0x30] sm:$0xf]
      %v235 = vld [vmem:[%s219 + $0x34] sm:$0xf]
      %v236 = vld [vmem:[%s219 + $0x3c] sm:$0xf]
      %v237 = vld [vmem:[%s219 + $0x40] sm:$0xf]
      %v238 = vld [vmem:[%s219 + $0x48] sm:$0xf]
      %v239 = vld [vmem:[%s219 + $0x4c] sm:$0xf]
      %v240 = vld [vmem:[%s219 + $0x54] sm:$0xf]
      %v241 = vld [vmem:[%s219 + $0x58] sm:$0xf]
      %v242 = vld [vmem:[%s219 + $0x60] sm:$0xf]
      %v243 = vld [vmem:[%s219 + $0x64] sm:$0xf]
      %v244 = vld [vmem:[%s219 + $0x6c] sm:$0xf]
      %v245 = vld [vmem:[%s219 + $0x70] sm:$0xf]
      %v246 = vld [vmem:[%s219 + $0x78] sm:$0xf]
      %v247 = vld [vmem:[%s219 + $0x7c] sm:$0xf]
      %v248 = vld [vmem:[%s219 + $0x84] sm:$0xf]
      %v249 = vld [vmem:[%s219 + $0x88] sm:$0xf]
      %v250 = vld [vmem:[%s219 + $0x90] sm:$0xf]
      %v251 = vld [vmem:[%s219 + $0x94] sm:$0xf]
      %v252 = vld [vmem:[%s219 + $0x9c] sm:$0xf]
      %v253 = vld [vmem:[%s219 + $0xa0] sm:$0xf]
      %v254 = vld [vmem:[%s219 + $0xa8] sm:$0xf]
      %v255 = vld [vmem:[%s219 + $0xac] sm:$0xf]
      %v256 = vld [vmem:[%s219 + $0xb4] sm:$0xf]
      %v257 = vld [vmem:[%s219 + $0xb8] sm:$0xf]
      %v258 = vld [vmem:[%s219 + $0x8] sm:$0x1]
      %v259 = vld [vmem:[%s219 + $0x14] sm:$0x1]
      %v260 = vld [vmem:[%s219 + $0x20] sm:$0x1]
      %v261 = vld [vmem:[%s219 + $0x2c] sm:$0x1]
      %v262 = vld [vmem:[%s219 + $0x38] sm:$0x1]
      %v263 = vld [vmem:[%s219 + $0x44] sm:$0x1]
      %v264 = vld [vmem:[%s219 + $0x50] sm:$0x1]
      %v265 = vld [vmem:[%s219 + $0x5c] sm:$0x1]
      %v266 = vld [vmem:[%s219 + $0x68] sm:$0x1]
      %v267 = vld [vmem:[%s219 + $0x74] sm:$0x1]
      %v268 = vld [vmem:[%s219 + $0x80] sm:$0x1]
      %v269 = vld [vmem:[%s219 + $0x8c] sm:$0x1]
      %v270 = vld [vmem:[%s219 + $0x98] sm:$0x1]
      %v271 = vld [vmem:[%s219 + $0xa4] sm:$0x1]
      %v272 = vld [vmem:[%s219 + $0xb0] sm:$0x1]
      %v273 = vld [vmem:[%s219 + $0xbc] sm:$0x1]
      %vm274 = vsmask.f32 3328
      %vm275 = vsmask.f32 7440
      %vm276 = vmor %vm274, %vm275
      %v278 = vshrl.u32 %v226, 16
      %v280 = vrot.slane %v278, 4
      %v281 = vshll.u32 %v226, 16
      %v283 = vrot.slane %v281, 5
      %v284 = vor.u32 %v280, %v283
      %v285 = vrot.slane %v284, 4
      %v287 = vshll.u32 %v227, 16
      %v289 = vrot.slane %v287, 5
      %v290 = vsel %vm276, %v285, %v289
      %v291 = vshrl.u32 %v227, 16
      %v293 = vrot.slane %v291, 4
      %v294 = vor.u32 %v293, %v289
      %v295 = vrot.slane %v294, 4
      %v297 = vshll.u32 %v258, 16
      %v299 = vrot.slane %v297, 5
      %v300 = vsel %vm276, %v295, %v299
      %v302 = vshrl.u32 %v228, 16
      %v304 = vrot.slane %v302, 4
      %v305 = vshll.u32 %v228, 16
      %v307 = vrot.slane %v305, 5
      %v308 = vor.u32 %v304, %v307
      %v309 = vrot.slane %v308, 4
      %v311 = vshll.u32 %v229, 16
      %v313 = vrot.slane %v311, 5
      %v314 = vsel %vm276, %v309, %v313
      %v315 = vshrl.u32 %v229, 16
      %v317 = vrot.slane %v315, 4
      %v318 = vor.u32 %v317, %v313
      %v319 = vrot.slane %v318, 4
      %v321 = vshll.u32 %v259, 16
      %v323 = vrot.slane %v321, 5
      %v324 = vsel %vm276, %v319, %v323
      %v326 = vshrl.u32 %v230, 16
      %v328 = vrot.slane %v326, 4
      %v329 = vshll.u32 %v230, 16
      %v331 = vrot.slane %v329, 5
      %v332 = vor.u32 %v328, %v331
      %v333 = vrot.slane %v332, 4
      %v335 = vshll.u32 %v231, 16
      %v337 = vrot.slane %v335, 5
      %v338 = vsel %vm276, %v333, %v337
      %v339 = vshrl.u32 %v231, 16
      %v341 = vrot.slane %v339, 4
      %v342 = vor.u32 %v341, %v337
      %v343 = vrot.slane %v342, 4
      %v345 = vshll.u32 %v260, 16
      %v347 = vrot.slane %v345, 5
      %v348 = vsel %vm276, %v343, %v347
      %v350 = vshrl.u32 %v232, 16
      %v352 = vrot.slane %v350, 4
      %v353 = vshll.u32 %v232, 16
      %v355 = vrot.slane %v353, 5
      %v356 = vor.u32 %v352, %v355
      %v357 = vrot.slane %v356, 4
      %v359 = vshll.u32 %v233, 16
      %v361 = vrot.slane %v359, 5
      %v362 = vsel %vm276, %v357, %v361
      %v363 = vshrl.u32 %v233, 16
      %v365 = vrot.slane %v363, 4
      %v366 = vor.u32 %v365, %v361
      %v367 = vrot.slane %v366, 4
      %v369 = vshll.u32 %v261, 16
      %v371 = vrot.slane %v369, 5
      %v372 = vsel %vm276, %v367, %v371
      %v374 = vshrl.u32 %v234, 16
      %v376 = vrot.slane %v374, 4
      %v377 = vshll.u32 %v234, 16
      %v379 = vrot.slane %v377, 5
      %v380 = vor.u32 %v376, %v379
      %v381 = vrot.slane %v380, 4
      %v383 = vshll.u32 %v235, 16
      %v385 = vrot.slane %v383, 5
      %v386 = vsel %vm276, %v381, %v385
      %v387 = vshrl.u32 %v235, 16
      %v389 = vrot.slane %v387, 4
      %v390 = vor.u32 %v389, %v385
      %v391 = vrot.slane %v390, 4
      %v393 = vshll.u32 %v262, 16
      %v395 = vrot.slane %v393, 5
      %v396 = vsel %vm276, %v391, %v395
      %v398 = vshrl.u32 %v236, 16
      %v400 = vrot.slane %v398, 4
      %v401 = vshll.u32 %v236, 16
      %v403 = vrot.slane %v401, 5
      %v404 = vor.u32 %v400, %v403
      %v405 = vrot.slane %v404, 4
      %v407 = vshll.u32 %v237, 16
      %v409 = vrot.slane %v407, 5
      %v410 = vsel %vm276, %v405, %v409
      %v411 = vshrl.u32 %v237, 16
      %v413 = vrot.slane %v411, 4
      %v414 = vor.u32 %v413, %v409
      %v415 = vrot.slane %v414, 4
      %v417 = vshll.u32 %v263, 16
      %v419 = vrot.slane %v417, 5
      %v420 = vsel %vm276, %v415, %v419
      %v422 = vshrl.u32 %v238, 16
      %v424 = vrot.slane %v422, 4
      %v425 = vshll.u32 %v238, 16
      %v427 = vrot.slane %v425, 5
      %v428 = vor.u32 %v424, %v427
      %v429 = vrot.slane %v428, 4
      %v431 = vshll.u32 %v239, 16
      %v433 = vrot.slane %v431, 5
      %v434 = vsel %vm276, %v429, %v433
      %v435 = vshrl.u32 %v239, 16
      %v437 = vrot.slane %v435, 4
      %v438 = vor.u32 %v437, %v433
      %v439 = vrot.slane %v438, 4
      %v441 = vshll.u32 %v264, 16
      %v443 = vrot.slane %v441, 5
      %v444 = vsel %vm276, %v439, %v443
      %v446 = vshrl.u32 %v240, 16
      %v448 = vrot.slane %v446, 4
      %v449 = vshll.u32 %v240, 16
      %v451 = vrot.slane %v449, 5
      %v452 = vor.u32 %v448, %v451
      %v453 = vrot.slane %v452, 4
      %v455 = vshll.u32 %v241, 16
      %v457 = vrot.slane %v455, 5
      %v458 = vsel %vm276, %v453, %v457
      %v459 = vshrl.u32 %v241, 16
      %v461 = vrot.slane %v459, 4
      %v462 = vor.u32 %v461, %v457
      %v463 = vrot.slane %v462, 4
      %v465 = vshll.u32 %v265, 16
      %v467 = vrot.slane %v465, 5
      %v468 = vsel %vm276, %v463, %v467
      %v470 = vshrl.u32 %v242, 16
      %v472 = vrot.slane %v470, 4
      %v473 = vshll.u32 %v242, 16
      %v475 = vrot.slane %v473, 5
      %v476 = vor.u32 %v472, %v475
      %v477 = vrot.slane %v476, 4
      %v479 = vshll.u32 %v243, 16
      %v481 = vrot.slane %v479, 5
      %v482 = vsel %vm276, %v477, %v481
      %v483 = vshrl.u32 %v243, 16
      %v485 = vrot.slane %v483, 4
      %v486 = vor.u32 %v485, %v481
      %v487 = vrot.slane %v486, 4
      %v489 = vshll.u32 %v266, 16
      %v491 = vrot.slane %v489, 5
      %v492 = vsel %vm276, %v487, %v491
      %v494 = vshrl.u32 %v244, 16
      %v496 = vrot.slane %v494, 4
      %v497 = vshll.u32 %v244, 16
      %v499 = vrot.slane %v497, 5
      %v500 = vor.u32 %v496, %v499
      %v501 = vrot.slane %v500, 4
      %v503 = vshll.u32 %v245, 16
      %v505 = vrot.slane %v503, 5
      %v506 = vsel %vm276, %v501, %v505
      %v507 = vshrl.u32 %v245, 16
      %v509 = vrot.slane %v507, 4
      %v510 = vor.u32 %v509, %v505
      %v511 = vrot.slane %v510, 4
      %v513 = vshll.u32 %v267, 16
      %v515 = vrot.slane %v513, 5
      %v516 = vsel %vm276, %v511, %v515
      %v518 = vshrl.u32 %v246, 16
      %v520 = vrot.slane %v518, 4
      %v521 = vshll.u32 %v246, 16
      %v523 = vrot.slane %v521, 5
      %v524 = vor.u32 %v520, %v523
      %v525 = vrot.slane %v524, 4
      %v527 = vshll.u32 %v247, 16
      %v529 = vrot.slane %v527, 5
      %v530 = vsel %vm276, %v525, %v529
      %v531 = vshrl.u32 %v247, 16
      %v533 = vrot.slane %v531, 4
      %v534 = vor.u32 %v533, %v529
      %v535 = vrot.slane %v534, 4
      %v537 = vshll.u32 %v268, 16
      %v539 = vrot.slane %v537, 5
      %v540 = vsel %vm276, %v535, %v539
      %v542 = vshrl.u32 %v248, 16
      %v544 = vrot.slane %v542, 4
      %v545 = vshll.u32 %v248, 16
      %v547 = vrot.slane %v545, 5
      %v548 = vor.u32 %v544, %v547
      %v549 = vrot.slane %v548, 4
      %v551 = vshll.u32 %v249, 16
      %v553 = vrot.slane %v551, 5
      %v554 = vsel %vm276, %v549, %v553
      %v555 = vshrl.u32 %v249, 16
      %v557 = vrot.slane %v555, 4
      %v558 = vor.u32 %v557, %v553
      %v559 = vrot.slane %v558, 4
      %v561 = vshll.u32 %v269, 16
      %v563 = vrot.slane %v561, 5
      %v564 = vsel %vm276, %v559, %v563
      %v566 = vshrl.u32 %v250, 16
      %v568 = vrot.slane %v566, 4
      %v569 = vshll.u32 %v250, 16
      %v571 = vrot.slane %v569, 5
      %v572 = vor.u32 %v568, %v571
      %v573 = vrot.slane %v572, 4
      %v575 = vshll.u32 %v251, 16
      %v577 = vrot.slane %v575, 5
      %v578 = vsel %vm276, %v573, %v577
      %v579 = vshrl.u32 %v251, 16
      %v581 = vrot.slane %v579, 4
      %v582 = vor.u32 %v581, %v577
      %v583 = vrot.slane %v582, 4
      %v585 = vshll.u32 %v270, 16
      %v587 = vrot.slane %v585, 5
      %v588 = vsel %vm276, %v583, %v587
      %v590 = vshrl.u32 %v252, 16
      %v592 = vrot.slane %v590, 4
      %v593 = vshll.u32 %v252, 16
      %v595 = vrot.slane %v593, 5
      %v596 = vor.u32 %v592, %v595
      %v597 = vrot.slane %v596, 4
      %v599 = vshll.u32 %v253, 16
      %v601 = vrot.slane %v599, 5
      %v602 = vsel %vm276, %v597, %v601
      %v603 = vshrl.u32 %v253, 16
      %v605 = vrot.slane %v603, 4
      %v606 = vor.u32 %v605, %v601
      %v607 = vrot.slane %v606, 4
      %v609 = vshll.u32 %v271, 16
      %v611 = vrot.slane %v609, 5
      %v612 = vsel %vm276, %v607, %v611
      %v614 = vshrl.u32 %v254, 16
      %v616 = vrot.slane %v614, 4
      %v617 = vshll.u32 %v254, 16
      %v619 = vrot.slane %v617, 5
      %v620 = vor.u32 %v616, %v619
      %v621 = vrot.slane %v620, 4
      %v623 = vshll.u32 %v255, 16
      %v625 = vrot.slane %v623, 5
      %v626 = vsel %vm276, %v621, %v625
      %v627 = vshrl.u32 %v255, 16
      %v629 = vrot.slane %v627, 4
      %v630 = vor.u32 %v629, %v625
      %v631 = vrot.slane %v630, 4
      %v633 = vshll.u32 %v272, 16
      %v635 = vrot.slane %v633, 5
      %v636 = vsel %vm276, %v631, %v635
      %v638 = vshrl.u32 %v256, 16
      %v640 = vrot.slane %v638, 4
      %v641 = vshll.u32 %v256, 16
      %v643 = vrot.slane %v641, 5
      %v644 = vor.u32 %v640, %v643
      %v645 = vrot.slane %v644, 4
      %v647 = vshll.u32 %v257, 16
      %v649 = vrot.slane %v647, 5
      %v650 = vsel %vm276, %v645, %v649
      %v651 = vshrl.u32 %v257, 16
      %v653 = vrot.slane %v651, 4
      %v654 = vor.u32 %v653, %v649
      %v655 = vrot.slane %v654, 4
      %v657 = vshll.u32 %v273, 16
      %v659 = vrot.slane %v657, 5
      %v660 = vsel %vm276, %v655, %v659
      %v661 = vld [vmem:[%s219] sm:$0xe]
      %v662 = vld [vmem:[%s219 + $0xc] sm:$0xe]
      %v663 = vld [vmem:[%s219 + $0x18] sm:$0xe]
      %v664 = vld [vmem:[%s219 + $0x24] sm:$0xe]
      %v665 = vld [vmem:[%s219 + $0x30] sm:$0xe]
      %v666 = vld [vmem:[%s219 + $0x3c] sm:$0xe]
      %v667 = vld [vmem:[%s219 + $0x48] sm:$0xe]
      %v668 = vld [vmem:[%s219 + $0x54] sm:$0xe]
      %v669 = vld [vmem:[%s219 + $0x60] sm:$0xe]
      %v670 = vld [vmem:[%s219 + $0x6c] sm:$0xe]
      %v671 = vld [vmem:[%s219 + $0x78] sm:$0xe]
      %v672 = vld [vmem:[%s219 + $0x84] sm:$0xe]
      %v673 = vld [vmem:[%s219 + $0x90] sm:$0xe]
      %v674 = vld [vmem:[%s219 + $0x9c] sm:$0xe]
      %v675 = vld [vmem:[%s219 + $0xa8] sm:$0xe]
      %v676 = vld [vmem:[%s219 + $0xb4] sm:$0xe]
      %vm725 = vcmask 1042432
      %vm726 = vcmask 1046532
      %vm727 = vmor %vm725, %vm726
      %v728 = vrot.slane %v661, 5
      %v729 = vrot.slane %v728, 4
      %v730 = vrot.slane %v227, 5
      %v731 = vsel %vm727, %v729, %v730
      %v732 = vrot.slane %v730, 4
      %v733 = vrot.slane %v258, 5
      %v734 = vsel %vm727, %v732, %v733
      %v735 = vrot.slane %v662, 5
      %v736 = vrot.slane %v735, 4
      %v737 = vrot.slane %v229, 5
      %v738 = vsel %vm727, %v736, %v737
      %v739 = vrot.slane %v737, 4
      %v740 = vrot.slane %v259, 5
      %v741 = vsel %vm727, %v739, %v740
      %v742 = vrot.slane %v663, 5
      %v743 = vrot.slane %v742, 4
      %v744 = vrot.slane %v231, 5
      %v745 = vsel %vm727, %v743, %v744
      %v746 = vrot.slane %v744, 4
      %v747 = vrot.slane %v260, 5
      %v748 = vsel %vm727, %v746, %v747
      %v749 = vrot.slane %v664, 5
      %v750 = vrot.slane %v749, 4
      %v751 = vrot.slane %v233, 5
      %v752 = vsel %vm727, %v750, %v751
      %v753 = vrot.slane %v751, 4
      %v754 = vrot.slane %v261, 5
      %v755 = vsel %vm727, %v753, %v754
      %v756 = vrot.slane %v665, 5
      %v757 = vrot.slane %v756, 4
      %v758 = vrot.slane %v235, 5
      %v759 = vsel %vm727, %v757, %v758
      %v760 = vrot.slane %v758, 4
      %v761 = vrot.slane %v262, 5
      %v762 = vsel %vm727, %v760, %v761
      %v763 = vrot.slane %v666, 5
      %v764 = vrot.slane %v763, 4
      %v765 = vrot.slane %v237, 5
      %v766 = vsel %vm727, %v764, %v765
      %v767 = vrot.slane %v765, 4
      %v768 = vrot.slane %v263, 5
      %v769 = vsel %vm727, %v767, %v768
      %v770 = vrot.slane %v667, 5
      %v771 = vrot.slane %v770, 4
      %v772 = vrot.slane %v239, 5
      %v773 = vsel %vm727, %v771, %v772
      %v774 = vrot.slane %v772, 4
      %v775 = vrot.slane %v264, 5
      %v776 = vsel %vm727, %v774, %v775
      %v777 = vrot.slane %v668, 5
      %v778 = vrot.slane %v777, 4
      %v779 = vrot.slane %v241, 5
      %v780 = vsel %vm727, %v778, %v779
      %v781 = vrot.slane %v779, 4
      %v782 = vrot.slane %v265, 5
      %v783 = vsel %vm727, %v781, %v782
      %v784 = vrot.slane %v669, 5
      %v785 = vrot.slane %v784, 4
      %v786 = vrot.slane %v243, 5
      %v787 = vsel %vm727, %v785, %v786
      %v788 = vrot.slane %v786, 4
      %v789 = vrot.slane %v266, 5
      %v790 = vsel %vm727, %v788, %v789
      %v791 = vrot.slane %v670, 5
      %v792 = vrot.slane %v791, 4
      %v793 = vrot.slane %v245, 5
      %v794 = vsel %vm727, %v792, %v793
      %v795 = vrot.slane %v793, 4
      %v796 = vrot.slane %v267, 5
      %v797 = vsel %vm727, %v795, %v796
      %v798 = vrot.slane %v671, 5
      %v799 = vrot.slane %v798, 4
      %v800 = vrot.slane %v247, 5
      %v801 = vsel %vm727, %v799, %v800
      %v802 = vrot.slane %v800, 4
      %v803 = vrot.slane %v268, 5
      %v804 = vsel %vm727, %v802, %v803
      %v805 = vrot.slane %v672, 5
      %v806 = vrot.slane %v805, 4
      %v807 = vrot.slane %v249, 5
      %v808 = vsel %vm727, %v806, %v807
      %v809 = vrot.slane %v807, 4
      %v810 = vrot.slane %v269, 5
      %v811 = vsel %vm727, %v809, %v810
      %v812 = vrot.slane %v673, 5
      %v813 = vrot.slane %v812, 4
      %v814 = vrot.slane %v251, 5
      %v815 = vsel %vm727, %v813, %v814
      %v816 = vrot.slane %v814, 4
      %v817 = vrot.slane %v270, 5
      %v818 = vsel %vm727, %v816, %v817
      %v819 = vrot.slane %v674, 5
      %v820 = vrot.slane %v819, 4
      %v821 = vrot.slane %v253, 5
      %v822 = vsel %vm727, %v820, %v821
      %v823 = vrot.slane %v821, 4
      %v824 = vrot.slane %v271, 5
      %v825 = vsel %vm727, %v823, %v824
      %v826 = vrot.slane %v675, 5
      %v827 = vrot.slane %v826, 4
      %v828 = vrot.slane %v255, 5
      %v829 = vsel %vm727, %v827, %v828
      %v830 = vrot.slane %v828, 4
      %v831 = vrot.slane %v272, 5
      %v832 = vsel %vm727, %v830, %v831
      %v833 = vrot.slane %v676, 5
      %v834 = vrot.slane %v833, 4
      %v835 = vrot.slane %v257, 5
      %v836 = vsel %vm727, %v834, %v835
      %v837 = vrot.slane %v835, 4
      %v838 = vrot.slane %v273, 5
      %v839 = vsel %vm727, %v837, %v838
      %v856 = vunpack.c.l.b16 %v226
      %v857 = vunpack.c.l.b16 %v227
      %v858 = vunpack.c.l.b16 %v228
      %v859 = vunpack.c.l.b16 %v229
      %v860 = vunpack.c.l.b16 %v230
      %v861 = vunpack.c.l.b16 %v231
      %v862 = vunpack.c.l.b16 %v232
      %v863 = vunpack.c.l.b16 %v233
      %v864 = vunpack.c.l.b16 %v234
      %v865 = vunpack.c.l.b16 %v235
      %v866 = vunpack.c.l.b16 %v236
      %v867 = vunpack.c.l.b16 %v237
      %v868 = vunpack.c.l.b16 %v238
      %v869 = vunpack.c.l.b16 %v239
      %v870 = vunpack.c.l.b16 %v240
      %v871 = vunpack.c.l.b16 %v241
      %v872 = vunpack.c.l.b16 %v242
      %v873 = vunpack.c.l.b16 %v243
      %v874 = vunpack.c.l.b16 %v244
      %v875 = vunpack.c.l.b16 %v245
      %v876 = vunpack.c.l.b16 %v246
      %v877 = vunpack.c.l.b16 %v247
      %v878 = vunpack.c.l.b16 %v248
      %v879 = vunpack.c.l.b16 %v249
      %v880 = vunpack.c.l.b16 %v250
      %v881 = vunpack.c.l.b16 %v251
      %v882 = vunpack.c.l.b16 %v252
      %v883 = vunpack.c.l.b16 %v253
      %v884 = vunpack.c.l.b16 %v254
      %v885 = vunpack.c.l.b16 %v255
      %v886 = vunpack.c.l.b16 %v256
      %v887 = vunpack.c.l.b16 %v257
      %v888 = vpack.c.b16 %v857, %v856
      %v889 = vpack.c.b16 %v859, %v858
      %v890 = vpack.c.b16 %v861, %v860
      %v891 = vpack.c.b16 %v863, %v862
      %v892 = vpack.c.b16 %v865, %v864
      %v893 = vpack.c.b16 %v867, %v866
      %v894 = vpack.c.b16 %v869, %v868
      %v895 = vpack.c.b16 %v871, %v870
      %v896 = vpack.c.b16 %v873, %v872
      %v897 = vpack.c.b16 %v875, %v874
      %v898 = vpack.c.b16 %v877, %v876
      %v899 = vpack.c.b16 %v879, %v878
      %v900 = vpack.c.b16 %v881, %v880
      %v901 = vpack.c.b16 %v883, %v882
      %v902 = vpack.c.b16 %v885, %v884
      %v903 = vpack.c.b16 %v887, %v886
      %v920 = vunpack.c.l.b16 %v290
      %v921 = vunpack.c.l.b16 %v300
      %v922 = vunpack.c.l.b16 %v314
      %v923 = vunpack.c.l.b16 %v324
      %v924 = vunpack.c.l.b16 %v338
      %v925 = vunpack.c.l.b16 %v348
      %v926 = vunpack.c.l.b16 %v362
      %v927 = vunpack.c.l.b16 %v372
      %v928 = vunpack.c.l.b16 %v386
      %v929 = vunpack.c.l.b16 %v396
      %v930 = vunpack.c.l.b16 %v410
      %v931 = vunpack.c.l.b16 %v420
      %v932 = vunpack.c.l.b16 %v434
      %v933 = vunpack.c.l.b16 %v444
      %v934 = vunpack.c.l.b16 %v458
      %v935 = vunpack.c.l.b16 %v468
      %v936 = vunpack.c.l.b16 %v482
      %v937 = vunpack.c.l.b16 %v492
      %v938 = vunpack.c.l.b16 %v506
      %v939 = vunpack.c.l.b16 %v516
      %v940 = vunpack.c.l.b16 %v530
      %v941 = vunpack.c.l.b16 %v540
      %v942 = vunpack.c.l.b16 %v554
      %v943 = vunpack.c.l.b16 %v564
      %v944 = vunpack.c.l.b16 %v578
      %v945 = vunpack.c.l.b16 %v588
      %v946 = vunpack.c.l.b16 %v602
      %v947 = vunpack.c.l.b16 %v612
      %v948 = vunpack.c.l.b16 %v626
      %v949 = vunpack.c.l.b16 %v636
      %v950 = vunpack.c.l.b16 %v650
      %v951 = vunpack.c.l.b16 %v660
      %v952 = vpack.c.b16 %v921, %v920
      %v953 = vpack.c.b16 %v923, %v922
      %v954 = vpack.c.b16 %v925, %v924
      %v955 = vpack.c.b16 %v927, %v926
      %v956 = vpack.c.b16 %v929, %v928
      %v957 = vpack.c.b16 %v931, %v930
      %v958 = vpack.c.b16 %v933, %v932
      %v959 = vpack.c.b16 %v935, %v934
      %v960 = vpack.c.b16 %v937, %v936
      %v961 = vpack.c.b16 %v939, %v938
      %v962 = vpack.c.b16 %v941, %v940
      %v963 = vpack.c.b16 %v943, %v942
      %v964 = vpack.c.b16 %v945, %v944
      %v965 = vpack.c.b16 %v947, %v946
      %v966 = vpack.c.b16 %v949, %v948
      %v967 = vpack.c.b16 %v951, %v950
      %v984 = vunpack.c.l.b16 %v731
      %v985 = vunpack.c.l.b16 %v734
      %v986 = vunpack.c.l.b16 %v738
      %v987 = vunpack.c.l.b16 %v741
      %v988 = vunpack.c.l.b16 %v745
      %v989 = vunpack.c.l.b16 %v748
      %v990 = vunpack.c.l.b16 %v752
      %v991 = vunpack.c.l.b16 %v755
      %v992 = vunpack.c.l.b16 %v759
      %v993 = vunpack.c.l.b16 %v762
      %v994 = vunpack.c.l.b16 %v766
      %v995 = vunpack.c.l.b16 %v769
      %v996 = vunpack.c.l.b16 %v773
      %v997 = vunpack.c.l.b16 %v776
      %v998 = vunpack.c.l.b16 %v780
      %v999 = vunpack.c.l.b16 %v783
      %v1000 = vunpack.c.l.b16 %v787
      %v1001 = vunpack.c.l.b16 %v790
      %v1002 = vunpack.c.l.b16 %v794
      %v1003 = vunpack.c.l.b16 %v797
      %v1004 = vunpack.c.l.b16 %v801
      %v1005 = vunpack.c.l.b16 %v804
      %v1006 = vunpack.c.l.b16 %v808
      %v1007 = vunpack.c.l.b16 %v811
      %v1008 = vunpack.c.l.b16 %v815
      %v1009 = vunpack.c.l.b16 %v818
      %v1010 = vunpack.c.l.b16 %v822
      %v1011 = vunpack.c.l.b16 %v825
      %v1012 = vunpack.c.l.b16 %v829
      %v1013 = vunpack.c.l.b16 %v832
      %v1014 = vunpack.c.l.b16 %v836
      %v1015 = vunpack.c.l.b16 %v839
      %v1016 = vpack.c.b16 %v985, %v984
      %v1017 = vpack.c.b16 %v987, %v986
      %v1018 = vpack.c.b16 %v989, %v988
      %v1019 = vpack.c.b16 %v991, %v990
      %v1020 = vpack.c.b16 %v993, %v992
      %v1021 = vpack.c.b16 %v995, %v994
      %v1022 = vpack.c.b16 %v997, %v996
      %v1023 = vpack.c.b16 %v999, %v998
      %v1024 = vpack.c.b16 %v1001, %v1000
      %v1025 = vpack.c.b16 %v1003, %v1002
      %v1026 = vpack.c.b16 %v1005, %v1004
      %v1027 = vpack.c.b16 %v1007, %v1006
      %v1028 = vpack.c.b16 %v1009, %v1008
      %v1029 = vpack.c.b16 %v1011, %v1010
      %v1030 = vpack.c.b16 %v1013, %v1012
      %v1031 = vpack.c.b16 %v1015, %v1014
      %v1048 = vld [vmem:[%s1] sm:$0xf]
      %v1049 = vld [vmem:[%s1 + $0x4] sm:$0xf]
      %v1050 = vld [vmem:[%s1 + $0x8] sm:$0xf]
      %v1051 = vld [vmem:[%s1 + $0xc] sm:$0xf]
      %v1052 = vld [vmem:[%s1 + $0x10] sm:$0xf]
      %v1053 = vld [vmem:[%s1 + $0x14] sm:$0xf]
      %v1054 = vld [vmem:[%s1 + $0x18] sm:$0xf]
      %v1055 = vld [vmem:[%s1 + $0x1c] sm:$0xf]
      %v1056 = vld [vmem:[%s1 + $0x20] sm:$0xf]
      %v1057 = vld [vmem:[%s1 + $0x24] sm:$0xf]
      %v1058 = vld [vmem:[%s1 + $0x28] sm:$0xf]
      %v1059 = vld [vmem:[%s1 + $0x2c] sm:$0xf]
      %v1060 = vld [vmem:[%s1 + $0x30] sm:$0xf]
      %v1061 = vld [vmem:[%s1 + $0x34] sm:$0xf]
      %v1062 = vld [vmem:[%s1 + $0x38] sm:$0xf]
      %v1063 = vld [vmem:[%s1 + $0x3c] sm:$0xf]
      %v1064 = vld [vmem:[%s1 + $0x40] sm:$0xf]
      %v1065 = vld [vmem:[%s1 + $0x44] sm:$0xf]
      %v1066 = vld [vmem:[%s1 + $0x48] sm:$0xf]
      %v1067 = vld [vmem:[%s1 + $0x4c] sm:$0xf]
      %v1068 = vld [vmem:[%s1 + $0x50] sm:$0xf]
      %v1069 = vld [vmem:[%s1 + $0x54] sm:$0xf]
      %v1070 = vld [vmem:[%s1 + $0x58] sm:$0xf]
      %v1071 = vld [vmem:[%s1 + $0x5c] sm:$0xf]
      %v1072 = vld [vmem:[%s1 + $0x60] sm:$0xf]
      %v1073 = vld [vmem:[%s1 + $0x64] sm:$0xf]
      %v1074 = vld [vmem:[%s1 + $0x68] sm:$0xf]
      %v1075 = vld [vmem:[%s1 + $0x6c] sm:$0xf]
      %v1076 = vld [vmem:[%s1 + $0x70] sm:$0xf]
      %v1077 = vld [vmem:[%s1 + $0x74] sm:$0xf]
      %v1078 = vld [vmem:[%s1 + $0x78] sm:$0xf]
      %v1079 = vld [vmem:[%s1 + $0x7c] sm:$0xf]
      %v1080 = vld [vmem:[%s1 + $0x80] sm:$0xf]
      %v1081 = vld [vmem:[%s1 + $0x84] sm:$0xf]
      %v1082 = vld [vmem:[%s1 + $0x88] sm:$0xf]
      %v1083 = vld [vmem:[%s1 + $0x8c] sm:$0xf]
      %v1084 = vld [vmem:[%s1 + $0x90] sm:$0xf]
      %v1085 = vld [vmem:[%s1 + $0x94] sm:$0xf]
      %v1086 = vld [vmem:[%s1 + $0x98] sm:$0xf]
      %v1087 = vld [vmem:[%s1 + $0x9c] sm:$0xf]
      %v1088 = vld [vmem:[%s1 + $0xa0] sm:$0xf]
      %v1089 = vld [vmem:[%s1 + $0xa4] sm:$0xf]
      %v1090 = vld [vmem:[%s1 + $0xa8] sm:$0xf]
      %v1091 = vld [vmem:[%s1 + $0xac] sm:$0xf]
      %v1092 = vld [vmem:[%s1 + $0xb0] sm:$0xf]
      %v1093 = vld [vmem:[%s1 + $0xb4] sm:$0xf]
      %v1094 = vld [vmem:[%s1 + $0xb8] sm:$0xf]
      %v1095 = vld [vmem:[%s1 + $0xbc] sm:$0xf]
      %s1096 = scalar_lea.vmem %s219, 12
      %v1097 = vld [vmem:[%s1096] sm:$0xf]
      %v1098 = vld [vmem:[%s1096 + $0x4] sm:$0xf]
      %v1099 = vld [vmem:[%s1096 + $0xc] sm:$0xf]
      %v1100 = vld [vmem:[%s1096 + $0x10] sm:$0xf]
      %v1101 = vld [vmem:[%s1096 + $0x18] sm:$0xf]
      %v1102 = vld [vmem:[%s1096 + $0x1c] sm:$0xf]
      %v1103 = vld [vmem:[%s1096 + $0x24] sm:$0xf]
      %v1104 = vld [vmem:[%s1096 + $0x28] sm:$0xf]
      %v1105 = vld [vmem:[%s1096 + $0x30] sm:$0xf]
      %v1106 = vld [vmem:[%s1096 + $0x34] sm:$0xf]
      %v1107 = vld [vmem:[%s1096 + $0x3c] sm:$0xf]
      %v1108 = vld [vmem:[%s1096 + $0x40] sm:$0xf]
      %v1109 = vld [vmem:[%s1096 + $0x48] sm:$0xf]
      %v1110 = vld [vmem:[%s1096 + $0x4c] sm:$0xf]
      %v1111 = vld [vmem:[%s1096 + $0x54] sm:$0xf]
      %v1112 = vld [vmem:[%s1096 + $0x58] sm:$0xf]
      %v1113 = vld [vmem:[%s1096 + $0x60] sm:$0xf]
      %v1114 = vld [vmem:[%s1096 + $0x64] sm:$0xf]
      %v1115 = vld [vmem:[%s1096 + $0x6c] sm:$0xf]
      %v1116 = vld [vmem:[%s1096 + $0x70] sm:$0xf]
      %v1117 = vld [vmem:[%s1096 + $0x78] sm:$0xf]
      %v1118 = vld [vmem:[%s1096 + $0x7c] sm:$0xf]
      %v1119 = vld [vmem:[%s1096 + $0x84] sm:$0xf]
      %v1120 = vld [vmem:[%s1096 + $0x88] sm:$0xf]
      %v1121 = vld [vmem:[%s1096 + $0x90] sm:$0xf]
      %v1122 = vld [vmem:[%s1096 + $0x94] sm:$0xf]
      %v1123 = vld [vmem:[%s1096 + $0x9c] sm:$0xf]
      %v1124 = vld [vmem:[%s1096 + $0xa0] sm:$0xf]
      %v1125 = vld [vmem:[%s1096 + $0xa8] sm:$0xf]
      %v1126 = vld [vmem:[%s1096 + $0xac] sm:$0xf]
      %v1127 = vld [vmem:[%s1096 + $0xb4] sm:$0xf]
      %v1128 = vld [vmem:[%s1096 + $0xb8] sm:$0xf]
      %v1129 = vld [vmem:[%s1096 + $0x8] sm:$0x1]
      %v1130 = vld [vmem:[%s1096 + $0x14] sm:$0x1]
      %v1131 = vld [vmem:[%s1096 + $0x20] sm:$0x1]
      %v1132 = vld [vmem:[%s1096 + $0x2c] sm:$0x1]
      %v1133 = vld [vmem:[%s1096 + $0x38] sm:$0x1]
      %v1134 = vld [vmem:[%s1096 + $0x44] sm:$0x1]
      %v1135 = vld [vmem:[%s1096 + $0x50] sm:$0x1]
      %v1136 = vld [vmem:[%s1096 + $0x5c] sm:$0x1]
      %v1137 = vld [vmem:[%s1096 + $0x68] sm:$0x1]
      %v1138 = vld [vmem:[%s1096 + $0x74] sm:$0x1]
      %v1139 = vld [vmem:[%s1096 + $0x80] sm:$0x1]
      %v1140 = vld [vmem:[%s1096 + $0x8c] sm:$0x1]
      %v1141 = vld [vmem:[%s1096 + $0x98] sm:$0x1]
      %v1142 = vld [vmem:[%s1096 + $0xa4] sm:$0x1]
      %v1143 = vld [vmem:[%s1096 + $0xb0] sm:$0x1]
      %v1144 = vld [vmem:[%s1096 + $0xbc] sm:$0x1]
      %v1146 = vshrl.u32 %v1097, 16
      %v1148 = vrot.slane %v1146, 4
      %v1149 = vshll.u32 %v1097, 16
      %v1151 = vrot.slane %v1149, 5
      %v1152 = vor.u32 %v1148, %v1151
      %v1153 = vrot.slane %v1152, 4
      %v1155 = vshll.u32 %v1098, 16
      %v1157 = vrot.slane %v1155, 5
      %v1158 = vsel %vm276, %v1153, %v1157
      %v1159 = vshrl.u32 %v1098, 16
      %v1161 = vrot.slane %v1159, 4
      %v1162 = vor.u32 %v1161, %v1157
      %v1163 = vrot.slane %v1162, 4
      %v1165 = vshll.u32 %v1129, 16
      %v1167 = vrot.slane %v1165, 5
      %v1168 = vsel %vm276, %v1163, %v1167
      %v1170 = vshrl.u32 %v1099, 16
      %v1172 = vrot.slane %v1170, 4
      %v1173 = vshll.u32 %v1099, 16
      %v1175 = vrot.slane %v1173, 5
      %v1176 = vor.u32 %v1172, %v1175
      %v1177 = vrot.slane %v1176, 4
      %v1179 = vshll.u32 %v1100, 16
      %v1181 = vrot.slane %v1179, 5
      %v1182 = vsel %vm276, %v1177, %v1181
      %v1183 = vshrl.u32 %v1100, 16
      %v1185 = vrot.slane %v1183, 4
      %v1186 = vor.u32 %v1185, %v1181
      %v1187 = vrot.slane %v1186, 4
      %v1189 = vshll.u32 %v1130, 16
      %v1191 = vrot.slane %v1189, 5
      %v1192 = vsel %vm276, %v1187, %v1191
      %v1194 = vshrl.u32 %v1101, 16
      %v1196 = vrot.slane %v1194, 4
      %v1197 = vshll.u32 %v1101, 16
      %v1199 = vrot.slane %v1197, 5
      %v1200 = vor.u32 %v1196, %v1199
      %v1201 = vrot.slane %v1200, 4
      %v1203 = vshll.u32 %v1102, 16
      %v1205 = vrot.slane %v1203, 5
      %v1206 = vsel %vm276, %v1201, %v1205
      %v1207 = vshrl.u32 %v1102, 16
      %v1209 = vrot.slane %v1207, 4
      %v1210 = vor.u32 %v1209, %v1205
      %v1211 = vrot.slane %v1210, 4
      %v1213 = vshll.u32 %v1131, 16
      %v1215 = vrot.slane %v1213, 5
      %v1216 = vsel %vm276, %v1211, %v1215
      %v1218 = vshrl.u32 %v1103, 16
      %v1220 = vrot.slane %v1218, 4
      %v1221 = vshll.u32 %v1103, 16
      %v1223 = vrot.slane %v1221, 5
      %v1224 = vor.u32 %v1220, %v1223
      %v1225 = vrot.slane %v1224, 4
      %v1227 = vshll.u32 %v1104, 16
      %v1229 = vrot.slane %v1227, 5
      %v1230 = vsel %vm276, %v1225, %v1229
      %v1231 = vshrl.u32 %v1104, 16
      %v1233 = vrot.slane %v1231, 4
      %v1234 = vor.u32 %v1233, %v1229
      %v1235 = vrot.slane %v1234, 4
      %v1237 = vshll.u32 %v1132, 16
      %v1239 = vrot.slane %v1237, 5
      %v1240 = vsel %vm276, %v1235, %v1239
      %v1242 = vshrl.u32 %v1105, 16
      %v1244 = vrot.slane %v1242, 4
      %v1245 = vshll.u32 %v1105, 16
      %v1247 = vrot.slane %v1245, 5
      %v1248 = vor.u32 %v1244, %v1247
      %v1249 = vrot.slane %v1248, 4
      %v1251 = vshll.u32 %v1106, 16
      %v1253 = vrot.slane %v1251, 5
      %v1254 = vsel %vm276, %v1249, %v1253
      %v1255 = vshrl.u32 %v1106, 16
      %v1257 = vrot.slane %v1255, 4
      %v1258 = vor.u32 %v1257, %v1253
      %v1259 = vrot.slane %v1258, 4
      %v1261 = vshll.u32 %v1133, 16
      %v1263 = vrot.slane %v1261, 5
      %v1264 = vsel %vm276, %v1259, %v1263
      %v1266 = vshrl.u32 %v1107, 16
      %v1268 = vrot.slane %v1266, 4
      %v1269 = vshll.u32 %v1107, 16
      %v1271 = vrot.slane %v1269, 5
      %v1272 = vor.u32 %v1268, %v1271
      %v1273 = vrot.slane %v1272, 4
      %v1275 = vshll.u32 %v1108, 16
      %v1277 = vrot.slane %v1275, 5
      %v1278 = vsel %vm276, %v1273, %v1277
      %v1279 = vshrl.u32 %v1108, 16
      %v1281 = vrot.slane %v1279, 4
      %v1282 = vor.u32 %v1281, %v1277
      %v1283 = vrot.slane %v1282, 4
      %v1285 = vshll.u32 %v1134, 16
      %v1287 = vrot.slane %v1285, 5
      %v1288 = vsel %vm276, %v1283, %v1287
      %v1290 = vshrl.u32 %v1109, 16
      %v1292 = vrot.slane %v1290, 4
      %v1293 = vshll.u32 %v1109, 16
      %v1295 = vrot.slane %v1293, 5
      %v1296 = vor.u32 %v1292, %v1295
      %v1297 = vrot.slane %v1296, 4
      %v1299 = vshll.u32 %v1110, 16
      %v1301 = vrot.slane %v1299, 5
      %v1302 = vsel %vm276, %v1297, %v1301
      %v1303 = vshrl.u32 %v1110, 16
      %v1305 = vrot.slane %v1303, 4
      %v1306 = vor.u32 %v1305, %v1301
      %v1307 = vrot.slane %v1306, 4
      %v1309 = vshll.u32 %v1135, 16
      %v1311 = vrot.slane %v1309, 5
      %v1312 = vsel %vm276, %v1307, %v1311
      %v1314 = vshrl.u32 %v1111, 16
      %v1316 = vrot.slane %v1314, 4
      %v1317 = vshll.u32 %v1111, 16
      %v1319 = vrot.slane %v1317, 5
      %v1320 = vor.u32 %v1316, %v1319
      %v1321 = vrot.slane %v1320, 4
      %v1323 = vshll.u32 %v1112, 16
      %v1325 = vrot.slane %v1323, 5
      %v1326 = vsel %vm276, %v1321, %v1325
      %v1327 = vshrl.u32 %v1112, 16
      %v1329 = vrot.slane %v1327, 4
      %v1330 = vor.u32 %v1329, %v1325
      %v1331 = vrot.slane %v1330, 4
      %v1333 = vshll.u32 %v1136, 16
      %v1335 = vrot.slane %v1333, 5
      %v1336 = vsel %vm276, %v1331, %v1335
      %v1338 = vshrl.u32 %v1113, 16
      %v1340 = vrot.slane %v1338, 4
      %v1341 = vshll.u32 %v1113, 16
      %v1343 = vrot.slane %v1341, 5
      %v1344 = vor.u32 %v1340, %v1343
      %v1345 = vrot.slane %v1344, 4
      %v1347 = vshll.u32 %v1114, 16
      %v1349 = vrot.slane %v1347, 5
      %v1350 = vsel %vm276, %v1345, %v1349
      %v1351 = vshrl.u32 %v1114, 16
      %v1353 = vrot.slane %v1351, 4
      %v1354 = vor.u32 %v1353, %v1349
      %v1355 = vrot.slane %v1354, 4
      %v1357 = vshll.u32 %v1137, 16
      %v1359 = vrot.slane %v1357, 5
      %v1360 = vsel %vm276, %v1355, %v1359
      %v1362 = vshrl.u32 %v1115, 16
      %v1364 = vrot.slane %v1362, 4
      %v1365 = vshll.u32 %v1115, 16
      %v1367 = vrot.slane %v1365, 5
      %v1368 = vor.u32 %v1364, %v1367
      %v1369 = vrot.slane %v1368, 4
      %v1371 = vshll.u32 %v1116, 16
      %v1373 = vrot.slane %v1371, 5
      %v1374 = vsel %vm276, %v1369, %v1373
      %v1375 = vshrl.u32 %v1116, 16
      %v1377 = vrot.slane %v1375, 4
      %v1378 = vor.u32 %v1377, %v1373
      %v1379 = vrot.slane %v1378, 4
      %v1381 = vshll.u32 %v1138, 16
      %v1383 = vrot.slane %v1381, 5
      %v1384 = vsel %vm276, %v1379, %v1383
      %v1386 = vshrl.u32 %v1117, 16
      %v1388 = vrot.slane %v1386, 4
      %v1389 = vshll.u32 %v1117, 16
      %v1391 = vrot.slane %v1389, 5
      %v1392 = vor.u32 %v1388, %v1391
      %v1393 = vrot.slane %v1392, 4
      %v1395 = vshll.u32 %v1118, 16
      %v1397 = vrot.slane %v1395, 5
      %v1398 = vsel %vm276, %v1393, %v1397
      %v1399 = vshrl.u32 %v1118, 16
      %v1401 = vrot.slane %v1399, 4
      %v1402 = vor.u32 %v1401, %v1397
      %v1403 = vrot.slane %v1402, 4
      %v1405 = vshll.u32 %v1139, 16
      %v1407 = vrot.slane %v1405, 5
      %v1408 = vsel %vm276, %v1403, %v1407
      %v1410 = vshrl.u32 %v1119, 16
      %v1412 = vrot.slane %v1410, 4
      %v1413 = vshll.u32 %v1119, 16
      %v1415 = vrot.slane %v1413, 5
      %v1416 = vor.u32 %v1412, %v1415
      %v1417 = vrot.slane %v1416, 4
      %v1419 = vshll.u32 %v1120, 16
      %v1421 = vrot.slane %v1419, 5
      %v1422 = vsel %vm276, %v1417, %v1421
      %v1423 = vshrl.u32 %v1120, 16
      %v1425 = vrot.slane %v1423, 4
      %v1426 = vor.u32 %v1425, %v1421
      %v1427 = vrot.slane %v1426, 4
      %v1429 = vshll.u32 %v1140, 16
      %v1431 = vrot.slane %v1429, 5
      %v1432 = vsel %vm276, %v1427, %v1431
      %v1434 = vshrl.u32 %v1121, 16
      %v1436 = vrot.slane %v1434, 4
      %v1437 = vshll.u32 %v1121, 16
      %v1439 = vrot.slane %v1437, 5
      %v1440 = vor.u32 %v1436, %v1439
      %v1441 = vrot.slane %v1440, 4
      %v1443 = vshll.u32 %v1122, 16
      %v1445 = vrot.slane %v1443, 5
      %v1446 = vsel %vm276, %v1441, %v1445
      %v1447 = vshrl.u32 %v1122, 16
      %v1449 = vrot.slane %v1447, 4
      %v1450 = vor.u32 %v1449, %v1445
      %v1451 = vrot.slane %v1450, 4
      %v1453 = vshll.u32 %v1141, 16
      %v1455 = vrot.slane %v1453, 5
      %v1456 = vsel %vm276, %v1451, %v1455
      %v1458 = vshrl.u32 %v1123, 16
      %v1460 = vrot.slane %v1458, 4
      %v1461 = vshll.u32 %v1123, 16
      %v1463 = vrot.slane %v1461, 5
      %v1464 = vor.u32 %v1460, %v1463
      %v1465 = vrot.slane %v1464, 4
      %v1467 = vshll.u32 %v1124, 16
      %v1469 = vrot.slane %v1467, 5
      %v1470 = vsel %vm276, %v1465, %v1469
      %v1471 = vshrl.u32 %v1124, 16
      %v1473 = vrot.slane %v1471, 4
      %v1474 = vor.u32 %v1473, %v1469
      %v1475 = vrot.slane %v1474, 4
      %v1477 = vshll.u32 %v1142, 16
      %v1479 = vrot.slane %v1477, 5
      %v1480 = vsel %vm276, %v1475, %v1479
      %v1482 = vshrl.u32 %v1125, 16
      %v1484 = vrot.slane %v1482, 4
      %v1485 = vshll.u32 %v1125, 16
      %v1487 = vrot.slane %v1485, 5
      %v1488 = vor.u32 %v1484, %v1487
      %v1489 = vrot.slane %v1488, 4
      %v1491 = vshll.u32 %v1126, 16
      %v1493 = vrot.slane %v1491, 5
      %v1494 = vsel %vm276, %v1489, %v1493
      %v1495 = vshrl.u32 %v1126, 16
      %v1497 = vrot.slane %v1495, 4
      %v1498 = vor.u32 %v1497, %v1493
      %v1499 = vrot.slane %v1498, 4
      %v1501 = vshll.u32 %v1143, 16
      %v1503 = vrot.slane %v1501, 5
      %v1504 = vsel %vm276, %v1499, %v1503
      %v1506 = vshrl.u32 %v1127, 16
      %v1508 = vrot.slane %v1506, 4
      %v1509 = vshll.u32 %v1127, 16
      %v1511 = vrot.slane %v1509, 5
      %v1512 = vor.u32 %v1508, %v1511
      %v1513 = vrot.slane %v1512, 4
      %v1515 = vshll.u32 %v1128, 16
      %v1517 = vrot.slane %v1515, 5
      %v1518 = vsel %vm276, %v1513, %v1517
      %v1519 = vshrl.u32 %v1128, 16
      %v1521 = vrot.slane %v1519, 4
      %v1522 = vor.u32 %v1521, %v1517
      %v1523 = vrot.slane %v1522, 4
      %v1525 = vshll.u32 %v1144, 16
      %v1527 = vrot.slane %v1525, 5
      %v1528 = vsel %vm276, %v1523, %v1527
      %v1529 = vld [vmem:[%s1096] sm:$0xe]
      %v1530 = vld [vmem:[%s1096 + $0xc] sm:$0xe]
      %v1531 = vld [vmem:[%s1096 + $0x18] sm:$0xe]
      %v1532 = vld [vmem:[%s1096 + $0x24] sm:$0xe]
      %v1533 = vld [vmem:[%s1096 + $0x30] sm:$0xe]
      %v1534 = vld [vmem:[%s1096 + $0x3c] sm:$0xe]
      %v1535 = vld [vmem:[%s1096 + $0x48] sm:$0xe]
      %v1536 = vld [vmem:[%s1096 + $0x54] sm:$0xe]
      %v1537 = vld [vmem:[%s1096 + $0x60] sm:$0xe]
      %v1538 = vld [vmem:[%s1096 + $0x6c] sm:$0xe]
      %v1539 = vld [vmem:[%s1096 + $0x78] sm:$0xe]
      %v1540 = vld [vmem:[%s1096 + $0x84] sm:$0xe]
      %v1541 = vld [vmem:[%s1096 + $0x90] sm:$0xe]
      %v1542 = vld [vmem:[%s1096 + $0x9c] sm:$0xe]
      %v1543 = vld [vmem:[%s1096 + $0xa8] sm:$0xe]
      %v1544 = vld [vmem:[%s1096 + $0xb4] sm:$0xe]
      %v1593 = vrot.slane %v1529, 5
      %v1594 = vrot.slane %v1593, 4
      %v1595 = vrot.slane %v1098, 5
      %v1596 = vsel %vm727, %v1594, %v1595
      %v1597 = vrot.slane %v1595, 4
      %v1598 = vrot.slane %v1129, 5
      %v1599 = vsel %vm727, %v1597, %v1598
      %v1600 = vrot.slane %v1530, 5
      %v1601 = vrot.slane %v1600, 4
      %v1602 = vrot.slane %v1100, 5
      %v1603 = vsel %vm727, %v1601, %v1602
      %v1604 = vrot.slane %v1602, 4
      %v1605 = vrot.slane %v1130, 5
      %v1606 = vsel %vm727, %v1604, %v1605
      %v1607 = vrot.slane %v1531, 5
      %v1608 = vrot.slane %v1607, 4
      %v1609 = vrot.slane %v1102, 5
      %v1610 = vsel %vm727, %v1608, %v1609
      %v1611 = vrot.slane %v1609, 4
      %v1612 = vrot.slane %v1131, 5
      %v1613 = vsel %vm727, %v1611, %v1612
      %v1614 = vrot.slane %v1532, 5
      %v1615 = vrot.slane %v1614, 4
      %v1616 = vrot.slane %v1104, 5
      %v1617 = vsel %vm727, %v1615, %v1616
      %v1618 = vrot.slane %v1616, 4
      %v1619 = vrot.slane %v1132, 5
      %v1620 = vsel %vm727, %v1618, %v1619
      %v1621 = vrot.slane %v1533, 5
      %v1622 = vrot.slane %v1621, 4
      %v1623 = vrot.slane %v1106, 5
      %v1624 = vsel %vm727, %v1622, %v1623
      %v1625 = vrot.slane %v1623, 4
      %v1626 = vrot.slane %v1133, 5
      %v1627 = vsel %vm727, %v1625, %v1626
      %v1628 = vrot.slane %v1534, 5
      %v1629 = vrot.slane %v1628, 4
      %v1630 = vrot.slane %v1108, 5
      %v1631 = vsel %vm727, %v1629, %v1630
      %v1632 = vrot.slane %v1630, 4
      %v1633 = vrot.slane %v1134, 5
      %v1634 = vsel %vm727, %v1632, %v1633
      %v1635 = vrot.slane %v1535, 5
      %v1636 = vrot.slane %v1635, 4
      %v1637 = vrot.slane %v1110, 5
      %v1638 = vsel %vm727, %v1636, %v1637
      %v1639 = vrot.slane %v1637, 4
      %v1640 = vrot.slane %v1135, 5
      %v1641 = vsel %vm727, %v1639, %v1640
      %v1642 = vrot.slane %v1536, 5
      %v1643 = vrot.slane %v1642, 4
      %v1644 = vrot.slane %v1112, 5
      %v1645 = vsel %vm727, %v1643, %v1644
      %v1646 = vrot.slane %v1644, 4
      %v1647 = vrot.slane %v1136, 5
      %v1648 = vsel %vm727, %v1646, %v1647
      %v1649 = vrot.slane %v1537, 5
      %v1650 = vrot.slane %v1649, 4
      %v1651 = vrot.slane %v1114, 5
      %v1652 = vsel %vm727, %v1650, %v1651
      %v1653 = vrot.slane %v1651, 4
      %v1654 = vrot.slane %v1137, 5
      %v1655 = vsel %vm727, %v1653, %v1654
      %v1656 = vrot.slane %v1538, 5
      %v1657 = vrot.slane %v1656, 4
      %v1658 = vrot.slane %v1116, 5
      %v1659 = vsel %vm727, %v1657, %v1658
      %v1660 = vrot.slane %v1658, 4
      %v1661 = vrot.slane %v1138, 5
      %v1662 = vsel %vm727, %v1660, %v1661
      %v1663 = vrot.slane %v1539, 5
      %v1664 = vrot.slane %v1663, 4
      %v1665 = vrot.slane %v1118, 5
      %v1666 = vsel %vm727, %v1664, %v1665
      %v1667 = vrot.slane %v1665, 4
      %v1668 = vrot.slane %v1139, 5
      %v1669 = vsel %vm727, %v1667, %v1668
      %v1670 = vrot.slane %v1540, 5
      %v1671 = vrot.slane %v1670, 4
      %v1672 = vrot.slane %v1120, 5
      %v1673 = vsel %vm727, %v1671, %v1672
      %v1674 = vrot.slane %v1672, 4
      %v1675 = vrot.slane %v1140, 5
      %v1676 = vsel %vm727, %v1674, %v1675
      %v1677 = vrot.slane %v1541, 5
      %v1678 = vrot.slane %v1677, 4
      %v1679 = vrot.slane %v1122, 5
      %v1680 = vsel %vm727, %v1678, %v1679
      %v1681 = vrot.slane %v1679, 4
      %v1682 = vrot.slane %v1141, 5
      %v1683 = vsel %vm727, %v1681, %v1682
      %v1684 = vrot.slane %v1542, 5
      %v1685 = vrot.slane %v1684, 4
      %v1686 = vrot.slane %v1124, 5
      %v1687 = vsel %vm727, %v1685, %v1686
      %v1688 = vrot.slane %v1686, 4
      %v1689 = vrot.slane %v1142, 5
      %v1690 = vsel %vm727, %v1688, %v1689
      %v1691 = vrot.slane %v1543, 5
      %v1692 = vrot.slane %v1691, 4
      %v1693 = vrot.slane %v1126, 5
      %v1694 = vsel %vm727, %v1692, %v1693
      %v1695 = vrot.slane %v1693, 4
      %v1696 = vrot.slane %v1143, 5
      %v1697 = vsel %vm727, %v1695, %v1696
      %v1698 = vrot.slane %v1544, 5
      %v1699 = vrot.slane %v1698, 4
      %v1700 = vrot.slane %v1128, 5
      %v1701 = vsel %vm727, %v1699, %v1700
      %v1702 = vrot.slane %v1700, 4
      %v1703 = vrot.slane %v1144, 5
      %v1704 = vsel %vm727, %v1702, %v1703
      %v1721 = vunpack.c.l.b16 %v1097
      %v1722 = vunpack.c.l.b16 %v1098
      %v1723 = vunpack.c.l.b16 %v1099
      %v1724 = vunpack.c.l.b16 %v1100
      %v1725 = vunpack.c.l.b16 %v1101
      %v1726 = vunpack.c.l.b16 %v1102
      %v1727 = vunpack.c.l.b16 %v1103
      %v1728 = vunpack.c.l.b16 %v1104
      %v1729 = vunpack.c.l.b16 %v1105
      %v1730 = vunpack.c.l.b16 %v1106
      %v1731 = vunpack.c.l.b16 %v1107
      %v1732 = vunpack.c.l.b16 %v1108
      %v1733 = vunpack.c.l.b16 %v1109
      %v1734 = vunpack.c.l.b16 %v1110
      %v1735 = vunpack.c.l.b16 %v1111
      %v1736 = vunpack.c.l.b16 %v1112
      %v1737 = vunpack.c.l.b16 %v1113
      %v1738 = vunpack.c.l.b16 %v1114
      %v1739 = vunpack.c.l.b16 %v1115
      %v1740 = vunpack.c.l.b16 %v1116
      %v1741 = vunpack.c.l.b16 %v1117
      %v1742 = vunpack.c.l.b16 %v1118
      %v1743 = vunpack.c.l.b16 %v1119
      %v1744 = vunpack.c.l.b16 %v1120
      %v1745 = vunpack.c.l.b16 %v1121
      %v1746 = vunpack.c.l.b16 %v1122
      %v1747 = vunpack.c.l.b16 %v1123
      %v1748 = vunpack.c.l.b16 %v1124
      %v1749 = vunpack.c.l.b16 %v1125
      %v1750 = vunpack.c.l.b16 %v1126
      %v1751 = vunpack.c.l.b16 %v1127
      %v1752 = vunpack.c.l.b16 %v1128
      %v1753 = vpack.c.b16 %v1722, %v1721
      %v1754 = vpack.c.b16 %v1724, %v1723
      %v1755 = vpack.c.b16 %v1726, %v1725
      %v1756 = vpack.c.b16 %v1728, %v1727
      %v1757 = vpack.c.b16 %v1730, %v1729
      %v1758 = vpack.c.b16 %v1732, %v1731
      %v1759 = vpack.c.b16 %v1734, %v1733
      %v1760 = vpack.c.b16 %v1736, %v1735
      %v1761 = vpack.c.b16 %v1738, %v1737
      %v1762 = vpack.c.b16 %v1740, %v1739
      %v1763 = vpack.c.b16 %v1742, %v1741
      %v1764 = vpack.c.b16 %v1744, %v1743
      %v1765 = vpack.c.b16 %v1746, %v1745
      %v1766 = vpack.c.b16 %v1748, %v1747
      %v1767 = vpack.c.b16 %v1750, %v1749
      %v1768 = vpack.c.b16 %v1752, %v1751
      %v1785 = vunpack.c.l.b16 %v1158
      %v1786 = vunpack.c.l.b16 %v1168
      %v1787 = vunpack.c.l.b16 %v1182
      %v1788 = vunpack.c.l.b16 %v1192
      %v1789 = vunpack.c.l.b16 %v1206
      %v1790 = vunpack.c.l.b16 %v1216
      %v1791 = vunpack.c.l.b16 %v1230
      %v1792 = vunpack.c.l.b16 %v1240
      %v1793 = vunpack.c.l.b16 %v1254
      %v1794 = vunpack.c.l.b16 %v1264
      %v1795 = vunpack.c.l.b16 %v1278
      %v1796 = vunpack.c.l.b16 %v1288
      %v1797 = vunpack.c.l.b16 %v1302
      %v1798 = vunpack.c.l.b16 %v1312
      %v1799 = vunpack.c.l.b16 %v1326
      %v1800 = vunpack.c.l.b16 %v1336
      %v1801 = vunpack.c.l.b16 %v1350
      %v1802 = vunpack.c.l.b16 %v1360
      %v1803 = vunpack.c.l.b16 %v1374
      %v1804 = vunpack.c.l.b16 %v1384
      %v1805 = vunpack.c.l.b16 %v1398
      %v1806 = vunpack.c.l.b16 %v1408
      %v1807 = vunpack.c.l.b16 %v1422
      %v1808 = vunpack.c.l.b16 %v1432
      %v1809 = vunpack.c.l.b16 %v1446
      %v1810 = vunpack.c.l.b16 %v1456
      %v1811 = vunpack.c.l.b16 %v1470
      %v1812 = vunpack.c.l.b16 %v1480
      %v1813 = vunpack.c.l.b16 %v1494
      %v1814 = vunpack.c.l.b16 %v1504
      %v1815 = vunpack.c.l.b16 %v1518
      %v1816 = vunpack.c.l.b16 %v1528
      %v1817 = vpack.c.b16 %v1786, %v1785
      %v1818 = vpack.c.b16 %v1788, %v1787
      %v1819 = vpack.c.b16 %v1790, %v1789
      %v1820 = vpack.c.b16 %v1792, %v1791
      %v1821 = vpack.c.b16 %v1794, %v1793
      %v1822 = vpack.c.b16 %v1796, %v1795
      %v1823 = vpack.c.b16 %v1798, %v1797
      %v1824 = vpack.c.b16 %v1800, %v1799
      %v1825 = vpack.c.b16 %v1802, %v1801
      %v1826 = vpack.c.b16 %v1804, %v1803
      %v1827 = vpack.c.b16 %v1806, %v1805
      %v1828 = vpack.c.b16 %v1808, %v1807
      %v1829 = vpack.c.b16 %v1810, %v1809
      %v1830 = vpack.c.b16 %v1812, %v1811
      %v1831 = vpack.c.b16 %v1814, %v1813
      %v1832 = vpack.c.b16 %v1816, %v1815
      %v1849 = vunpack.c.l.b16 %v1596
      %v1850 = vunpack.c.l.b16 %v1599
      %v1851 = vunpack.c.l.b16 %v1603
      %v1852 = vunpack.c.l.b16 %v1606
      %v1853 = vunpack.c.l.b16 %v1610
      %v1854 = vunpack.c.l.b16 %v1613
      %v1855 = vunpack.c.l.b16 %v1617
      %v1856 = vunpack.c.l.b16 %v1620
      %v1857 = vunpack.c.l.b16 %v1624
      %v1858 = vunpack.c.l.b16 %v1627
      %v1859 = vunpack.c.l.b16 %v1631
      %v1860 = vunpack.c.l.b16 %v1634
      %v1861 = vunpack.c.l.b16 %v1638
      %v1862 = vunpack.c.l.b16 %v1641
      %v1863 = vunpack.c.l.b16 %v1645
      %v1864 = vunpack.c.l.b16 %v1648
      %v1865 = vunpack.c.l.b16 %v1652
      %v1866 = vunpack.c.l.b16 %v1655
      %v1867 = vunpack.c.l.b16 %v1659
      %v1868 = vunpack.c.l.b16 %v1662
      %v1869 = vunpack.c.l.b16 %v1666
      %v1870 = vunpack.c.l.b16 %v1669
      %v1871 = vunpack.c.l.b16 %v1673
      %v1872 = vunpack.c.l.b16 %v1676
      %v1873 = vunpack.c.l.b16 %v1680
      %v1874 = vunpack.c.l.b16 %v1683
      %v1875 = vunpack.c.l.b16 %v1687
      %v1876 = vunpack.c.l.b16 %v1690
      %v1877 = vunpack.c.l.b16 %v1694
      %v1878 = vunpack.c.l.b16 %v1697
      %v1879 = vunpack.c.l.b16 %v1701
      %v1880 = vunpack.c.l.b16 %v1704
      %v1881 = vpack.c.b16 %v1850, %v1849
      %v1882 = vpack.c.b16 %v1852, %v1851
      %v1883 = vpack.c.b16 %v1854, %v1853
      %v1884 = vpack.c.b16 %v1856, %v1855
      %v1885 = vpack.c.b16 %v1858, %v1857
      %v1886 = vpack.c.b16 %v1860, %v1859
      %v1887 = vpack.c.b16 %v1862, %v1861
      %v1888 = vpack.c.b16 %v1864, %v1863
      %v1889 = vpack.c.b16 %v1866, %v1865
      %v1890 = vpack.c.b16 %v1868, %v1867
      %v1891 = vpack.c.b16 %v1870, %v1869
      %v1892 = vpack.c.b16 %v1872, %v1871
      %v1893 = vpack.c.b16 %v1874, %v1873
      %v1894 = vpack.c.b16 %v1876, %v1875
      %v1895 = vpack.c.b16 %v1878, %v1877
      %v1896 = vpack.c.b16 %v1880, %v1879
      %s1913 = scalar_lea.vmem %s1, 192
      %v1914 = vld [vmem:[%s1913] sm:$0xf]
      %v1915 = vld [vmem:[%s1913 + $0x4] sm:$0xf]
      %v1916 = vld [vmem:[%s1913 + $0x8] sm:$0xf]
      %v1917 = vld [vmem:[%s1913 + $0xc] sm:$0xf]
      %v1918 = vld [vmem:[%s1913 + $0x10] sm:$0xf]
      %v1919 = vld [vmem:[%s1913 + $0x14] sm:$0xf]
      %v1920 = vld [vmem:[%s1913 + $0x18] sm:$0xf]
      %v1921 = vld [vmem:[%s1913 + $0x1c] sm:$0xf]
      %v1922 = vld [vmem:[%s1913 + $0x20] sm:$0xf]
      %v1923 = vld [vmem:[%s1913 + $0x24] sm:$0xf]
      %v1924 = vld [vmem:[%s1913 + $0x28] sm:$0xf]
      %v1925 = vld [vmem:[%s1913 + $0x2c] sm:$0xf]
      %v1926 = vld [vmem:[%s1913 + $0x30] sm:$0xf]
      %v1927 = vld [vmem:[%s1913 + $0x34] sm:$0xf]
      %v1928 = vld [vmem:[%s1913 + $0x38] sm:$0xf]
      %v1929 = vld [vmem:[%s1913 + $0x3c] sm:$0xf]
      %v1930 = vld [vmem:[%s1913 + $0x40] sm:$0xf]
      %v1931 = vld [vmem:[%s1913 + $0x44] sm:$0xf]
      %v1932 = vld [vmem:[%s1913 + $0x48] sm:$0xf]
      %v1933 = vld [vmem:[%s1913 + $0x4c] sm:$0xf]
      %v1934 = vld [vmem:[%s1913 + $0x50] sm:$0xf]
      %v1935 = vld [vmem:[%s1913 + $0x54] sm:$0xf]
      %v1936 = vld [vmem:[%s1913 + $0x58] sm:$0xf]
      %v1937 = vld [vmem:[%s1913 + $0x5c] sm:$0xf]
      %v1938 = vld [vmem:[%s1913 + $0x60] sm:$0xf]
      %v1939 = vld [vmem:[%s1913 + $0x64] sm:$0xf]
      %v1940 = vld [vmem:[%s1913 + $0x68] sm:$0xf]
      %v1941 = vld [vmem:[%s1913 + $0x6c] sm:$0xf]
      %v1942 = vld [vmem:[%s1913 + $0x70] sm:$0xf]
      %v1943 = vld [vmem:[%s1913 + $0x74] sm:$0xf]
      %v1944 = vld [vmem:[%s1913 + $0x78] sm:$0xf]
      %v1945 = vld [vmem:[%s1913 + $0x7c] sm:$0xf]
      %v1946 = vld [vmem:[%s1913 + $0x80] sm:$0xf]
      %v1947 = vld [vmem:[%s1913 + $0x84] sm:$0xf]
      %v1948 = vld [vmem:[%s1913 + $0x88] sm:$0xf]
      %v1949 = vld [vmem:[%s1913 + $0x8c] sm:$0xf]
      %v1950 = vld [vmem:[%s1913 + $0x90] sm:$0xf]
      %v1951 = vld [vmem:[%s1913 + $0x94] sm:$0xf]
      %v1952 = vld [vmem:[%s1913 + $0x98] sm:$0xf]
      %v1953 = vld [vmem:[%s1913 + $0x9c] sm:$0xf]
      %v1954 = vld [vmem:[%s1913 + $0xa0] sm:$0xf]
      %v1955 = vld [vmem:[%s1913 + $0xa4] sm:$0xf]
      %v1956 = vld [vmem:[%s1913 + $0xa8] sm:$0xf]
      %v1957 = vld [vmem:[%s1913 + $0xac] sm:$0xf]
      %v1958 = vld [vmem:[%s1913 + $0xb0] sm:$0xf]
      %v1959 = vld [vmem:[%s1913 + $0xb4] sm:$0xf]
      %v1960 = vld [vmem:[%s1913 + $0xb8] sm:$0xf]
      %v1961 = vld [vmem:[%s1913 + $0xbc] sm:$0xf]
      %v2010 = vunpack.c.l.b16 %v1914
      %v2011 = vunpack.c.l.b16 %v1915
      %v2012 = vunpack.c.l.b16 %v1916
      %v2013 = vunpack.c.l.b16 %v1917
      %v2014 = vunpack.c.l.b16 %v1918
      %v2015 = vunpack.c.l.b16 %v1919
      %v2016 = vunpack.c.l.b16 %v1920
      %v2017 = vunpack.c.l.b16 %v1921
      %v2018 = vunpack.c.l.b16 %v1922
      %v2019 = vunpack.c.l.b16 %v1923
      %v2020 = vunpack.c.l.b16 %v1924
      %v2021 = vunpack.c.l.b16 %v1925
      %v2022 = vunpack.c.l.b16 %v1926
      %v2023 = vunpack.c.l.b16 %v1927
      %v2024 = vunpack.c.l.b16 %v1928
      %v2025 = vunpack.c.l.b16 %v1929
      %v2026 = vunpack.c.l.b16 %v1930
      %v2027 = vunpack.c.l.b16 %v1931
      %v2028 = vunpack.c.l.b16 %v1932
      %v2029 = vunpack.c.l.b16 %v1933
      %v2030 = vunpack.c.l.b16 %v1934
      %v2031 = vunpack.c.l.b16 %v1935
      %v2032 = vunpack.c.l.b16 %v1936
      %v2033 = vunpack.c.l.b16 %v1937
      %v2034 = vunpack.c.l.b16 %v1938
      %v2035 = vunpack.c.l.b16 %v1939
      %v2036 = vunpack.c.l.b16 %v1940
      %v2037 = vunpack.c.l.b16 %v1941
      %v2038 = vunpack.c.l.b16 %v1942
      %v2039 = vunpack.c.l.b16 %v1943
      %v2040 = vunpack.c.l.b16 %v1944
      %v2041 = vunpack.c.l.b16 %v1945
      %v2042 = vunpack.c.l.b16 %v1946
      %v2043 = vunpack.c.l.b16 %v1947
      %v2044 = vunpack.c.l.b16 %v1948
      %v2045 = vunpack.c.l.b16 %v1949
      %v2046 = vunpack.c.l.b16 %v1950
      %v2047 = vunpack.c.l.b16 %v1951
      %v2048 = vunpack.c.l.b16 %v1952
      %v2049 = vunpack.c.l.b16 %v1953
      %v2050 = vunpack.c.l.b16 %v1954
      %v2051 = vunpack.c.l.b16 %v1955
      %v2052 = vunpack.c.l.b16 %v1956
      %v2053 = vunpack.c.l.b16 %v1957
      %v2054 = vunpack.c.l.b16 %v1958
      %v2055 = vunpack.c.l.b16 %v1959
      %v2056 = vunpack.c.l.b16 %v1960
      %v2057 = vunpack.c.l.b16 %v1961
      %v2058 = vpack.c.b16 %v2011, %v2010
      %v2059 = vpack.c.b16 %v2013, %v2012
      %v2060 = vpack.c.b16 %v2015, %v2014
      %v2061 = vpack.c.b16 %v2017, %v2016
      %v2062 = vpack.c.b16 %v2019, %v2018
      %v2063 = vpack.c.b16 %v2021, %v2020
      %v2064 = vpack.c.b16 %v2023, %v2022
      %v2065 = vpack.c.b16 %v2025, %v2024
      %v2066 = vpack.c.b16 %v2027, %v2026
      %v2067 = vpack.c.b16 %v2029, %v2028
      %v2068 = vpack.c.b16 %v2031, %v2030
      %v2069 = vpack.c.b16 %v2033, %v2032
      %v2070 = vpack.c.b16 %v2035, %v2034
      %v2071 = vpack.c.b16 %v2037, %v2036
      %v2072 = vpack.c.b16 %v2039, %v2038
      %v2073 = vpack.c.b16 %v2041, %v2040
      %v2074 = vpack.c.b16 %v2043, %v2042
      %v2075 = vpack.c.b16 %v2045, %v2044
      %v2076 = vpack.c.b16 %v2047, %v2046
      %v2077 = vpack.c.b16 %v2049, %v2048
      %v2078 = vpack.c.b16 %v2051, %v2050
      %v2079 = vpack.c.b16 %v2053, %v2052
      %v2080 = vpack.c.b16 %v2055, %v2054
      %v2081 = vpack.c.b16 %v2057, %v2056
      %2106 = vmatprep.subr.bf16.mxu0 0
      %2107 = vmatpush1.bf16.msra.mxu0 %v2058
      %2108 = vmatprep.subr.bf16.mxu0 0
      %2109 = vmatpush1.bf16.msra.mxu0 %v2059
      %2110 = vmatprep.subr.bf16.mxu0 0
      %2111 = vmatpush1.bf16.msra.mxu0 %v2060
      %2112 = vmatprep.subr.bf16.mxu0 0
      %2113 = vmatpush1.bf16.msra.mxu0 %v2061
      %2114 = vmatprep.subr.bf16.mxu0 0
      %2115 = vmatpush1.bf16.msra.mxu0 %v2062
      %2116 = vmatprep.subr.bf16.mxu0 0
      %2117 = vmatpush1.bf16.msra.mxu0 %v2063
      %2118 = vmatprep.subr.bf16.mxu0 0
      %2119 = vmatpush1.bf16.msra.mxu0 %v2064
      %2120 = vmatprep.subr.bf16.mxu0 0
      %2121 = vmatpush1.bf16.msra.mxu0 %v2065
      %2122 = vmatprep.subr.bf16.mxu0 0
      %2123 = vmatpush1.bf16.msra.mxu0 %v2066
      %2124 = vmatprep.subr.bf16.mxu0 0
      %2125 = vmatpush1.bf16.msra.mxu0 %v2067
      %2126 = vmatprep.subr.bf16.mxu0 0
      %2127 = vmatpush1.bf16.msra.mxu0 %v2068
      %2128 = vmatprep.subr.bf16.mxu0 0
      %2129 = vmatpush1.bf16.msra.mxu0 %v2069
      %2130 = vmatprep.subr.bf16.mxu0 0
      %2131 = vmatpush1.bf16.msra.mxu0 %v2070
      %2132 = vmatprep.subr.bf16.mxu0 0
      %2133 = vmatpush1.bf16.msra.mxu0 %v2071
      %2134 = vmatprep.subr.bf16.mxu0 0
      %2135 = vmatpush1.bf16.msra.mxu0 %v2072
      %2136 = vmatprep.subr.bf16.mxu0 0
      %2137 = vmatpush1.bf16.msra.mxu0 %v2073
      %2138 = vmatprep.mubr.bf16.mxu0 %v1817
      %2139 = vmatmul.mubr.bf16.gmra.mrb[0].mxu0 %v1753
      %v2140 = vpop.f32.mrb[0].mxu0
      %v2141 = vadd.f32 0.0, %v2140
      %v2142 = vpop.f32.mrb[0].mxu0
      %v2143 = vpop.f32.mrb[0].mxu0
      %v2144 = vadd.f32 0.0, %v2143
      %v2145 = vpop.f32.mrb[0].mxu0
      %2146 = vmatprep.mubr.bf16.mxu0 %v1818
      %2147 = vmatmul.mubr.bf16.gmra.mrb[0].mxu0 %v1754
      %v2148 = vpop.f32.mrb[0].mxu0
      %v2149 = vadd.f32 0.0, %v2148
      %v2150 = vpop.f32.mrb[0].mxu0
      %v2151 = vpop.f32.mrb[0].mxu0
      %v2152 = vadd.f32 0.0, %v2151
      %v2153 = vpop.f32.mrb[0].mxu0
      %2154 = vmatprep.mubr.bf16.mxu0 %v1819
      %2155 = vmatmul.mubr.bf16.gmra.mrb[0].mxu0 %v1755
      %v2156 = vpop.f32.mrb[0].mxu0
      %v2157 = vadd.f32 0.0, %v2156
      %v2158 = vpop.f32.mrb[0].mxu0
      %v2159 = vpop.f32.mrb[0].mxu0
      %v2160 = vadd.f32 0.0, %v2159
      %v2161 = vpop.f32.mrb[0].mxu0
      %2162 = vmatprep.mubr.bf16.mxu0 %v1820
      %2163 = vmatmul.mubr.bf16.gmra.mrb[0].mxu0 %v1756
      %v2164 = vpop.f32.mrb[0].mxu0
      %v2165 = vadd.f32 0.0, %v2164
      %v2166 = vpop.f32.mrb[0].mxu0
      %v2167 = vpop.f32.mrb[0].mxu0
      %v2168 = vadd.f32 0.0, %v2167
      %v2169 = vpop.f32.mrb[0].mxu0
      %2170 = vmatprep.mubr.bf16.mxu0 %v1821
      %2171 = vmatmul.mubr.bf16.gmra.mrb[0].mxu0 %v1757
      %v2172 = vpop.f32.mrb[0].mxu0
      %v2173 = vadd.f32 0.0, %v2172
      %v2174 = vpop.f32.mrb[0].mxu0
      %v2175 = vpop.f32.mrb[0].mxu0
      %v2176 = vadd.f32 0.0, %v2175
      %v2177 = vpop.f32.mrb[0].mxu0
      %2178 = vmatprep.mubr.bf16.mxu0 %v1822
      %2179 = vmatmul.mubr.bf16.gmra.mrb[0].mxu0 %v1758
      %v2180 = vpop.f32.mrb[0].mxu0
      %v2181 = vadd.f32 0.0, %v2180
      %v2182 = vpop.f32.mrb[0].mxu0
      %v2183 = vpop.f32.mrb[0].mxu0
      %v2184 = vadd.f32 0.0, %v2183
      %v2185 = vpop.f32.mrb[0].mxu0
      %2186 = vmatprep.mubr.bf16.mxu0 %v1823
      %2187 = vmatmul.mubr.bf16.gmra.mrb[0].mxu0 %v1759
      %v2188 = vpop.f32.mrb[0].mxu0
      %v2189 = vadd.f32 0.0, %v2188
      %v2190 = vpop.f32.mrb[0].mxu0
      %v2191 = vpop.f32.mrb[0].mxu0
      %v2192 = vadd.f32 0.0, %v2191
      %v2193 = vpop.f32.mrb[0].mxu0
      %2194 = vmatprep.mubr.bf16.mxu0 %v1824
      %2195 = vmatmul.mubr.bf16.gmra.mrb[0].mxu0 %v1760
      %v2196 = vpop.f32.mrb[0].mxu0
      %v2197 = vadd.f32 0.0, %v2196
      %v2198 = vpop.f32.mrb[0].mxu0
      %v2199 = vpop.f32.mrb[0].mxu0
      %v2200 = vadd.f32 0.0, %v2199
      %v2201 = vpop.f32.mrb[0].mxu0
      %2202 = vmatprep.mubr.bf16.mxu0 %v1825
      %2203 = vmatmul.mubr.bf16.gmra.mrb[0].mxu0 %v1761
      %v2204 = vpop.f32.mrb[0].mxu0
      %v2205 = vadd.f32 0.0, %v2204
      %v2206 = vpop.f32.mrb[0].mxu0
      %v2207 = vpop.f32.mrb[0].mxu0
      %v2208 = vadd.f32 0.0, %v2207
      %v2209 = vpop.f32.mrb[0].mxu0
      %2210 = vmatprep.mubr.bf16.mxu0 %v1826
      %2211 = vmatmul.mubr.bf16.gmra.mrb[0].mxu0 %v1762
      %v2212 = vpop.f32.mrb[0].mxu0
      %v2213 = vadd.f32 0.0, %v2212
      %v2214 = vpop.f32.mrb[0].mxu0
      %v2215 = vpop.f32.mrb[0].mxu0
      %v2216 = vadd.f32 0.0, %v2215
      %v2217 = vpop.f32.mrb[0].mxu0
      %2218 = vmatprep.mubr.bf16.mxu0 %v1827
      %2219 = vmatmul.mubr.bf16.gmra.mrb[0].mxu0 %v1763
      %v2220 = vpop.f32.mrb[0].mxu0
      %v2221 = vadd.f32 0.0, %v2220
      %v2222 = vpop.f32.mrb[0].mxu0
      %v2223 = vpop.f32.mrb[0].mxu0
      %v2224 = vadd.f32 0.0, %v2223
      %v2225 = vpop.f32.mrb[0].mxu0
      %2226 = vmatprep.mubr.bf16.mxu0 %v1828
      %2227 = vmatmul.mubr.bf16.gmra.mrb[0].mxu0 %v1764
      %v2228 = vpop.f32.mrb[0].mxu0
      %v2229 = vadd.f32 0.0, %v2228
      %v2230 = vpop.f32.mrb[0].mxu0
      %v2231 = vpop.f32.mrb[0].mxu0
      %v2232 = vadd.f32 0.0, %v2231
      %v2233 = vpop.f32.mrb[0].mxu0
      %2234 = vmatprep.mubr.bf16.mxu0 %v1829
      %2235 = vmatmul.mubr.bf16.gmra.mrb[0].mxu0 %v1765
      %v2236 = vpop.f32.mrb[0].mxu0
      %v2237 = vadd.f32 0.0, %v2236
      %v2238 = vpop.f32.mrb[0].mxu0
      %v2239 = vpop.f32.mrb[0].mxu0
      %v2240 = vadd.f32 0.0, %v2239
      %v2241 = vpop.f32.mrb[0].mxu0
      %2242 = vmatprep.mubr.bf16.mxu0 %v1830
      %2243 = vmatmul.mubr.bf16.gmra.mrb[0].mxu0 %v1766
      %v2244 = vpop.f32.mrb[0].mxu0
      %v2245 = vadd.f32 0.0, %v2244
      %v2246 = vpop.f32.mrb[0].mxu0
      %v2247 = vpop.f32.mrb[0].mxu0
      %v2248 = vadd.f32 0.0, %v2247
      %v2249 = vpop.f32.mrb[0].mxu0
      %2250 = vmatprep.mubr.bf16.mxu0 %v1831
      %2251 = vmatmul.mubr.bf16.gmra.mrb[0].mxu0 %v1767
      %v2252 = vpop.f32.mrb[0].mxu0
      %v2253 = vadd.f32 0.0, %v2252
      %v2254 = vpop.f32.mrb[0].mxu0
      %v2255 = vpop.f32.mrb[0].mxu0
      %v2256 = vadd.f32 0.0, %v2255
      %v2257 = vpop.f32.mrb[0].mxu0
      %2258 = vmatprep.mubr.bf16.mxu0 %v1832
      %2259 = vmatmul.mubr.bf16.gmra.mrb[0].mxu0 %v1768
      %v2260 = vpop.f32.mrb[0].mxu0
      %v2261 = vadd.f32 0.0, %v2260
      %v2262 = vpop.f32.mrb[0].mxu0
      %v2263 = vpop.f32.mrb[0].mxu0
      %v2264 = vadd.f32 0.0, %v2263
      %v2265 = vpop.f32.mrb[0].mxu0
      %2266 = vdwg.mxu0
      %2267 = vmatprep.subr.bf16.mxu0 0
      %2268 = vmatpush1.bf16.msra.mxu0 %v2074
      %2269 = vmatprep.subr.bf16.mxu0 0
      %2270 = vmatpush1.bf16.msra.mxu0 %v2075
      %2271 = vmatprep.subr.bf16.mxu0 0
      %2272 = vmatpush1.bf16.msra.mxu0 %v2076
      %2273 = vmatprep.subr.bf16.mxu0 0
      %2274 = vmatpush1.bf16.msra.mxu0 %v2077
      %2275 = vmatprep.subr.bf16.mxu0 0
      %2276 = vmatpush1.bf16.msra.mxu0 %v2078
      %2277 = vmatprep.subr.bf16.mxu0 0
      %2278 = vmatpush1.bf16.msra.mxu0 %v2079
      %2279 = vmatprep.subr.bf16.mxu0 0
      %2280 = vmatpush1.bf16.msra.mxu0 %v2080
      %2281 = vmatprep.subr.bf16.mxu0 0
      %2282 = vmatpush1.bf16.msra.mxu0 %v2081
      %2283 = vmatprep.subr.bf16.mxu0 0
      %2284 = vmatpush1.bf16.msra.mxu0 0
      %2285 = vmatprep.subr.bf16.mxu0 0
      %2286 = vmatpush1.bf16.msra.mxu0 0
      %2287 = vmatprep.subr.bf16.mxu0 0
      %2288 = vmatpush1.bf16.msra.mxu0 0
      %2289 = vmatprep.subr.bf16.mxu0 0
      %2290 = vmatpush1.bf16.msra.mxu0 0
      %2291 = vmatprep.subr.bf16.mxu0 0
      %2292 = vmatpush1.bf16.msra.mxu0 0
      %2293 = vmatprep.subr.bf16.mxu0 0
      %2294 = vmatpush1.bf16.msra.mxu0 0
      %2295 = vmatprep.subr.bf16.mxu0 0
      %2296 = vmatpush1.bf16.msra.mxu0 0
      %2297 = vmatprep.subr.bf16.mxu0 0
      %2298 = vmatpush1.bf16.msra.mxu0 0
      %2299 = vmatprep.mubr.bf16.mxu0 0
      %2300 = vmatmul.mubr.bf16.gmra.mrb[0].mxu0 %v1881
      %v2301 = vpop.f32.mrb[0].mxu0
      %v2302 = vadd.f32 %v2141, %v2301
      %v2303 = vpop.f32.mrb[0].mxu0
      %v2304 = vpop.f32.mrb[0].mxu0
      %v2305 = vadd.f32 %v2144, %v2304
      %v2306 = vpop.f32.mrb[0].mxu0
      %2307 = vmatprep.mubr.bf16.mxu0 0
      %2308 = vmatmul.mubr.bf16.gmra.mrb[0].mxu0 %v1882
      %v2309 = vpop.f32.mrb[0].mxu0
      %v2310 = vadd.f32 %v2149, %v2309
      %v2311 = vpop.f32.mrb[0].mxu0
      %v2312 = vpop.f32.mrb[0].mxu0
      %v2313 = vadd.f32 %v2152, %v2312
      %v2314 = vpop.f32.mrb[0].mxu0
      %2315 = vmatprep.mubr.bf16.mxu0 0
      %2316 = vmatmul.mubr.bf16.gmra.mrb[0].mxu0 %v1883
      %v2317 = vpop.f32.mrb[0].mxu0
      %v2318 = vadd.f32 %v2157, %v2317
      %v2319 = vpop.f32.mrb[0].mxu0
      %v2320 = vpop.f32.mrb[0].mxu0
      %v2321 = vadd.f32 %v2160, %v2320
      %v2322 = vpop.f32.mrb[0].mxu0
      %2323 = vmatprep.mubr.bf16.mxu0 0
      %2324 = vmatmul.mubr.bf16.gmra.mrb[0].mxu0 %v1884
      %v2325 = vpop.f32.mrb[0].mxu0
      %v2326 = vadd.f32 %v2165, %v2325
      %v2327 = vpop.f32.mrb[0].mxu0
      %v2328 = vpop.f32.mrb[0].mxu0
      %v2329 = vadd.f32 %v2168, %v2328
      %v2330 = vpop.f32.mrb[0].mxu0
      %2331 = vmatprep.mubr.bf16.mxu0 0
      %2332 = vmatmul.mubr.bf16.gmra.mrb[0].mxu0 %v1885
      %v2333 = vpop.f32.mrb[0].mxu0
      %v2334 = vadd.f32 %v2173, %v2333
      %v2335 = vpop.f32.mrb[0].mxu0
      %v2336 = vpop.f32.mrb[0].mxu0
      %v2337 = vadd.f32 %v2176, %v2336
      %v2338 = vpop.f32.mrb[0].mxu0
      %2339 = vmatprep.mubr.bf16.mxu0 0
      %2340 = vmatmul.mubr.bf16.gmra.mrb[0].mxu0 %v1886
      %v2341 = vpop.f32.mrb[0].mxu0
      %v2342 = vadd.f32 %v2181, %v2341
      %v2343 = vpop.f32.mrb[0].mxu0
      %v2344 = vpop.f32.mrb[0].mxu0
      %v2345 = vadd.f32 %v2184, %v2344
      %v2346 = vpop.f32.mrb[0].mxu0
      %2347 = vmatprep.mubr.bf16.mxu0 0
      %2348 = vmatmul.mubr.bf16.gmra.mrb[0].mxu0 %v1887
      %v2349 = vpop.f32.mrb[0].mxu0
      %v2350 = vadd.f32 %v2189, %v2349
      %v2351 = vpop.f32.mrb[0].mxu0
      %v2352 = vpop.f32.mrb[0].mxu0
      %v2353 = vadd.f32 %v2192, %v2352
      %v2354 = vpop.f32.mrb[0].mxu0
      %2355 = vmatprep.mubr.bf16.mxu0 0
      %2356 = vmatmul.mubr.bf16.gmra.mrb[0].mxu0 %v1888
      %v2357 = vpop.f32.mrb[0].mxu0
      %v2358 = vadd.f32 %v2197, %v2357
      %v2359 = vpop.f32.mrb[0].mxu0
      %v2360 = vpop.f32.mrb[0].mxu0
      %v2361 = vadd.f32 %v2200, %v2360
      %v2362 = vpop.f32.mrb[0].mxu0
      %2363 = vmatprep.mubr.bf16.mxu0 0
      %2364 = vmatmul.mubr.bf16.gmra.mrb[0].mxu0 %v1889
      %v2365 = vpop.f32.mrb[0].mxu0
      %v2366 = vadd.f32 %v2205, %v2365
      %v2367 = vpop.f32.mrb[0].mxu0
      %v2368 = vpop.f32.mrb[0].mxu0
      %v2369 = vadd.f32 %v2208, %v2368
      %v2370 = vpop.f32.mrb[0].mxu0
      %2371 = vmatprep.mubr.bf16.mxu0 0
      %2372 = vmatmul.mubr.bf16.gmra.mrb[0].mxu0 %v1890
      %v2373 = vpop.f32.mrb[0].mxu0
      %v2374 = vadd.f32 %v2213, %v2373
      %v2375 = vpop.f32.mrb[0].mxu0
      %v2376 = vpop.f32.mrb[0].mxu0
      %v2377 = vadd.f32 %v2216, %v2376
      %v2378 = vpop.f32.mrb[0].mxu0
      %2379 = vmatprep.mubr.bf16.mxu0 0
      %2380 = vmatmul.mubr.bf16.gmra.mrb[0].mxu0 %v1891
      %v2381 = vpop.f32.mrb[0].mxu0
      %v2382 = vadd.f32 %v2221, %v2381
      %v2383 = vpop.f32.mrb[0].mxu0
      %v2384 = vpop.f32.mrb[0].mxu0
      %v2385 = vadd.f32 %v2224, %v2384
      %v2386 = vpop.f32.mrb[0].mxu0
      %2387 = vmatprep.mubr.bf16.mxu0 0
      %2388 = vmatmul.mubr.bf16.gmra.mrb[0].mxu0 %v1892
      %v2389 = vpop.f32.mrb[0].mxu0
      %v2390 = vadd.f32 %v2229, %v2389
      %v2391 = vpop.f32.mrb[0].mxu0
      %v2392 = vpop.f32.mrb[0].mxu0
      %v2393 = vadd.f32 %v2232, %v2392
      %v2394 = vpop.f32.mrb[0].mxu0
      %2395 = vmatprep.mubr.bf16.mxu0 0
      %2396 = vmatmul.mubr.bf16.gmra.mrb[0].mxu0 %v1893
      %v2397 = vpop.f32.mrb[0].mxu0
      %v2398 = vadd.f32 %v2237, %v2397
      %v2399 = vpop.f32.mrb[0].mxu0
      %v2400 = vpop.f32.mrb[0].mxu0
      %v2401 = vadd.f32 %v2240, %v2400
      %v2402 = vpop.f32.mrb[0].mxu0
      %2403 = vmatprep.mubr.bf16.mxu0 0
      %2404 = vmatmul.mubr.bf16.gmra.mrb[0].mxu0 %v1894
      %v2405 = vpop.f32.mrb[0].mxu0
      %v2406 = vadd.f32 %v2245, %v2405
      %v2407 = vpop.f32.mrb[0].mxu0
      %v2408 = vpop.f32.mrb[0].mxu0
      %v2409 = vadd.f32 %v2248, %v2408
      %v2410 = vpop.f32.mrb[0].mxu0
      %2411 = vmatprep.mubr.bf16.mxu0 0
      %2412 = vmatmul.mubr.bf16.gmra.mrb[0].mxu0 %v1895
      %v2413 = vpop.f32.mrb[0].mxu0
      %v2414 = vadd.f32 %v2253, %v2413
      %v2415 = vpop.f32.mrb[0].mxu0
      %v2416 = vpop.f32.mrb[0].mxu0
      %v2417 = vadd.f32 %v2256, %v2416
      %v2418 = vpop.f32.mrb[0].mxu0
      %2419 = vmatprep.mubr.bf16.mxu0 0
      %2420 = vmatmul.mubr.bf16.gmra.mrb[0].mxu0 %v1896
      %v2421 = vpop.f32.mrb[0].mxu0
      %v2422 = vadd.f32 %v2261, %v2421
      %v2423 = vpop.f32.mrb[0].mxu0
      %v2424 = vpop.f32.mrb[0].mxu0
      %v2425 = vadd.f32 %v2264, %v2424
      %v2426 = vpop.f32.mrb[0].mxu0
      %2427 = vdwg.mxu0
      %v2476 = vunpack.c.l.b16 %v1048
      %v2477 = vunpack.c.l.b16 %v1049
      %v2478 = vunpack.c.l.b16 %v1050
      %v2479 = vunpack.c.l.b16 %v1051
      %v2480 = vunpack.c.l.b16 %v1052
      %v2481 = vunpack.c.l.b16 %v1053
      %v2482 = vunpack.c.l.b16 %v1054
      %v2483 = vunpack.c.l.b16 %v1055
      %v2484 = vunpack.c.l.b16 %v1056
      %v2485 = vunpack.c.l.b16 %v1057
      %v2486 = vunpack.c.l.b16 %v1058
      %v2487 = vunpack.c.l.b16 %v1059
      %v2488 = vunpack.c.l.b16 %v1060
      %v2489 = vunpack.c.l.b16 %v1061
      %v2490 = vunpack.c.l.b16 %v1062
      %v2491 = vunpack.c.l.b16 %v1063
      %v2492 = vunpack.c.l.b16 %v1064
      %v2493 = vunpack.c.l.b16 %v1065
      %v2494 = vunpack.c.l.b16 %v1066
      %v2495 = vunpack.c.l.b16 %v1067
      %v2496 = vunpack.c.l.b16 %v1068
      %v2497 = vunpack.c.l.b16 %v1069
      %v2498 = vunpack.c.l.b16 %v1070
      %v2499 = vunpack.c.l.b16 %v1071
      %v2500 = vunpack.c.l.b16 %v1072
      %v2501 = vunpack.c.l.b16 %v1073
      %v2502 = vunpack.c.l.b16 %v1074
      %v2503 = vunpack.c.l.b16 %v1075
      %v2504 = vunpack.c.l.b16 %v1076
      %v2505 = vunpack.c.l.b16 %v1077
      %v2506 = vunpack.c.l.b16 %v1078
      %v2507 = vunpack.c.l.b16 %v1079
      %v2508 = vunpack.c.l.b16 %v1080
      %v2509 = vunpack.c.l.b16 %v1081
      %v2510 = vunpack.c.l.b16 %v1082
      %v2511 = vunpack.c.l.b16 %v1083
      %v2512 = vunpack.c.l.b16 %v1084
      %v2513 = vunpack.c.l.b16 %v1085
      %v2514 = vunpack.c.l.b16 %v1086
      %v2515 = vunpack.c.l.b16 %v1087
      %v2516 = vunpack.c.l.b16 %v1088
      %v2517 = vunpack.c.l.b16 %v1089
      %v2518 = vunpack.c.l.b16 %v1090
      %v2519 = vunpack.c.l.b16 %v1091
      %v2520 = vunpack.c.l.b16 %v1092
      %v2521 = vunpack.c.l.b16 %v1093
      %v2522 = vunpack.c.l.b16 %v1094
      %v2523 = vunpack.c.l.b16 %v1095
      %v2524 = vpack.c.b16 %v2477, %v2476
      %v2525 = vpack.c.b16 %v2479, %v2478
      %v2526 = vpack.c.b16 %v2481, %v2480
      %v2527 = vpack.c.b16 %v2483, %v2482
      %v2528 = vpack.c.b16 %v2485, %v2484
      %v2529 = vpack.c.b16 %v2487, %v2486
      %v2530 = vpack.c.b16 %v2489, %v2488
      %v2531 = vpack.c.b16 %v2491, %v2490
      %v2532 = vpack.c.b16 %v2493, %v2492
      %v2533 = vpack.c.b16 %v2495, %v2494
      %v2534 = vpack.c.b16 %v2497, %v2496
      %v2535 = vpack.c.b16 %v2499, %v2498
      %v2536 = vpack.c.b16 %v2501, %v2500
      %v2537 = vpack.c.b16 %v2503, %v2502
      %v2538 = vpack.c.b16 %v2505, %v2504
      %v2539 = vpack.c.b16 %v2507, %v2506
      %v2540 = vpack.c.b16 %v2509, %v2508
      %v2541 = vpack.c.b16 %v2511, %v2510
      %v2542 = vpack.c.b16 %v2513, %v2512
      %v2543 = vpack.c.b16 %v2515, %v2514
      %v2544 = vpack.c.b16 %v2517, %v2516
      %v2545 = vpack.c.b16 %v2519, %v2518
      %v2546 = vpack.c.b16 %v2521, %v2520
      %v2547 = vpack.c.b16 %v2523, %v2522
      %2572 = vmatprep.subr.bf16.mxu0 0
      %2573 = vmatpush1.bf16.msra.mxu0 %v2524
      %2574 = vmatprep.subr.bf16.mxu0 0
      %2575 = vmatpush1.bf16.msra.mxu0 %v2525
      %2576 = vmatprep.subr.bf16.mxu0 0
      %2577 = vmatpush1.bf16.msra.mxu0 %v2526
      %2578 = vmatprep.subr.bf16.mxu0 0
      %2579 = vmatpush1.bf16.msra.mxu0 %v2527
      %2580 = vmatprep.subr.bf16.mxu0 0
      %2581 = vmatpush1.bf16.msra.mxu0 %v2528
      %2582 = vmatprep.subr.bf16.mxu0 0
      %2583 = vmatpush1.bf16.msra.mxu0 %v2529
      %2584 = vmatprep.subr.bf16.mxu0 0
      %2585 = vmatpush1.bf16.msra.mxu0 %v2530
      %2586 = vmatprep.subr.bf16.mxu0 0
      %2587 = vmatpush1.bf16.msra.mxu0 %v2531
      %2588 = vmatprep.subr.bf16.mxu0 0
      %2589 = vmatpush1.bf16.msra.mxu0 %v2532
      %2590 = vmatprep.subr.bf16.mxu0 0
      %2591 = vmatpush1.bf16.msra.mxu0 %v2533
      %2592 = vmatprep.subr.bf16.mxu0 0
      %2593 = vmatpush1.bf16.msra.mxu0 %v2534
      %2594 = vmatprep.subr.bf16.mxu0 0
      %2595 = vmatpush1.bf16.msra.mxu0 %v2535
      %2596 = vmatprep.subr.bf16.mxu0 0
      %2597 = vmatpush1.bf16.msra.mxu0 %v2536
      %2598 = vmatprep.subr.bf16.mxu0 0
      %2599 = vmatpush1.bf16.msra.mxu0 %v2537
      %2600 = vmatprep.subr.bf16.mxu0 0
      %2601 = vmatpush1.bf16.msra.mxu0 %v2538
      %2602 = vmatprep.subr.bf16.mxu0 0
      %2603 = vmatpush1.bf16.msra.mxu0 %v2539
      %2604 = vmatprep.mubr.bf16.mxu0 %v952
      %2605 = vmatmul.mubr.bf16.gmra.mrb[0].mxu0 %v888
      %v2606 = vpop.f32.mrb[0].mxu0
      %v2607 = vadd.f32 %v2302, %v2606
      %v2608 = vpop.f32.mrb[0].mxu0
      %v2609 = vpop.f32.mrb[0].mxu0
      %v2610 = vadd.f32 %v2305, %v2609
      %v2611 = vpop.f32.mrb[0].mxu0
      %2612 = vmatprep.mubr.bf16.mxu0 %v953
      %2613 = vmatmul.mubr.bf16.gmra.mrb[0].mxu0 %v889
      %v2614 = vpop.f32.mrb[0].mxu0
      %v2615 = vadd.f32 %v2310, %v2614
      %v2616 = vpop.f32.mrb[0].mxu0
      %v2617 = vpop.f32.mrb[0].mxu0
      %v2618 = vadd.f32 %v2313, %v2617
      %v2619 = vpop.f32.mrb[0].mxu0
      %2620 = vmatprep.mubr.bf16.mxu0 %v954
      %2621 = vmatmul.mubr.bf16.gmra.mrb[0].mxu0 %v890
      %v2622 = vpop.f32.mrb[0].mxu0
      %v2623 = vadd.f32 %v2318, %v2622
      %v2624 = vpop.f32.mrb[0].mxu0
      %v2625 = vpop.f32.mrb[0].mxu0
      %v2626 = vadd.f32 %v2321, %v2625
      %v2627 = vpop.f32.mrb[0].mxu0
      %2628 = vmatprep.mubr.bf16.mxu0 %v955
      %2629 = vmatmul.mubr.bf16.gmra.mrb[0].mxu0 %v891
      %v2630 = vpop.f32.mrb[0].mxu0
      %v2631 = vadd.f32 %v2326, %v2630
      %v2632 = vpop.f32.mrb[0].mxu0
      %v2633 = vpop.f32.mrb[0].mxu0
      %v2634 = vadd.f32 %v2329, %v2633
      %v2635 = vpop.f32.mrb[0].mxu0
      %2636 = vmatprep.mubr.bf16.mxu0 %v956
      %2637 = vmatmul.mubr.bf16.gmra.mrb[0].mxu0 %v892
      %v2638 = vpop.f32.mrb[0].mxu0
      %v2639 = vadd.f32 %v2334, %v2638
      %v2640 = vpop.f32.mrb[0].mxu0
      %v2641 = vpop.f32.mrb[0].mxu0
      %v2642 = vadd.f32 %v2337, %v2641
      %v2643 = vpop.f32.mrb[0].mxu0
      %2644 = vmatprep.mubr.bf16.mxu0 %v957
      %2645 = vmatmul.mubr.bf16.gmra.mrb[0].mxu0 %v893
      %v2646 = vpop.f32.mrb[0].mxu0
      %v2647 = vadd.f32 %v2342, %v2646
      %v2648 = vpop.f32.mrb[0].mxu0
      %v2649 = vpop.f32.mrb[0].mxu0
      %v2650 = vadd.f32 %v2345, %v2649
      %v2651 = vpop.f32.mrb[0].mxu0
      %2652 = vmatprep.mubr.bf16.mxu0 %v958
      %2653 = vmatmul.mubr.bf16.gmra.mrb[0].mxu0 %v894
      %v2654 = vpop.f32.mrb[0].mxu0
      %v2655 = vadd.f32 %v2350, %v2654
      %v2656 = vpop.f32.mrb[0].mxu0
      %v2657 = vpop.f32.mrb[0].mxu0
      %v2658 = vadd.f32 %v2353, %v2657
      %v2659 = vpop.f32.mrb[0].mxu0
      %2660 = vmatprep.mubr.bf16.mxu0 %v959
      %2661 = vmatmul.mubr.bf16.gmra.mrb[0].mxu0 %v895
      %v2662 = vpop.f32.mrb[0].mxu0
      %v2663 = vadd.f32 %v2358, %v2662
      %v2664 = vpop.f32.mrb[0].mxu0
      %v2665 = vpop.f32.mrb[0].mxu0
      %v2666 = vadd.f32 %v2361, %v2665
      %v2667 = vpop.f32.mrb[0].mxu0
      %2668 = vmatprep.mubr.bf16.mxu0 %v960
      %2669 = vmatmul.mubr.bf16.gmra.mrb[0].mxu0 %v896
      %v2670 = vpop.f32.mrb[0].mxu0
      %v2671 = vadd.f32 %v2366, %v2670
      %v2672 = vpop.f32.mrb[0].mxu0
      %v2673 = vpop.f32.mrb[0].mxu0
      %v2674 = vadd.f32 %v2369, %v2673
      %v2675 = vpop.f32.mrb[0].mxu0
      %2676 = vmatprep.mubr.bf16.mxu0 %v961
      %2677 = vmatmul.mubr.bf16.gmra.mrb[0].mxu0 %v897
      %v2678 = vpop.f32.mrb[0].mxu0
      %v2679 = vadd.f32 %v2374, %v2678
      %v2680 = vpop.f32.mrb[0].mxu0
      %v2681 = vpop.f32.mrb[0].mxu0
      %v2682 = vadd.f32 %v2377, %v2681
      %v2683 = vpop.f32.mrb[0].mxu0
      %2684 = vmatprep.mubr.bf16.mxu0 %v962
      %2685 = vmatmul.mubr.bf16.gmra.mrb[0].mxu0 %v898
      %v2686 = vpop.f32.mrb[0].mxu0
      %v2687 = vadd.f32 %v2382, %v2686
      %v2688 = vpop.f32.mrb[0].mxu0
      %v2689 = vpop.f32.mrb[0].mxu0
      %v2690 = vadd.f32 %v2385, %v2689
      %v2691 = vpop.f32.mrb[0].mxu0
      %2692 = vmatprep.mubr.bf16.mxu0 %v963
      %2693 = vmatmul.mubr.bf16.gmra.mrb[0].mxu0 %v899
      %v2694 = vpop.f32.mrb[0].mxu0
      %v2695 = vadd.f32 %v2390, %v2694
      %v2696 = vpop.f32.mrb[0].mxu0
      %v2697 = vpop.f32.mrb[0].mxu0
      %v2698 = vadd.f32 %v2393, %v2697
      %v2699 = vpop.f32.mrb[0].mxu0
      %2700 = vmatprep.mubr.bf16.mxu0 %v964
      %2701 = vmatmul.mubr.bf16.gmra.mrb[0].mxu0 %v900
      %v2702 = vpop.f32.mrb[0].mxu0
      %v2703 = vadd.f32 %v2398, %v2702
      %v2704 = vpop.f32.mrb[0].mxu0
      %v2705 = vpop.f32.mrb[0].mxu0
      %v2706 = vadd.f32 %v2401, %v2705
      %v2707 = vpop.f32.mrb[0].mxu0
      %2708 = vmatprep.mubr.bf16.mxu0 %v965
      %2709 = vmatmul.mubr.bf16.gmra.mrb[0].mxu0 %v901
      %v2710 = vpop.f32.mrb[0].mxu0
      %v2711 = vadd.f32 %v2406, %v2710
      %v2712 = vpop.f32.mrb[0].mxu0
      %v2713 = vpop.f32.mrb[0].mxu0
      %v2714 = vadd.f32 %v2409, %v2713
      %v2715 = vpop.f32.mrb[0].mxu0
      %2716 = vmatprep.mubr.bf16.mxu0 %v966
      %2717 = vmatmul.mubr.bf16.gmra.mrb[0].mxu0 %v902
      %v2718 = vpop.f32.mrb[0].mxu0
      %v2719 = vadd.f32 %v2414, %v2718
      %v2720 = vpop.f32.mrb[0].mxu0
      %v2721 = vpop.f32.mrb[0].mxu0
      %v2722 = vadd.f32 %v2417, %v2721
      %v2723 = vpop.f32.mrb[0].mxu0
      %2724 = vmatprep.mubr.bf16.mxu0 %v967
      %2725 = vmatmul.mubr.bf16.gmra.mrb[0].mxu0 %v903
      %v2726 = vpop.f32.mrb[0].mxu0
      %v2727 = vadd.f32 %v2422, %v2726
      %v2728 = vpop.f32.mrb[0].mxu0
      %v2729 = vpop.f32.mrb[0].mxu0
      %v2730 = vadd.f32 %v2425, %v2729
      %v2731 = vpop.f32.mrb[0].mxu0
      %2732 = vdwg.mxu0
      %2733 = vmatprep.subr.bf16.mxu0 0
      %2734 = vmatpush1.bf16.msra.mxu0 %v2540
      %2735 = vmatprep.subr.bf16.mxu0 0
      %2736 = vmatpush1.bf16.msra.mxu0 %v2541
      %2737 = vmatprep.subr.bf16.mxu0 0
      %2738 = vmatpush1.bf16.msra.mxu0 %v2542
      %2739 = vmatprep.subr.bf16.mxu0 0
      %2740 = vmatpush1.bf16.msra.mxu0 %v2543
      %2741 = vmatprep.subr.bf16.mxu0 0
      %2742 = vmatpush1.bf16.msra.mxu0 %v2544
      %2743 = vmatprep.subr.bf16.mxu0 0
      %2744 = vmatpush1.bf16.msra.mxu0 %v2545
      %2745 = vmatprep.subr.bf16.mxu0 0
      %2746 = vmatpush1.bf16.msra.mxu0 %v2546
      %2747 = vmatprep.subr.bf16.mxu0 0
      %2748 = vmatpush1.bf16.msra.mxu0 %v2547
      %2749 = vmatprep.subr.bf16.mxu0 0
      %2750 = vmatpush1.bf16.msra.mxu0 0
      %2751 = vmatprep.subr.bf16.mxu0 0
      %2752 = vmatpush1.bf16.msra.mxu0 0
      %2753 = vmatprep.subr.bf16.mxu0 0
      %2754 = vmatpush1.bf16.msra.mxu0 0
      %2755 = vmatprep.subr.bf16.mxu0 0
      %2756 = vmatpush1.bf16.msra.mxu0 0
      %2757 = vmatprep.subr.bf16.mxu0 0
      %2758 = vmatpush1.bf16.msra.mxu0 0
      %2759 = vmatprep.subr.bf16.mxu0 0
      %2760 = vmatpush1.bf16.msra.mxu0 0
      %2761 = vmatprep.subr.bf16.mxu0 0
      %2762 = vmatpush1.bf16.msra.mxu0 0
      %2763 = vmatprep.subr.bf16.mxu0 0
      %2764 = vmatpush1.bf16.msra.mxu0 0
      %2765 = vmatprep.mubr.bf16.mxu0 0
      %2766 = vmatmul.mubr.bf16.gmra.mrb[0].mxu0 %v1016
      %v2767 = vpop.f32.mrb[0].mxu0
      %v2768 = vadd.f32 %v2607, %v2767
      %v2769 = vpop.f32.mrb[0].mxu0
      %v2770 = vpop.f32.mrb[0].mxu0
      %v2771 = vadd.f32 %v2610, %v2770
      %v2772 = vpop.f32.mrb[0].mxu0
      %2773 = vmatprep.mubr.bf16.mxu0 0
      %2774 = vmatmul.mubr.bf16.gmra.mrb[0].mxu0 %v1017
      %v2775 = vpop.f32.mrb[0].mxu0
      %v2776 = vadd.f32 %v2615, %v2775
      %v2777 = vpop.f32.mrb[0].mxu0
      %v2778 = vpop.f32.mrb[0].mxu0
      %v2779 = vadd.f32 %v2618, %v2778
      %v2780 = vpop.f32.mrb[0].mxu0
      %2781 = vmatprep.mubr.bf16.mxu0 0
      %2782 = vmatmul.mubr.bf16.gmra.mrb[0].mxu0 %v1018
      %v2783 = vpop.f32.mrb[0].mxu0
      %v2784 = vadd.f32 %v2623, %v2783
      %v2785 = vpop.f32.mrb[0].mxu0
      %v2786 = vpop.f32.mrb[0].mxu0
      %v2787 = vadd.f32 %v2626, %v2786
      %v2788 = vpop.f32.mrb[0].mxu0
      %2789 = vmatprep.mubr.bf16.mxu0 0
      %2790 = vmatmul.mubr.bf16.gmra.mrb[0].mxu0 %v1019
      %v2791 = vpop.f32.mrb[0].mxu0
      %v2792 = vadd.f32 %v2631, %v2791
      %v2793 = vpop.f32.mrb[0].mxu0
      %v2794 = vpop.f32.mrb[0].mxu0
      %v2795 = vadd.f32 %v2634, %v2794
      %v2796 = vpop.f32.mrb[0].mxu0
      %2797 = vmatprep.mubr.bf16.mxu0 0
      %2798 = vmatmul.mubr.bf16.gmra.mrb[0].mxu0 %v1020
      %v2799 = vpop.f32.mrb[0].mxu0
      %v2800 = vadd.f32 %v2639, %v2799
      %v2801 = vpop.f32.mrb[0].mxu0
      %v2802 = vpop.f32.mrb[0].mxu0
      %v2803 = vadd.f32 %v2642, %v2802
      %v2804 = vpop.f32.mrb[0].mxu0
      %2805 = vmatprep.mubr.bf16.mxu0 0
      %2806 = vmatmul.mubr.bf16.gmra.mrb[0].mxu0 %v1021
      %v2807 = vpop.f32.mrb[0].mxu0
      %v2808 = vadd.f32 %v2647, %v2807
      %v2809 = vpop.f32.mrb[0].mxu0
      %v2810 = vpop.f32.mrb[0].mxu0
      %v2811 = vadd.f32 %v2650, %v2810
      %v2812 = vpop.f32.mrb[0].mxu0
      %2813 = vmatprep.mubr.bf16.mxu0 0
      %2814 = vmatmul.mubr.bf16.gmra.mrb[0].mxu0 %v1022
      %v2815 = vpop.f32.mrb[0].mxu0
      %v2816 = vadd.f32 %v2655, %v2815
      %v2817 = vpop.f32.mrb[0].mxu0
      %v2818 = vpop.f32.mrb[0].mxu0
      %v2819 = vadd.f32 %v2658, %v2818
      %v2820 = vpop.f32.mrb[0].mxu0
      %2821 = vmatprep.mubr.bf16.mxu0 0
      %2822 = vmatmul.mubr.bf16.gmra.mrb[0].mxu0 %v1023
      %v2823 = vpop.f32.mrb[0].mxu0
      %v2824 = vadd.f32 %v2663, %v2823
      %v2825 = vpop.f32.mrb[0].mxu0
      %v2826 = vpop.f32.mrb[0].mxu0
      %v2827 = vadd.f32 %v2666, %v2826
      %v2828 = vpop.f32.mrb[0].mxu0
      %2829 = vmatprep.mubr.bf16.mxu0 0
      %2830 = vmatmul.mubr.bf16.gmra.mrb[0].mxu0 %v1024
      %v2831 = vpop.f32.mrb[0].mxu0
      %v2832 = vadd.f32 %v2671, %v2831
      %v2833 = vpop.f32.mrb[0].mxu0
      %v2834 = vpop.f32.mrb[0].mxu0
      %v2835 = vadd.f32 %v2674, %v2834
      %v2836 = vpop.f32.mrb[0].mxu0
      %2837 = vmatprep.mubr.bf16.mxu0 0
      %2838 = vmatmul.mubr.bf16.gmra.mrb[0].mxu0 %v1025
      %v2839 = vpop.f32.mrb[0].mxu0
      %v2840 = vadd.f32 %v2679, %v2839
      %v2841 = vpop.f32.mrb[0].mxu0
      %v2842 = vpop.f32.mrb[0].mxu0
      %v2843 = vadd.f32 %v2682, %v2842
      %v2844 = vpop.f32.mrb[0].mxu0
      %2845 = vmatprep.mubr.bf16.mxu0 0
      %2846 = vmatmul.mubr.bf16.gmra.mrb[0].mxu0 %v1026
      %v2847 = vpop.f32.mrb[0].mxu0
      %v2848 = vadd.f32 %v2687, %v2847
      %v2849 = vpop.f32.mrb[0].mxu0
      %v2850 = vpop.f32.mrb[0].mxu0
      %v2851 = vadd.f32 %v2690, %v2850
      %v2852 = vpop.f32.mrb[0].mxu0
      %2853 = vmatprep.mubr.bf16.mxu0 0
      %2854 = vmatmul.mubr.bf16.gmra.mrb[0].mxu0 %v1027
      %v2855 = vpop.f32.mrb[0].mxu0
      %v2856 = vadd.f32 %v2695, %v2855
      %v2857 = vpop.f32.mrb[0].mxu0
      %v2858 = vpop.f32.mrb[0].mxu0
      %v2859 = vadd.f32 %v2698, %v2858
      %v2860 = vpop.f32.mrb[0].mxu0
      %2861 = vmatprep.mubr.bf16.mxu0 0
      %2862 = vmatmul.mubr.bf16.gmra.mrb[0].mxu0 %v1028
      %v2863 = vpop.f32.mrb[0].mxu0
      %v2864 = vadd.f32 %v2703, %v2863
      %v2865 = vpop.f32.mrb[0].mxu0
      %v2866 = vpop.f32.mrb[0].mxu0
      %v2867 = vadd.f32 %v2706, %v2866
      %v2868 = vpop.f32.mrb[0].mxu0
      %2869 = vmatprep.mubr.bf16.mxu0 0
      %2870 = vmatmul.mubr.bf16.gmra.mrb[0].mxu0 %v1029
      %v2871 = vpop.f32.mrb[0].mxu0
      %v2872 = vadd.f32 %v2711, %v2871
      %v2873 = vpop.f32.mrb[0].mxu0
      %v2874 = vpop.f32.mrb[0].mxu0
      %v2875 = vadd.f32 %v2714, %v2874
      %v2876 = vpop.f32.mrb[0].mxu0
      %2877 = vmatprep.mubr.bf16.mxu0 0
      %2878 = vmatmul.mubr.bf16.gmra.mrb[0].mxu0 %v1030
      %v2879 = vpop.f32.mrb[0].mxu0
      %v2880 = vadd.f32 %v2719, %v2879
      %v2881 = vpop.f32.mrb[0].mxu0
      %v2882 = vpop.f32.mrb[0].mxu0
      %v2883 = vadd.f32 %v2722, %v2882
      %v2884 = vpop.f32.mrb[0].mxu0
      %2885 = vmatprep.mubr.bf16.mxu0 0
      %2886 = vmatmul.mubr.bf16.gmra.mrb[0].mxu0 %v1031
      %v2887 = vpop.f32.mrb[0].mxu0
      %v2888 = vadd.f32 %v2727, %v2887
      %v2889 = vpop.f32.mrb[0].mxu0
      %v2890 = vpop.f32.mrb[0].mxu0
      %v2891 = vadd.f32 %v2730, %v2890
      %v2892 = vpop.f32.mrb[0].mxu0
      %2893 = vdwg.mxu0
      %s2894 = scalar_lea.vmem %s219, 24
      %v2895 = vld [vmem:[%s2894] sm:$0xf]
      %v2896 = vld [vmem:[%s2894 + $0x4] sm:$0xf]
      %v2897 = vld [vmem:[%s2894 + $0xc] sm:$0xf]
      %v2898 = vld [vmem:[%s2894 + $0x10] sm:$0xf]
      %v2899 = vld [vmem:[%s2894 + $0x18] sm:$0xf]
      %v2900 = vld [vmem:[%s2894 + $0x1c] sm:$0xf]
      %v2901 = vld [vmem:[%s2894 + $0x24] sm:$0xf]
      %v2902 = vld [vmem:[%s2894 + $0x28] sm:$0xf]
      %v2903 = vld [vmem:[%s2894 + $0x30] sm:$0xf]
      %v2904 = vld [vmem:[%s2894 + $0x34] sm:$0xf]
      %v2905 = vld [vmem:[%s2894 + $0x3c] sm:$0xf]
      %v2906 = vld [vmem:[%s2894 + $0x40] sm:$0xf]
      %v2907 = vld [vmem:[%s2894 + $0x48] sm:$0xf]
      %v2908 = vld [vmem:[%s2894 + $0x4c] sm:$0xf]
      %v2909 = vld [vmem:[%s2894 + $0x54] sm:$0xf]
      %v2910 = vld [vmem:[%s2894 + $0x58] sm:$0xf]
      %v2911 = vld [vmem:[%s2894 + $0x60] sm:$0xf]
      %v2912 = vld [vmem:[%s2894 + $0x64] sm:$0xf]
      %v2913 = vld [vmem:[%s2894 + $0x6c] sm:$0xf]
      %v2914 = vld [vmem:[%s2894 + $0x70] sm:$0xf]
      %v2915 = vld [vmem:[%s2894 + $0x78] sm:$0xf]
      %v2916 = vld [vmem:[%s2894 + $0x7c] sm:$0xf]
      %v2917 = vld [vmem:[%s2894 + $0x84] sm:$0xf]
      %v2918 = vld [vmem:[%s2894 + $0x88] sm:$0xf]
      %v2919 = vld [vmem:[%s2894 + $0x90] sm:$0xf]
      %v2920 = vld [vmem:[%s2894 + $0x94] sm:$0xf]
      %v2921 = vld [vmem:[%s2894 + $0x9c] sm:$0xf]
      %v2922 = vld [vmem:[%s2894 + $0xa0] sm:$0xf]
      %v2923 = vld [vmem:[%s2894 + $0xa8] sm:$0xf]
      %v2924 = vld [vmem:[%s2894 + $0xac] sm:$0xf]
      %v2925 = vld [vmem:[%s2894 + $0xb4] sm:$0xf]
      %v2926 = vld [vmem:[%s2894 + $0xb8] sm:$0xf]
      %v2927 = vld [vmem:[%s2894 + $0x8] sm:$0x1]
      %v2928 = vld [vmem:[%s2894 + $0x14] sm:$0x1]
      %v2929 = vld [vmem:[%s2894 + $0x20] sm:$0x1]
      %v2930 = vld [vmem:[%s2894 + $0x2c] sm:$0x1]
      %v2931 = vld [vmem:[%s2894 + $0x38] sm:$0x1]
      %v2932 = vld [vmem:[%s2894 + $0x44] sm:$0x1]
      %v2933 = vld [vmem:[%s2894 + $0x50] sm:$0x1]
      %v2934 = vld [vmem:[%s2894 + $0x5c] sm:$0x1]
      %v2935 = vld [vmem:[%s2894 + $0x68] sm:$0x1]
      %v2936 = vld [vmem:[%s2894 + $0x74] sm:$0x1]
      %v2937 = vld [vmem:[%s2894 + $0x80] sm:$0x1]
      %v2938 = vld [vmem:[%s2894 + $0x8c] sm:$0x1]
      %v2939 = vld [vmem:[%s2894 + $0x98] sm:$0x1]
      %v2940 = vld [vmem:[%s2894 + $0xa4] sm:$0x1]
      %v2941 = vld [vmem:[%s2894 + $0xb0] sm:$0x1]
      %v2942 = vld [vmem:[%s2894 + $0xbc] sm:$0x1]
      %v2944 = vshrl.u32 %v2895, 16
      %v2946 = vrot.slane %v2944, 4
      %v2947 = vshll.u32 %v2895, 16
      %v2949 = vrot.slane %v2947, 5
      %v2950 = vor.u32 %v2946, %v2949
      %v2951 = vrot.slane %v2950, 4
      %v2953 = vshll.u32 %v2896, 16
      %v2955 = vrot.slane %v2953, 5
      %v2956 = vsel %vm276, %v2951, %v2955
      %v2957 = vshrl.u32 %v2896, 16
      %v2959 = vrot.slane %v2957, 4
      %v2960 = vor.u32 %v2959, %v2955
      %v2961 = vrot.slane %v2960, 4
      %v2963 = vshll.u32 %v2927, 16
      %v2965 = vrot.slane %v2963, 5
      %v2966 = vsel %vm276, %v2961, %v2965
      %v2968 = vshrl.u32 %v2897, 16
      %v2970 = vrot.slane %v2968, 4
      %v2971 = vshll.u32 %v2897, 16
      %v2973 = vrot.slane %v2971, 5
      %v2974 = vor.u32 %v2970, %v2973
      %v2975 = vrot.slane %v2974, 4
      %v2977 = vshll.u32 %v2898, 16
      %v2979 = vrot.slane %v2977, 5
      %v2980 = vsel %vm276, %v2975, %v2979
      %v2981 = vshrl.u32 %v2898, 16
      %v2983 = vrot.slane %v2981, 4
      %v2984 = vor.u32 %v2983, %v2979
      %v2985 = vrot.slane %v2984, 4
      %v2987 = vshll.u32 %v2928, 16
      %v2989 = vrot.slane %v2987, 5
      %v2990 = vsel %vm276, %v2985, %v2989
      %v2992 = vshrl.u32 %v2899, 16
      %v2994 = vrot.slane %v2992, 4
      %v2995 = vshll.u32 %v2899, 16
      %v2997 = vrot.slane %v2995, 5
      %v2998 = vor.u32 %v2994, %v2997
      %v2999 = vrot.slane %v2998, 4
      %v3001 = vshll.u32 %v2900, 16
      %v3003 = vrot.slane %v3001, 5
      %v3004 = vsel %vm276, %v2999, %v3003
      %v3005 = vshrl.u32 %v2900, 16
      %v3007 = vrot.slane %v3005, 4
      %v3008 = vor.u32 %v3007, %v3003
      %v3009 = vrot.slane %v3008, 4
      %v3011 = vshll.u32 %v2929, 16
      %v3013 = vrot.slane %v3011, 5
      %v3014 = vsel %vm276, %v3009, %v3013
      %v3016 = vshrl.u32 %v2901, 16
      %v3018 = vrot.slane %v3016, 4
      %v3019 = vshll.u32 %v2901, 16
      %v3021 = vrot.slane %v3019, 5
      %v3022 = vor.u32 %v3018, %v3021
      %v3023 = vrot.slane %v3022, 4
      %v3025 = vshll.u32 %v2902, 16
      %v3027 = vrot.slane %v3025, 5
      %v3028 = vsel %vm276, %v3023, %v3027
      %v3029 = vshrl.u32 %v2902, 16
      %v3031 = vrot.slane %v3029, 4
      %v3032 = vor.u32 %v3031, %v3027
      %v3033 = vrot.slane %v3032, 4
      %v3035 = vshll.u32 %v2930, 16
      %v3037 = vrot.slane %v3035, 5
      %v3038 = vsel %vm276, %v3033, %v3037
      %v3040 = vshrl.u32 %v2903, 16
      %v3042 = vrot.slane %v3040, 4
      %v3043 = vshll.u32 %v2903, 16
      %v3045 = vrot.slane %v3043, 5
      %v3046 = vor.u32 %v3042, %v3045
      %v3047 = vrot.slane %v3046, 4
      %v3049 = vshll.u32 %v2904, 16
      %v3051 = vrot.slane %v3049, 5
      %v3052 = vsel %vm276, %v3047, %v3051
      %v3053 = vshrl.u32 %v2904, 16
      %v3055 = vrot.slane %v3053, 4
      %v3056 = vor.u32 %v3055, %v3051
      %v3057 = vrot.slane %v3056, 4
      %v3059 = vshll.u32 %v2931, 16
      %v3061 = vrot.slane %v3059, 5
      %v3062 = vsel %vm276, %v3057, %v3061
      %v3064 = vshrl.u32 %v2905, 16
      %v3066 = vrot.slane %v3064, 4
      %v3067 = vshll.u32 %v2905, 16
      %v3069 = vrot.slane %v3067, 5
      %v3070 = vor.u32 %v3066, %v3069
      %v3071 = vrot.slane %v3070, 4
      %v3073 = vshll.u32 %v2906, 16
      %v3075 = vrot.slane %v3073, 5
      %v3076 = vsel %vm276, %v3071, %v3075
      %v3077 = vshrl.u32 %v2906, 16
      %v3079 = vrot.slane %v3077, 4
      %v3080 = vor.u32 %v3079, %v3075
      %v3081 = vrot.slane %v3080, 4
      %v3083 = vshll.u32 %v2932, 16
      %v3085 = vrot.slane %v3083, 5
      %v3086 = vsel %vm276, %v3081, %v3085
      %v3088 = vshrl.u32 %v2907, 16
      %v3090 = vrot.slane %v3088, 4
      %v3091 = vshll.u32 %v2907, 16
      %v3093 = vrot.slane %v3091, 5
      %v3094 = vor.u32 %v3090, %v3093
      %v3095 = vrot.slane %v3094, 4
      %v3097 = vshll.u32 %v2908, 16
      %v3099 = vrot.slane %v3097, 5
      %v3100 = vsel %vm276, %v3095, %v3099
      %v3101 = vshrl.u32 %v2908, 16
      %v3103 = vrot.slane %v3101, 4
      %v3104 = vor.u32 %v3103, %v3099
      %v3105 = vrot.slane %v3104, 4
      %v3107 = vshll.u32 %v2933, 16
      %v3109 = vrot.slane %v3107, 5
      %v3110 = vsel %vm276, %v3105, %v3109
      %v3112 = vshrl.u32 %v2909, 16
      %v3114 = vrot.slane %v3112, 4
      %v3115 = vshll.u32 %v2909, 16
      %v3117 = vrot.slane %v3115, 5
      %v3118 = vor.u32 %v3114, %v3117
      %v3119 = vrot.slane %v3118, 4
      %v3121 = vshll.u32 %v2910, 16
      %v3123 = vrot.slane %v3121, 5
      %v3124 = vsel %vm276, %v3119, %v3123
      %v3125 = vshrl.u32 %v2910, 16
      %v3127 = vrot.slane %v3125, 4
      %v3128 = vor.u32 %v3127, %v3123
      %v3129 = vrot.slane %v3128, 4
      %v3131 = vshll.u32 %v2934, 16
      %v3133 = vrot.slane %v3131, 5
      %v3134 = vsel %vm276, %v3129, %v3133
      %v3136 = vshrl.u32 %v2911, 16
      %v3138 = vrot.slane %v3136, 4
      %v3139 = vshll.u32 %v2911, 16
      %v3141 = vrot.slane %v3139, 5
      %v3142 = vor.u32 %v3138, %v3141
      %v3143 = vrot.slane %v3142, 4
      %v3145 = vshll.u32 %v2912, 16
      %v3147 = vrot.slane %v3145, 5
      %v3148 = vsel %vm276, %v3143, %v3147
      %v3149 = vshrl.u32 %v2912, 16
      %v3151 = vrot.slane %v3149, 4
      %v3152 = vor.u32 %v3151, %v3147
      %v3153 = vrot.slane %v3152, 4
      %v3155 = vshll.u32 %v2935, 16
      %v3157 = vrot.slane %v3155, 5
      %v3158 = vsel %vm276, %v3153, %v3157
      %v3160 = vshrl.u32 %v2913, 16
      %v3162 = vrot.slane %v3160, 4
      %v3163 = vshll.u32 %v2913, 16
      %v3165 = vrot.slane %v3163, 5
      %v3166 = vor.u32 %v3162, %v3165
      %v3167 = vrot.slane %v3166, 4
      %v3169 = vshll.u32 %v2914, 16
      %v3171 = vrot.slane %v3169, 5
      %v3172 = vsel %vm276, %v3167, %v3171
      %v3173 = vshrl.u32 %v2914, 16
      %v3175 = vrot.slane %v3173, 4
      %v3176 = vor.u32 %v3175, %v3171
      %v3177 = vrot.slane %v3176, 4
      %v3179 = vshll.u32 %v2936, 16
      %v3181 = vrot.slane %v3179, 5
      %v3182 = vsel %vm276, %v3177, %v3181
      %v3184 = vshrl.u32 %v2915, 16
      %v3186 = vrot.slane %v3184, 4
      %v3187 = vshll.u32 %v2915, 16
      %v3189 = vrot.slane %v3187, 5
      %v3190 = vor.u32 %v3186, %v3189
      %v3191 = vrot.slane %v3190, 4
      %v3193 = vshll.u32 %v2916, 16
      %v3195 = vrot.slane %v3193, 5
      %v3196 = vsel %vm276, %v3191, %v3195
      %v3197 = vshrl.u32 %v2916, 16
      %v3199 = vrot.slane %v3197, 4
      %v3200 = vor.u32 %v3199, %v3195
      %v3201 = vrot.slane %v3200, 4
      %v3203 = vshll.u32 %v2937, 16
      %v3205 = vrot.slane %v3203, 5
      %v3206 = vsel %vm276, %v3201, %v3205
      %v3208 = vshrl.u32 %v2917, 16
      %v3210 = vrot.slane %v3208, 4
      %v3211 = vshll.u32 %v2917, 16
      %v3213 = vrot.slane %v3211, 5
      %v3214 = vor.u32 %v3210, %v3213
      %v3215 = vrot.slane %v3214, 4
      %v3217 = vshll.u32 %v2918, 16
      %v3219 = vrot.slane %v3217, 5
      %v3220 = vsel %vm276, %v3215, %v3219
      %v3221 = vshrl.u32 %v2918, 16
      %v3223 = vrot.slane %v3221, 4
      %v3224 = vor.u32 %v3223, %v3219
      %v3225 = vrot.slane %v3224, 4
      %v3227 = vshll.u32 %v2938, 16
      %v3229 = vrot.slane %v3227, 5
      %v3230 = vsel %vm276, %v3225, %v3229
      %v3232 = vshrl.u32 %v2919, 16
      %v3234 = vrot.slane %v3232, 4
      %v3235 = vshll.u32 %v2919, 16
      %v3237 = vrot.slane %v3235, 5
      %v3238 = vor.u32 %v3234, %v3237
      %v3239 = vrot.slane %v3238, 4
      %v3241 = vshll.u32 %v2920, 16
      %v3243 = vrot.slane %v3241, 5
      %v3244 = vsel %vm276, %v3239, %v3243
      %v3245 = vshrl.u32 %v2920, 16
      %v3247 = vrot.slane %v3245, 4
      %v3248 = vor.u32 %v3247, %v3243
      %v3249 = vrot.slane %v3248, 4
      %v3251 = vshll.u32 %v2939, 16
      %v3253 = vrot.slane %v3251, 5
      %v3254 = vsel %vm276, %v3249, %v3253
      %v3256 = vshrl.u32 %v2921, 16
      %v3258 = vrot.slane %v3256, 4
      %v3259 = vshll.u32 %v2921, 16
      %v3261 = vrot.slane %v3259, 5
      %v3262 = vor.u32 %v3258, %v3261
      %v3263 = vrot.slane %v3262, 4
      %v3265 = vshll.u32 %v2922, 16
      %v3267 = vrot.slane %v3265, 5
      %v3268 = vsel %vm276, %v3263, %v3267
      %v3269 = vshrl.u32 %v2922, 16
      %v3271 = vrot.slane %v3269, 4
      %v3272 = vor.u32 %v3271, %v3267
      %v3273 = vrot.slane %v3272, 4
      %v3275 = vshll.u32 %v2940, 16
      %v3277 = vrot.slane %v3275, 5
      %v3278 = vsel %vm276, %v3273, %v3277
      %v3280 = vshrl.u32 %v2923, 16
      %v3282 = vrot.slane %v3280, 4
      %v3283 = vshll.u32 %v2923, 16
      %v3285 = vrot.slane %v3283, 5
      %v3286 = vor.u32 %v3282, %v3285
      %v3287 = vrot.slane %v3286, 4
      %v3289 = vshll.u32 %v2924, 16
      %v3291 = vrot.slane %v3289, 5
      %v3292 = vsel %vm276, %v3287, %v3291
      %v3293 = vshrl.u32 %v2924, 16
      %v3295 = vrot.slane %v3293, 4
      %v3296 = vor.u32 %v3295, %v3291
      %v3297 = vrot.slane %v3296, 4
      %v3299 = vshll.u32 %v2941, 16
      %v3301 = vrot.slane %v3299, 5
      %v3302 = vsel %vm276, %v3297, %v3301
      %v3304 = vshrl.u32 %v2925, 16
      %v3306 = vrot.slane %v3304, 4
      %v3307 = vshll.u32 %v2925, 16
      %v3309 = vrot.slane %v3307, 5
      %v3310 = vor.u32 %v3306, %v3309
      %v3311 = vrot.slane %v3310, 4
      %v3313 = vshll.u32 %v2926, 16
      %v3315 = vrot.slane %v3313, 5
      %v3316 = vsel %vm276, %v3311, %v3315
      %v3317 = vshrl.u32 %v2926, 16
      %v3319 = vrot.slane %v3317, 4
      %v3320 = vor.u32 %v3319, %v3315
      %v3321 = vrot.slane %v3320, 4
      %v3323 = vshll.u32 %v2942, 16
      %v3325 = vrot.slane %v3323, 5
      %v3326 = vsel %vm276, %v3321, %v3325
      %v3327 = vld [vmem:[%s2894] sm:$0xe]
      %v3328 = vld [vmem:[%s2894 + $0xc] sm:$0xe]
      %v3329 = vld [vmem:[%s2894 + $0x18] sm:$0xe]
      %v3330 = vld [vmem:[%s2894 + $0x24] sm:$0xe]
      %v3331 = vld [vmem:[%s2894 + $0x30] sm:$0xe]
      %v3332 = vld [vmem:[%s2894 + $0x3c] sm:$0xe]
      %v3333 = vld [vmem:[%s2894 + $0x48] sm:$0xe]
      %v3334 = vld [vmem:[%s2894 + $0x54] sm:$0xe]
      %v3335 = vld [vmem:[%s2894 + $0x60] sm:$0xe]
      %v3336 = vld [vmem:[%s2894 + $0x6c] sm:$0xe]
      %v3337 = vld [vmem:[%s2894 + $0x78] sm:$0xe]
      %v3338 = vld [vmem:[%s2894 + $0x84] sm:$0xe]
      %v3339 = vld [vmem:[%s2894 + $0x90] sm:$0xe]
      %v3340 = vld [vmem:[%s2894 + $0x9c] sm:$0xe]
      %v3341 = vld [vmem:[%s2894 + $0xa8] sm:$0xe]
      %v3342 = vld [vmem:[%s2894 + $0xb4] sm:$0xe]
      %v3391 = vrot.slane %v3327, 5
      %v3392 = vrot.slane %v3391, 4
      %v3393 = vrot.slane %v2896, 5
      %v3394 = vsel %vm727, %v3392, %v3393
      %v3395 = vrot.slane %v3393, 4
      %v3396 = vrot.slane %v2927, 5
      %v3397 = vsel %vm727, %v3395, %v3396
      %v3398 = vrot.slane %v3328, 5
      %v3399 = vrot.slane %v3398, 4
      %v3400 = vrot.slane %v2898, 5
      %v3401 = vsel %vm727, %v3399, %v3400
      %v3402 = vrot.slane %v3400, 4
      %v3403 = vrot.slane %v2928, 5
      %v3404 = vsel %vm727, %v3402, %v3403
      %v3405 = vrot.slane %v3329, 5
      %v3406 = vrot.slane %v3405, 4
      %v3407 = vrot.slane %v2900, 5
      %v3408 = vsel %vm727, %v3406, %v3407
      %v3409 = vrot.slane %v3407, 4
      %v3410 = vrot.slane %v2929, 5
      %v3411 = vsel %vm727, %v3409, %v3410
      %v3412 = vrot.slane %v3330, 5
      %v3413 = vrot.slane %v3412, 4
      %v3414 = vrot.slane %v2902, 5
      %v3415 = vsel %vm727, %v3413, %v3414
      %v3416 = vrot.slane %v3414, 4
      %v3417 = vrot.slane %v2930, 5
      %v3418 = vsel %vm727, %v3416, %v3417
      %v3419 = vrot.slane %v3331, 5
      %v3420 = vrot.slane %v3419, 4
      %v3421 = vrot.slane %v2904, 5
      %v3422 = vsel %vm727, %v3420, %v3421
      %v3423 = vrot.slane %v3421, 4
      %v3424 = vrot.slane %v2931, 5
      %v3425 = vsel %vm727, %v3423, %v3424
      %v3426 = vrot.slane %v3332, 5
      %v3427 = vrot.slane %v3426, 4
      %v3428 = vrot.slane %v2906, 5
      %v3429 = vsel %vm727, %v3427, %v3428
      %v3430 = vrot.slane %v3428, 4
      %v3431 = vrot.slane %v2932, 5
      %v3432 = vsel %vm727, %v3430, %v3431
      %v3433 = vrot.slane %v3333, 5
      %v3434 = vrot.slane %v3433, 4
      %v3435 = vrot.slane %v2908, 5
      %v3436 = vsel %vm727, %v3434, %v3435
      %v3437 = vrot.slane %v3435, 4
      %v3438 = vrot.slane %v2933, 5
      %v3439 = vsel %vm727, %v3437, %v3438
      %v3440 = vrot.slane %v3334, 5
      %v3441 = vrot.slane %v3440, 4
      %v3442 = vrot.slane %v2910, 5
      %v3443 = vsel %vm727, %v3441, %v3442
      %v3444 = vrot.slane %v3442, 4
      %v3445 = vrot.slane %v2934, 5
      %v3446 = vsel %vm727, %v3444, %v3445
      %v3447 = vrot.slane %v3335, 5
      %v3448 = vrot.slane %v3447, 4
      %v3449 = vrot.slane %v2912, 5
      %v3450 = vsel %vm727, %v3448, %v3449
      %v3451 = vrot.slane %v3449, 4
      %v3452 = vrot.slane %v2935, 5
      %v3453 = vsel %vm727, %v3451, %v3452
      %v3454 = vrot.slane %v3336, 5
      %v3455 = vrot.slane %v3454, 4
      %v3456 = vrot.slane %v2914, 5
      %v3457 = vsel %vm727, %v3455, %v3456
      %v3458 = vrot.slane %v3456, 4
      %v3459 = vrot.slane %v2936, 5
      %v3460 = vsel %vm727, %v3458, %v3459
      %v3461 = vrot.slane %v3337, 5
      %v3462 = vrot.slane %v3461, 4
      %v3463 = vrot.slane %v2916, 5
      %v3464 = vsel %vm727, %v3462, %v3463
      %v3465 = vrot.slane %v3463, 4
      %v3466 = vrot.slane %v2937, 5
      %v3467 = vsel %vm727, %v3465, %v3466
      %v3468 = vrot.slane %v3338, 5
      %v3469 = vrot.slane %v3468, 4
      %v3470 = vrot.slane %v2918, 5
      %v3471 = vsel %vm727, %v3469, %v3470
      %v3472 = vrot.slane %v3470, 4
      %v3473 = vrot.slane %v2938, 5
      %v3474 = vsel %vm727, %v3472, %v3473
      %v3475 = vrot.slane %v3339, 5
      %v3476 = vrot.slane %v3475, 4
      %v3477 = vrot.slane %v2920, 5
      %v3478 = vsel %vm727, %v3476, %v3477
      %v3479 = vrot.slane %v3477, 4
      %v3480 = vrot.slane %v2939, 5
      %v3481 = vsel %vm727, %v3479, %v3480
      %v3482 = vrot.slane %v3340, 5
      %v3483 = vrot.slane %v3482, 4
      %v3484 = vrot.slane %v2922, 5
      %v3485 = vsel %vm727, %v3483, %v3484
      %v3486 = vrot.slane %v3484, 4
      %v3487 = vrot.slane %v2940, 5
      %v3488 = vsel %vm727, %v3486, %v3487
      %v3489 = vrot.slane %v3341, 5
      %v3490 = vrot.slane %v3489, 4
      %v3491 = vrot.slane %v2924, 5
      %v3492 = vsel %vm727, %v3490, %v3491
      %v3493 = vrot.slane %v3491, 4
      %v3494 = vrot.slane %v2941, 5
      %v3495 = vsel %vm727, %v3493, %v3494
      %v3496 = vrot.slane %v3342, 5
      %v3497 = vrot.slane %v3496, 4
      %v3498 = vrot.slane %v2926, 5
      %v3499 = vsel %vm727, %v3497, %v3498
      %v3500 = vrot.slane %v3498, 4
      %v3501 = vrot.slane %v2942, 5
      %v3502 = vsel %vm727, %v3500, %v3501
      %v3519 = vunpack.c.l.b16 %v2895
      %v3520 = vunpack.c.l.b16 %v2896
      %v3521 = vunpack.c.l.b16 %v2897
      %v3522 = vunpack.c.l.b16 %v2898
      %v3523 = vunpack.c.l.b16 %v2899
      %v3524 = vunpack.c.l.b16 %v2900
      %v3525 = vunpack.c.l.b16 %v2901
      %v3526 = vunpack.c.l.b16 %v2902
      %v3527 = vunpack.c.l.b16 %v2903
      %v3528 = vunpack.c.l.b16 %v2904
      %v3529 = vunpack.c.l.b16 %v2905
      %v3530 = vunpack.c.l.b16 %v2906
      %v3531 = vunpack.c.l.b16 %v2907
      %v3532 = vunpack.c.l.b16 %v2908
      %v3533 = vunpack.c.l.b16 %v2909
      %v3534 = vunpack.c.l.b16 %v2910
      %v3535 = vunpack.c.l.b16 %v2911
      %v3536 = vunpack.c.l.b16 %v2912
      %v3537 = vunpack.c.l.b16 %v2913
      %v3538 = vunpack.c.l.b16 %v2914
      %v3539 = vunpack.c.l.b16 %v2915
      %v3540 = vunpack.c.l.b16 %v2916
      %v3541 = vunpack.c.l.b16 %v2917
      %v3542 = vunpack.c.l.b16 %v2918
      %v3543 = vunpack.c.l.b16 %v2919
      %v3544 = vunpack.c.l.b16 %v2920
      %v3545 = vunpack.c.l.b16 %v2921
      %v3546 = vunpack.c.l.b16 %v2922
      %v3547 = vunpack.c.l.b16 %v2923
      %v3548 = vunpack.c.l.b16 %v2924
      %v3549 = vunpack.c.l.b16 %v2925
      %v3550 = vunpack.c.l.b16 %v2926
      %v3551 = vpack.c.b16 %v3520, %v3519
      %v3552 = vpack.c.b16 %v3522, %v3521
      %v3553 = vpack.c.b16 %v3524, %v3523
      %v3554 = vpack.c.b16 %v3526, %v3525
      %v3555 = vpack.c.b16 %v3528, %v3527
      %v3556 = vpack.c.b16 %v3530, %v3529
      %v3557 = vpack.c.b16 %v3532, %v3531
      %v3558 = vpack.c.b16 %v3534, %v3533
      %v3559 = vpack.c.b16 %v3536, %v3535
      %v3560 = vpack.c.b16 %v3538, %v3537
      %v3561 = vpack.c.b16 %v3540, %v3539
      %v3562 = vpack.c.b16 %v3542, %v3541
      %v3563 = vpack.c.b16 %v3544, %v3543
      %v3564 = vpack.c.b16 %v3546, %v3545
      %v3565 = vpack.c.b16 %v3548, %v3547
      %v3566 = vpack.c.b16 %v3550, %v3549
      %v3583 = vunpack.c.l.b16 %v2956
      %v3584 = vunpack.c.l.b16 %v2966
      %v3585 = vunpack.c.l.b16 %v2980
      %v3586 = vunpack.c.l.b16 %v2990
      %v3587 = vunpack.c.l.b16 %v3004
      %v3588 = vunpack.c.l.b16 %v3014
      %v3589 = vunpack.c.l.b16 %v3028
      %v3590 = vunpack.c.l.b16 %v3038
      %v3591 = vunpack.c.l.b16 %v3052
      %v3592 = vunpack.c.l.b16 %v3062
      %v3593 = vunpack.c.l.b16 %v3076
      %v3594 = vunpack.c.l.b16 %v3086
      %v3595 = vunpack.c.l.b16 %v3100
      %v3596 = vunpack.c.l.b16 %v3110
      %v3597 = vunpack.c.l.b16 %v3124
      %v3598 = vunpack.c.l.b16 %v3134
      %v3599 = vunpack.c.l.b16 %v3148
      %v3600 = vunpack.c.l.b16 %v3158
      %v3601 = vunpack.c.l.b16 %v3172
      %v3602 = vunpack.c.l.b16 %v3182
      %v3603 = vunpack.c.l.b16 %v3196
      %v3604 = vunpack.c.l.b16 %v3206
      %v3605 = vunpack.c.l.b16 %v3220
      %v3606 = vunpack.c.l.b16 %v3230
      %v3607 = vunpack.c.l.b16 %v3244
      %v3608 = vunpack.c.l.b16 %v3254
      %v3609 = vunpack.c.l.b16 %v3268
      %v3610 = vunpack.c.l.b16 %v3278
      %v3611 = vunpack.c.l.b16 %v3292
      %v3612 = vunpack.c.l.b16 %v3302
      %v3613 = vunpack.c.l.b16 %v3316
      %v3614 = vunpack.c.l.b16 %v3326
      %v3615 = vpack.c.b16 %v3584, %v3583
      %v3616 = vpack.c.b16 %v3586, %v3585
      %v3617 = vpack.c.b16 %v3588, %v3587
      %v3618 = vpack.c.b16 %v3590, %v3589
      %v3619 = vpack.c.b16 %v3592, %v3591
      %v3620 = vpack.c.b16 %v3594, %v3593
      %v3621 = vpack.c.b16 %v3596, %v3595
      %v3622 = vpack.c.b16 %v3598, %v3597
      %v3623 = vpack.c.b16 %v3600, %v3599
      %v3624 = vpack.c.b16 %v3602, %v3601
      %v3625 = vpack.c.b16 %v3604, %v3603
      %v3626 = vpack.c.b16 %v3606, %v3605
      %v3627 = vpack.c.b16 %v3608, %v3607
      %v3628 = vpack.c.b16 %v3610, %v3609
      %v3629 = vpack.c.b16 %v3612, %v3611
      %v3630 = vpack.c.b16 %v3614, %v3613
      %v3647 = vunpack.c.l.b16 %v3394
      %v3648 = vunpack.c.l.b16 %v3397
      %v3649 = vunpack.c.l.b16 %v3401
      %v3650 = vunpack.c.l.b16 %v3404
      %v3651 = vunpack.c.l.b16 %v3408
      %v3652 = vunpack.c.l.b16 %v3411
      %v3653 = vunpack.c.l.b16 %v3415
      %v3654 = vunpack.c.l.b16 %v3418
      %v3655 = vunpack.c.l.b16 %v3422
      %v3656 = vunpack.c.l.b16 %v3425
      %v3657 = vunpack.c.l.b16 %v3429
      %v3658 = vunpack.c.l.b16 %v3432
      %v3659 = vunpack.c.l.b16 %v3436
      %v3660 = vunpack.c.l.b16 %v3439
      %v3661 = vunpack.c.l.b16 %v3443
      %v3662 = vunpack.c.l.b16 %v3446
      %v3663 = vunpack.c.l.b16 %v3450
      %v3664 = vunpack.c.l.b16 %v3453
      %v3665 = vunpack.c.l.b16 %v3457
      %v3666 = vunpack.c.l.b16 %v3460
      %v3667 = vunpack.c.l.b16 %v3464
      %v3668 = vunpack.c.l.b16 %v3467
      %v3669 = vunpack.c.l.b16 %v3471
      %v3670 = vunpack.c.l.b16 %v3474
      %v3671 = vunpack.c.l.b16 %v3478
      %v3672 = vunpack.c.l.b16 %v3481
      %v3673 = vunpack.c.l.b16 %v3485
      %v3674 = vunpack.c.l.b16 %v3488
      %v3675 = vunpack.c.l.b16 %v3492
      %v3676 = vunpack.c.l.b16 %v3495
      %v3677 = vunpack.c.l.b16 %v3499
      %v3678 = vunpack.c.l.b16 %v3502
      %v3679 = vpack.c.b16 %v3648, %v3647
      %v3680 = vpack.c.b16 %v3650, %v3649
      %v3681 = vpack.c.b16 %v3652, %v3651
      %v3682 = vpack.c.b16 %v3654, %v3653
      %v3683 = vpack.c.b16 %v3656, %v3655
      %v3684 = vpack.c.b16 %v3658, %v3657
      %v3685 = vpack.c.b16 %v3660, %v3659
      %v3686 = vpack.c.b16 %v3662, %v3661
      %v3687 = vpack.c.b16 %v3664, %v3663
      %v3688 = vpack.c.b16 %v3666, %v3665
      %v3689 = vpack.c.b16 %v3668, %v3667
      %v3690 = vpack.c.b16 %v3670, %v3669
      %v3691 = vpack.c.b16 %v3672, %v3671
      %v3692 = vpack.c.b16 %v3674, %v3673
      %v3693 = vpack.c.b16 %v3676, %v3675
      %v3694 = vpack.c.b16 %v3678, %v3677
      %s3711 = scalar_lea.vmem %s1, 384
      %v3712 = vld [vmem:[%s3711] sm:$0xf]
      %v3713 = vld [vmem:[%s3711 + $0x4] sm:$0xf]
      %v3714 = vld [vmem:[%s3711 + $0x8] sm:$0xf]
      %v3715 = vld [vmem:[%s3711 + $0xc] sm:$0xf]
      %v3716 = vld [vmem:[%s3711 + $0x10] sm:$0xf]
      %v3717 = vld [vmem:[%s3711 + $0x14] sm:$0xf]
      %v3718 = vld [vmem:[%s3711 + $0x18] sm:$0xf]
      %v3719 = vld [vmem:[%s3711 + $0x1c] sm:$0xf]
      %v3720 = vld [vmem:[%s3711 + $0x20] sm:$0xf]
      %v3721 = vld [vmem:[%s3711 + $0x24] sm:$0xf]
      %v3722 = vld [vmem:[%s3711 + $0x28] sm:$0xf]
      %v3723 = vld [vmem:[%s3711 + $0x2c] sm:$0xf]
      %v3724 = vld [vmem:[%s3711 + $0x30] sm:$0xf]
      %v3725 = vld [vmem:[%s3711 + $0x34] sm:$0xf]
      %v3726 = vld [vmem:[%s3711 + $0x38] sm:$0xf]
      %v3727 = vld [vmem:[%s3711 + $0x3c] sm:$0xf]
      %v3728 = vld [vmem:[%s3711 + $0x40] sm:$0xf]
      %v3729 = vld [vmem:[%s3711 + $0x44] sm:$0xf]
      %v3730 = vld [vmem:[%s3711 + $0x48] sm:$0xf]
      %v3731 = vld [vmem:[%s3711 + $0x4c] sm:$0xf]
      %v3732 = vld [vmem:[%s3711 + $0x50] sm:$0xf]
      %v3733 = vld [vmem:[%s3711 + $0x54] sm:$0xf]
      %v3734 = vld [vmem:[%s3711 + $0x58] sm:$0xf]
      %v3735 = vld [vmem:[%s3711 + $0x5c] sm:$0xf]
      %v3736 = vld [vmem:[%s3711 + $0x60] sm:$0xf]
      %v3737 = vld [vmem:[%s3711 + $0x64] sm:$0xf]
      %v3738 = vld [vmem:[%s3711 + $0x68] sm:$0xf]
      %v3739 = vld [vmem:[%s3711 + $0x6c] sm:$0xf]
      %v3740 = vld [vmem:[%s3711 + $0x70] sm:$0xf]
      %v3741 = vld [vmem:[%s3711 + $0x74] sm:$0xf]
      %v3742 = vld [vmem:[%s3711 + $0x78] sm:$0xf]
      %v3743 = vld [vmem:[%s3711 + $0x7c] sm:$0xf]
      %v3744 = vld [vmem:[%s3711 + $0x80] sm:$0xf]
      %v3745 = vld [vmem:[%s3711 + $0x84] sm:$0xf]
      %v3746 = vld [vmem:[%s3711 + $0x88] sm:$0xf]
      %v3747 = vld [vmem:[%s3711 + $0x8c] sm:$0xf]
      %v3748 = vld [vmem:[%s3711 + $0x90] sm:$0xf]
      %v3749 = vld [vmem:[%s3711 + $0x94] sm:$0xf]
      %v3750 = vld [vmem:[%s3711 + $0x98] sm:$0xf]
      %v3751 = vld [vmem:[%s3711 + $0x9c] sm:$0xf]
      %v3752 = vld [vmem:[%s3711 + $0xa0] sm:$0xf]
      %v3753 = vld [vmem:[%s3711 + $0xa4] sm:$0xf]
      %v3754 = vld [vmem:[%s3711 + $0xa8] sm:$0xf]
      %v3755 = vld [vmem:[%s3711 + $0xac] sm:$0xf]
      %v3756 = vld [vmem:[%s3711 + $0xb0] sm:$0xf]
      %v3757 = vld [vmem:[%s3711 + $0xb4] sm:$0xf]
      %v3758 = vld [vmem:[%s3711 + $0xb8] sm:$0xf]
      %v3759 = vld [vmem:[%s3711 + $0xbc] sm:$0xf]
      %v3808 = vunpack.c.l.b16 %v3712
      %v3809 = vunpack.c.l.b16 %v3713
      %v3810 = vunpack.c.l.b16 %v3714
      %v3811 = vunpack.c.l.b16 %v3715
      %v3812 = vunpack.c.l.b16 %v3716
      %v3813 = vunpack.c.l.b16 %v3717
      %v3814 = vunpack.c.l.b16 %v3718
      %v3815 = vunpack.c.l.b16 %v3719
      %v3816 = vunpack.c.l.b16 %v3720
      %v3817 = vunpack.c.l.b16 %v3721
      %v3818 = vunpack.c.l.b16 %v3722
      %v3819 = vunpack.c.l.b16 %v3723
      %v3820 = vunpack.c.l.b16 %v3724
      %v3821 = vunpack.c.l.b16 %v3725
      %v3822 = vunpack.c.l.b16 %v3726
      %v3823 = vunpack.c.l.b16 %v3727
      %v3824 = vunpack.c.l.b16 %v3728
      %v3825 = vunpack.c.l.b16 %v3729
      %v3826 = vunpack.c.l.b16 %v3730
      %v3827 = vunpack.c.l.b16 %v3731
      %v3828 = vunpack.c.l.b16 %v3732
      %v3829 = vunpack.c.l.b16 %v3733
      %v3830 = vunpack.c.l.b16 %v3734
      %v3831 = vunpack.c.l.b16 %v3735
      %v3832 = vunpack.c.l.b16 %v3736
      %v3833 = vunpack.c.l.b16 %v3737
      %v3834 = vunpack.c.l.b16 %v3738
      %v3835 = vunpack.c.l.b16 %v3739
      %v3836 = vunpack.c.l.b16 %v3740
      %v3837 = vunpack.c.l.b16 %v3741
      %v3838 = vunpack.c.l.b16 %v3742
      %v3839 = vunpack.c.l.b16 %v3743
      %v3840 = vunpack.c.l.b16 %v3744
      %v3841 = vunpack.c.l.b16 %v3745
      %v3842 = vunpack.c.l.b16 %v3746
      %v3843 = vunpack.c.l.b16 %v3747
      %v3844 = vunpack.c.l.b16 %v3748
      %v3845 = vunpack.c.l.b16 %v3749
      %v3846 = vunpack.c.l.b16 %v3750
      %v3847 = vunpack.c.l.b16 %v3751
      %v3848 = vunpack.c.l.b16 %v3752
      %v3849 = vunpack.c.l.b16 %v3753
      %v3850 = vunpack.c.l.b16 %v3754
      %v3851 = vunpack.c.l.b16 %v3755
      %v3852 = vunpack.c.l.b16 %v3756
      %v3853 = vunpack.c.l.b16 %v3757
      %v3854 = vunpack.c.l.b16 %v3758
      %v3855 = vunpack.c.l.b16 %v3759
      %v3856 = vpack.c.b16 %v3809, %v3808
      %v3857 = vpack.c.b16 %v3811, %v3810
      %v3858 = vpack.c.b16 %v3813, %v3812
      %v3859 = vpack.c.b16 %v3815, %v3814
      %v3860 = vpack.c.b16 %v3817, %v3816
      %v3861 = vpack.c.b16 %v3819, %v3818
      %v3862 = vpack.c.b16 %v3821, %v3820
      %v3863 = vpack.c.b16 %v3823, %v3822
      %v3864 = vpack.c.b16 %v3825, %v3824
      %v3865 = vpack.c.b16 %v3827, %v3826
      %v3866 = vpack.c.b16 %v3829, %v3828
      %v3867 = vpack.c.b16 %v3831, %v3830
      %v3868 = vpack.c.b16 %v3833, %v3832
      %v3869 = vpack.c.b16 %v3835, %v3834
      %v3870 = vpack.c.b16 %v3837, %v3836
      %v3871 = vpack.c.b16 %v3839, %v3838
      %v3872 = vpack.c.b16 %v3841, %v3840
      %v3873 = vpack.c.b16 %v3843, %v3842
      %v3874 = vpack.c.b16 %v3845, %v3844
      %v3875 = vpack.c.b16 %v3847, %v3846
      %v3876 = vpack.c.b16 %v3849, %v3848
      %v3877 = vpack.c.b16 %v3851, %v3850
      %v3878 = vpack.c.b16 %v3853, %v3852
      %v3879 = vpack.c.b16 %v3855, %v3854
      %3904 = vmatprep.subr.bf16.mxu0 0
      %3905 = vmatpush1.bf16.msra.mxu0 %v3856
      %3906 = vmatprep.subr.bf16.mxu0 0
      %3907 = vmatpush1.bf16.msra.mxu0 %v3857
      %3908 = vmatprep.subr.bf16.mxu0 0
      %3909 = vmatpush1.bf16.msra.mxu0 %v3858
      %3910 = vmatprep.subr.bf16.mxu0 0
      %3911 = vmatpush1.bf16.msra.mxu0 %v3859
      %3912 = vmatprep.subr.bf16.mxu0 0
      %3913 = vmatpush1.bf16.msra.mxu0 %v3860
      %3914 = vmatprep.subr.bf16.mxu0 0
      %3915 = vmatpush1.bf16.msra.mxu0 %v3861
      %3916 = vmatprep.subr.bf16.mxu0 0
      %3917 = vmatpush1.bf16.msra.mxu0 %v3862
      %3918 = vmatprep.subr.bf16.mxu0 0
      %3919 = vmatpush1.bf16.msra.mxu0 %v3863
      %3920 = vmatprep.subr.bf16.mxu0 0
      %3921 = vmatpush1.bf16.msra.mxu0 %v3864
      %3922 = vmatprep.subr.bf16.mxu0 0
      %3923 = vmatpush1.bf16.msra.mxu0 %v3865
      %3924 = vmatprep.subr.bf16.mxu0 0
      %3925 = vmatpush1.bf16.msra.mxu0 %v3866
      %3926 = vmatprep.subr.bf16.mxu0 0
      %3927 = vmatpush1.bf16.msra.mxu0 %v3867
      %3928 = vmatprep.subr.bf16.mxu0 0
      %3929 = vmatpush1.bf16.msra.mxu0 %v3868
      %3930 = vmatprep.subr.bf16.mxu0 0
      %3931 = vmatpush1.bf16.msra.mxu0 %v3869
      %3932 = vmatprep.subr.bf16.mxu0 0
      %3933 = vmatpush1.bf16.msra.mxu0 %v3870
      %3934 = vmatprep.subr.bf16.mxu0 0
      %3935 = vmatpush1.bf16.msra.mxu0 %v3871
      %3936 = vmatprep.mubr.bf16.mxu0 %v3615
      %3937 = vmatmul.mubr.bf16.gmra.mrb[0].mxu0 %v3551
      %v3938 = vpop.f32.mrb[0].mxu0
      %v3939 = vadd.f32 0.0, %v3938
      %v3940 = vpop.f32.mrb[0].mxu0
      %v3941 = vpop.f32.mrb[0].mxu0
      %v3942 = vadd.f32 0.0, %v3941
      %v3943 = vpop.f32.mrb[0].mxu0
      %3944 = vmatprep.mubr.bf16.mxu0 %v3616
      %3945 = vmatmul.mubr.bf16.gmra.mrb[0].mxu0 %v3552
      %v3946 = vpop.f32.mrb[0].mxu0
      %v3947 = vadd.f32 0.0, %v3946
      %v3948 = vpop.f32.mrb[0].mxu0
      %v3949 = vpop.f32.mrb[0].mxu0
      %v3950 = vadd.f32 0.0, %v3949
      %v3951 = vpop.f32.mrb[0].mxu0
      %3952 = vmatprep.mubr.bf16.mxu0 %v3617
      %3953 = vmatmul.mubr.bf16.gmra.mrb[0].mxu0 %v3553
      %v3954 = vpop.f32.mrb[0].mxu0
      %v3955 = vadd.f32 0.0, %v3954
      %v3956 = vpop.f32.mrb[0].mxu0
      %v3957 = vpop.f32.mrb[0].mxu0
      %v3958 = vadd.f32 0.0, %v3957
      %v3959 = vpop.f32.mrb[0].mxu0
      %3960 = vmatprep.mubr.bf16.mxu0 %v3618
      %3961 = vmatmul.mubr.bf16.gmra.mrb[0].mxu0 %v3554
      %v3962 = vpop.f32.mrb[0].mxu0
      %v3963 = vadd.f32 0.0, %v3962
      %v3964 = vpop.f32.mrb[0].mxu0
      %v3965 = vpop.f32.mrb[0].mxu0
      %v3966 = vadd.f32 0.0, %v3965
      %v3967 = vpop.f32.mrb[0].mxu0
      %3968 = vmatprep.mubr.bf16.mxu0 %v3619
      %3969 = vmatmul.mubr.bf16.gmra.mrb[0].mxu0 %v3555
      %v3970 = vpop.f32.mrb[0].mxu0
      %v3971 = vadd.f32 0.0, %v3970
      %v3972 = vpop.f32.mrb[0].mxu0
      %v3973 = vpop.f32.mrb[0].mxu0
      %v3974 = vadd.f32 0.0, %v3973
      %v3975 = vpop.f32.mrb[0].mxu0
      %3976 = vmatprep.mubr.bf16.mxu0 %v3620
      %3977 = vmatmul.mubr.bf16.gmra.mrb[0].mxu0 %v3556
      %v3978 = vpop.f32.mrb[0].mxu0
      %v3979 = vadd.f32 0.0, %v3978
      %v3980 = vpop.f32.mrb[0].mxu0
      %v3981 = vpop.f32.mrb[0].mxu0
      %v3982 = vadd.f32 0.0, %v3981
      %v3983 = vpop.f32.mrb[0].mxu0
      %3984 = vmatprep.mubr.bf16.mxu0 %v3621
      %3985 = vmatmul.mubr.bf16.gmra.mrb[0].mxu0 %v3557
      %v3986 = vpop.f32.mrb[0].mxu0
      %v3987 = vadd.f32 0.0, %v3986
      %v3988 = vpop.f32.mrb[0].mxu0
      %v3989 = vpop.f32.mrb[0].mxu0
      %v3990 = vadd.f32 0.0, %v3989
      %v3991 = vpop.f32.mrb[0].mxu0
      %3992 = vmatprep.mubr.bf16.mxu0 %v3622
      %3993 = vmatmul.mubr.bf16.gmra.mrb[0].mxu0 %v3558
      %v3994 = vpop.f32.mrb[0].mxu0
      %v3995 = vadd.f32 0.0, %v3994
      %v3996 = vpop.f32.mrb[0].mxu0
      %v3997 = vpop.f32.mrb[0].mxu0
      %v3998 = vadd.f32 0.0, %v3997
      %v3999 = vpop.f32.mrb[0].mxu0
      %4000 = vmatprep.mubr.bf16.mxu0 %v3623
      %4001 = vmatmul.mubr.bf16.gmra.mrb[0].mxu0 %v3559
      %v4002 = vpop.f32.mrb[0].mxu0
      %v4003 = vadd.f32 0.0, %v4002
      %v4004 = vpop.f32.mrb[0].mxu0
      %v4005 = vpop.f32.mrb[0].mxu0
      %v4006 = vadd.f32 0.0, %v4005
      %v4007 = vpop.f32.mrb[0].mxu0
      %4008 = vmatprep.mubr.bf16.mxu0 %v3624
      %4009 = vmatmul.mubr.bf16.gmra.mrb[0].mxu0 %v3560
      %v4010 = vpop.f32.mrb[0].mxu0
      %v4011 = vadd.f32 0.0, %v4010
      %v4012 = vpop.f32.mrb[0].mxu0
      %v4013 = vpop.f32.mrb[0].mxu0
      %v4014 = vadd.f32 0.0, %v4013
      %v4015 = vpop.f32.mrb[0].mxu0
      %4016 = vmatprep.mubr.bf16.mxu0 %v3625
      %4017 = vmatmul.mubr.bf16.gmra.mrb[0].mxu0 %v3561
      %v4018 = vpop.f32.mrb[0].mxu0
      %v4019 = vadd.f32 0.0, %v4018
      %v4020 = vpop.f32.mrb[0].mxu0
      %v4021 = vpop.f32.mrb[0].mxu0
      %v4022 = vadd.f32 0.0, %v4021
      %v4023 = vpop.f32.mrb[0].mxu0
      %4024 = vmatprep.mubr.bf16.mxu0 %v3626
      %4025 = vmatmul.mubr.bf16.gmra.mrb[0].mxu0 %v3562
      %v4026 = vpop.f32.mrb[0].mxu0
      %v4027 = vadd.f32 0.0, %v4026
      %v4028 = vpop.f32.mrb[0].mxu0
      %v4029 = vpop.f32.mrb[0].mxu0
      %v4030 = vadd.f32 0.0, %v4029
      %v4031 = vpop.f32.mrb[0].mxu0
      %4032 = vmatprep.mubr.bf16.mxu0 %v3627
      %4033 = vmatmul.mubr.bf16.gmra.mrb[0].mxu0 %v3563
      %v4034 = vpop.f32.mrb[0].mxu0
      %v4035 = vadd.f32 0.0, %v4034
      %v4036 = vpop.f32.mrb[0].mxu0
      %v4037 = vpop.f32.mrb[0].mxu0
      %v4038 = vadd.f32 0.0, %v4037
      %v4039 = vpop.f32.mrb[0].mxu0
      %4040 = vmatprep.mubr.bf16.mxu0 %v3628
      %4041 = vmatmul.mubr.bf16.gmra.mrb[0].mxu0 %v3564
      %v4042 = vpop.f32.mrb[0].mxu0
      %v4043 = vadd.f32 0.0, %v4042
      %v4044 = vpop.f32.mrb[0].mxu0
      %v4045 = vpop.f32.mrb[0].mxu0
      %v4046 = vadd.f32 0.0, %v4045
      %v4047 = vpop.f32.mrb[0].mxu0
      %4048 = vmatprep.mubr.bf16.mxu0 %v3629
      %4049 = vmatmul.mubr.bf16.gmra.mrb[0].mxu0 %v3565
      %v4050 = vpop.f32.mrb[0].mxu0
      %v4051 = vadd.f32 0.0, %v4050
      %v4052 = vpop.f32.mrb[0].mxu0
      %v4053 = vpop.f32.mrb[0].mxu0
      %v4054 = vadd.f32 0.0, %v4053
      %v4055 = vpop.f32.mrb[0].mxu0
      %4056 = vmatprep.mubr.bf16.mxu0 %v3630
      %4057 = vmatmul.mubr.bf16.gmra.mrb[0].mxu0 %v3566
      %v4058 = vpop.f32.mrb[0].mxu0
      %v4059 = vadd.f32 0.0, %v4058
      %v4060 = vpop.f32.mrb[0].mxu0
      %v4061 = vpop.f32.mrb[0].mxu0
      %v4062 = vadd.f32 0.0, %v4061
      %v4063 = vpop.f32.mrb[0].mxu0
      %4064 = vdwg.mxu0
      %4065 = vmatprep.subr.bf16.mxu0 0
      %4066 = vmatpush1.bf16.msra.mxu0 %v3872
      %4067 = vmatprep.subr.bf16.mxu0 0
      %4068 = vmatpush1.bf16.msra.mxu0 %v3873
      %4069 = vmatprep.subr.bf16.mxu0 0
      %4070 = vmatpush1.bf16.msra.mxu0 %v3874
      %4071 = vmatprep.subr.bf16.mxu0 0
      %4072 = vmatpush1.bf16.msra.mxu0 %v3875
      %4073 = vmatprep.subr.bf16.mxu0 0
      %4074 = vmatpush1.bf16.msra.mxu0 %v3876
      %4075 = vmatprep.subr.bf16.mxu0 0
      %4076 = vmatpush1.bf16.msra.mxu0 %v3877
      %4077 = vmatprep.subr.bf16.mxu0 0
      %4078 = vmatpush1.bf16.msra.mxu0 %v3878
      %4079 = vmatprep.subr.bf16.mxu0 0
      %4080 = vmatpush1.bf16.msra.mxu0 %v3879
      %4081 = vmatprep.subr.bf16.mxu0 0
      %4082 = vmatpush1.bf16.msra.mxu0 0
      %4083 = vmatprep.subr.bf16.mxu0 0
      %4084 = vmatpush1.bf16.msra.mxu0 0
      %4085 = vmatprep.subr.bf16.mxu0 0
      %4086 = vmatpush1.bf16.msra.mxu0 0
      %4087 = vmatprep.subr.bf16.mxu0 0
      %4088 = vmatpush1.bf16.msra.mxu0 0
      %4089 = vmatprep.subr.bf16.mxu0 0
      %4090 = vmatpush1.bf16.msra.mxu0 0
      %4091 = vmatprep.subr.bf16.mxu0 0
      %4092 = vmatpush1.bf16.msra.mxu0 0
      %4093 = vmatprep.subr.bf16.mxu0 0
      %4094 = vmatpush1.bf16.msra.mxu0 0
      %4095 = vmatprep.subr.bf16.mxu0 0
      %4096 = vmatpush1.bf16.msra.mxu0 0
      %4097 = vmatprep.mubr.bf16.mxu0 0
      %4098 = vmatmul.mubr.bf16.gmra.mrb[0].mxu0 %v3679
      %v4099 = vpop.f32.mrb[0].mxu0
      %v4100 = vadd.f32 %v3939, %v4099
      %v4101 = vpop.f32.mrb[0].mxu0
      %v4102 = vpop.f32.mrb[0].mxu0
      %v4103 = vadd.f32 %v3942, %v4102
      %v4104 = vpop.f32.mrb[0].mxu0
      %4105 = vmatprep.mubr.bf16.mxu0 0
      %4106 = vmatmul.mubr.bf16.gmra.mrb[0].mxu0 %v3680
      %v4107 = vpop.f32.mrb[0].mxu0
      %v4108 = vadd.f32 %v3947, %v4107
      %v4109 = vpop.f32.mrb[0].mxu0
      %v4110 = vpop.f32.mrb[0].mxu0
      %v4111 = vadd.f32 %v3950, %v4110
      %v4112 = vpop.f32.mrb[0].mxu0
      %4113 = vmatprep.mubr.bf16.mxu0 0
      %4114 = vmatmul.mubr.bf16.gmra.mrb[0].mxu0 %v3681
      %v4115 = vpop.f32.mrb[0].mxu0
      %v4116 = vadd.f32 %v3955, %v4115
      %v4117 = vpop.f32.mrb[0].mxu0
      %v4118 = vpop.f32.mrb[0].mxu0
      %v4119 = vadd.f32 %v3958, %v4118
      %v4120 = vpop.f32.mrb[0].mxu0
      %4121 = vmatprep.mubr.bf16.mxu0 0
      %4122 = vmatmul.mubr.bf16.gmra.mrb[0].mxu0 %v3682
      %v4123 = vpop.f32.mrb[0].mxu0
      %v4124 = vadd.f32 %v3963, %v4123
      %v4125 = vpop.f32.mrb[0].mxu0
      %v4126 = vpop.f32.mrb[0].mxu0
      %v4127 = vadd.f32 %v3966, %v4126
      %v4128 = vpop.f32.mrb[0].mxu0
      %4129 = vmatprep.mubr.bf16.mxu0 0
      %4130 = vmatmul.mubr.bf16.gmra.mrb[0].mxu0 %v3683
      %v4131 = vpop.f32.mrb[0].mxu0
      %v4132 = vadd.f32 %v3971, %v4131
      %v4133 = vpop.f32.mrb[0].mxu0
      %v4134 = vpop.f32.mrb[0].mxu0
      %v4135 = vadd.f32 %v3974, %v4134
      %v4136 = vpop.f32.mrb[0].mxu0
      %4137 = vmatprep.mubr.bf16.mxu0 0
      %4138 = vmatmul.mubr.bf16.gmra.mrb[0].mxu0 %v3684
      %v4139 = vpop.f32.mrb[0].mxu0
      %v4140 = vadd.f32 %v3979, %v4139
      %v4141 = vpop.f32.mrb[0].mxu0
      %v4142 = vpop.f32.mrb[0].mxu0
      %v4143 = vadd.f32 %v3982, %v4142
      %v4144 = vpop.f32.mrb[0].mxu0
      %4145 = vmatprep.mubr.bf16.mxu0 0
      %4146 = vmatmul.mubr.bf16.gmra.mrb[0].mxu0 %v3685
      %v4147 = vpop.f32.mrb[0].mxu0
      %v4148 = vadd.f32 %v3987, %v4147
      %v4149 = vpop.f32.mrb[0].mxu0
      %v4150 = vpop.f32.mrb[0].mxu0
      %v4151 = vadd.f32 %v3990, %v4150
      %v4152 = vpop.f32.mrb[0].mxu0
      %4153 = vmatprep.mubr.bf16.mxu0 0
      %4154 = vmatmul.mubr.bf16.gmra.mrb[0].mxu0 %v3686
      %v4155 = vpop.f32.mrb[0].mxu0
      %v4156 = vadd.f32 %v3995, %v4155
      %v4157 = vpop.f32.mrb[0].mxu0
      %v4158 = vpop.f32.mrb[0].mxu0
      %v4159 = vadd.f32 %v3998, %v4158
      %v4160 = vpop.f32.mrb[0].mxu0
      %4161 = vmatprep.mubr.bf16.mxu0 0
      %4162 = vmatmul.mubr.bf16.gmra.mrb[0].mxu0 %v3687
      %v4163 = vpop.f32.mrb[0].mxu0
      %v4164 = vadd.f32 %v4003, %v4163
      %v4165 = vpop.f32.mrb[0].mxu0
      %v4166 = vpop.f32.mrb[0].mxu0
      %v4167 = vadd.f32 %v4006, %v4166
      %v4168 = vpop.f32.mrb[0].mxu0
      %4169 = vmatprep.mubr.bf16.mxu0 0
      %4170 = vmatmul.mubr.bf16.gmra.mrb[0].mxu0 %v3688
      %v4171 = vpop.f32.mrb[0].mxu0
      %v4172 = vadd.f32 %v4011, %v4171
      %v4173 = vpop.f32.mrb[0].mxu0
      %v4174 = vpop.f32.mrb[0].mxu0
      %v4175 = vadd.f32 %v4014, %v4174
      %v4176 = vpop.f32.mrb[0].mxu0
      %4177 = vmatprep.mubr.bf16.mxu0 0
      %4178 = vmatmul.mubr.bf16.gmra.mrb[0].mxu0 %v3689
      %v4179 = vpop.f32.mrb[0].mxu0
      %v4180 = vadd.f32 %v4019, %v4179
      %v4181 = vpop.f32.mrb[0].mxu0
      %v4182 = vpop.f32.mrb[0].mxu0
      %v4183 = vadd.f32 %v4022, %v4182
      %v4184 = vpop.f32.mrb[0].mxu0
      %4185 = vmatprep.mubr.bf16.mxu0 0
      %4186 = vmatmul.mubr.bf16.gmra.mrb[0].mxu0 %v3690
      %v4187 = vpop.f32.mrb[0].mxu0
      %v4188 = vadd.f32 %v4027, %v4187
      %v4189 = vpop.f32.mrb[0].mxu0
      %v4190 = vpop.f32.mrb[0].mxu0
      %v4191 = vadd.f32 %v4030, %v4190
      %v4192 = vpop.f32.mrb[0].mxu0
      %4193 = vmatprep.mubr.bf16.mxu0 0
      %4194 = vmatmul.mubr.bf16.gmra.mrb[0].mxu0 %v3691
      %v4195 = vpop.f32.mrb[0].mxu0
      %v4196 = vadd.f32 %v4035, %v4195
      %v4197 = vpop.f32.mrb[0].mxu0
      %v4198 = vpop.f32.mrb[0].mxu0
      %v4199 = vadd.f32 %v4038, %v4198
      %v4200 = vpop.f32.mrb[0].mxu0
      %4201 = vmatprep.mubr.bf16.mxu0 0
      %4202 = vmatmul.mubr.bf16.gmra.mrb[0].mxu0 %v3692
      %v4203 = vpop.f32.mrb[0].mxu0
      %v4204 = vadd.f32 %v4043, %v4203
      %v4205 = vpop.f32.mrb[0].mxu0
      %v4206 = vpop.f32.mrb[0].mxu0
      %v4207 = vadd.f32 %v4046, %v4206
      %v4208 = vpop.f32.mrb[0].mxu0
      %4209 = vmatprep.mubr.bf16.mxu0 0
      %4210 = vmatmul.mubr.bf16.gmra.mrb[0].mxu0 %v3693
      %v4211 = vpop.f32.mrb[0].mxu0
      %v4212 = vadd.f32 %v4051, %v4211
      %v4213 = vpop.f32.mrb[0].mxu0
      %v4214 = vpop.f32.mrb[0].mxu0
      %v4215 = vadd.f32 %v4054, %v4214
      %v4216 = vpop.f32.mrb[0].mxu0
      %4217 = vmatprep.mubr.bf16.mxu0 0
      %4218 = vmatmul.mubr.bf16.gmra.mrb[0].mxu0 %v3694
      %v4219 = vpop.f32.mrb[0].mxu0
      %v4220 = vadd.f32 %v4059, %v4219
      %v4221 = vpop.f32.mrb[0].mxu0
      %v4222 = vpop.f32.mrb[0].mxu0
      %v4223 = vadd.f32 %v4062, %v4222
      %v4224 = vpop.f32.mrb[0].mxu0
      %4225 = vdwg.mxu0
      %v4226 = vadd.f32 %v2768, %v4100
      %v4227 = vadd.f32 %v2771, %v4103
      %v4228 = vadd.f32 %v2776, %v4108
      %v4229 = vadd.f32 %v2779, %v4111
      %v4230 = vadd.f32 %v2784, %v4116
      %v4231 = vadd.f32 %v2787, %v4119
      %v4232 = vadd.f32 %v2792, %v4124
      %v4233 = vadd.f32 %v2795, %v4127
      %v4234 = vadd.f32 %v2800, %v4132
      %v4235 = vadd.f32 %v2803, %v4135
      %v4236 = vadd.f32 %v2808, %v4140
      %v4237 = vadd.f32 %v2811, %v4143
      %v4238 = vadd.f32 %v2816, %v4148
      %v4239 = vadd.f32 %v2819, %v4151
      %v4240 = vadd.f32 %v2824, %v4156
      %v4241 = vadd.f32 %v2827, %v4159
      %v4242 = vadd.f32 %v2832, %v4164
      %v4243 = vadd.f32 %v2835, %v4167
      %v4244 = vadd.f32 %v2840, %v4172
      %v4245 = vadd.f32 %v2843, %v4175
      %v4246 = vadd.f32 %v2848, %v4180
      %v4247 = vadd.f32 %v2851, %v4183
      %v4248 = vadd.f32 %v2856, %v4188
      %v4249 = vadd.f32 %v2859, %v4191
      %v4250 = vadd.f32 %v2864, %v4196
      %v4251 = vadd.f32 %v2867, %v4199
      %v4252 = vadd.f32 %v2872, %v4204
      %v4253 = vadd.f32 %v2875, %v4207
      %v4254 = vadd.f32 %v2880, %v4212
      %v4255 = vadd.f32 %v2883, %v4215
      %v4256 = vadd.f32 %v2888, %v4220
      %v4257 = vadd.f32 %v2891, %v4223
      %v4258 = vld [vmem:[%s2] sm:$0x1]
      %v4260 = vlaneseq
      %v4261 = vshrl.u32 %v4260, 7
      %v4262 = vsub.s32 0, %v4261
      %v4263 = vrot.slane %v4258, %v4262
      %v4265 = vadd.f32 %v4226, %v4263
      %v4266 = vadd.f32 %v4227, %v4263
      %v4267 = vadd.f32 %v4228, %v4263
      %v4268 = vadd.f32 %v4229, %v4263
      %v4269 = vadd.f32 %v4230, %v4263
      %v4270 = vadd.f32 %v4231, %v4263
      %v4271 = vadd.f32 %v4232, %v4263
      %v4272 = vadd.f32 %v4233, %v4263
      %v4273 = vadd.f32 %v4234, %v4263
      %v4274 = vadd.f32 %v4235, %v4263
      %v4275 = vadd.f32 %v4236, %v4263
      %v4276 = vadd.f32 %v4237, %v4263
      %v4277 = vadd.f32 %v4238, %v4263
      %v4278 = vadd.f32 %v4239, %v4263
      %v4279 = vadd.f32 %v4240, %v4263
      %v4280 = vadd.f32 %v4241, %v4263
      %v4281 = vadd.f32 %v4242, %v4263
      %v4282 = vadd.f32 %v4243, %v4263
      %v4283 = vadd.f32 %v4244, %v4263
      %v4284 = vadd.f32 %v4245, %v4263
      %v4285 = vadd.f32 %v4246, %v4263
      %v4286 = vadd.f32 %v4247, %v4263
      %v4287 = vadd.f32 %v4248, %v4263
      %v4288 = vadd.f32 %v4249, %v4263
      %v4289 = vadd.f32 %v4250, %v4263
      %v4290 = vadd.f32 %v4251, %v4263
      %v4291 = vadd.f32 %v4252, %v4263
      %v4292 = vadd.f32 %v4253, %v4263
      %v4293 = vadd.f32 %v4254, %v4263
      %v4294 = vadd.f32 %v4255, %v4263
      %v4295 = vadd.f32 %v4256, %v4263
      %v4296 = vadd.f32 %v4257, %v4263
      %v4297 = vmax.f32 %v4265, 0.0
      %v4298 = vmax.f32 %v4266, 0.0
      %v4299 = vmax.f32 %v4267, 0.0
      %v4300 = vmax.f32 %v4268, 0.0
      %v4301 = vmax.f32 %v4269, 0.0
      %v4302 = vmax.f32 %v4270, 0.0
      %v4303 = vmax.f32 %v4271, 0.0
      %v4304 = vmax.f32 %v4272, 0.0
      %v4305 = vmax.f32 %v4273, 0.0
      %v4306 = vmax.f32 %v4274, 0.0
      %v4307 = vmax.f32 %v4275, 0.0
      %v4308 = vmax.f32 %v4276, 0.0
      %v4309 = vmax.f32 %v4277, 0.0
      %v4310 = vmax.f32 %v4278, 0.0
      %v4311 = vmax.f32 %v4279, 0.0
      %v4312 = vmax.f32 %v4280, 0.0
      %v4313 = vmax.f32 %v4281, 0.0
      %v4314 = vmax.f32 %v4282, 0.0
      %v4315 = vmax.f32 %v4283, 0.0
      %v4316 = vmax.f32 %v4284, 0.0
      %v4317 = vmax.f32 %v4285, 0.0
      %v4318 = vmax.f32 %v4286, 0.0
      %v4319 = vmax.f32 %v4287, 0.0
      %v4320 = vmax.f32 %v4288, 0.0
      %v4321 = vmax.f32 %v4289, 0.0
      %v4322 = vmax.f32 %v4290, 0.0
      %v4323 = vmax.f32 %v4291, 0.0
      %v4324 = vmax.f32 %v4292, 0.0
      %v4325 = vmax.f32 %v4293, 0.0
      %v4326 = vmax.f32 %v4294, 0.0
      %v4327 = vmax.f32 %v4295, 0.0
      %v4328 = vmax.f32 %v4296, 0.0
      %4329 = vst [vmem:[#allocation2] sm:$0xf] 0
      %4330 = vst [vmem:[#allocation2 + $0x4] sm:$0xf] 0
      %4331 = vst [vmem:[#allocation2 + $0x8] sm:$0x1] 0
      %s4332 = scalar_lea.vmem [#allocation2], 204
      %4333 = vst [vmem:[%s4332] sm:$0xf] 0
      %4334 = vst [vmem:[%s4332 + $0x4] sm:$0xf] 0
      %4335 = vst [vmem:[%s4332 + $0x8] sm:$0x1] 0
      %vm4336 = vcmask 1040384
      %vm4337 = vsmask.f32 256
      %vm4338 = vmand %vm4336, %vm4337
      %v4339 = vld [vmem:[#allocation2] sm:$0x1]
      %v4340 = vsel %vm4338, 0, %v4339
      %4341 = vst [vmem:[#allocation2] sm:$0x1] %v4340
      %v4342 = vld [vmem:[#allocation2 + $0xc] sm:$0x1]
      %v4343 = vsel %vm4338, 0, %v4342
      %4344 = vst [vmem:[#allocation2 + $0xc] sm:$0x1] %v4343
      %v4345 = vld [vmem:[#allocation2 + $0x18] sm:$0x1]
      %v4346 = vsel %vm4338, 0, %v4345
      %4347 = vst [vmem:[#allocation2 + $0x18] sm:$0x1] %v4346
      %v4348 = vld [vmem:[#allocation2 + $0x24] sm:$0x1]
      %v4349 = vsel %vm4338, 0, %v4348
      %4350 = vst [vmem:[#allocation2 + $0x24] sm:$0x1] %v4349
      %v4351 = vld [vmem:[#allocation2 + $0x30] sm:$0x1]
      %v4352 = vsel %vm4338, 0, %v4351
      %4353 = vst [vmem:[#allocation2 + $0x30] sm:$0x1] %v4352
      %v4354 = vld [vmem:[#allocation2 + $0x3c] sm:$0x1]
      %v4355 = vsel %vm4338, 0, %v4354
      %4356 = vst [vmem:[#allocation2 + $0x3c] sm:$0x1] %v4355
      %v4357 = vld [vmem:[#allocation2 + $0x48] sm:$0x1]
      %v4358 = vsel %vm4338, 0, %v4357
      %4359 = vst [vmem:[#allocation2 + $0x48] sm:$0x1] %v4358
      %v4360 = vld [vmem:[#allocation2 + $0x54] sm:$0x1]
      %v4361 = vsel %vm4338, 0, %v4360
      %4362 = vst [vmem:[#allocation2 + $0x54] sm:$0x1] %v4361
      %v4363 = vld [vmem:[#allocation2 + $0x60] sm:$0x1]
      %v4364 = vsel %vm4338, 0, %v4363
      %4365 = vst [vmem:[#allocation2 + $0x60] sm:$0x1] %v4364
      %v4366 = vld [vmem:[#allocation2 + $0x6c] sm:$0x1]
      %v4367 = vsel %vm4338, 0, %v4366
      %4368 = vst [vmem:[#allocation2 + $0x6c] sm:$0x1] %v4367
      %v4369 = vld [vmem:[#allocation2 + $0x78] sm:$0x1]
      %v4370 = vsel %vm4338, 0, %v4369
      %4371 = vst [vmem:[#allocation2 + $0x78] sm:$0x1] %v4370
      %v4372 = vld [vmem:[#allocation2 + $0x84] sm:$0x1]
      %v4373 = vsel %vm4338, 0, %v4372
      %4374 = vst [vmem:[#allocation2 + $0x84] sm:$0x1] %v4373
      %v4375 = vld [vmem:[#allocation2 + $0x90] sm:$0x1]
      %v4376 = vsel %vm4338, 0, %v4375
      %4377 = vst [vmem:[#allocation2 + $0x90] sm:$0x1] %v4376
      %v4378 = vld [vmem:[#allocation2 + $0x9c] sm:$0x1]
      %v4379 = vsel %vm4338, 0, %v4378
      %4380 = vst [vmem:[#allocation2 + $0x9c] sm:$0x1] %v4379
      %v4381 = vld [vmem:[#allocation2 + $0xa8] sm:$0x1]
      %v4382 = vsel %vm4338, 0, %v4381
      %4383 = vst [vmem:[#allocation2 + $0xa8] sm:$0x1] %v4382
      %v4384 = vld [vmem:[#allocation2 + $0xb4] sm:$0x1]
      %v4385 = vsel %vm4338, 0, %v4384
      %4386 = vst [vmem:[#allocation2 + $0xb4] sm:$0x1] %v4385
      %v4387 = vld [vmem:[#allocation2 + $0xc0] sm:$0x1]
      %v4388 = vsel %vm4338, 0, %v4387
      %4389 = vst [vmem:[#allocation2 + $0xc0] sm:$0x1] %v4388
      %v4390 = vld [vmem:[#allocation2 + $0xcc] sm:$0x1]
      %v4391 = vsel %vm4338, 0, %v4390
      %4392 = vst [vmem:[#allocation2 + $0xcc] sm:$0x1] %v4391
      %vm4393 = vsmask.f32 7938
      %vm4394 = vmand %vm4336, %vm4393
      %v4395 = vld [vmem:[#allocation2 + $0x8] sm:$0x1]
      %v4396 = vsel %vm4394, 0, %v4395
      %4397 = vst [vmem:[#allocation2 + $0x8] sm:$0x1] %v4396
      %v4398 = vld [vmem:[#allocation2 + $0x14] sm:$0x1]
      %v4399 = vsel %vm4394, 0, %v4398
      %4400 = vst [vmem:[#allocation2 + $0x14] sm:$0x1] %v4399
      %v4401 = vld [vmem:[#allocation2 + $0x20] sm:$0x1]
      %v4402 = vsel %vm4394, 0, %v4401
      %4403 = vst [vmem:[#allocation2 + $0x20] sm:$0x1] %v4402
      %v4404 = vld [vmem:[#allocation2 + $0x2c] sm:$0x1]
      %v4405 = vsel %vm4394, 0, %v4404
      %4406 = vst [vmem:[#allocation2 + $0x2c] sm:$0x1] %v4405
      %v4407 = vld [vmem:[#allocation2 + $0x38] sm:$0x1]
      %v4408 = vsel %vm4394, 0, %v4407
      %4409 = vst [vmem:[#allocation2 + $0x38] sm:$0x1] %v4408
      %v4410 = vld [vmem:[#allocation2 + $0x44] sm:$0x1]
      %v4411 = vsel %vm4394, 0, %v4410
      %4412 = vst [vmem:[#allocation2 + $0x44] sm:$0x1] %v4411
      %v4413 = vld [vmem:[#allocation2 + $0x50] sm:$0x1]
      %v4414 = vsel %vm4394, 0, %v4413
      %4415 = vst [vmem:[#allocation2 + $0x50] sm:$0x1] %v4414
      %v4416 = vld [vmem:[#allocation2 + $0x5c] sm:$0x1]
      %v4417 = vsel %vm4394, 0, %v4416
      %4418 = vst [vmem:[#allocation2 + $0x5c] sm:$0x1] %v4417
      %v4419 = vld [vmem:[#allocation2 + $0x68] sm:$0x1]
      %v4420 = vsel %vm4394, 0, %v4419
      %4421 = vst [vmem:[#allocation2 + $0x68] sm:$0x1] %v4420
      %v4422 = vld [vmem:[#allocation2 + $0x74] sm:$0x1]
      %v4423 = vsel %vm4394, 0, %v4422
      %4424 = vst [vmem:[#allocation2 + $0x74] sm:$0x1] %v4423
      %v4425 = vld [vmem:[#allocation2 + $0x80] sm:$0x1]
      %v4426 = vsel %vm4394, 0, %v4425
      %4427 = vst [vmem:[#allocation2 + $0x80] sm:$0x1] %v4426
      %v4428 = vld [vmem:[#allocation2 + $0x8c] sm:$0x1]
      %v4429 = vsel %vm4394, 0, %v4428
      %4430 = vst [vmem:[#allocation2 + $0x8c] sm:$0x1] %v4429
      %v4431 = vld [vmem:[#allocation2 + $0x98] sm:$0x1]
      %v4432 = vsel %vm4394, 0, %v4431
      %4433 = vst [vmem:[#allocation2 + $0x98] sm:$0x1] %v4432
      %v4434 = vld [vmem:[#allocation2 + $0xa4] sm:$0x1]
      %v4435 = vsel %vm4394, 0, %v4434
      %4436 = vst [vmem:[#allocation2 + $0xa4] sm:$0x1] %v4435
      %v4437 = vld [vmem:[#allocation2 + $0xb0] sm:$0x1]
      %v4438 = vsel %vm4394, 0, %v4437
      %4439 = vst [vmem:[#allocation2 + $0xb0] sm:$0x1] %v4438
      %v4440 = vld [vmem:[#allocation2 + $0xbc] sm:$0x1]
      %v4441 = vsel %vm4394, 0, %v4440
      %4442 = vst [vmem:[#allocation2 + $0xbc] sm:$0x1] %v4441
      %v4443 = vld [vmem:[#allocation2 + $0xc8] sm:$0x1]
      %v4444 = vsel %vm4394, 0, %v4443
      %4445 = vst [vmem:[#allocation2 + $0xc8] sm:$0x1] %v4444
      %v4446 = vld [vmem:[#allocation2 + $0xd4] sm:$0x1]
      %v4447 = vsel %vm4394, 0, %v4446
      %4448 = vst [vmem:[#allocation2 + $0xd4] sm:$0x1] %v4447
      %v4449 = vpack.c.bf16 %v4298, %v4297
      %v4450 = vpack.c.bf16 %v4300, %v4299
      %v4451 = vpack.c.bf16 %v4302, %v4301
      %v4452 = vpack.c.bf16 %v4304, %v4303
      %v4453 = vpack.c.bf16 %v4306, %v4305
      %v4454 = vpack.c.bf16 %v4308, %v4307
      %v4455 = vpack.c.bf16 %v4310, %v4309
      %v4456 = vpack.c.bf16 %v4312, %v4311
      %v4457 = vpack.c.bf16 %v4314, %v4313
      %v4458 = vpack.c.bf16 %v4316, %v4315
      %v4459 = vpack.c.bf16 %v4318, %v4317
      %v4460 = vpack.c.bf16 %v4320, %v4319
      %v4461 = vpack.c.bf16 %v4322, %v4321
      %v4462 = vpack.c.bf16 %v4324, %v4323
      %v4463 = vpack.c.bf16 %v4326, %v4325
      %v4464 = vpack.c.bf16 %v4328, %v4327
      %v4481 = vunpack.c.l.b16 %v4449
      %v4482 = vunpack.c.h.b16 %v4449
      %v4483 = vunpack.c.l.b16 %v4450
      %v4484 = vunpack.c.h.b16 %v4450
      %v4485 = vunpack.c.l.b16 %v4451
      %v4486 = vunpack.c.h.b16 %v4451
      %v4487 = vunpack.c.l.b16 %v4452
      %v4488 = vunpack.c.h.b16 %v4452
      %v4489 = vunpack.c.l.b16 %v4453
      %v4490 = vunpack.c.h.b16 %v4453
      %v4491 = vunpack.c.l.b16 %v4454
      %v4492 = vunpack.c.h.b16 %v4454
      %v4493 = vunpack.c.l.b16 %v4455
      %v4494 = vunpack.c.h.b16 %v4455
      %v4495 = vunpack.c.l.b16 %v4456
      %v4496 = vunpack.c.h.b16 %v4456
      %v4497 = vunpack.c.l.b16 %v4457
      %v4498 = vunpack.c.h.b16 %v4457
      %v4499 = vunpack.c.l.b16 %v4458
      %v4500 = vunpack.c.h.b16 %v4458
      %v4501 = vunpack.c.l.b16 %v4459
      %v4502 = vunpack.c.h.b16 %v4459
      %v4503 = vunpack.c.l.b16 %v4460
      %v4504 = vunpack.c.h.b16 %v4460
      %v4505 = vunpack.c.l.b16 %v4461
      %v4506 = vunpack.c.h.b16 %v4461
      %v4507 = vunpack.c.l.b16 %v4462
      %v4508 = vunpack.c.h.b16 %v4462
      %v4509 = vunpack.c.l.b16 %v4463
      %v4510 = vunpack.c.h.b16 %v4463
      %v4511 = vunpack.c.l.b16 %v4464
      %v4512 = vunpack.c.h.b16 %v4464
      %v4513 = vpack.c.b16 %v4481, %v4481
      %v4514 = vpack.c.b16 %v4482, %v4482
      %v4515 = vpack.c.b16 %v4483, %v4483
      %v4516 = vpack.c.b16 %v4484, %v4484
      %v4517 = vpack.c.b16 %v4485, %v4485
      %v4518 = vpack.c.b16 %v4486, %v4486
      %v4519 = vpack.c.b16 %v4487, %v4487
      %v4520 = vpack.c.b16 %v4488, %v4488
      %v4521 = vpack.c.b16 %v4489, %v4489
      %v4522 = vpack.c.b16 %v4490, %v4490
      %v4523 = vpack.c.b16 %v4491, %v4491
      %v4524 = vpack.c.b16 %v4492, %v4492
      %v4525 = vpack.c.b16 %v4493, %v4493
      %v4526 = vpack.c.b16 %v4494, %v4494
      %v4527 = vpack.c.b16 %v4495, %v4495
      %v4528 = vpack.c.b16 %v4496, %v4496
      %v4529 = vpack.c.b16 %v4497, %v4497
      %v4530 = vpack.c.b16 %v4498, %v4498
      %v4531 = vpack.c.b16 %v4499, %v4499
      %v4532 = vpack.c.b16 %v4500, %v4500
      %v4533 = vpack.c.b16 %v4501, %v4501
      %v4534 = vpack.c.b16 %v4502, %v4502
      %v4535 = vpack.c.b16 %v4503, %v4503
      %v4536 = vpack.c.b16 %v4504, %v4504
      %v4537 = vpack.c.b16 %v4505, %v4505
      %v4538 = vpack.c.b16 %v4506, %v4506
      %v4539 = vpack.c.b16 %v4507, %v4507
      %v4540 = vpack.c.b16 %v4508, %v4508
      %v4541 = vpack.c.b16 %v4509, %v4509
      %v4542 = vpack.c.b16 %v4510, %v4510
      %v4543 = vpack.c.b16 %v4511, %v4511
      %v4544 = vpack.c.b16 %v4512, %v4512
      %vm4545 = vsmask.f32 4368
      %vm4546 = vmor %vm4337, %vm4545
      %v4548 = vshrl.u32 %v4513, 16
      %v4550 = vrot.slane %v4548, 7
      %v4551 = vshll.u32 %v4513, 16
      %v4553 = vor.u32 %v4550, %v4551
      %v4554 = vrot.slane %v4550, 4
      %v4556 = vshrl.u32 %v4514, 16
      %v4558 = vrot.slane %v4556, 7
      %v4559 = vshll.u32 %v4514, 16
      %v4561 = vor.u32 %v4558, %v4559
      %v4562 = vsel %vm4546, %v4554, %v4561
      %v4563 = vrot.slane %v4558, 4
      %v4565 = vshrl.u32 %v4515, 16
      %v4567 = vrot.slane %v4565, 7
      %v4568 = vshll.u32 %v4515, 16
      %v4570 = vor.u32 %v4567, %v4568
      %v4571 = vrot.slane %v4567, 4
      %v4573 = vshrl.u32 %v4516, 16
      %v4575 = vrot.slane %v4573, 7
      %v4576 = vshll.u32 %v4516, 16
      %v4578 = vor.u32 %v4575, %v4576
      %v4579 = vsel %vm4546, %v4571, %v4578
      %v4580 = vrot.slane %v4575, 4
      %v4582 = vshrl.u32 %v4517, 16
      %v4584 = vrot.slane %v4582, 7
      %v4585 = vshll.u32 %v4517, 16
      %v4587 = vor.u32 %v4584, %v4585
      %v4588 = vrot.slane %v4584, 4
      %v4590 = vshrl.u32 %v4518, 16
      %v4592 = vrot.slane %v4590, 7
      %v4593 = vshll.u32 %v4518, 16
      %v4595 = vor.u32 %v4592, %v4593
      %v4596 = vsel %vm4546, %v4588, %v4595
      %v4597 = vrot.slane %v4592, 4
      %v4599 = vshrl.u32 %v4519, 16
      %v4601 = vrot.slane %v4599, 7
      %v4602 = vshll.u32 %v4519, 16
      %v4604 = vor.u32 %v4601, %v4602
      %v4605 = vrot.slane %v4601, 4
      %v4607 = vshrl.u32 %v4520, 16
      %v4609 = vrot.slane %v4607, 7
      %v4610 = vshll.u32 %v4520, 16
      %v4612 = vor.u32 %v4609, %v4610
      %v4613 = vsel %vm4546, %v4605, %v4612
      %v4614 = vrot.slane %v4609, 4
      %v4616 = vshrl.u32 %v4521, 16
      %v4618 = vrot.slane %v4616, 7
      %v4619 = vshll.u32 %v4521, 16
      %v4621 = vor.u32 %v4618, %v4619
      %v4622 = vrot.slane %v4618, 4
      %v4624 = vshrl.u32 %v4522, 16
      %v4626 = vrot.slane %v4624, 7
      %v4627 = vshll.u32 %v4522, 16
      %v4629 = vor.u32 %v4626, %v4627
      %v4630 = vsel %vm4546, %v4622, %v4629
      %v4631 = vrot.slane %v4626, 4
      %v4633 = vshrl.u32 %v4523, 16
      %v4635 = vrot.slane %v4633, 7
      %v4636 = vshll.u32 %v4523, 16
      %v4638 = vor.u32 %v4635, %v4636
      %v4639 = vrot.slane %v4635, 4
      %v4641 = vshrl.u32 %v4524, 16
      %v4643 = vrot.slane %v4641, 7
      %v4644 = vshll.u32 %v4524, 16
      %v4646 = vor.u32 %v4643, %v4644
      %v4647 = vsel %vm4546, %v4639, %v4646
      %v4648 = vrot.slane %v4643, 4
      %v4650 = vshrl.u32 %v4525, 16
      %v4652 = vrot.slane %v4650, 7
      %v4653 = vshll.u32 %v4525, 16
      %v4655 = vor.u32 %v4652, %v4653
      %v4656 = vrot.slane %v4652, 4
      %v4658 = vshrl.u32 %v4526, 16
      %v4660 = vrot.slane %v4658, 7
      %v4661 = vshll.u32 %v4526, 16
      %v4663 = vor.u32 %v4660, %v4661
      %v4664 = vsel %vm4546, %v4656, %v4663
      %v4665 = vrot.slane %v4660, 4
      %v4667 = vshrl.u32 %v4527, 16
      %v4669 = vrot.slane %v4667, 7
      %v4670 = vshll.u32 %v4527, 16
      %v4672 = vor.u32 %v4669, %v4670
      %v4673 = vrot.slane %v4669, 4
      %v4675 = vshrl.u32 %v4528, 16
      %v4677 = vrot.slane %v4675, 7
      %v4678 = vshll.u32 %v4528, 16
      %v4680 = vor.u32 %v4677, %v4678
      %v4681 = vsel %vm4546, %v4673, %v4680
      %v4682 = vrot.slane %v4677, 4
      %v4684 = vshrl.u32 %v4529, 16
      %v4686 = vrot.slane %v4684, 7
      %v4687 = vshll.u32 %v4529, 16
      %v4689 = vor.u32 %v4686, %v4687
      %v4690 = vrot.slane %v4686, 4
      %v4692 = vshrl.u32 %v4530, 16
      %v4694 = vrot.slane %v4692, 7
      %v4695 = vshll.u32 %v4530, 16
      %v4697 = vor.u32 %v4694, %v4695
      %v4698 = vsel %vm4546, %v4690, %v4697
      %v4699 = vrot.slane %v4694, 4
      %v4701 = vshrl.u32 %v4531, 16
      %v4703 = vrot.slane %v4701, 7
      %v4704 = vshll.u32 %v4531, 16
      %v4706 = vor.u32 %v4703, %v4704
      %v4707 = vrot.slane %v4703, 4
      %v4709 = vshrl.u32 %v4532, 16
      %v4711 = vrot.slane %v4709, 7
      %v4712 = vshll.u32 %v4532, 16
      %v4714 = vor.u32 %v4711, %v4712
      %v4715 = vsel %vm4546, %v4707, %v4714
      %v4716 = vrot.slane %v4711, 4
      %v4718 = vshrl.u32 %v4533, 16
      %v4720 = vrot.slane %v4718, 7
      %v4721 = vshll.u32 %v4533, 16
      %v4723 = vor.u32 %v4720, %v4721
      %v4724 = vrot.slane %v4720, 4
      %v4726 = vshrl.u32 %v4534, 16
      %v4728 = vrot.slane %v4726, 7
      %v4729 = vshll.u32 %v4534, 16
      %v4731 = vor.u32 %v4728, %v4729
      %v4732 = vsel %vm4546, %v4724, %v4731
      %v4733 = vrot.slane %v4728, 4
      %v4735 = vshrl.u32 %v4535, 16
      %v4737 = vrot.slane %v4735, 7
      %v4738 = vshll.u32 %v4535, 16
      %v4740 = vor.u32 %v4737, %v4738
      %v4741 = vrot.slane %v4737, 4
      %v4743 = vshrl.u32 %v4536, 16
      %v4745 = vrot.slane %v4743, 7
      %v4746 = vshll.u32 %v4536, 16
      %v4748 = vor.u32 %v4745, %v4746
      %v4749 = vsel %vm4546, %v4741, %v4748
      %v4750 = vrot.slane %v4745, 4
      %v4752 = vshrl.u32 %v4537, 16
      %v4754 = vrot.slane %v4752, 7
      %v4755 = vshll.u32 %v4537, 16
      %v4757 = vor.u32 %v4754, %v4755
      %v4758 = vrot.slane %v4754, 4
      %v4760 = vshrl.u32 %v4538, 16
      %v4762 = vrot.slane %v4760, 7
      %v4763 = vshll.u32 %v4538, 16
      %v4765 = vor.u32 %v4762, %v4763
      %v4766 = vsel %vm4546, %v4758, %v4765
      %v4767 = vrot.slane %v4762, 4
      %v4769 = vshrl.u32 %v4539, 16
      %v4771 = vrot.slane %v4769, 7
      %v4772 = vshll.u32 %v4539, 16
      %v4774 = vor.u32 %v4771, %v4772
      %v4775 = vrot.slane %v4771, 4
      %v4777 = vshrl.u32 %v4540, 16
      %v4779 = vrot.slane %v4777, 7
      %v4780 = vshll.u32 %v4540, 16
      %v4782 = vor.u32 %v4779, %v4780
      %v4783 = vsel %vm4546, %v4775, %v4782
      %v4784 = vrot.slane %v4779, 4
      %v4786 = vshrl.u32 %v4541, 16
      %v4788 = vrot.slane %v4786, 7
      %v4789 = vshll.u32 %v4541, 16
      %v4791 = vor.u32 %v4788, %v4789
      %v4792 = vrot.slane %v4788, 4
      %v4794 = vshrl.u32 %v4542, 16
      %v4796 = vrot.slane %v4794, 7
      %v4797 = vshll.u32 %v4542, 16
      %v4799 = vor.u32 %v4796, %v4797
      %v4800 = vsel %vm4546, %v4792, %v4799
      %v4801 = vrot.slane %v4796, 4
      %v4803 = vshrl.u32 %v4543, 16
      %v4805 = vrot.slane %v4803, 7
      %v4806 = vshll.u32 %v4543, 16
      %v4808 = vor.u32 %v4805, %v4806
      %v4809 = vrot.slane %v4805, 4
      %v4811 = vshrl.u32 %v4544, 16
      %v4813 = vrot.slane %v4811, 7
      %v4814 = vshll.u32 %v4544, 16
      %v4816 = vor.u32 %v4813, %v4814
      %v4817 = vsel %vm4546, %v4809, %v4816
      %v4818 = vrot.slane %v4813, 4
      %s4867 = scalar_lea.vmem [#allocation2], 12
      %vm4868 = vcmask 1043456
      %vm4869 = vmand %vm4868, %vm4393
      %v4870 = vld [vmem:[%s4867] sm:$0xf]
      %v4871 = vsel %vm4869, %v4553, %v4870
      %4872 = vst [vmem:[%s4867] sm:$0xf] %v4871
      %4873 = vst [vmem:[%s4867 + $0x4] sm:$0xf] %v4562
      %v4874 = vld [vmem:[%s4867 + $0x8] sm:$0x1]
      %v4875 = vsel %vm4338, %v4563, %v4874
      %4876 = vst [vmem:[%s4867 + $0x8] sm:$0x1] %v4875
      %v4877 = vld [vmem:[%s4867 + $0xc] sm:$0xf]
      %v4878 = vsel %vm4869, %v4570, %v4877
      %4879 = vst [vmem:[%s4867 + $0xc] sm:$0xf] %v4878
      %4880 = vst [vmem:[%s4867 + $0x10] sm:$0xf] %v4579
      %v4881 = vld [vmem:[%s4867 + $0x14] sm:$0x1]
      %v4882 = vsel %vm4338, %v4580, %v4881
      %4883 = vst [vmem:[%s4867 + $0x14] sm:$0x1] %v4882
      %v4884 = vld [vmem:[%s4867 + $0x18] sm:$0xf]
      %v4885 = vsel %vm4869, %v4587, %v4884
      %4886 = vst [vmem:[%s4867 + $0x18] sm:$0xf] %v4885
      %4887 = vst [vmem:[%s4867 + $0x1c] sm:$0xf] %v4596
      %v4888 = vld [vmem:[%s4867 + $0x20] sm:$0x1]
      %v4889 = vsel %vm4338, %v4597, %v4888
      %4890 = vst [vmem:[%s4867 + $0x20] sm:$0x1] %v4889
      %v4891 = vld [vmem:[%s4867 + $0x24] sm:$0xf]
      %v4892 = vsel %vm4869, %v4604, %v4891
      %4893 = vst [vmem:[%s4867 + $0x24] sm:$0xf] %v4892
      %4894 = vst [vmem:[%s4867 + $0x28] sm:$0xf] %v4613
      %v4895 = vld [vmem:[%s4867 + $0x2c] sm:$0x1]
      %v4896 = vsel %vm4338, %v4614, %v4895
      %4897 = vst [vmem:[%s4867 + $0x2c] sm:$0x1] %v4896
      %v4898 = vld [vmem:[%s4867 + $0x30] sm:$0xf]
      %v4899 = vsel %vm4869, %v4621, %v4898
      %4900 = vst [vmem:[%s4867 + $0x30] sm:$0xf] %v4899
      %4901 = vst [vmem:[%s4867 + $0x34] sm:$0xf] %v4630
      %v4902 = vld [vmem:[%s4867 + $0x38] sm:$0x1]
      %v4903 = vsel %vm4338, %v4631, %v4902
      %4904 = vst [vmem:[%s4867 + $0x38] sm:$0x1] %v4903
      %v4905 = vld [vmem:[%s4867 + $0x3c] sm:$0xf]
      %v4906 = vsel %vm4869, %v4638, %v4905
      %4907 = vst [vmem:[%s4867 + $0x3c] sm:$0xf] %v4906
      %4908 = vst [vmem:[%s4867 + $0x40] sm:$0xf] %v4647
      %v4909 = vld [vmem:[%s4867 + $0x44] sm:$0x1]
      %v4910 = vsel %vm4338, %v4648, %v4909
      %4911 = vst [vmem:[%s4867 + $0x44] sm:$0x1] %v4910
      %v4912 = vld [vmem:[%s4867 + $0x48] sm:$0xf]
      %v4913 = vsel %vm4869, %v4655, %v4912
      %4914 = vst [vmem:[%s4867 + $0x48] sm:$0xf] %v4913
      %4915 = vst [vmem:[%s4867 + $0x4c] sm:$0xf] %v4664
      %v4916 = vld [vmem:[%s4867 + $0x50] sm:$0x1]
      %v4917 = vsel %vm4338, %v4665, %v4916
      %4918 = vst [vmem:[%s4867 + $0x50] sm:$0x1] %v4917
      %v4919 = vld [vmem:[%s4867 + $0x54] sm:$0xf]
      %v4920 = vsel %vm4869, %v4672, %v4919
      %4921 = vst [vmem:[%s4867 + $0x54] sm:$0xf] %v4920
      %4922 = vst [vmem:[%s4867 + $0x58] sm:$0xf] %v4681
      %v4923 = vld [vmem:[%s4867 + $0x5c] sm:$0x1]
      %v4924 = vsel %vm4338, %v4682, %v4923
      %4925 = vst [vmem:[%s4867 + $0x5c] sm:$0x1] %v4924
      %v4926 = vld [vmem:[%s4867 + $0x60] sm:$0xf]
      %v4927 = vsel %vm4869, %v4689, %v4926
      %4928 = vst [vmem:[%s4867 + $0x60] sm:$0xf] %v4927
      %4929 = vst [vmem:[%s4867 + $0x64] sm:$0xf] %v4698
      %v4930 = vld [vmem:[%s4867 + $0x68] sm:$0x1]
      %v4931 = vsel %vm4338, %v4699, %v4930
      %4932 = vst [vmem:[%s4867 + $0x68] sm:$0x1] %v4931
      %v4933 = vld [vmem:[%s4867 + $0x6c] sm:$0xf]
      %v4934 = vsel %vm4869, %v4706, %v4933
      %4935 = vst [vmem:[%s4867 + $0x6c] sm:$0xf] %v4934
      %4936 = vst [vmem:[%s4867 + $0x70] sm:$0xf] %v4715
      %v4937 = vld [vmem:[%s4867 + $0x74] sm:$0x1]
      %v4938 = vsel %vm4338, %v4716, %v4937
      %4939 = vst [vmem:[%s4867 + $0x74] sm:$0x1] %v4938
      %v4940 = vld [vmem:[%s4867 + $0x78] sm:$0xf]
      %v4941 = vsel %vm4869, %v4723, %v4940
      %4942 = vst [vmem:[%s4867 + $0x78] sm:$0xf] %v4941
      %4943 = vst [vmem:[%s4867 + $0x7c] sm:$0xf] %v4732
      %v4944 = vld [vmem:[%s4867 + $0x80] sm:$0x1]
      %v4945 = vsel %vm4338, %v4733, %v4944
      %4946 = vst [vmem:[%s4867 + $0x80] sm:$0x1] %v4945
      %v4947 = vld [vmem:[%s4867 + $0x84] sm:$0xf]
      %v4948 = vsel %vm4869, %v4740, %v4947
      %4949 = vst [vmem:[%s4867 + $0x84] sm:$0xf] %v4948
      %4950 = vst [vmem:[%s4867 + $0x88] sm:$0xf] %v4749
      %v4951 = vld [vmem:[%s4867 + $0x8c] sm:$0x1]
      %v4952 = vsel %vm4338, %v4750, %v4951
      %4953 = vst [vmem:[%s4867 + $0x8c] sm:$0x1] %v4952
      %v4954 = vld [vmem:[%s4867 + $0x90] sm:$0xf]
      %v4955 = vsel %vm4869, %v4757, %v4954
      %4956 = vst [vmem:[%s4867 + $0x90] sm:$0xf] %v4955
      %4957 = vst [vmem:[%s4867 + $0x94] sm:$0xf] %v4766
      %v4958 = vld [vmem:[%s4867 + $0x98] sm:$0x1]
      %v4959 = vsel %vm4338, %v4767, %v4958
      %4960 = vst [vmem:[%s4867 + $0x98] sm:$0x1] %v4959
      %v4961 = vld [vmem:[%s4867 + $0x9c] sm:$0xf]
      %v4962 = vsel %vm4869, %v4774, %v4961
      %4963 = vst [vmem:[%s4867 + $0x9c] sm:$0xf] %v4962
      %4964 = vst [vmem:[%s4867 + $0xa0] sm:$0xf] %v4783
      %v4965 = vld [vmem:[%s4867 + $0xa4] sm:$0x1]
      %v4966 = vsel %vm4338, %v4784, %v4965
      %4967 = vst [vmem:[%s4867 + $0xa4] sm:$0x1] %v4966
      %v4968 = vld [vmem:[%s4867 + $0xa8] sm:$0xf]
      %v4969 = vsel %vm4869, %v4791, %v4968
      %4970 = vst [vmem:[%s4867 + $0xa8] sm:$0xf] %v4969
      %4971 = vst [vmem:[%s4867 + $0xac] sm:$0xf] %v4800
      %v4972 = vld [vmem:[%s4867 + $0xb0] sm:$0x1]
      %v4973 = vsel %vm4338, %v4801, %v4972
      %4974 = vst [vmem:[%s4867 + $0xb0] sm:$0x1] %v4973
      %v4975 = vld [vmem:[%s4867 + $0xb4] sm:$0xf]
      %v4976 = vsel %vm4869, %v4808, %v4975
      %4977 = vst [vmem:[%s4867 + $0xb4] sm:$0xf] %v4976
      %4978 = vst [vmem:[%s4867 + $0xb8] sm:$0xf] %v4817
      %v4979 = vld [vmem:[%s4867 + $0xbc] sm:$0x1]
      %v4980 = vsel %vm4338, %v4818, %v4979
      %4981 = vst [vmem:[%s4867 + $0xbc] sm:$0x1] %v4980
      %v4982 = vld [vmem:[#allocation2] sm:$0xf]
      %v4983 = vld [vmem:[#allocation2 + $0x4] sm:$0xf]
      %v4984 = vld [vmem:[#allocation2 + $0xc] sm:$0xf]
      %v4985 = vld [vmem:[#allocation2 + $0x10] sm:$0xf]
      %v4986 = vld [vmem:[#allocation2 + $0x18] sm:$0xf]
      %v4987 = vld [vmem:[#allocation2 + $0x1c] sm:$0xf]
      %v4988 = vld [vmem:[#allocation2 + $0x24] sm:$0xf]
      %v4989 = vld [vmem:[#allocation2 + $0x28] sm:$0xf]
      %v4990 = vld [vmem:[#allocation2 + $0x30] sm:$0xf]
      %v4991 = vld [vmem:[#allocation2 + $0x34] sm:$0xf]
      %v4992 = vld [vmem:[#allocation2 + $0x3c] sm:$0xf]
      %v4993 = vld [vmem:[#allocation2 + $0x40] sm:$0xf]
      %v4994 = vld [vmem:[#allocation2 + $0x48] sm:$0xf]
      %v4995 = vld [vmem:[#allocation2 + $0x4c] sm:$0xf]
      %v4996 = vld [vmem:[#allocation2 + $0x54] sm:$0xf]
      %v4997 = vld [vmem:[#allocation2 + $0x58] sm:$0xf]
      %v4998 = vld [vmem:[#allocation2 + $0x60] sm:$0xf]
      %v4999 = vld [vmem:[#allocation2 + $0x64] sm:$0xf]
      %v5000 = vld [vmem:[#allocation2 + $0x6c] sm:$0xf]
      %v5001 = vld [vmem:[#allocation2 + $0x70] sm:$0xf]
      %v5002 = vld [vmem:[#allocation2 + $0x78] sm:$0xf]
      %v5003 = vld [vmem:[#allocation2 + $0x7c] sm:$0xf]
      %v5004 = vld [vmem:[#allocation2 + $0x84] sm:$0xf]
      %v5005 = vld [vmem:[#allocation2 + $0x88] sm:$0xf]
      %v5006 = vld [vmem:[#allocation2 + $0x90] sm:$0xf]
      %v5007 = vld [vmem:[#allocation2 + $0x94] sm:$0xf]
      %v5008 = vld [vmem:[#allocation2 + $0x9c] sm:$0xf]
      %v5009 = vld [vmem:[#allocation2 + $0xa0] sm:$0xf]
      %v5010 = vld [vmem:[#allocation2 + $0xa8] sm:$0xf]
      %v5011 = vld [vmem:[#allocation2 + $0xac] sm:$0xf]
      %v5012 = vld [vmem:[#allocation2 + $0xb4] sm:$0xf]
      %v5013 = vld [vmem:[#allocation2 + $0xb8] sm:$0xf]
      %v5014 = vld [vmem:[#allocation2 + $0x8] sm:$0x1]
      %v5015 = vld [vmem:[#allocation2 + $0x14] sm:$0x1]
      %v5016 = vld [vmem:[#allocation2 + $0x20] sm:$0x1]
      %v5017 = vld [vmem:[#allocation2 + $0x2c] sm:$0x1]
      %v5018 = vld [vmem:[#allocation2 + $0x38] sm:$0x1]
      %v5019 = vld [vmem:[#allocation2 + $0x44] sm:$0x1]
      %v5020 = vld [vmem:[#allocation2 + $0x50] sm:$0x1]
      %v5021 = vld [vmem:[#allocation2 + $0x5c] sm:$0x1]
      %v5022 = vld [vmem:[#allocation2 + $0x68] sm:$0x1]
      %v5023 = vld [vmem:[#allocation2 + $0x74] sm:$0x1]
      %v5024 = vld [vmem:[#allocation2 + $0x80] sm:$0x1]
      %v5025 = vld [vmem:[#allocation2 + $0x8c] sm:$0x1]
      %v5026 = vld [vmem:[#allocation2 + $0x98] sm:$0x1]
      %v5027 = vld [vmem:[#allocation2 + $0xa4] sm:$0x1]
      %v5028 = vld [vmem:[#allocation2 + $0xb0] sm:$0x1]
      %v5029 = vld [vmem:[#allocation2 + $0xbc] sm:$0x1]
      %v5031 = vshrl.u32 %v4982, 16
      %v5033 = vrot.slane %v5031, 4
      %v5034 = vshll.u32 %v4982, 16
      %v5036 = vrot.slane %v5034, 5
      %v5037 = vor.u32 %v5033, %v5036
      %v5038 = vrot.slane %v5037, 4
      %v5040 = vshll.u32 %v4983, 16
      %v5042 = vrot.slane %v5040, 5
      %v5043 = vsel %vm276, %v5038, %v5042
      %v5044 = vshrl.u32 %v4983, 16
      %v5046 = vrot.slane %v5044, 4
      %v5047 = vor.u32 %v5046, %v5042
      %v5048 = vrot.slane %v5047, 4
      %v5050 = vshll.u32 %v5014, 16
      %v5052 = vrot.slane %v5050, 5
      %v5053 = vsel %vm276, %v5048, %v5052
      %v5055 = vshrl.u32 %v4984, 16
      %v5057 = vrot.slane %v5055, 4
      %v5058 = vshll.u32 %v4984, 16
      %v5060 = vrot.slane %v5058, 5
      %v5061 = vor.u32 %v5057, %v5060
      %v5062 = vrot.slane %v5061, 4
      %v5064 = vshll.u32 %v4985, 16
      %v5066 = vrot.slane %v5064, 5
      %v5067 = vsel %vm276, %v5062, %v5066
      %v5068 = vshrl.u32 %v4985, 16
      %v5070 = vrot.slane %v5068, 4
      %v5071 = vor.u32 %v5070, %v5066
      %v5072 = vrot.slane %v5071, 4
      %v5074 = vshll.u32 %v5015, 16
      %v5076 = vrot.slane %v5074, 5
      %v5077 = vsel %vm276, %v5072, %v5076
      %v5079 = vshrl.u32 %v4986, 16
      %v5081 = vrot.slane %v5079, 4
      %v5082 = vshll.u32 %v4986, 16
      %v5084 = vrot.slane %v5082, 5
      %v5085 = vor.u32 %v5081, %v5084
      %v5086 = vrot.slane %v5085, 4
      %v5088 = vshll.u32 %v4987, 16
      %v5090 = vrot.slane %v5088, 5
      %v5091 = vsel %vm276, %v5086, %v5090
      %v5092 = vshrl.u32 %v4987, 16
      %v5094 = vrot.slane %v5092, 4
      %v5095 = vor.u32 %v5094, %v5090
      %v5096 = vrot.slane %v5095, 4
      %v5098 = vshll.u32 %v5016, 16
      %v5100 = vrot.slane %v5098, 5
      %v5101 = vsel %vm276, %v5096, %v5100
      %v5103 = vshrl.u32 %v4988, 16
      %v5105 = vrot.slane %v5103, 4
      %v5106 = vshll.u32 %v4988, 16
      %v5108 = vrot.slane %v5106, 5
      %v5109 = vor.u32 %v5105, %v5108
      %v5110 = vrot.slane %v5109, 4
      %v5112 = vshll.u32 %v4989, 16
      %v5114 = vrot.slane %v5112, 5
      %v5115 = vsel %vm276, %v5110, %v5114
      %v5116 = vshrl.u32 %v4989, 16
      %v5118 = vrot.slane %v5116, 4
      %v5119 = vor.u32 %v5118, %v5114
      %v5120 = vrot.slane %v5119, 4
      %v5122 = vshll.u32 %v5017, 16
      %v5124 = vrot.slane %v5122, 5
      %v5125 = vsel %vm276, %v5120, %v5124
      %v5127 = vshrl.u32 %v4990, 16
      %v5129 = vrot.slane %v5127, 4
      %v5130 = vshll.u32 %v4990, 16
      %v5132 = vrot.slane %v5130, 5
      %v5133 = vor.u32 %v5129, %v5132
      %v5134 = vrot.slane %v5133, 4
      %v5136 = vshll.u32 %v4991, 16
      %v5138 = vrot.slane %v5136, 5
      %v5139 = vsel %vm276, %v5134, %v5138
      %v5140 = vshrl.u32 %v4991, 16
      %v5142 = vrot.slane %v5140, 4
      %v5143 = vor.u32 %v5142, %v5138
      %v5144 = vrot.slane %v5143, 4
      %v5146 = vshll.u32 %v5018, 16
      %v5148 = vrot.slane %v5146, 5
      %v5149 = vsel %vm276, %v5144, %v5148
      %v5151 = vshrl.u32 %v4992, 16
      %v5153 = vrot.slane %v5151, 4
      %v5154 = vshll.u32 %v4992, 16
      %v5156 = vrot.slane %v5154, 5
      %v5157 = vor.u32 %v5153, %v5156
      %v5158 = vrot.slane %v5157, 4
      %v5160 = vshll.u32 %v4993, 16
      %v5162 = vrot.slane %v5160, 5
      %v5163 = vsel %vm276, %v5158, %v5162
      %v5164 = vshrl.u32 %v4993, 16
      %v5166 = vrot.slane %v5164, 4
      %v5167 = vor.u32 %v5166, %v5162
      %v5168 = vrot.slane %v5167, 4
      %v5170 = vshll.u32 %v5019, 16
      %v5172 = vrot.slane %v5170, 5
      %v5173 = vsel %vm276, %v5168, %v5172
      %v5175 = vshrl.u32 %v4994, 16
      %v5177 = vrot.slane %v5175, 4
      %v5178 = vshll.u32 %v4994, 16
      %v5180 = vrot.slane %v5178, 5
      %v5181 = vor.u32 %v5177, %v5180
      %v5182 = vrot.slane %v5181, 4
      %v5184 = vshll.u32 %v4995, 16
      %v5186 = vrot.slane %v5184, 5
      %v5187 = vsel %vm276, %v5182, %v5186
      %v5188 = vshrl.u32 %v4995, 16
      %v5190 = vrot.slane %v5188, 4
      %v5191 = vor.u32 %v5190, %v5186
      %v5192 = vrot.slane %v5191, 4
      %v5194 = vshll.u32 %v5020, 16
      %v5196 = vrot.slane %v5194, 5
      %v5197 = vsel %vm276, %v5192, %v5196
      %v5199 = vshrl.u32 %v4996, 16
      %v5201 = vrot.slane %v5199, 4
      %v5202 = vshll.u32 %v4996, 16
      %v5204 = vrot.slane %v5202, 5
      %v5205 = vor.u32 %v5201, %v5204
      %v5206 = vrot.slane %v5205, 4
      %v5208 = vshll.u32 %v4997, 16
      %v5210 = vrot.slane %v5208, 5
      %v5211 = vsel %vm276, %v5206, %v5210
      %v5212 = vshrl.u32 %v4997, 16
      %v5214 = vrot.slane %v5212, 4
      %v5215 = vor.u32 %v5214, %v5210
      %v5216 = vrot.slane %v5215, 4
      %v5218 = vshll.u32 %v5021, 16
      %v5220 = vrot.slane %v5218, 5
      %v5221 = vsel %vm276, %v5216, %v5220
      %v5223 = vshrl.u32 %v4998, 16
      %v5225 = vrot.slane %v5223, 4
      %v5226 = vshll.u32 %v4998, 16
      %v5228 = vrot.slane %v5226, 5
      %v5229 = vor.u32 %v5225, %v5228
      %v5230 = vrot.slane %v5229, 4
      %v5232 = vshll.u32 %v4999, 16
      %v5234 = vrot.slane %v5232, 5
      %v5235 = vsel %vm276, %v5230, %v5234
      %v5236 = vshrl.u32 %v4999, 16
      %v5238 = vrot.slane %v5236, 4
      %v5239 = vor.u32 %v5238, %v5234
      %v5240 = vrot.slane %v5239, 4
      %v5242 = vshll.u32 %v5022, 16
      %v5244 = vrot.slane %v5242, 5
      %v5245 = vsel %vm276, %v5240, %v5244
      %v5247 = vshrl.u32 %v5000, 16
      %v5249 = vrot.slane %v5247, 4
      %v5250 = vshll.u32 %v5000, 16
      %v5252 = vrot.slane %v5250, 5
      %v5253 = vor.u32 %v5249, %v5252
      %v5254 = vrot.slane %v5253, 4
      %v5256 = vshll.u32 %v5001, 16
      %v5258 = vrot.slane %v5256, 5
      %v5259 = vsel %vm276, %v5254, %v5258
      %v5260 = vshrl.u32 %v5001, 16
      %v5262 = vrot.slane %v5260, 4
      %v5263 = vor.u32 %v5262, %v5258
      %v5264 = vrot.slane %v5263, 4
      %v5266 = vshll.u32 %v5023, 16
      %v5268 = vrot.slane %v5266, 5
      %v5269 = vsel %vm276, %v5264, %v5268
      %v5271 = vshrl.u32 %v5002, 16
      %v5273 = vrot.slane %v5271, 4
      %v5274 = vshll.u32 %v5002, 16
      %v5276 = vrot.slane %v5274, 5
      %v5277 = vor.u32 %v5273, %v5276
      %v5278 = vrot.slane %v5277, 4
      %v5280 = vshll.u32 %v5003, 16
      %v5282 = vrot.slane %v5280, 5
      %v5283 = vsel %vm276, %v5278, %v5282
      %v5284 = vshrl.u32 %v5003, 16
      %v5286 = vrot.slane %v5284, 4
      %v5287 = vor.u32 %v5286, %v5282
      %v5288 = vrot.slane %v5287, 4
      %v5290 = vshll.u32 %v5024, 16
      %v5292 = vrot.slane %v5290, 5
      %v5293 = vsel %vm276, %v5288, %v5292
      %v5295 = vshrl.u32 %v5004, 16
      %v5297 = vrot.slane %v5295, 4
      %v5298 = vshll.u32 %v5004, 16
      %v5300 = vrot.slane %v5298, 5
      %v5301 = vor.u32 %v5297, %v5300
      %v5302 = vrot.slane %v5301, 4
      %v5304 = vshll.u32 %v5005, 16
      %v5306 = vrot.slane %v5304, 5
      %v5307 = vsel %vm276, %v5302, %v5306
      %v5308 = vshrl.u32 %v5005, 16
      %v5310 = vrot.slane %v5308, 4
      %v5311 = vor.u32 %v5310, %v5306
      %v5312 = vrot.slane %v5311, 4
      %v5314 = vshll.u32 %v5025, 16
      %v5316 = vrot.slane %v5314, 5
      %v5317 = vsel %vm276, %v5312, %v5316
      %v5319 = vshrl.u32 %v5006, 16
      %v5321 = vrot.slane %v5319, 4
      %v5322 = vshll.u32 %v5006, 16
      %v5324 = vrot.slane %v5322, 5
      %v5325 = vor.u32 %v5321, %v5324
      %v5326 = vrot.slane %v5325, 4
      %v5328 = vshll.u32 %v5007, 16
      %v5330 = vrot.slane %v5328, 5
      %v5331 = vsel %vm276, %v5326, %v5330
      %v5332 = vshrl.u32 %v5007, 16
      %v5334 = vrot.slane %v5332, 4
      %v5335 = vor.u32 %v5334, %v5330
      %v5336 = vrot.slane %v5335, 4
      %v5338 = vshll.u32 %v5026, 16
      %v5340 = vrot.slane %v5338, 5
      %v5341 = vsel %vm276, %v5336, %v5340
      %v5343 = vshrl.u32 %v5008, 16
      %v5345 = vrot.slane %v5343, 4
      %v5346 = vshll.u32 %v5008, 16
      %v5348 = vrot.slane %v5346, 5
      %v5349 = vor.u32 %v5345, %v5348
      %v5350 = vrot.slane %v5349, 4
      %v5352 = vshll.u32 %v5009, 16
      %v5354 = vrot.slane %v5352, 5
      %v5355 = vsel %vm276, %v5350, %v5354
      %v5356 = vshrl.u32 %v5009, 16
      %v5358 = vrot.slane %v5356, 4
      %v5359 = vor.u32 %v5358, %v5354
      %v5360 = vrot.slane %v5359, 4
      %v5362 = vshll.u32 %v5027, 16
      %v5364 = vrot.slane %v5362, 5
      %v5365 = vsel %vm276, %v5360, %v5364
      %v5367 = vshrl.u32 %v5010, 16
      %v5369 = vrot.slane %v5367, 4
      %v5370 = vshll.u32 %v5010, 16
      %v5372 = vrot.slane %v5370, 5
      %v5373 = vor.u32 %v5369, %v5372
      %v5374 = vrot.slane %v5373, 4
      %v5376 = vshll.u32 %v5011, 16
      %v5378 = vrot.slane %v5376, 5
      %v5379 = vsel %vm276, %v5374, %v5378
      %v5380 = vshrl.u32 %v5011, 16
      %v5382 = vrot.slane %v5380, 4
      %v5383 = vor.u32 %v5382, %v5378
      %v5384 = vrot.slane %v5383, 4
      %v5386 = vshll.u32 %v5028, 16
      %v5388 = vrot.slane %v5386, 5
      %v5389 = vsel %vm276, %v5384, %v5388
      %v5391 = vshrl.u32 %v5012, 16
      %v5393 = vrot.slane %v5391, 4
      %v5394 = vshll.u32 %v5012, 16
      %v5396 = vrot.slane %v5394, 5
      %v5397 = vor.u32 %v5393, %v5396
      %v5398 = vrot.slane %v5397, 4
      %v5400 = vshll.u32 %v5013, 16
      %v5402 = vrot.slane %v5400, 5
      %v5403 = vsel %vm276, %v5398, %v5402
      %v5404 = vshrl.u32 %v5013, 16
      %v5406 = vrot.slane %v5404, 4
      %v5407 = vor.u32 %v5406, %v5402
      %v5408 = vrot.slane %v5407, 4
      %v5410 = vshll.u32 %v5029, 16
      %v5412 = vrot.slane %v5410, 5
      %v5413 = vsel %vm276, %v5408, %v5412
      %v5414 = vld [vmem:[#allocation2] sm:$0xe]
      %v5415 = vld [vmem:[#allocation2 + $0xc] sm:$0xe]
      %v5416 = vld [vmem:[#allocation2 + $0x18] sm:$0xe]
      %v5417 = vld [vmem:[#allocation2 + $0x24] sm:$0xe]
      %v5418 = vld [vmem:[#allocation2 + $0x30] sm:$0xe]
      %v5419 = vld [vmem:[#allocation2 + $0x3c] sm:$0xe]
      %v5420 = vld [vmem:[#allocation2 + $0x48] sm:$0xe]
      %v5421 = vld [vmem:[#allocation2 + $0x54] sm:$0xe]
      %v5422 = vld [vmem:[#allocation2 + $0x60] sm:$0xe]
      %v5423 = vld [vmem:[#allocation2 + $0x6c] sm:$0xe]
      %v5424 = vld [vmem:[#allocation2 + $0x78] sm:$0xe]
      %v5425 = vld [vmem:[#allocation2 + $0x84] sm:$0xe]
      %v5426 = vld [vmem:[#allocation2 + $0x90] sm:$0xe]
      %v5427 = vld [vmem:[#allocation2 + $0x9c] sm:$0xe]
      %v5428 = vld [vmem:[#allocation2 + $0xa8] sm:$0xe]
      %v5429 = vld [vmem:[#allocation2 + $0xb4] sm:$0xe]
      %v5478 = vrot.slane %v5414, 5
      %v5479 = vrot.slane %v5478, 4
      %v5480 = vrot.slane %v4983, 5
      %v5481 = vsel %vm727, %v5479, %v5480
      %v5482 = vrot.slane %v5480, 4
      %v5483 = vrot.slane %v5014, 5
      %v5484 = vsel %vm727, %v5482, %v5483
      %v5485 = vrot.slane %v5415, 5
      %v5486 = vrot.slane %v5485, 4
      %v5487 = vrot.slane %v4985, 5
      %v5488 = vsel %vm727, %v5486, %v5487
      %v5489 = vrot.slane %v5487, 4
      %v5490 = vrot.slane %v5015, 5
      %v5491 = vsel %vm727, %v5489, %v5490
      %v5492 = vrot.slane %v5416, 5
      %v5493 = vrot.slane %v5492, 4
      %v5494 = vrot.slane %v4987, 5
      %v5495 = vsel %vm727, %v5493, %v5494
      %v5496 = vrot.slane %v5494, 4
      %v5497 = vrot.slane %v5016, 5
      %v5498 = vsel %vm727, %v5496, %v5497
      %v5499 = vrot.slane %v5417, 5
      %v5500 = vrot.slane %v5499, 4
      %v5501 = vrot.slane %v4989, 5
      %v5502 = vsel %vm727, %v5500, %v5501
      %v5503 = vrot.slane %v5501, 4
      %v5504 = vrot.slane %v5017, 5
      %v5505 = vsel %vm727, %v5503, %v5504
      %v5506 = vrot.slane %v5418, 5
      %v5507 = vrot.slane %v5506, 4
      %v5508 = vrot.slane %v4991, 5
      %v5509 = vsel %vm727, %v5507, %v5508
      %v5510 = vrot.slane %v5508, 4
      %v5511 = vrot.slane %v5018, 5
      %v5512 = vsel %vm727, %v5510, %v5511
      %v5513 = vrot.slane %v5419, 5
      %v5514 = vrot.slane %v5513, 4
      %v5515 = vrot.slane %v4993, 5
      %v5516 = vsel %vm727, %v5514, %v5515
      %v5517 = vrot.slane %v5515, 4
      %v5518 = vrot.slane %v5019, 5
      %v5519 = vsel %vm727, %v5517, %v5518
      %v5520 = vrot.slane %v5420, 5
      %v5521 = vrot.slane %v5520, 4
      %v5522 = vrot.slane %v4995, 5
      %v5523 = vsel %vm727, %v5521, %v5522
      %v5524 = vrot.slane %v5522, 4
      %v5525 = vrot.slane %v5020, 5
      %v5526 = vsel %vm727, %v5524, %v5525
      %v5527 = vrot.slane %v5421, 5
      %v5528 = vrot.slane %v5527, 4
      %v5529 = vrot.slane %v4997, 5
      %v5530 = vsel %vm727, %v5528, %v5529
      %v5531 = vrot.slane %v5529, 4
      %v5532 = vrot.slane %v5021, 5
      %v5533 = vsel %vm727, %v5531, %v5532
      %v5534 = vrot.slane %v5422, 5
      %v5535 = vrot.slane %v5534, 4
      %v5536 = vrot.slane %v4999, 5
      %v5537 = vsel %vm727, %v5535, %v5536
      %v5538 = vrot.slane %v5536, 4
      %v5539 = vrot.slane %v5022, 5
      %v5540 = vsel %vm727, %v5538, %v5539
      %v5541 = vrot.slane %v5423, 5
      %v5542 = vrot.slane %v5541, 4
      %v5543 = vrot.slane %v5001, 5
      %v5544 = vsel %vm727, %v5542, %v5543
      %v5545 = vrot.slane %v5543, 4
      %v5546 = vrot.slane %v5023, 5
      %v5547 = vsel %vm727, %v5545, %v5546
      %v5548 = vrot.slane %v5424, 5
      %v5549 = vrot.slane %v5548, 4
      %v5550 = vrot.slane %v5003, 5
      %v5551 = vsel %vm727, %v5549, %v5550
      %v5552 = vrot.slane %v5550, 4
      %v5553 = vrot.slane %v5024, 5
      %v5554 = vsel %vm727, %v5552, %v5553
      %v5555 = vrot.slane %v5425, 5
      %v5556 = vrot.slane %v5555, 4
      %v5557 = vrot.slane %v5005, 5
      %v5558 = vsel %vm727, %v5556, %v5557
      %v5559 = vrot.slane %v5557, 4
      %v5560 = vrot.slane %v5025, 5
      %v5561 = vsel %vm727, %v5559, %v5560
      %v5562 = vrot.slane %v5426, 5
      %v5563 = vrot.slane %v5562, 4
      %v5564 = vrot.slane %v5007, 5
      %v5565 = vsel %vm727, %v5563, %v5564
      %v5566 = vrot.slane %v5564, 4
      %v5567 = vrot.slane %v5026, 5
      %v5568 = vsel %vm727, %v5566, %v5567
      %v5569 = vrot.slane %v5427, 5
      %v5570 = vrot.slane %v5569, 4
      %v5571 = vrot.slane %v5009, 5
      %v5572 = vsel %vm727, %v5570, %v5571
      %v5573 = vrot.slane %v5571, 4
      %v5574 = vrot.slane %v5027, 5
      %v5575 = vsel %vm727, %v5573, %v5574
      %v5576 = vrot.slane %v5428, 5
      %v5577 = vrot.slane %v5576, 4
      %v5578 = vrot.slane %v5011, 5
      %v5579 = vsel %vm727, %v5577, %v5578
      %v5580 = vrot.slane %v5578, 4
      %v5581 = vrot.slane %v5028, 5
      %v5582 = vsel %vm727, %v5580, %v5581
      %v5583 = vrot.slane %v5429, 5
      %v5584 = vrot.slane %v5583, 4
      %v5585 = vrot.slane %v5013, 5
      %v5586 = vsel %vm727, %v5584, %v5585
      %v5587 = vrot.slane %v5585, 4
      %v5588 = vrot.slane %v5029, 5
      %v5589 = vsel %vm727, %v5587, %v5588
      %v5606 = vunpack.c.l.b16 %v4982
      %v5607 = vunpack.c.l.b16 %v4983
      %v5608 = vunpack.c.l.b16 %v4984
      %v5609 = vunpack.c.l.b16 %v4985
      %v5610 = vunpack.c.l.b16 %v4986
      %v5611 = vunpack.c.l.b16 %v4987
      %v5612 = vunpack.c.l.b16 %v4988
      %v5613 = vunpack.c.l.b16 %v4989
      %v5614 = vunpack.c.l.b16 %v4990
      %v5615 = vunpack.c.l.b16 %v4991
      %v5616 = vunpack.c.l.b16 %v4992
      %v5617 = vunpack.c.l.b16 %v4993
      %v5618 = vunpack.c.l.b16 %v4994
      %v5619 = vunpack.c.l.b16 %v4995
      %v5620 = vunpack.c.l.b16 %v4996
      %v5621 = vunpack.c.l.b16 %v4997
      %v5622 = vunpack.c.l.b16 %v4998
      %v5623 = vunpack.c.l.b16 %v4999
      %v5624 = vunpack.c.l.b16 %v5000
      %v5625 = vunpack.c.l.b16 %v5001
      %v5626 = vunpack.c.l.b16 %v5002
      %v5627 = vunpack.c.l.b16 %v5003
      %v5628 = vunpack.c.l.b16 %v5004
      %v5629 = vunpack.c.l.b16 %v5005
      %v5630 = vunpack.c.l.b16 %v5006
      %v5631 = vunpack.c.l.b16 %v5007
      %v5632 = vunpack.c.l.b16 %v5008
      %v5633 = vunpack.c.l.b16 %v5009
      %v5634 = vunpack.c.l.b16 %v5010
      %v5635 = vunpack.c.l.b16 %v5011
      %v5636 = vunpack.c.l.b16 %v5012
      %v5637 = vunpack.c.l.b16 %v5013
      %v5638 = vpack.c.b16 %v5607, %v5606
      %v5639 = vpack.c.b16 %v5609, %v5608
      %v5640 = vpack.c.b16 %v5611, %v5610
      %v5641 = vpack.c.b16 %v5613, %v5612
      %v5642 = vpack.c.b16 %v5615, %v5614
      %v5643 = vpack.c.b16 %v5617, %v5616
      %v5644 = vpack.c.b16 %v5619, %v5618
      %v5645 = vpack.c.b16 %v5621, %v5620
      %v5646 = vpack.c.b16 %v5623, %v5622
      %v5647 = vpack.c.b16 %v5625, %v5624
      %v5648 = vpack.c.b16 %v5627, %v5626
      %v5649 = vpack.c.b16 %v5629, %v5628
      %v5650 = vpack.c.b16 %v5631, %v5630
      %v5651 = vpack.c.b16 %v5633, %v5632
      %v5652 = vpack.c.b16 %v5635, %v5634
      %v5653 = vpack.c.b16 %v5637, %v5636
      %v5670 = vunpack.c.l.b16 %v5043
      %v5671 = vunpack.c.l.b16 %v5053
      %v5672 = vunpack.c.l.b16 %v5067
      %v5673 = vunpack.c.l.b16 %v5077
      %v5674 = vunpack.c.l.b16 %v5091
      %v5675 = vunpack.c.l.b16 %v5101
      %v5676 = vunpack.c.l.b16 %v5115
      %v5677 = vunpack.c.l.b16 %v5125
      %v5678 = vunpack.c.l.b16 %v5139
      %v5679 = vunpack.c.l.b16 %v5149
      %v5680 = vunpack.c.l.b16 %v5163
      %v5681 = vunpack.c.l.b16 %v5173
      %v5682 = vunpack.c.l.b16 %v5187
      %v5683 = vunpack.c.l.b16 %v5197
      %v5684 = vunpack.c.l.b16 %v5211
      %v5685 = vunpack.c.l.b16 %v5221
      %v5686 = vunpack.c.l.b16 %v5235
      %v5687 = vunpack.c.l.b16 %v5245
      %v5688 = vunpack.c.l.b16 %v5259
      %v5689 = vunpack.c.l.b16 %v5269
      %v5690 = vunpack.c.l.b16 %v5283
      %v5691 = vunpack.c.l.b16 %v5293
      %v5692 = vunpack.c.l.b16 %v5307
      %v5693 = vunpack.c.l.b16 %v5317
      %v5694 = vunpack.c.l.b16 %v5331
      %v5695 = vunpack.c.l.b16 %v5341
      %v5696 = vunpack.c.l.b16 %v5355
      %v5697 = vunpack.c.l.b16 %v5365
      %v5698 = vunpack.c.l.b16 %v5379
      %v5699 = vunpack.c.l.b16 %v5389
      %v5700 = vunpack.c.l.b16 %v5403
      %v5701 = vunpack.c.l.b16 %v5413
      %v5702 = vpack.c.b16 %v5671, %v5670
      %v5703 = vpack.c.b16 %v5673, %v5672
      %v5704 = vpack.c.b16 %v5675, %v5674
      %v5705 = vpack.c.b16 %v5677, %v5676
      %v5706 = vpack.c.b16 %v5679, %v5678
      %v5707 = vpack.c.b16 %v5681, %v5680
      %v5708 = vpack.c.b16 %v5683, %v5682
      %v5709 = vpack.c.b16 %v5685, %v5684
      %v5710 = vpack.c.b16 %v5687, %v5686
      %v5711 = vpack.c.b16 %v5689, %v5688
      %v5712 = vpack.c.b16 %v5691, %v5690
      %v5713 = vpack.c.b16 %v5693, %v5692
      %v5714 = vpack.c.b16 %v5695, %v5694
      %v5715 = vpack.c.b16 %v5697, %v5696
      %v5716 = vpack.c.b16 %v5699, %v5698
      %v5717 = vpack.c.b16 %v5701, %v5700
      %v5734 = vunpack.c.l.b16 %v5481
      %v5735 = vunpack.c.l.b16 %v5484
      %v5736 = vunpack.c.l.b16 %v5488
      %v5737 = vunpack.c.l.b16 %v5491
      %v5738 = vunpack.c.l.b16 %v5495
      %v5739 = vunpack.c.l.b16 %v5498
      %v5740 = vunpack.c.l.b16 %v5502
      %v5741 = vunpack.c.l.b16 %v5505
      %v5742 = vunpack.c.l.b16 %v5509
      %v5743 = vunpack.c.l.b16 %v5512
      %v5744 = vunpack.c.l.b16 %v5516
      %v5745 = vunpack.c.l.b16 %v5519
      %v5746 = vunpack.c.l.b16 %v5523
      %v5747 = vunpack.c.l.b16 %v5526
      %v5748 = vunpack.c.l.b16 %v5530
      %v5749 = vunpack.c.l.b16 %v5533
      %v5750 = vunpack.c.l.b16 %v5537
      %v5751 = vunpack.c.l.b16 %v5540
      %v5752 = vunpack.c.l.b16 %v5544
      %v5753 = vunpack.c.l.b16 %v5547
      %v5754 = vunpack.c.l.b16 %v5551
      %v5755 = vunpack.c.l.b16 %v5554
      %v5756 = vunpack.c.l.b16 %v5558
      %v5757 = vunpack.c.l.b16 %v5561
      %v5758 = vunpack.c.l.b16 %v5565
      %v5759 = vunpack.c.l.b16 %v5568
      %v5760 = vunpack.c.l.b16 %v5572
      %v5761 = vunpack.c.l.b16 %v5575
      %v5762 = vunpack.c.l.b16 %v5579
      %v5763 = vunpack.c.l.b16 %v5582
      %v5764 = vunpack.c.l.b16 %v5586
      %v5765 = vunpack.c.l.b16 %v5589
      %v5766 = vpack.c.b16 %v5735, %v5734
      %v5767 = vpack.c.b16 %v5737, %v5736
      %v5768 = vpack.c.b16 %v5739, %v5738
      %v5769 = vpack.c.b16 %v5741, %v5740
      %v5770 = vpack.c.b16 %v5743, %v5742
      %v5771 = vpack.c.b16 %v5745, %v5744
      %v5772 = vpack.c.b16 %v5747, %v5746
      %v5773 = vpack.c.b16 %v5749, %v5748
      %v5774 = vpack.c.b16 %v5751, %v5750
      %v5775 = vpack.c.b16 %v5753, %v5752
      %v5776 = vpack.c.b16 %v5755, %v5754
      %v5777 = vpack.c.b16 %v5757, %v5756
      %v5778 = vpack.c.b16 %v5759, %v5758
      %v5779 = vpack.c.b16 %v5761, %v5760
      %v5780 = vpack.c.b16 %v5763, %v5762
      %v5781 = vpack.c.b16 %v5765, %v5764
      %v5798 = vld [vmem:[%s3] sm:$0xf]
      %v5799 = vld [vmem:[%s3 + $0x4] sm:$0xf]
      %v5800 = vld [vmem:[%s3 + $0x8] sm:$0xf]
      %v5801 = vld [vmem:[%s3 + $0xc] sm:$0xf]
      %v5802 = vld [vmem:[%s3 + $0x10] sm:$0xf]
      %v5803 = vld [vmem:[%s3 + $0x14] sm:$0xf]
      %v5804 = vld [vmem:[%s3 + $0x18] sm:$0xf]
      %v5805 = vld [vmem:[%s3 + $0x1c] sm:$0xf]
      %v5806 = vld [vmem:[%s3 + $0x20] sm:$0xf]
      %v5807 = vld [vmem:[%s3 + $0x24] sm:$0xf]
      %v5808 = vld [vmem:[%s3 + $0x28] sm:$0xf]
      %v5809 = vld [vmem:[%s3 + $0x2c] sm:$0xf]
      %v5810 = vld [vmem:[%s3 + $0x30] sm:$0xf]
      %v5811 = vld [vmem:[%s3 + $0x34] sm:$0xf]
      %v5812 = vld [vmem:[%s3 + $0x38] sm:$0xf]
      %v5813 = vld [vmem:[%s3 + $0x3c] sm:$0xf]
      %v5814 = vld [vmem:[%s3 + $0x40] sm:$0xf]
      %v5815 = vld [vmem:[%s3 + $0x44] sm:$0xf]
      %v5816 = vld [vmem:[%s3 + $0x48] sm:$0xf]
      %v5817 = vld [vmem:[%s3 + $0x4c] sm:$0xf]
      %v5818 = vld [vmem:[%s3 + $0x50] sm:$0xf]
      %v5819 = vld [vmem:[%s3 + $0x54] sm:$0xf]
      %v5820 = vld [vmem:[%s3 + $0x58] sm:$0xf]
      %v5821 = vld [vmem:[%s3 + $0x5c] sm:$0xf]
      %v5822 = vld [vmem:[%s3 + $0x60] sm:$0xf]
      %v5823 = vld [vmem:[%s3 + $0x64] sm:$0xf]
      %v5824 = vld [vmem:[%s3 + $0x68] sm:$0xf]
      %v5825 = vld [vmem:[%s3 + $0x6c] sm:$0xf]
      %v5826 = vld [vmem:[%s3 + $0x70] sm:$0xf]
      %v5827 = vld [vmem:[%s3 + $0x74] sm:$0xf]
      %v5828 = vld [vmem:[%s3 + $0x78] sm:$0xf]
      %v5829 = vld [vmem:[%s3 + $0x7c] sm:$0xf]
      %v5830 = vld [vmem:[%s3 + $0x80] sm:$0xf]
      %v5831 = vld [vmem:[%s3 + $0x84] sm:$0xf]
      %v5832 = vld [vmem:[%s3 + $0x88] sm:$0xf]
      %v5833 = vld [vmem:[%s3 + $0x8c] sm:$0xf]
      %v5834 = vld [vmem:[%s3 + $0x90] sm:$0xf]
      %v5835 = vld [vmem:[%s3 + $0x94] sm:$0xf]
      %v5836 = vld [vmem:[%s3 + $0x98] sm:$0xf]
      %v5837 = vld [vmem:[%s3 + $0x9c] sm:$0xf]
      %v5838 = vld [vmem:[%s3 + $0xa0] sm:$0xf]
      %v5839 = vld [vmem:[%s3 + $0xa4] sm:$0xf]
      %v5840 = vld [vmem:[%s3 + $0xa8] sm:$0xf]
      %v5841 = vld [vmem:[%s3 + $0xac] sm:$0xf]
      %v5842 = vld [vmem:[%s3 + $0xb0] sm:$0xf]
      %v5843 = vld [vmem:[%s3 + $0xb4] sm:$0xf]
      %v5844 = vld [vmem:[%s3 + $0xb8] sm:$0xf]
      %v5845 = vld [vmem:[%s3 + $0xbc] sm:$0xf]
      %v5846 = vld [vmem:[%s4867] sm:$0xf]
      %v5847 = vld [vmem:[%s4867 + $0x4] sm:$0xf]
      %v5848 = vld [vmem:[%s4867 + $0xc] sm:$0xf]
      %v5849 = vld [vmem:[%s4867 + $0x10] sm:$0xf]
      %v5850 = vld [vmem:[%s4867 + $0x18] sm:$0xf]
      %v5851 = vld [vmem:[%s4867 + $0x1c] sm:$0xf]
      %v5852 = vld [vmem:[%s4867 + $0x24] sm:$0xf]
      %v5853 = vld [vmem:[%s4867 + $0x28] sm:$0xf]
      %v5854 = vld [vmem:[%s4867 + $0x30] sm:$0xf]
      %v5855 = vld [vmem:[%s4867 + $0x34] sm:$0xf]
      %v5856 = vld [vmem:[%s4867 + $0x3c] sm:$0xf]
      %v5857 = vld [vmem:[%s4867 + $0x40] sm:$0xf]
      %v5858 = vld [vmem:[%s4867 + $0x48] sm:$0xf]
      %v5859 = vld [vmem:[%s4867 + $0x4c] sm:$0xf]
      %v5860 = vld [vmem:[%s4867 + $0x54] sm:$0xf]
      %v5861 = vld [vmem:[%s4867 + $0x58] sm:$0xf]
      %v5862 = vld [vmem:[%s4867 + $0x60] sm:$0xf]
      %v5863 = vld [vmem:[%s4867 + $0x64] sm:$0xf]
      %v5864 = vld [vmem:[%s4867 + $0x6c] sm:$0xf]
      %v5865 = vld [vmem:[%s4867 + $0x70] sm:$0xf]
      %v5866 = vld [vmem:[%s4867 + $0x78] sm:$0xf]
      %v5867 = vld [vmem:[%s4867 + $0x7c] sm:$0xf]
      %v5868 = vld [vmem:[%s4867 + $0x84] sm:$0xf]
      %v5869 = vld [vmem:[%s4867 + $0x88] sm:$0xf]
      %v5870 = vld [vmem:[%s4867 + $0x90] sm:$0xf]
      %v5871 = vld [vmem:[%s4867 + $0x94] sm:$0xf]
      %v5872 = vld [vmem:[%s4867 + $0x9c] sm:$0xf]
      %v5873 = vld [vmem:[%s4867 + $0xa0] sm:$0xf]
      %v5874 = vld [vmem:[%s4867 + $0xa8] sm:$0xf]
      %v5875 = vld [vmem:[%s4867 + $0xac] sm:$0xf]
      %v5876 = vld [vmem:[%s4867 + $0xb4] sm:$0xf]
      %v5877 = vld [vmem:[%s4867 + $0xb8] sm:$0xf]
      %v5878 = vld [vmem:[%s4867 + $0x8] sm:$0x1]
      %v5879 = vld [vmem:[%s4867 + $0x14] sm:$0x1]
      %v5880 = vld [vmem:[%s4867 + $0x20] sm:$0x1]
      %v5881 = vld [vmem:[%s4867 + $0x2c] sm:$0x1]
      %v5882 = vld [vmem:[%s4867 + $0x38] sm:$0x1]
      %v5883 = vld [vmem:[%s4867 + $0x44] sm:$0x1]
      %v5884 = vld [vmem:[%s4867 + $0x50] sm:$0x1]
      %v5885 = vld [vmem:[%s4867 + $0x5c] sm:$0x1]
      %v5886 = vld [vmem:[%s4867 + $0x68] sm:$0x1]
      %v5887 = vld [vmem:[%s4867 + $0x74] sm:$0x1]
      %v5888 = vld [vmem:[%s4867 + $0x80] sm:$0x1]
      %v5889 = vld [vmem:[%s4867 + $0x8c] sm:$0x1]
      %v5890 = vld [vmem:[%s4867 + $0x98] sm:$0x1]
      %v5891 = vld [vmem:[%s4867 + $0xa4] sm:$0x1]
      %v5892 = vld [vmem:[%s4867 + $0xb0] sm:$0x1]
      %v5893 = vld [vmem:[%s4867 + $0xbc] sm:$0x1]
      %v5895 = vshrl.u32 %v5846, 16
      %v5897 = vrot.slane %v5895, 4
      %v5898 = vshll.u32 %v5846, 16
      %v5900 = vrot.slane %v5898, 5
      %v5901 = vor.u32 %v5897, %v5900
      %v5902 = vrot.slane %v5901, 4
      %v5904 = vshll.u32 %v5847, 16
      %v5906 = vrot.slane %v5904, 5
      %v5907 = vsel %vm276, %v5902, %v5906
      %v5908 = vshrl.u32 %v5847, 16
      %v5910 = vrot.slane %v5908, 4
      %v5911 = vor.u32 %v5910, %v5906
      %v5912 = vrot.slane %v5911, 4
      %v5914 = vshll.u32 %v5878, 16
      %v5916 = vrot.slane %v5914, 5
      %v5917 = vsel %vm276, %v5912, %v5916
      %v5919 = vshrl.u32 %v5848, 16
      %v5921 = vrot.slane %v5919, 4
      %v5922 = vshll.u32 %v5848, 16
      %v5924 = vrot.slane %v5922, 5
      %v5925 = vor.u32 %v5921, %v5924
      %v5926 = vrot.slane %v5925, 4
      %v5928 = vshll.u32 %v5849, 16
      %v5930 = vrot.slane %v5928, 5
      %v5931 = vsel %vm276, %v5926, %v5930
      %v5932 = vshrl.u32 %v5849, 16
      %v5934 = vrot.slane %v5932, 4
      %v5935 = vor.u32 %v5934, %v5930
      %v5936 = vrot.slane %v5935, 4
      %v5938 = vshll.u32 %v5879, 16
      %v5940 = vrot.slane %v5938, 5
      %v5941 = vsel %vm276, %v5936, %v5940
      %v5943 = vshrl.u32 %v5850, 16
      %v5945 = vrot.slane %v5943, 4
      %v5946 = vshll.u32 %v5850, 16
      %v5948 = vrot.slane %v5946, 5
      %v5949 = vor.u32 %v5945, %v5948
      %v5950 = vrot.slane %v5949, 4
      %v5952 = vshll.u32 %v5851, 16
      %v5954 = vrot.slane %v5952, 5
      %v5955 = vsel %vm276, %v5950, %v5954
      %v5956 = vshrl.u32 %v5851, 16
      %v5958 = vrot.slane %v5956, 4
      %v5959 = vor.u32 %v5958, %v5954
      %v5960 = vrot.slane %v5959, 4
      %v5962 = vshll.u32 %v5880, 16
      %v5964 = vrot.slane %v5962, 5
      %v5965 = vsel %vm276, %v5960, %v5964
      %v5967 = vshrl.u32 %v5852, 16
      %v5969 = vrot.slane %v5967, 4
      %v5970 = vshll.u32 %v5852, 16
      %v5972 = vrot.slane %v5970, 5
      %v5973 = vor.u32 %v5969, %v5972
      %v5974 = vrot.slane %v5973, 4
      %v5976 = vshll.u32 %v5853, 16
      %v5978 = vrot.slane %v5976, 5
      %v5979 = vsel %vm276, %v5974, %v5978
      %v5980 = vshrl.u32 %v5853, 16
      %v5982 = vrot.slane %v5980, 4
      %v5983 = vor.u32 %v5982, %v5978
      %v5984 = vrot.slane %v5983, 4
      %v5986 = vshll.u32 %v5881, 16
      %v5988 = vrot.slane %v5986, 5
      %v5989 = vsel %vm276, %v5984, %v5988
      %v5991 = vshrl.u32 %v5854, 16
      %v5993 = vrot.slane %v5991, 4
      %v5994 = vshll.u32 %v5854, 16
      %v5996 = vrot.slane %v5994, 5
      %v5997 = vor.u32 %v5993, %v5996
      %v5998 = vrot.slane %v5997, 4
      %v6000 = vshll.u32 %v5855, 16
      %v6002 = vrot.slane %v6000, 5
      %v6003 = vsel %vm276, %v5998, %v6002
      %v6004 = vshrl.u32 %v5855, 16
      %v6006 = vrot.slane %v6004, 4
      %v6007 = vor.u32 %v6006, %v6002
      %v6008 = vrot.slane %v6007, 4
      %v6010 = vshll.u32 %v5882, 16
      %v6012 = vrot.slane %v6010, 5
      %v6013 = vsel %vm276, %v6008, %v6012
      %v6015 = vshrl.u32 %v5856, 16
      %v6017 = vrot.slane %v6015, 4
      %v6018 = vshll.u32 %v5856, 16
      %v6020 = vrot.slane %v6018, 5
      %v6021 = vor.u32 %v6017, %v6020
      %v6022 = vrot.slane %v6021, 4
      %v6024 = vshll.u32 %v5857, 16
      %v6026 = vrot.slane %v6024, 5
      %v6027 = vsel %vm276, %v6022, %v6026
      %v6028 = vshrl.u32 %v5857, 16
      %v6030 = vrot.slane %v6028, 4
      %v6031 = vor.u32 %v6030, %v6026
      %v6032 = vrot.slane %v6031, 4
      %v6034 = vshll.u32 %v5883, 16
      %v6036 = vrot.slane %v6034, 5
      %v6037 = vsel %vm276, %v6032, %v6036
      %v6039 = vshrl.u32 %v5858, 16
      %v6041 = vrot.slane %v6039, 4
      %v6042 = vshll.u32 %v5858, 16
      %v6044 = vrot.slane %v6042, 5
      %v6045 = vor.u32 %v6041, %v6044
      %v6046 = vrot.slane %v6045, 4
      %v6048 = vshll.u32 %v5859, 16
      %v6050 = vrot.slane %v6048, 5
      %v6051 = vsel %vm276, %v6046, %v6050
      %v6052 = vshrl.u32 %v5859, 16
      %v6054 = vrot.slane %v6052, 4
      %v6055 = vor.u32 %v6054, %v6050
      %v6056 = vrot.slane %v6055, 4
      %v6058 = vshll.u32 %v5884, 16
      %v6060 = vrot.slane %v6058, 5
      %v6061 = vsel %vm276, %v6056, %v6060
      %v6063 = vshrl.u32 %v5860, 16
      %v6065 = vrot.slane %v6063, 4
      %v6066 = vshll.u32 %v5860, 16
      %v6068 = vrot.slane %v6066, 5
      %v6069 = vor.u32 %v6065, %v6068
      %v6070 = vrot.slane %v6069, 4
      %v6072 = vshll.u32 %v5861, 16
      %v6074 = vrot.slane %v6072, 5
      %v6075 = vsel %vm276, %v6070, %v6074
      %v6076 = vshrl.u32 %v5861, 16
      %v6078 = vrot.slane %v6076, 4
      %v6079 = vor.u32 %v6078, %v6074
      %v6080 = vrot.slane %v6079, 4
      %v6082 = vshll.u32 %v5885, 16
      %v6084 = vrot.slane %v6082, 5
      %v6085 = vsel %vm276, %v6080, %v6084
      %v6087 = vshrl.u32 %v5862, 16
      %v6089 = vrot.slane %v6087, 4
      %v6090 = vshll.u32 %v5862, 16
      %v6092 = vrot.slane %v6090, 5
      %v6093 = vor.u32 %v6089, %v6092
      %v6094 = vrot.slane %v6093, 4
      %v6096 = vshll.u32 %v5863, 16
      %v6098 = vrot.slane %v6096, 5
      %v6099 = vsel %vm276, %v6094, %v6098
      %v6100 = vshrl.u32 %v5863, 16
      %v6102 = vrot.slane %v6100, 4
      %v6103 = vor.u32 %v6102, %v6098
      %v6104 = vrot.slane %v6103, 4
      %v6106 = vshll.u32 %v5886, 16
      %v6108 = vrot.slane %v6106, 5
      %v6109 = vsel %vm276, %v6104, %v6108
      %v6111 = vshrl.u32 %v5864, 16
      %v6113 = vrot.slane %v6111, 4
      %v6114 = vshll.u32 %v5864, 16
      %v6116 = vrot.slane %v6114, 5
      %v6117 = vor.u32 %v6113, %v6116
      %v6118 = vrot.slane %v6117, 4
      %v6120 = vshll.u32 %v5865, 16
      %v6122 = vrot.slane %v6120, 5
      %v6123 = vsel %vm276, %v6118, %v6122
      %v6124 = vshrl.u32 %v5865, 16
      %v6126 = vrot.slane %v6124, 4
      %v6127 = vor.u32 %v6126, %v6122
      %v6128 = vrot.slane %v6127, 4
      %v6130 = vshll.u32 %v5887, 16
      %v6132 = vrot.slane %v6130, 5
      %v6133 = vsel %vm276, %v6128, %v6132
      %v6135 = vshrl.u32 %v5866, 16
      %v6137 = vrot.slane %v6135, 4
      %v6138 = vshll.u32 %v5866, 16
      %v6140 = vrot.slane %v6138, 5
      %v6141 = vor.u32 %v6137, %v6140
      %v6142 = vrot.slane %v6141, 4
      %v6144 = vshll.u32 %v5867, 16
      %v6146 = vrot.slane %v6144, 5
      %v6147 = vsel %vm276, %v6142, %v6146
      %v6148 = vshrl.u32 %v5867, 16
      %v6150 = vrot.slane %v6148, 4
      %v6151 = vor.u32 %v6150, %v6146
      %v6152 = vrot.slane %v6151, 4
      %v6154 = vshll.u32 %v5888, 16
      %v6156 = vrot.slane %v6154, 5
      %v6157 = vsel %vm276, %v6152, %v6156
      %v6159 = vshrl.u32 %v5868, 16
      %v6161 = vrot.slane %v6159, 4
      %v6162 = vshll.u32 %v5868, 16
      %v6164 = vrot.slane %v6162, 5
      %v6165 = vor.u32 %v6161, %v6164
      %v6166 = vrot.slane %v6165, 4
      %v6168 = vshll.u32 %v5869, 16
      %v6170 = vrot.slane %v6168, 5
      %v6171 = vsel %vm276, %v6166, %v6170
      %v6172 = vshrl.u32 %v5869, 16
      %v6174 = vrot.slane %v6172, 4
      %v6175 = vor.u32 %v6174, %v6170
      %v6176 = vrot.slane %v6175, 4
      %v6178 = vshll.u32 %v5889, 16
      %v6180 = vrot.slane %v6178, 5
      %v6181 = vsel %vm276, %v6176, %v6180
      %v6183 = vshrl.u32 %v5870, 16
      %v6185 = vrot.slane %v6183, 4
      %v6186 = vshll.u32 %v5870, 16
      %v6188 = vrot.slane %v6186, 5
      %v6189 = vor.u32 %v6185, %v6188
      %v6190 = vrot.slane %v6189, 4
      %v6192 = vshll.u32 %v5871, 16
      %v6194 = vrot.slane %v6192, 5
      %v6195 = vsel %vm276, %v6190, %v6194
      %v6196 = vshrl.u32 %v5871, 16
      %v6198 = vrot.slane %v6196, 4
      %v6199 = vor.u32 %v6198, %v6194
      %v6200 = vrot.slane %v6199, 4
      %v6202 = vshll.u32 %v5890, 16
      %v6204 = vrot.slane %v6202, 5
      %v6205 = vsel %vm276, %v6200, %v6204
      %v6207 = vshrl.u32 %v5872, 16
      %v6209 = vrot.slane %v6207, 4
      %v6210 = vshll.u32 %v5872, 16
      %v6212 = vrot.slane %v6210, 5
      %v6213 = vor.u32 %v6209, %v6212
      %v6214 = vrot.slane %v6213, 4
      %v6216 = vshll.u32 %v5873, 16
      %v6218 = vrot.slane %v6216, 5
      %v6219 = vsel %vm276, %v6214, %v6218
      %v6220 = vshrl.u32 %v5873, 16
      %v6222 = vrot.slane %v6220, 4
      %v6223 = vor.u32 %v6222, %v6218
      %v6224 = vrot.slane %v6223, 4
      %v6226 = vshll.u32 %v5891, 16
      %v6228 = vrot.slane %v6226, 5
      %v6229 = vsel %vm276, %v6224, %v6228
      %v6231 = vshrl.u32 %v5874, 16
      %v6233 = vrot.slane %v6231, 4
      %v6234 = vshll.u32 %v5874, 16
      %v6236 = vrot.slane %v6234, 5
      %v6237 = vor.u32 %v6233, %v6236
      %v6238 = vrot.slane %v6237, 4
      %v6240 = vshll.u32 %v5875, 16
      %v6242 = vrot.slane %v6240, 5
      %v6243 = vsel %vm276, %v6238, %v6242
      %v6244 = vshrl.u32 %v5875, 16
      %v6246 = vrot.slane %v6244, 4
      %v6247 = vor.u32 %v6246, %v6242
      %v6248 = vrot.slane %v6247, 4
      %v6250 = vshll.u32 %v5892, 16
      %v6252 = vrot.slane %v6250, 5
      %v6253 = vsel %vm276, %v6248, %v6252
      %v6255 = vshrl.u32 %v5876, 16
      %v6257 = vrot.slane %v6255, 4
      %v6258 = vshll.u32 %v5876, 16
      %v6260 = vrot.slane %v6258, 5
      %v6261 = vor.u32 %v6257, %v6260
      %v6262 = vrot.slane %v6261, 4
      %v6264 = vshll.u32 %v5877, 16
      %v6266 = vrot.slane %v6264, 5
      %v6267 = vsel %vm276, %v6262, %v6266
      %v6268 = vshrl.u32 %v5877, 16
      %v6270 = vrot.slane %v6268, 4
      %v6271 = vor.u32 %v6270, %v6266
      %v6272 = vrot.slane %v6271, 4
      %v6274 = vshll.u32 %v5893, 16
      %v6276 = vrot.slane %v6274, 5
      %v6277 = vsel %vm276, %v6272, %v6276
      %v6278 = vld [vmem:[%s4867] sm:$0xe]
      %v6279 = vld [vmem:[%s4867 + $0xc] sm:$0xe]
      %v6280 = vld [vmem:[%s4867 + $0x18] sm:$0xe]
      %v6281 = vld [vmem:[%s4867 + $0x24] sm:$0xe]
      %v6282 = vld [vmem:[%s4867 + $0x30] sm:$0xe]
      %v6283 = vld [vmem:[%s4867 + $0x3c] sm:$0xe]
      %v6284 = vld [vmem:[%s4867 + $0x48] sm:$0xe]
      %v6285 = vld [vmem:[%s4867 + $0x54] sm:$0xe]
      %v6286 = vld [vmem:[%s4867 + $0x60] sm:$0xe]
      %v6287 = vld [vmem:[%s4867 + $0x6c] sm:$0xe]
      %v6288 = vld [vmem:[%s4867 + $0x78] sm:$0xe]
      %v6289 = vld [vmem:[%s4867 + $0x84] sm:$0xe]
      %v6290 = vld [vmem:[%s4867 + $0x90] sm:$0xe]
      %v6291 = vld [vmem:[%s4867 + $0x9c] sm:$0xe]
      %v6292 = vld [vmem:[%s4867 + $0xa8] sm:$0xe]
      %v6293 = vld [vmem:[%s4867 + $0xb4] sm:$0xe]
      %v6342 = vrot.slane %v6278, 5
      %v6343 = vrot.slane %v6342, 4
      %v6344 = vrot.slane %v5847, 5
      %v6345 = vsel %vm727, %v6343, %v6344
      %v6346 = vrot.slane %v6344, 4
      %v6347 = vrot.slane %v5878, 5
      %v6348 = vsel %vm727, %v6346, %v6347
      %v6349 = vrot.slane %v6279, 5
      %v6350 = vrot.slane %v6349, 4
      %v6351 = vrot.slane %v5849, 5
      %v6352 = vsel %vm727, %v6350, %v6351
      %v6353 = vrot.slane %v6351, 4
      %v6354 = vrot.slane %v5879, 5
      %v6355 = vsel %vm727, %v6353, %v6354
      %v6356 = vrot.slane %v6280, 5
      %v6357 = vrot.slane %v6356, 4
      %v6358 = vrot.slane %v5851, 5
      %v6359 = vsel %vm727, %v6357, %v6358
      %v6360 = vrot.slane %v6358, 4
      %v6361 = vrot.slane %v5880, 5
      %v6362 = vsel %vm727, %v6360, %v6361
      %v6363 = vrot.slane %v6281, 5
      %v6364 = vrot.slane %v6363, 4
      %v6365 = vrot.slane %v5853, 5
      %v6366 = vsel %vm727, %v6364, %v6365
      %v6367 = vrot.slane %v6365, 4
      %v6368 = vrot.slane %v5881, 5
      %v6369 = vsel %vm727, %v6367, %v6368
      %v6370 = vrot.slane %v6282, 5
      %v6371 = vrot.slane %v6370, 4
      %v6372 = vrot.slane %v5855, 5
      %v6373 = vsel %vm727, %v6371, %v6372
      %v6374 = vrot.slane %v6372, 4
      %v6375 = vrot.slane %v5882, 5
      %v6376 = vsel %vm727, %v6374, %v6375
      %v6377 = vrot.slane %v6283, 5
      %v6378 = vrot.slane %v6377, 4
      %v6379 = vrot.slane %v5857, 5
      %v6380 = vsel %vm727, %v6378, %v6379
      %v6381 = vrot.slane %v6379, 4
      %v6382 = vrot.slane %v5883, 5
      %v6383 = vsel %vm727, %v6381, %v6382
      %v6384 = vrot.slane %v6284, 5
      %v6385 = vrot.slane %v6384, 4
      %v6386 = vrot.slane %v5859, 5
      %v6387 = vsel %vm727, %v6385, %v6386
      %v6388 = vrot.slane %v6386, 4
      %v6389 = vrot.slane %v5884, 5
      %v6390 = vsel %vm727, %v6388, %v6389
      %v6391 = vrot.slane %v6285, 5
      %v6392 = vrot.slane %v6391, 4
      %v6393 = vrot.slane %v5861, 5
      %v6394 = vsel %vm727, %v6392, %v6393
      %v6395 = vrot.slane %v6393, 4
      %v6396 = vrot.slane %v5885, 5
      %v6397 = vsel %vm727, %v6395, %v6396
      %v6398 = vrot.slane %v6286, 5
      %v6399 = vrot.slane %v6398, 4
      %v6400 = vrot.slane %v5863, 5
      %v6401 = vsel %vm727, %v6399, %v6400
      %v6402 = vrot.slane %v6400, 4
      %v6403 = vrot.slane %v5886, 5
      %v6404 = vsel %vm727, %v6402, %v6403
      %v6405 = vrot.slane %v6287, 5
      %v6406 = vrot.slane %v6405, 4
      %v6407 = vrot.slane %v5865, 5
      %v6408 = vsel %vm727, %v6406, %v6407
      %v6409 = vrot.slane %v6407, 4
      %v6410 = vrot.slane %v5887, 5
      %v6411 = vsel %vm727, %v6409, %v6410
      %v6412 = vrot.slane %v6288, 5
      %v6413 = vrot.slane %v6412, 4
      %v6414 = vrot.slane %v5867, 5
      %v6415 = vsel %vm727, %v6413, %v6414
      %v6416 = vrot.slane %v6414, 4
      %v6417 = vrot.slane %v5888, 5
      %v6418 = vsel %vm727, %v6416, %v6417
      %v6419 = vrot.slane %v6289, 5
      %v6420 = vrot.slane %v6419, 4
      %v6421 = vrot.slane %v5869, 5
      %v6422 = vsel %vm727, %v6420, %v6421
      %v6423 = vrot.slane %v6421, 4
      %v6424 = vrot.slane %v5889, 5
      %v6425 = vsel %vm727, %v6423, %v6424
      %v6426 = vrot.slane %v6290, 5
      %v6427 = vrot.slane %v6426, 4
      %v6428 = vrot.slane %v5871, 5
      %v6429 = vsel %vm727, %v6427, %v6428
      %v6430 = vrot.slane %v6428, 4
      %v6431 = vrot.slane %v5890, 5
      %v6432 = vsel %vm727, %v6430, %v6431
      %v6433 = vrot.slane %v6291, 5
      %v6434 = vrot.slane %v6433, 4
      %v6435 = vrot.slane %v5873, 5
      %v6436 = vsel %vm727, %v6434, %v6435
      %v6437 = vrot.slane %v6435, 4
      %v6438 = vrot.slane %v5891, 5
      %v6439 = vsel %vm727, %v6437, %v6438
      %v6440 = vrot.slane %v6292, 5
      %v6441 = vrot.slane %v6440, 4
      %v6442 = vrot.slane %v5875, 5
      %v6443 = vsel %vm727, %v6441, %v6442
      %v6444 = vrot.slane %v6442, 4
      %v6445 = vrot.slane %v5892, 5
      %v6446 = vsel %vm727, %v6444, %v6445
      %v6447 = vrot.slane %v6293, 5
      %v6448 = vrot.slane %v6447, 4
      %v6449 = vrot.slane %v5877, 5
      %v6450 = vsel %vm727, %v6448, %v6449
      %v6451 = vrot.slane %v6449, 4
      %v6452 = vrot.slane %v5893, 5
      %v6453 = vsel %vm727, %v6451, %v6452
      %v6470 = vunpack.c.l.b16 %v5846
      %v6471 = vunpack.c.l.b16 %v5847
      %v6472 = vunpack.c.l.b16 %v5848
      %v6473 = vunpack.c.l.b16 %v5849
      %v6474 = vunpack.c.l.b16 %v5850
      %v6475 = vunpack.c.l.b16 %v5851
      %v6476 = vunpack.c.l.b16 %v5852
      %v6477 = vunpack.c.l.b16 %v5853
      %v6478 = vunpack.c.l.b16 %v5854
      %v6479 = vunpack.c.l.b16 %v5855
      %v6480 = vunpack.c.l.b16 %v5856
      %v6481 = vunpack.c.l.b16 %v5857
      %v6482 = vunpack.c.l.b16 %v5858
      %v6483 = vunpack.c.l.b16 %v5859
      %v6484 = vunpack.c.l.b16 %v5860
      %v6485 = vunpack.c.l.b16 %v5861
      %v6486 = vunpack.c.l.b16 %v5862
      %v6487 = vunpack.c.l.b16 %v5863
      %v6488 = vunpack.c.l.b16 %v5864
      %v6489 = vunpack.c.l.b16 %v5865
      %v6490 = vunpack.c.l.b16 %v5866
      %v6491 = vunpack.c.l.b16 %v5867
      %v6492 = vunpack.c.l.b16 %v5868
      %v6493 = vunpack.c.l.b16 %v5869
      %v6494 = vunpack.c.l.b16 %v5870
      %v6495 = vunpack.c.l.b16 %v5871
      %v6496 = vunpack.c.l.b16 %v5872
      %v6497 = vunpack.c.l.b16 %v5873
      %v6498 = vunpack.c.l.b16 %v5874
      %v6499 = vunpack.c.l.b16 %v5875
      %v6500 = vunpack.c.l.b16 %v5876
      %v6501 = vunpack.c.l.b16 %v5877
      %v6502 = vpack.c.b16 %v6471, %v6470
      %v6503 = vpack.c.b16 %v6473, %v6472
      %v6504 = vpack.c.b16 %v6475, %v6474
      %v6505 = vpack.c.b16 %v6477, %v6476
      %v6506 = vpack.c.b16 %v6479, %v6478
      %v6507 = vpack.c.b16 %v6481, %v6480
      %v6508 = vpack.c.b16 %v6483, %v6482
      %v6509 = vpack.c.b16 %v6485, %v6484
      %v6510 = vpack.c.b16 %v6487, %v6486
      %v6511 = vpack.c.b16 %v6489, %v6488
      %v6512 = vpack.c.b16 %v6491, %v6490
      %v6513 = vpack.c.b16 %v6493, %v6492
      %v6514 = vpack.c.b16 %v6495, %v6494
      %v6515 = vpack.c.b16 %v6497, %v6496
      %v6516 = vpack.c.b16 %v6499, %v6498
      %v6517 = vpack.c.b16 %v6501, %v6500
      %v6534 = vunpack.c.l.b16 %v5907
      %v6535 = vunpack.c.l.b16 %v5917
      %v6536 = vunpack.c.l.b16 %v5931
      %v6537 = vunpack.c.l.b16 %v5941
      %v6538 = vunpack.c.l.b16 %v5955
      %v6539 = vunpack.c.l.b16 %v5965
      %v6540 = vunpack.c.l.b16 %v5979
      %v6541 = vunpack.c.l.b16 %v5989
      %v6542 = vunpack.c.l.b16 %v6003
      %v6543 = vunpack.c.l.b16 %v6013
      %v6544 = vunpack.c.l.b16 %v6027
      %v6545 = vunpack.c.l.b16 %v6037
      %v6546 = vunpack.c.l.b16 %v6051
      %v6547 = vunpack.c.l.b16 %v6061
      %v6548 = vunpack.c.l.b16 %v6075
      %v6549 = vunpack.c.l.b16 %v6085
      %v6550 = vunpack.c.l.b16 %v6099
      %v6551 = vunpack.c.l.b16 %v6109
      %v6552 = vunpack.c.l.b16 %v6123
      %v6553 = vunpack.c.l.b16 %v6133
      %v6554 = vunpack.c.l.b16 %v6147
      %v6555 = vunpack.c.l.b16 %v6157
      %v6556 = vunpack.c.l.b16 %v6171
      %v6557 = vunpack.c.l.b16 %v6181
      %v6558 = vunpack.c.l.b16 %v6195
      %v6559 = vunpack.c.l.b16 %v6205
      %v6560 = vunpack.c.l.b16 %v6219
      %v6561 = vunpack.c.l.b16 %v6229
      %v6562 = vunpack.c.l.b16 %v6243
      %v6563 = vunpack.c.l.b16 %v6253
      %v6564 = vunpack.c.l.b16 %v6267
      %v6565 = vunpack.c.l.b16 %v6277
      %v6566 = vpack.c.b16 %v6535, %v6534
      %v6567 = vpack.c.b16 %v6537, %v6536
      %v6568 = vpack.c.b16 %v6539, %v6538
      %v6569 = vpack.c.b16 %v6541, %v6540
      %v6570 = vpack.c.b16 %v6543, %v6542
      %v6571 = vpack.c.b16 %v6545, %v6544
      %v6572 = vpack.c.b16 %v6547, %v6546
      %v6573 = vpack.c.b16 %v6549, %v6548
      %v6574 = vpack.c.b16 %v6551, %v6550
      %v6575 = vpack.c.b16 %v6553, %v6552
      %v6576 = vpack.c.b16 %v6555, %v6554
      %v6577 = vpack.c.b16 %v6557, %v6556
      %v6578 = vpack.c.b16 %v6559, %v6558
      %v6579 = vpack.c.b16 %v6561, %v6560
      %v6580 = vpack.c.b16 %v6563, %v6562
      %v6581 = vpack.c.b16 %v6565, %v6564
      %v6598 = vunpack.c.l.b16 %v6345
      %v6599 = vunpack.c.l.b16 %v6348
      %v6600 = vunpack.c.l.b16 %v6352
      %v6601 = vunpack.c.l.b16 %v6355
      %v6602 = vunpack.c.l.b16 %v6359
      %v6603 = vunpack.c.l.b16 %v6362
      %v6604 = vunpack.c.l.b16 %v6366
      %v6605 = vunpack.c.l.b16 %v6369
      %v6606 = vunpack.c.l.b16 %v6373
      %v6607 = vunpack.c.l.b16 %v6376
      %v6608 = vunpack.c.l.b16 %v6380
      %v6609 = vunpack.c.l.b16 %v6383
      %v6610 = vunpack.c.l.b16 %v6387
      %v6611 = vunpack.c.l.b16 %v6390
      %v6612 = vunpack.c.l.b16 %v6394
      %v6613 = vunpack.c.l.b16 %v6397
      %v6614 = vunpack.c.l.b16 %v6401
      %v6615 = vunpack.c.l.b16 %v6404
      %v6616 = vunpack.c.l.b16 %v6408
      %v6617 = vunpack.c.l.b16 %v6411
      %v6618 = vunpack.c.l.b16 %v6415
      %v6619 = vunpack.c.l.b16 %v6418
      %v6620 = vunpack.c.l.b16 %v6422
      %v6621 = vunpack.c.l.b16 %v6425
      %v6622 = vunpack.c.l.b16 %v6429
      %v6623 = vunpack.c.l.b16 %v6432
      %v6624 = vunpack.c.l.b16 %v6436
      %v6625 = vunpack.c.l.b16 %v6439
      %v6626 = vunpack.c.l.b16 %v6443
      %v6627 = vunpack.c.l.b16 %v6446
      %v6628 = vunpack.c.l.b16 %v6450
      %v6629 = vunpack.c.l.b16 %v6453
      %v6630 = vpack.c.b16 %v6599, %v6598
      %v6631 = vpack.c.b16 %v6601, %v6600
      %v6632 = vpack.c.b16 %v6603, %v6602
      %v6633 = vpack.c.b16 %v6605, %v6604
      %v6634 = vpack.c.b16 %v6607, %v6606
      %v6635 = vpack.c.b16 %v6609, %v6608
      %v6636 = vpack.c.b16 %v6611, %v6610
      %v6637 = vpack.c.b16 %v6613, %v6612
      %v6638 = vpack.c.b16 %v6615, %v6614
      %v6639 = vpack.c.b16 %v6617, %v6616
      %v6640 = vpack.c.b16 %v6619, %v6618
      %v6641 = vpack.c.b16 %v6621, %v6620
      %v6642 = vpack.c.b16 %v6623, %v6622
      %v6643 = vpack.c.b16 %v6625, %v6624
      %v6644 = vpack.c.b16 %v6627, %v6626
      %v6645 = vpack.c.b16 %v6629, %v6628
      %s6662 = scalar_lea.vmem %s3, 192
      %v6663 = vld [vmem:[%s6662] sm:$0xf]
      %v6664 = vld [vmem:[%s6662 + $0x4] sm:$0xf]
      %v6665 = vld [vmem:[%s6662 + $0x8] sm:$0xf]
      %v6666 = vld [vmem:[%s6662 + $0xc] sm:$0xf]
      %v6667 = vld [vmem:[%s6662 + $0x10] sm:$0xf]
      %v6668 = vld [vmem:[%s6662 + $0x14] sm:$0xf]
      %v6669 = vld [vmem:[%s6662 + $0x18] sm:$0xf]
      %v6670 = vld [vmem:[%s6662 + $0x1c] sm:$0xf]
      %v6671 = vld [vmem:[%s6662 + $0x20] sm:$0xf]
      %v6672 = vld [vmem:[%s6662 + $0x24] sm:$0xf]
      %v6673 = vld [vmem:[%s6662 + $0x28] sm:$0xf]
      %v6674 = vld [vmem:[%s6662 + $0x2c] sm:$0xf]
      %v6675 = vld [vmem:[%s6662 + $0x30] sm:$0xf]
      %v6676 = vld [vmem:[%s6662 + $0x34] sm:$0xf]
      %v6677 = vld [vmem:[%s6662 + $0x38] sm:$0xf]
      %v6678 = vld [vmem:[%s6662 + $0x3c] sm:$0xf]
      %v6679 = vld [vmem:[%s6662 + $0x40] sm:$0xf]
      %v6680 = vld [vmem:[%s6662 + $0x44] sm:$0xf]
      %v6681 = vld [vmem:[%s6662 + $0x48] sm:$0xf]
      %v6682 = vld [vmem:[%s6662 + $0x4c] sm:$0xf]
      %v6683 = vld [vmem:[%s6662 + $0x50] sm:$0xf]
      %v6684 = vld [vmem:[%s6662 + $0x54] sm:$0xf]
      %v6685 = vld [vmem:[%s6662 + $0x58] sm:$0xf]
      %v6686 = vld [vmem:[%s6662 + $0x5c] sm:$0xf]
      %v6687 = vld [vmem:[%s6662 + $0x60] sm:$0xf]
      %v6688 = vld [vmem:[%s6662 + $0x64] sm:$0xf]
      %v6689 = vld [vmem:[%s6662 + $0x68] sm:$0xf]
      %v6690 = vld [vmem:[%s6662 + $0x6c] sm:$0xf]
      %v6691 = vld [vmem:[%s6662 + $0x70] sm:$0xf]
      %v6692 = vld [vmem:[%s6662 + $0x74] sm:$0xf]
      %v6693 = vld [vmem:[%s6662 + $0x78] sm:$0xf]
      %v6694 = vld [vmem:[%s6662 + $0x7c] sm:$0xf]
      %v6695 = vld [vmem:[%s6662 + $0x80] sm:$0xf]
      %v6696 = vld [vmem:[%s6662 + $0x84] sm:$0xf]
      %v6697 = vld [vmem:[%s6662 + $0x88] sm:$0xf]
      %v6698 = vld [vmem:[%s6662 + $0x8c] sm:$0xf]
      %v6699 = vld [vmem:[%s6662 + $0x90] sm:$0xf]
      %v6700 = vld [vmem:[%s6662 + $0x94] sm:$0xf]
      %v6701 = vld [vmem:[%s6662 + $0x98] sm:$0xf]
      %v6702 = vld [vmem:[%s6662 + $0x9c] sm:$0xf]
      %v6703 = vld [vmem:[%s6662 + $0xa0] sm:$0xf]
      %v6704 = vld [vmem:[%s6662 + $0xa4] sm:$0xf]
      %v6705 = vld [vmem:[%s6662 + $0xa8] sm:$0xf]
      %v6706 = vld [vmem:[%s6662 + $0xac] sm:$0xf]
      %v6707 = vld [vmem:[%s6662 + $0xb0] sm:$0xf]
      %v6708 = vld [vmem:[%s6662 + $0xb4] sm:$0xf]
      %v6709 = vld [vmem:[%s6662 + $0xb8] sm:$0xf]
      %v6710 = vld [vmem:[%s6662 + $0xbc] sm:$0xf]
      %v6759 = vunpack.c.l.b16 %v6663
      %v6760 = vunpack.c.l.b16 %v6664
      %v6761 = vunpack.c.l.b16 %v6665
      %v6762 = vunpack.c.l.b16 %v6666
      %v6763 = vunpack.c.l.b16 %v6667
      %v6764 = vunpack.c.l.b16 %v6668
      %v6765 = vunpack.c.l.b16 %v6669
      %v6766 = vunpack.c.l.b16 %v6670
      %v6767 = vunpack.c.l.b16 %v6671
      %v6768 = vunpack.c.l.b16 %v6672
      %v6769 = vunpack.c.l.b16 %v6673
      %v6770 = vunpack.c.l.b16 %v6674
      %v6771 = vunpack.c.l.b16 %v6675
      %v6772 = vunpack.c.l.b16 %v6676
      %v6773 = vunpack.c.l.b16 %v6677
      %v6774 = vunpack.c.l.b16 %v6678
      %v6775 = vunpack.c.l.b16 %v6679
      %v6776 = vunpack.c.l.b16 %v6680
      %v6777 = vunpack.c.l.b16 %v6681
      %v6778 = vunpack.c.l.b16 %v6682
      %v6779 = vunpack.c.l.b16 %v6683
      %v6780 = vunpack.c.l.b16 %v6684
      %v6781 = vunpack.c.l.b16 %v6685
      %v6782 = vunpack.c.l.b16 %v6686
      %v6783 = vunpack.c.l.b16 %v6687
      %v6784 = vunpack.c.l.b16 %v6688
      %v6785 = vunpack.c.l.b16 %v6689
      %v6786 = vunpack.c.l.b16 %v6690
      %v6787 = vunpack.c.l.b16 %v6691
      %v6788 = vunpack.c.l.b16 %v6692
      %v6789 = vunpack.c.l.b16 %v6693
      %v6790 = vunpack.c.l.b16 %v6694
      %v6791 = vunpack.c.l.b16 %v6695
      %v6792 = vunpack.c.l.b16 %v6696
      %v6793 = vunpack.c.l.b16 %v6697
      %v6794 = vunpack.c.l.b16 %v6698
      %v6795 = vunpack.c.l.b16 %v6699
      %v6796 = vunpack.c.l.b16 %v6700
      %v6797 = vunpack.c.l.b16 %v6701
      %v6798 = vunpack.c.l.b16 %v6702
      %v6799 = vunpack.c.l.b16 %v6703
      %v6800 = vunpack.c.l.b16 %v6704
      %v6801 = vunpack.c.l.b16 %v6705
      %v6802 = vunpack.c.l.b16 %v6706
      %v6803 = vunpack.c.l.b16 %v6707
      %v6804 = vunpack.c.l.b16 %v6708
      %v6805 = vunpack.c.l.b16 %v6709
      %v6806 = vunpack.c.l.b16 %v6710
      %v6807 = vpack.c.b16 %v6760, %v6759
      %v6808 = vpack.c.b16 %v6762, %v6761
      %v6809 = vpack.c.b16 %v6764, %v6763
      %v6810 = vpack.c.b16 %v6766, %v6765
      %v6811 = vpack.c.b16 %v6768, %v6767
      %v6812 = vpack.c.b16 %v6770, %v6769
      %v6813 = vpack.c.b16 %v6772, %v6771
      %v6814 = vpack.c.b16 %v6774, %v6773
      %v6815 = vpack.c.b16 %v6776, %v6775
      %v6816 = vpack.c.b16 %v6778, %v6777
      %v6817 = vpack.c.b16 %v6780, %v6779
      %v6818 = vpack.c.b16 %v6782, %v6781
      %v6819 = vpack.c.b16 %v6784, %v6783
      %v6820 = vpack.c.b16 %v6786, %v6785
      %v6821 = vpack.c.b16 %v6788, %v6787
      %v6822 = vpack.c.b16 %v6790, %v6789
      %v6823 = vpack.c.b16 %v6792, %v6791
      %v6824 = vpack.c.b16 %v6794, %v6793
      %v6825 = vpack.c.b16 %v6796, %v6795
      %v6826 = vpack.c.b16 %v6798, %v6797
      %v6827 = vpack.c.b16 %v6800, %v6799
      %v6828 = vpack.c.b16 %v6802, %v6801
      %v6829 = vpack.c.b16 %v6804, %v6803
      %v6830 = vpack.c.b16 %v6806, %v6805
      %6855 = vmatprep.subr.bf16.mxu0 0
      %6856 = vmatpush1.bf16.msra.mxu0 %v6807
      %6857 = vmatprep.subr.bf16.mxu0 0
      %6858 = vmatpush1.bf16.msra.mxu0 %v6808
      %6859 = vmatprep.subr.bf16.mxu0 0
      %6860 = vmatpush1.bf16.msra.mxu0 %v6809
      %6861 = vmatprep.subr.bf16.mxu0 0
      %6862 = vmatpush1.bf16.msra.mxu0 %v6810
      %6863 = vmatprep.subr.bf16.mxu0 0
      %6864 = vmatpush1.bf16.msra.mxu0 %v6811
      %6865 = vmatprep.subr.bf16.mxu0 0
      %6866 = vmatpush1.bf16.msra.mxu0 %v6812
      %6867 = vmatprep.subr.bf16.mxu0 0
      %6868 = vmatpush1.bf16.msra.mxu0 %v6813
      %6869 = vmatprep.subr.bf16.mxu0 0
      %6870 = vmatpush1.bf16.msra.mxu0 %v6814
      %6871 = vmatprep.subr.bf16.mxu0 0
      %6872 = vmatpush1.bf16.msra.mxu0 %v6815
      %6873 = vmatprep.subr.bf16.mxu0 0
      %6874 = vmatpush1.bf16.msra.mxu0 %v6816
      %6875 = vmatprep.subr.bf16.mxu0 0
      %6876 = vmatpush1.bf16.msra.mxu0 %v6817
      %6877 = vmatprep.subr.bf16.mxu0 0
      %6878 = vmatpush1.bf16.msra.mxu0 %v6818
      %6879 = vmatprep.subr.bf16.mxu0 0
      %6880 = vmatpush1.bf16.msra.mxu0 %v6819
      %6881 = vmatprep.subr.bf16.mxu0 0
      %6882 = vmatpush1.bf16.msra.mxu0 %v6820
      %6883 = vmatprep.subr.bf16.mxu0 0
      %6884 = vmatpush1.bf16.msra.mxu0 %v6821
      %6885 = vmatprep.subr.bf16.mxu0 0
      %6886 = vmatpush1.bf16.msra.mxu0 %v6822
      %6887 = vmatprep.mubr.bf16.mxu0 %v6566
      %6888 = vmatmul.mubr.bf16.gmra.mrb[0].mxu0 %v6502
      %v6889 = vpop.f32.mrb[0].mxu0
      %v6890 = vadd.f32 0.0, %v6889
      %v6891 = vpop.f32.mrb[0].mxu0
      %v6892 = vpop.f32.mrb[0].mxu0
      %v6893 = vadd.f32 0.0, %v6892
      %v6894 = vpop.f32.mrb[0].mxu0
      %6895 = vmatprep.mubr.bf16.mxu0 %v6567
      %6896 = vmatmul.mubr.bf16.gmra.mrb[0].mxu0 %v6503
      %v6897 = vpop.f32.mrb[0].mxu0
      %v6898 = vadd.f32 0.0, %v6897
      %v6899 = vpop.f32.mrb[0].mxu0
      %v6900 = vpop.f32.mrb[0].mxu0
      %v6901 = vadd.f32 0.0, %v6900
      %v6902 = vpop.f32.mrb[0].mxu0
      %6903 = vmatprep.mubr.bf16.mxu0 %v6568
      %6904 = vmatmul.mubr.bf16.gmra.mrb[0].mxu0 %v6504
      %v6905 = vpop.f32.mrb[0].mxu0
      %v6906 = vadd.f32 0.0, %v6905
      %v6907 = vpop.f32.mrb[0].mxu0
      %v6908 = vpop.f32.mrb[0].mxu0
      %v6909 = vadd.f32 0.0, %v6908
      %v6910 = vpop.f32.mrb[0].mxu0
      %6911 = vmatprep.mubr.bf16.mxu0 %v6569
      %6912 = vmatmul.mubr.bf16.gmra.mrb[0].mxu0 %v6505
      %v6913 = vpop.f32.mrb[0].mxu0
      %v6914 = vadd.f32 0.0, %v6913
      %v6915 = vpop.f32.mrb[0].mxu0
      %v6916 = vpop.f32.mrb[0].mxu0
      %v6917 = vadd.f32 0.0, %v6916
      %v6918 = vpop.f32.mrb[0].mxu0
      %6919 = vmatprep.mubr.bf16.mxu0 %v6570
      %6920 = vmatmul.mubr.bf16.gmra.mrb[0].mxu0 %v6506
      %v6921 = vpop.f32.mrb[0].mxu0
      %v6922 = vadd.f32 0.0, %v6921
      %v6923 = vpop.f32.mrb[0].mxu0
      %v6924 = vpop.f32.mrb[0].mxu0
      %v6925 = vadd.f32 0.0, %v6924
      %v6926 = vpop.f32.mrb[0].mxu0
      %6927 = vmatprep.mubr.bf16.mxu0 %v6571
      %6928 = vmatmul.mubr.bf16.gmra.mrb[0].mxu0 %v6507
      %v6929 = vpop.f32.mrb[0].mxu0
      %v6930 = vadd.f32 0.0, %v6929
      %v6931 = vpop.f32.mrb[0].mxu0
      %v6932 = vpop.f32.mrb[0].mxu0
      %v6933 = vadd.f32 0.0, %v6932
      %v6934 = vpop.f32.mrb[0].mxu0
      %6935 = vmatprep.mubr.bf16.mxu0 %v6572
      %6936 = vmatmul.mubr.bf16.gmra.mrb[0].mxu0 %v6508
      %v6937 = vpop.f32.mrb[0].mxu0
      %v6938 = vadd.f32 0.0, %v6937
      %v6939 = vpop.f32.mrb[0].mxu0
      %v6940 = vpop.f32.mrb[0].mxu0
      %v6941 = vadd.f32 0.0, %v6940
      %v6942 = vpop.f32.mrb[0].mxu0
      %6943 = vmatprep.mubr.bf16.mxu0 %v6573
      %6944 = vmatmul.mubr.bf16.gmra.mrb[0].mxu0 %v6509
      %v6945 = vpop.f32.mrb[0].mxu0
      %v6946 = vadd.f32 0.0, %v6945
      %v6947 = vpop.f32.mrb[0].mxu0
      %v6948 = vpop.f32.mrb[0].mxu0
      %v6949 = vadd.f32 0.0, %v6948
      %v6950 = vpop.f32.mrb[0].mxu0
      %6951 = vmatprep.mubr.bf16.mxu0 %v6574
      %6952 = vmatmul.mubr.bf16.gmra.mrb[0].mxu0 %v6510
      %v6953 = vpop.f32.mrb[0].mxu0
      %v6954 = vadd.f32 0.0, %v6953
      %v6955 = vpop.f32.mrb[0].mxu0
      %v6956 = vpop.f32.mrb[0].mxu0
      %v6957 = vadd.f32 0.0, %v6956
      %v6958 = vpop.f32.mrb[0].mxu0
      %6959 = vmatprep.mubr.bf16.mxu0 %v6575
      %6960 = vmatmul.mubr.bf16.gmra.mrb[0].mxu0 %v6511
      %v6961 = vpop.f32.mrb[0].mxu0
      %v6962 = vadd.f32 0.0, %v6961
      %v6963 = vpop.f32.mrb[0].mxu0
      %v6964 = vpop.f32.mrb[0].mxu0
      %v6965 = vadd.f32 0.0, %v6964
      %v6966 = vpop.f32.mrb[0].mxu0
      %6967 = vmatprep.mubr.bf16.mxu0 %v6576
      %6968 = vmatmul.mubr.bf16.gmra.mrb[0].mxu0 %v6512
      %v6969 = vpop.f32.mrb[0].mxu0
      %v6970 = vadd.f32 0.0, %v6969
      %v6971 = vpop.f32.mrb[0].mxu0
      %v6972 = vpop.f32.mrb[0].mxu0
      %v6973 = vadd.f32 0.0, %v6972
      %v6974 = vpop.f32.mrb[0].mxu0
      %6975 = vmatprep.mubr.bf16.mxu0 %v6577
      %6976 = vmatmul.mubr.bf16.gmra.mrb[0].mxu0 %v6513
      %v6977 = vpop.f32.mrb[0].mxu0
      %v6978 = vadd.f32 0.0, %v6977
      %v6979 = vpop.f32.mrb[0].mxu0
      %v6980 = vpop.f32.mrb[0].mxu0
      %v6981 = vadd.f32 0.0, %v6980
      %v6982 = vpop.f32.mrb[0].mxu0
      %6983 = vmatprep.mubr.bf16.mxu0 %v6578
      %6984 = vmatmul.mubr.bf16.gmra.mrb[0].mxu0 %v6514
      %v6985 = vpop.f32.mrb[0].mxu0
      %v6986 = vadd.f32 0.0, %v6985
      %v6987 = vpop.f32.mrb[0].mxu0
      %v6988 = vpop.f32.mrb[0].mxu0
      %v6989 = vadd.f32 0.0, %v6988
      %v6990 = vpop.f32.mrb[0].mxu0
      %6991 = vmatprep.mubr.bf16.mxu0 %v6579
      %6992 = vmatmul.mubr.bf16.gmra.mrb[0].mxu0 %v6515
      %v6993 = vpop.f32.mrb[0].mxu0
      %v6994 = vadd.f32 0.0, %v6993
      %v6995 = vpop.f32.mrb[0].mxu0
      %v6996 = vpop.f32.mrb[0].mxu0
      %v6997 = vadd.f32 0.0, %v6996
      %v6998 = vpop.f32.mrb[0].mxu0
      %6999 = vmatprep.mubr.bf16.mxu0 %v6580
      %7000 = vmatmul.mubr.bf16.gmra.mrb[0].mxu0 %v6516
      %v7001 = vpop.f32.mrb[0].mxu0
      %v7002 = vadd.f32 0.0, %v7001
      %v7003 = vpop.f32.mrb[0].mxu0
      %v7004 = vpop.f32.mrb[0].mxu0
      %v7005 = vadd.f32 0.0, %v7004
      %v7006 = vpop.f32.mrb[0].mxu0
      %7007 = vmatprep.mubr.bf16.mxu0 %v6581
      %7008 = vmatmul.mubr.bf16.gmra.mrb[0].mxu0 %v6517
      %v7009 = vpop.f32.mrb[0].mxu0
      %v7010 = vadd.f32 0.0, %v7009
      %v7011 = vpop.f32.mrb[0].mxu0
      %v7012 = vpop.f32.mrb[0].mxu0
      %v7013 = vadd.f32 0.0, %v7012
      %v7014 = vpop.f32.mrb[0].mxu0
      %7015 = vdwg.mxu0
      %7016 = vmatprep.subr.bf16.mxu0 0
      %7017 = vmatpush1.bf16.msra.mxu0 %v6823
      %7018 = vmatprep.subr.bf16.mxu0 0
      %7019 = vmatpush1.bf16.msra.mxu0 %v6824
      %7020 = vmatprep.subr.bf16.mxu0 0
      %7021 = vmatpush1.bf16.msra.mxu0 %v6825
      %7022 = vmatprep.subr.bf16.mxu0 0
      %7023 = vmatpush1.bf16.msra.mxu0 %v6826
      %7024 = vmatprep.subr.bf16.mxu0 0
      %7025 = vmatpush1.bf16.msra.mxu0 %v6827
      %7026 = vmatprep.subr.bf16.mxu0 0
      %7027 = vmatpush1.bf16.msra.mxu0 %v6828
      %7028 = vmatprep.subr.bf16.mxu0 0
      %7029 = vmatpush1.bf16.msra.mxu0 %v6829
      %7030 = vmatprep.subr.bf16.mxu0 0
      %7031 = vmatpush1.bf16.msra.mxu0 %v6830
      %7032 = vmatprep.subr.bf16.mxu0 0
      %7033 = vmatpush1.bf16.msra.mxu0 0
      %7034 = vmatprep.subr.bf16.mxu0 0
      %7035 = vmatpush1.bf16.msra.mxu0 0
      %7036 = vmatprep.subr.bf16.mxu0 0
      %7037 = vmatpush1.bf16.msra.mxu0 0
      %7038 = vmatprep.subr.bf16.mxu0 0
      %7039 = vmatpush1.bf16.msra.mxu0 0
      %7040 = vmatprep.subr.bf16.mxu0 0
      %7041 = vmatpush1.bf16.msra.mxu0 0
      %7042 = vmatprep.subr.bf16.mxu0 0
      %7043 = vmatpush1.bf16.msra.mxu0 0
      %7044 = vmatprep.subr.bf16.mxu0 0
      %7045 = vmatpush1.bf16.msra.mxu0 0
      %7046 = vmatprep.subr.bf16.mxu0 0
      %7047 = vmatpush1.bf16.msra.mxu0 0
      %7048 = vmatprep.mubr.bf16.mxu0 0
      %7049 = vmatmul.mubr.bf16.gmra.mrb[0].mxu0 %v6630
      %v7050 = vpop.f32.mrb[0].mxu0
      %v7051 = vadd.f32 %v6890, %v7050
      %v7052 = vpop.f32.mrb[0].mxu0
      %v7053 = vpop.f32.mrb[0].mxu0
      %v7054 = vadd.f32 %v6893, %v7053
      %v7055 = vpop.f32.mrb[0].mxu0
      %7056 = vmatprep.mubr.bf16.mxu0 0
      %7057 = vmatmul.mubr.bf16.gmra.mrb[0].mxu0 %v6631
      %v7058 = vpop.f32.mrb[0].mxu0
      %v7059 = vadd.f32 %v6898, %v7058
      %v7060 = vpop.f32.mrb[0].mxu0
      %v7061 = vpop.f32.mrb[0].mxu0
      %v7062 = vadd.f32 %v6901, %v7061
      %v7063 = vpop.f32.mrb[0].mxu0
      %7064 = vmatprep.mubr.bf16.mxu0 0
      %7065 = vmatmul.mubr.bf16.gmra.mrb[0].mxu0 %v6632
      %v7066 = vpop.f32.mrb[0].mxu0
      %v7067 = vadd.f32 %v6906, %v7066
      %v7068 = vpop.f32.mrb[0].mxu0
      %v7069 = vpop.f32.mrb[0].mxu0
      %v7070 = vadd.f32 %v6909, %v7069
      %v7071 = vpop.f32.mrb[0].mxu0
      %7072 = vmatprep.mubr.bf16.mxu0 0
      %7073 = vmatmul.mubr.bf16.gmra.mrb[0].mxu0 %v6633
      %v7074 = vpop.f32.mrb[0].mxu0
      %v7075 = vadd.f32 %v6914, %v7074
      %v7076 = vpop.f32.mrb[0].mxu0
      %v7077 = vpop.f32.mrb[0].mxu0
      %v7078 = vadd.f32 %v6917, %v7077
      %v7079 = vpop.f32.mrb[0].mxu0
      %7080 = vmatprep.mubr.bf16.mxu0 0
      %7081 = vmatmul.mubr.bf16.gmra.mrb[0].mxu0 %v6634
      %v7082 = vpop.f32.mrb[0].mxu0
      %v7083 = vadd.f32 %v6922, %v7082
      %v7084 = vpop.f32.mrb[0].mxu0
      %v7085 = vpop.f32.mrb[0].mxu0
      %v7086 = vadd.f32 %v6925, %v7085
      %v7087 = vpop.f32.mrb[0].mxu0
      %7088 = vmatprep.mubr.bf16.mxu0 0
      %7089 = vmatmul.mubr.bf16.gmra.mrb[0].mxu0 %v6635
      %v7090 = vpop.f32.mrb[0].mxu0
      %v7091 = vadd.f32 %v6930, %v7090
      %v7092 = vpop.f32.mrb[0].mxu0
      %v7093 = vpop.f32.mrb[0].mxu0
      %v7094 = vadd.f32 %v6933, %v7093
      %v7095 = vpop.f32.mrb[0].mxu0
      %7096 = vmatprep.mubr.bf16.mxu0 0
      %7097 = vmatmul.mubr.bf16.gmra.mrb[0].mxu0 %v6636
      %v7098 = vpop.f32.mrb[0].mxu0
      %v7099 = vadd.f32 %v6938, %v7098
      %v7100 = vpop.f32.mrb[0].mxu0
      %v7101 = vpop.f32.mrb[0].mxu0
      %v7102 = vadd.f32 %v6941, %v7101
      %v7103 = vpop.f32.mrb[0].mxu0
      %7104 = vmatprep.mubr.bf16.mxu0 0
      %7105 = vmatmul.mubr.bf16.gmra.mrb[0].mxu0 %v6637
      %v7106 = vpop.f32.mrb[0].mxu0
      %v7107 = vadd.f32 %v6946, %v7106
      %v7108 = vpop.f32.mrb[0].mxu0
      %v7109 = vpop.f32.mrb[0].mxu0
      %v7110 = vadd.f32 %v6949, %v7109
      %v7111 = vpop.f32.mrb[0].mxu0
      %7112 = vmatprep.mubr.bf16.mxu0 0
      %7113 = vmatmul.mubr.bf16.gmra.mrb[0].mxu0 %v6638
      %v7114 = vpop.f32.mrb[0].mxu0
      %v7115 = vadd.f32 %v6954, %v7114
      %v7116 = vpop.f32.mrb[0].mxu0
      %v7117 = vpop.f32.mrb[0].mxu0
      %v7118 = vadd.f32 %v6957, %v7117
      %v7119 = vpop.f32.mrb[0].mxu0
      %7120 = vmatprep.mubr.bf16.mxu0 0
      %7121 = vmatmul.mubr.bf16.gmra.mrb[0].mxu0 %v6639
      %v7122 = vpop.f32.mrb[0].mxu0
      %v7123 = vadd.f32 %v6962, %v7122
      %v7124 = vpop.f32.mrb[0].mxu0
      %v7125 = vpop.f32.mrb[0].mxu0
      %v7126 = vadd.f32 %v6965, %v7125
      %v7127 = vpop.f32.mrb[0].mxu0
      %7128 = vmatprep.mubr.bf16.mxu0 0
      %7129 = vmatmul.mubr.bf16.gmra.mrb[0].mxu0 %v6640
      %v7130 = vpop.f32.mrb[0].mxu0
      %v7131 = vadd.f32 %v6970, %v7130
      %v7132 = vpop.f32.mrb[0].mxu0
      %v7133 = vpop.f32.mrb[0].mxu0
      %v7134 = vadd.f32 %v6973, %v7133
      %v7135 = vpop.f32.mrb[0].mxu0
      %7136 = vmatprep.mubr.bf16.mxu0 0
      %7137 = vmatmul.mubr.bf16.gmra.mrb[0].mxu0 %v6641
      %v7138 = vpop.f32.mrb[0].mxu0
      %v7139 = vadd.f32 %v6978, %v7138
      %v7140 = vpop.f32.mrb[0].mxu0
      %v7141 = vpop.f32.mrb[0].mxu0
      %v7142 = vadd.f32 %v6981, %v7141
      %v7143 = vpop.f32.mrb[0].mxu0
      %7144 = vmatprep.mubr.bf16.mxu0 0
      %7145 = vmatmul.mubr.bf16.gmra.mrb[0].mxu0 %v6642
      %v7146 = vpop.f32.mrb[0].mxu0
      %v7147 = vadd.f32 %v6986, %v7146
      %v7148 = vpop.f32.mrb[0].mxu0
      %v7149 = vpop.f32.mrb[0].mxu0
      %v7150 = vadd.f32 %v6989, %v7149
      %v7151 = vpop.f32.mrb[0].mxu0
      %7152 = vmatprep.mubr.bf16.mxu0 0
      %7153 = vmatmul.mubr.bf16.gmra.mrb[0].mxu0 %v6643
      %v7154 = vpop.f32.mrb[0].mxu0
      %v7155 = vadd.f32 %v6994, %v7154
      %v7156 = vpop.f32.mrb[0].mxu0
      %v7157 = vpop.f32.mrb[0].mxu0
      %v7158 = vadd.f32 %v6997, %v7157
      %v7159 = vpop.f32.mrb[0].mxu0
      %7160 = vmatprep.mubr.bf16.mxu0 0
      %7161 = vmatmul.mubr.bf16.gmra.mrb[0].mxu0 %v6644
      %v7162 = vpop.f32.mrb[0].mxu0
      %v7163 = vadd.f32 %v7002, %v7162
      %v7164 = vpop.f32.mrb[0].mxu0
      %v7165 = vpop.f32.mrb[0].mxu0
      %v7166 = vadd.f32 %v7005, %v7165
      %v7167 = vpop.f32.mrb[0].mxu0
      %7168 = vmatprep.mubr.bf16.mxu0 0
      %7169 = vmatmul.mubr.bf16.gmra.mrb[0].mxu0 %v6645
      %v7170 = vpop.f32.mrb[0].mxu0
      %v7171 = vadd.f32 %v7010, %v7170
      %v7172 = vpop.f32.mrb[0].mxu0
      %v7173 = vpop.f32.mrb[0].mxu0
      %v7174 = vadd.f32 %v7013, %v7173
      %v7175 = vpop.f32.mrb[0].mxu0
      %7176 = vdwg.mxu0
      %v7225 = vunpack.c.l.b16 %v5798
      %v7226 = vunpack.c.l.b16 %v5799
      %v7227 = vunpack.c.l.b16 %v5800
      %v7228 = vunpack.c.l.b16 %v5801
      %v7229 = vunpack.c.l.b16 %v5802
      %v7230 = vunpack.c.l.b16 %v5803
      %v7231 = vunpack.c.l.b16 %v5804
      %v7232 = vunpack.c.l.b16 %v5805
      %v7233 = vunpack.c.l.b16 %v5806
      %v7234 = vunpack.c.l.b16 %v5807
      %v7235 = vunpack.c.l.b16 %v5808
      %v7236 = vunpack.c.l.b16 %v5809
      %v7237 = vunpack.c.l.b16 %v5810
      %v7238 = vunpack.c.l.b16 %v5811
      %v7239 = vunpack.c.l.b16 %v5812
      %v7240 = vunpack.c.l.b16 %v5813
      %v7241 = vunpack.c.l.b16 %v5814
      %v7242 = vunpack.c.l.b16 %v5815
      %v7243 = vunpack.c.l.b16 %v5816
      %v7244 = vunpack.c.l.b16 %v5817
      %v7245 = vunpack.c.l.b16 %v5818
      %v7246 = vunpack.c.l.b16 %v5819
      %v7247 = vunpack.c.l.b16 %v5820
      %v7248 = vunpack.c.l.b16 %v5821
      %v7249 = vunpack.c.l.b16 %v5822
      %v7250 = vunpack.c.l.b16 %v5823
      %v7251 = vunpack.c.l.b16 %v5824
      %v7252 = vunpack.c.l.b16 %v5825
      %v7253 = vunpack.c.l.b16 %v5826
      %v7254 = vunpack.c.l.b16 %v5827
      %v7255 = vunpack.c.l.b16 %v5828
      %v7256 = vunpack.c.l.b16 %v5829
      %v7257 = vunpack.c.l.b16 %v5830
      %v7258 = vunpack.c.l.b16 %v5831
      %v7259 = vunpack.c.l.b16 %v5832
      %v7260 = vunpack.c.l.b16 %v5833
      %v7261 = vunpack.c.l.b16 %v5834
      %v7262 = vunpack.c.l.b16 %v5835
      %v7263 = vunpack.c.l.b16 %v5836
      %v7264 = vunpack.c.l.b16 %v5837
      %v7265 = vunpack.c.l.b16 %v5838
      %v7266 = vunpack.c.l.b16 %v5839
      %v7267 = vunpack.c.l.b16 %v5840
      %v7268 = vunpack.c.l.b16 %v5841
      %v7269 = vunpack.c.l.b16 %v5842
      %v7270 = vunpack.c.l.b16 %v5843
      %v7271 = vunpack.c.l.b16 %v5844
      %v7272 = vunpack.c.l.b16 %v5845
      %v7273 = vpack.c.b16 %v7226, %v7225
      %v7274 = vpack.c.b16 %v7228, %v7227
      %v7275 = vpack.c.b16 %v7230, %v7229
      %v7276 = vpack.c.b16 %v7232, %v7231
      %v7277 = vpack.c.b16 %v7234, %v7233
      %v7278 = vpack.c.b16 %v7236, %v7235
      %v7279 = vpack.c.b16 %v7238, %v7237
      %v7280 = vpack.c.b16 %v7240, %v7239
      %v7281 = vpack.c.b16 %v7242, %v7241
      %v7282 = vpack.c.b16 %v7244, %v7243
      %v7283 = vpack.c.b16 %v7246, %v7245
      %v7284 = vpack.c.b16 %v7248, %v7247
      %v7285 = vpack.c.b16 %v7250, %v7249
      %v7286 = vpack.c.b16 %v7252, %v7251
      %v7287 = vpack.c.b16 %v7254, %v7253
      %v7288 = vpack.c.b16 %v7256, %v7255
      %v7289 = vpack.c.b16 %v7258, %v7257
      %v7290 = vpack.c.b16 %v7260, %v7259
      %v7291 = vpack.c.b16 %v7262, %v7261
      %v7292 = vpack.c.b16 %v7264, %v7263
      %v7293 = vpack.c.b16 %v7266, %v7265
      %v7294 = vpack.c.b16 %v7268, %v7267
      %v7295 = vpack.c.b16 %v7270, %v7269
      %v7296 = vpack.c.b16 %v7272, %v7271
      %7321 = vmatprep.subr.bf16.mxu0 0
      %7322 = vmatpush1.bf16.msra.mxu0 %v7273
      %7323 = vmatprep.subr.bf16.mxu0 0
      %7324 = vmatpush1.bf16.msra.mxu0 %v7274
      %7325 = vmatprep.subr.bf16.mxu0 0
      %7326 = vmatpush1.bf16.msra.mxu0 %v7275
      %7327 = vmatprep.subr.bf16.mxu0 0
      %7328 = vmatpush1.bf16.msra.mxu0 %v7276
      %7329 = vmatprep.subr.bf16.mxu0 0
      %7330 = vmatpush1.bf16.msra.mxu0 %v7277
      %7331 = vmatprep.subr.bf16.mxu0 0
      %7332 = vmatpush1.bf16.msra.mxu0 %v7278
      %7333 = vmatprep.subr.bf16.mxu0 0
      %7334 = vmatpush1.bf16.msra.mxu0 %v7279
      %7335 = vmatprep.subr.bf16.mxu0 0
      %7336 = vmatpush1.bf16.msra.mxu0 %v7280
      %7337 = vmatprep.subr.bf16.mxu0 0
      %7338 = vmatpush1.bf16.msra.mxu0 %v7281
      %7339 = vmatprep.subr.bf16.mxu0 0
      %7340 = vmatpush1.bf16.msra.mxu0 %v7282
      %7341 = vmatprep.subr.bf16.mxu0 0
      %7342 = vmatpush1.bf16.msra.mxu0 %v7283
      %7343 = vmatprep.subr.bf16.mxu0 0
      %7344 = vmatpush1.bf16.msra.mxu0 %v7284
      %7345 = vmatprep.subr.bf16.mxu0 0
      %7346 = vmatpush1.bf16.msra.mxu0 %v7285
      %7347 = vmatprep.subr.bf16.mxu0 0
      %7348 = vmatpush1.bf16.msra.mxu0 %v7286
      %7349 = vmatprep.subr.bf16.mxu0 0
      %7350 = vmatpush1.bf16.msra.mxu0 %v7287
      %7351 = vmatprep.subr.bf16.mxu0 0
      %7352 = vmatpush1.bf16.msra.mxu0 %v7288
      %7353 = vmatprep.mubr.bf16.mxu0 %v5702
      %7354 = vmatmul.mubr.bf16.gmra.mrb[0].mxu0 %v5638
      %v7355 = vpop.f32.mrb[0].mxu0
      %v7356 = vadd.f32 %v7051, %v7355
      %v7357 = vpop.f32.mrb[0].mxu0
      %v7358 = vpop.f32.mrb[0].mxu0
      %v7359 = vadd.f32 %v7054, %v7358
      %v7360 = vpop.f32.mrb[0].mxu0
      %7361 = vmatprep.mubr.bf16.mxu0 %v5703
      %7362 = vmatmul.mubr.bf16.gmra.mrb[0].mxu0 %v5639
      %v7363 = vpop.f32.mrb[0].mxu0
      %v7364 = vadd.f32 %v7059, %v7363
      %v7365 = vpop.f32.mrb[0].mxu0
      %v7366 = vpop.f32.mrb[0].mxu0
      %v7367 = vadd.f32 %v7062, %v7366
      %v7368 = vpop.f32.mrb[0].mxu0
      %7369 = vmatprep.mubr.bf16.mxu0 %v5704
      %7370 = vmatmul.mubr.bf16.gmra.mrb[0].mxu0 %v5640
      %v7371 = vpop.f32.mrb[0].mxu0
      %v7372 = vadd.f32 %v7067, %v7371
      %v7373 = vpop.f32.mrb[0].mxu0
      %v7374 = vpop.f32.mrb[0].mxu0
      %v7375 = vadd.f32 %v7070, %v7374
      %v7376 = vpop.f32.mrb[0].mxu0
      %7377 = vmatprep.mubr.bf16.mxu0 %v5705
      %7378 = vmatmul.mubr.bf16.gmra.mrb[0].mxu0 %v5641
      %v7379 = vpop.f32.mrb[0].mxu0
      %v7380 = vadd.f32 %v7075, %v7379
      %v7381 = vpop.f32.mrb[0].mxu0
      %v7382 = vpop.f32.mrb[0].mxu0
      %v7383 = vadd.f32 %v7078, %v7382
      %v7384 = vpop.f32.mrb[0].mxu0
      %7385 = vmatprep.mubr.bf16.mxu0 %v5706
      %7386 = vmatmul.mubr.bf16.gmra.mrb[0].mxu0 %v5642
      %v7387 = vpop.f32.mrb[0].mxu0
      %v7388 = vadd.f32 %v7083, %v7387
      %v7389 = vpop.f32.mrb[0].mxu0
      %v7390 = vpop.f32.mrb[0].mxu0
      %v7391 = vadd.f32 %v7086, %v7390
      %v7392 = vpop.f32.mrb[0].mxu0
      %7393 = vmatprep.mubr.bf16.mxu0 %v5707
      %7394 = vmatmul.mubr.bf16.gmra.mrb[0].mxu0 %v5643
      %v7395 = vpop.f32.mrb[0].mxu0
      %v7396 = vadd.f32 %v7091, %v7395
      %v7397 = vpop.f32.mrb[0].mxu0
      %v7398 = vpop.f32.mrb[0].mxu0
      %v7399 = vadd.f32 %v7094, %v7398
      %v7400 = vpop.f32.mrb[0].mxu0
      %7401 = vmatprep.mubr.bf16.mxu0 %v5708
      %7402 = vmatmul.mubr.bf16.gmra.mrb[0].mxu0 %v5644
      %v7403 = vpop.f32.mrb[0].mxu0
      %v7404 = vadd.f32 %v7099, %v7403
      %v7405 = vpop.f32.mrb[0].mxu0
      %v7406 = vpop.f32.mrb[0].mxu0
      %v7407 = vadd.f32 %v7102, %v7406
      %v7408 = vpop.f32.mrb[0].mxu0
      %7409 = vmatprep.mubr.bf16.mxu0 %v5709
      %7410 = vmatmul.mubr.bf16.gmra.mrb[0].mxu0 %v5645
      %v7411 = vpop.f32.mrb[0].mxu0
      %v7412 = vadd.f32 %v7107, %v7411
      %v7413 = vpop.f32.mrb[0].mxu0
      %v7414 = vpop.f32.mrb[0].mxu0
      %v7415 = vadd.f32 %v7110, %v7414
      %v7416 = vpop.f32.mrb[0].mxu0
      %7417 = vmatprep.mubr.bf16.mxu0 %v5710
      %7418 = vmatmul.mubr.bf16.gmra.mrb[0].mxu0 %v5646
      %v7419 = vpop.f32.mrb[0].mxu0
      %v7420 = vadd.f32 %v7115, %v7419
      %v7421 = vpop.f32.mrb[0].mxu0
      %v7422 = vpop.f32.mrb[0].mxu0
      %v7423 = vadd.f32 %v7118, %v7422
      %v7424 = vpop.f32.mrb[0].mxu0
      %7425 = vmatprep.mubr.bf16.mxu0 %v5711
      %7426 = vmatmul.mubr.bf16.gmra.mrb[0].mxu0 %v5647
      %v7427 = vpop.f32.mrb[0].mxu0
      %v7428 = vadd.f32 %v7123, %v7427
      %v7429 = vpop.f32.mrb[0].mxu0
      %v7430 = vpop.f32.mrb[0].mxu0
      %v7431 = vadd.f32 %v7126, %v7430
      %v7432 = vpop.f32.mrb[0].mxu0
      %7433 = vmatprep.mubr.bf16.mxu0 %v5712
      %7434 = vmatmul.mubr.bf16.gmra.mrb[0].mxu0 %v5648
      %v7435 = vpop.f32.mrb[0].mxu0
      %v7436 = vadd.f32 %v7131, %v7435
      %v7437 = vpop.f32.mrb[0].mxu0
      %v7438 = vpop.f32.mrb[0].mxu0
      %v7439 = vadd.f32 %v7134, %v7438
      %v7440 = vpop.f32.mrb[0].mxu0
      %7441 = vmatprep.mubr.bf16.mxu0 %v5713
      %7442 = vmatmul.mubr.bf16.gmra.mrb[0].mxu0 %v5649
      %v7443 = vpop.f32.mrb[0].mxu0
      %v7444 = vadd.f32 %v7139, %v7443
      %v7445 = vpop.f32.mrb[0].mxu0
      %v7446 = vpop.f32.mrb[0].mxu0
      %v7447 = vadd.f32 %v7142, %v7446
      %v7448 = vpop.f32.mrb[0].mxu0
      %7449 = vmatprep.mubr.bf16.mxu0 %v5714
      %7450 = vmatmul.mubr.bf16.gmra.mrb[0].mxu0 %v5650
      %v7451 = vpop.f32.mrb[0].mxu0
      %v7452 = vadd.f32 %v7147, %v7451
      %v7453 = vpop.f32.mrb[0].mxu0
      %v7454 = vpop.f32.mrb[0].mxu0
      %v7455 = vadd.f32 %v7150, %v7454
      %v7456 = vpop.f32.mrb[0].mxu0
      %7457 = vmatprep.mubr.bf16.mxu0 %v5715
      %7458 = vmatmul.mubr.bf16.gmra.mrb[0].mxu0 %v5651
      %v7459 = vpop.f32.mrb[0].mxu0
      %v7460 = vadd.f32 %v7155, %v7459
      %v7461 = vpop.f32.mrb[0].mxu0
      %v7462 = vpop.f32.mrb[0].mxu0
      %v7463 = vadd.f32 %v7158, %v7462
      %v7464 = vpop.f32.mrb[0].mxu0
      %7465 = vmatprep.mubr.bf16.mxu0 %v5716
      %7466 = vmatmul.mubr.bf16.gmra.mrb[0].mxu0 %v5652
      %v7467 = vpop.f32.mrb[0].mxu0
      %v7468 = vadd.f32 %v7163, %v7467
      %v7469 = vpop.f32.mrb[0].mxu0
      %v7470 = vpop.f32.mrb[0].mxu0
      %v7471 = vadd.f32 %v7166, %v7470
      %v7472 = vpop.f32.mrb[0].mxu0
      %7473 = vmatprep.mubr.bf16.mxu0 %v5717
      %7474 = vmatmul.mubr.bf16.gmra.mrb[0].mxu0 %v5653
      %v7475 = vpop.f32.mrb[0].mxu0
      %v7476 = vadd.f32 %v7171, %v7475
      %v7477 = vpop.f32.mrb[0].mxu0
      %v7478 = vpop.f32.mrb[0].mxu0
      %v7479 = vadd.f32 %v7174, %v7478
      %v7480 = vpop.f32.mrb[0].mxu0
      %7481 = vdwg.mxu0
      %7482 = vmatprep.subr.bf16.mxu0 0
      %7483 = vmatpush1.bf16.msra.mxu0 %v7289
      %7484 = vmatprep.subr.bf16.mxu0 0
      %7485 = vmatpush1.bf16.msra.mxu0 %v7290
      %7486 = vmatprep.subr.bf16.mxu0 0
      %7487 = vmatpush1.bf16.msra.mxu0 %v7291
      %7488 = vmatprep.subr.bf16.mxu0 0
      %7489 = vmatpush1.bf16.msra.mxu0 %v7292
      %7490 = vmatprep.subr.bf16.mxu0 0
      %7491 = vmatpush1.bf16.msra.mxu0 %v7293
      %7492 = vmatprep.subr.bf16.mxu0 0
      %7493 = vmatpush1.bf16.msra.mxu0 %v7294
      %7494 = vmatprep.subr.bf16.mxu0 0
      %7495 = vmatpush1.bf16.msra.mxu0 %v7295
      %7496 = vmatprep.subr.bf16.mxu0 0
      %7497 = vmatpush1.bf16.msra.mxu0 %v7296
      %7498 = vmatprep.subr.bf16.mxu0 0
      %7499 = vmatpush1.bf16.msra.mxu0 0
      %7500 = vmatprep.subr.bf16.mxu0 0
      %7501 = vmatpush1.bf16.msra.mxu0 0
      %7502 = vmatprep.subr.bf16.mxu0 0
      %7503 = vmatpush1.bf16.msra.mxu0 0
      %7504 = vmatprep.subr.bf16.mxu0 0
      %7505 = vmatpush1.bf16.msra.mxu0 0
      %7506 = vmatprep.subr.bf16.mxu0 0
      %7507 = vmatpush1.bf16.msra.mxu0 0
      %7508 = vmatprep.subr.bf16.mxu0 0
      %7509 = vmatpush1.bf16.msra.mxu0 0
      %7510 = vmatprep.subr.bf16.mxu0 0
      %7511 = vmatpush1.bf16.msra.mxu0 0
      %7512 = vmatprep.subr.bf16.mxu0 0
      %7513 = vmatpush1.bf16.msra.mxu0 0
      %7514 = vmatprep.mubr.bf16.mxu0 0
      %7515 = vmatmul.mubr.bf16.gmra.mrb[0].mxu0 %v5766
      %v7516 = vpop.f32.mrb[0].mxu0
      %v7517 = vadd.f32 %v7356, %v7516
      %v7518 = vpop.f32.mrb[0].mxu0
      %v7519 = vpop.f32.mrb[0].mxu0
      %v7520 = vadd.f32 %v7359, %v7519
      %v7521 = vpop.f32.mrb[0].mxu0
      %7522 = vmatprep.mubr.bf16.mxu0 0
      %7523 = vmatmul.mubr.bf16.gmra.mrb[0].mxu0 %v5767
      %v7524 = vpop.f32.mrb[0].mxu0
      %v7525 = vadd.f32 %v7364, %v7524
      %v7526 = vpop.f32.mrb[0].mxu0
      %v7527 = vpop.f32.mrb[0].mxu0
      %v7528 = vadd.f32 %v7367, %v7527
      %v7529 = vpop.f32.mrb[0].mxu0
      %7530 = vmatprep.mubr.bf16.mxu0 0
      %7531 = vmatmul.mubr.bf16.gmra.mrb[0].mxu0 %v5768
      %v7532 = vpop.f32.mrb[0].mxu0
      %v7533 = vadd.f32 %v7372, %v7532
      %v7534 = vpop.f32.mrb[0].mxu0
      %v7535 = vpop.f32.mrb[0].mxu0
      %v7536 = vadd.f32 %v7375, %v7535
      %v7537 = vpop.f32.mrb[0].mxu0
      %7538 = vmatprep.mubr.bf16.mxu0 0
      %7539 = vmatmul.mubr.bf16.gmra.mrb[0].mxu0 %v5769
      %v7540 = vpop.f32.mrb[0].mxu0
      %v7541 = vadd.f32 %v7380, %v7540
      %v7542 = vpop.f32.mrb[0].mxu0
      %v7543 = vpop.f32.mrb[0].mxu0
      %v7544 = vadd.f32 %v7383, %v7543
      %v7545 = vpop.f32.mrb[0].mxu0
      %7546 = vmatprep.mubr.bf16.mxu0 0
      %7547 = vmatmul.mubr.bf16.gmra.mrb[0].mxu0 %v5770
      %v7548 = vpop.f32.mrb[0].mxu0
      %v7549 = vadd.f32 %v7388, %v7548
      %v7550 = vpop.f32.mrb[0].mxu0
      %v7551 = vpop.f32.mrb[0].mxu0
      %v7552 = vadd.f32 %v7391, %v7551
      %v7553 = vpop.f32.mrb[0].mxu0
      %7554 = vmatprep.mubr.bf16.mxu0 0
      %7555 = vmatmul.mubr.bf16.gmra.mrb[0].mxu0 %v5771
      %v7556 = vpop.f32.mrb[0].mxu0
      %v7557 = vadd.f32 %v7396, %v7556
      %v7558 = vpop.f32.mrb[0].mxu0
      %v7559 = vpop.f32.mrb[0].mxu0
      %v7560 = vadd.f32 %v7399, %v7559
      %v7561 = vpop.f32.mrb[0].mxu0
      %7562 = vmatprep.mubr.bf16.mxu0 0
      %7563 = vmatmul.mubr.bf16.gmra.mrb[0].mxu0 %v5772
      %v7564 = vpop.f32.mrb[0].mxu0
      %v7565 = vadd.f32 %v7404, %v7564
      %v7566 = vpop.f32.mrb[0].mxu0
      %v7567 = vpop.f32.mrb[0].mxu0
      %v7568 = vadd.f32 %v7407, %v7567
      %v7569 = vpop.f32.mrb[0].mxu0
      %7570 = vmatprep.mubr.bf16.mxu0 0
      %7571 = vmatmul.mubr.bf16.gmra.mrb[0].mxu0 %v5773
      %v7572 = vpop.f32.mrb[0].mxu0
      %v7573 = vadd.f32 %v7412, %v7572
      %v7574 = vpop.f32.mrb[0].mxu0
      %v7575 = vpop.f32.mrb[0].mxu0
      %v7576 = vadd.f32 %v7415, %v7575
      %v7577 = vpop.f32.mrb[0].mxu0
      %7578 = vmatprep.mubr.bf16.mxu0 0
      %7579 = vmatmul.mubr.bf16.gmra.mrb[0].mxu0 %v5774
      %v7580 = vpop.f32.mrb[0].mxu0
      %v7581 = vadd.f32 %v7420, %v7580
      %v7582 = vpop.f32.mrb[0].mxu0
      %v7583 = vpop.f32.mrb[0].mxu0
      %v7584 = vadd.f32 %v7423, %v7583
      %v7585 = vpop.f32.mrb[0].mxu0
      %7586 = vmatprep.mubr.bf16.mxu0 0
      %7587 = vmatmul.mubr.bf16.gmra.mrb[0].mxu0 %v5775
      %v7588 = vpop.f32.mrb[0].mxu0
      %v7589 = vadd.f32 %v7428, %v7588
      %v7590 = vpop.f32.mrb[0].mxu0
      %v7591 = vpop.f32.mrb[0].mxu0
      %v7592 = vadd.f32 %v7431, %v7591
      %v7593 = vpop.f32.mrb[0].mxu0
      %7594 = vmatprep.mubr.bf16.mxu0 0
      %7595 = vmatmul.mubr.bf16.gmra.mrb[0].mxu0 %v5776
      %v7596 = vpop.f32.mrb[0].mxu0
      %v7597 = vadd.f32 %v7436, %v7596
      %v7598 = vpop.f32.mrb[0].mxu0
      %v7599 = vpop.f32.mrb[0].mxu0
      %v7600 = vadd.f32 %v7439, %v7599
      %v7601 = vpop.f32.mrb[0].mxu0
      %7602 = vmatprep.mubr.bf16.mxu0 0
      %7603 = vmatmul.mubr.bf16.gmra.mrb[0].mxu0 %v5777
      %v7604 = vpop.f32.mrb[0].mxu0
      %v7605 = vadd.f32 %v7444, %v7604
      %v7606 = vpop.f32.mrb[0].mxu0
      %v7607 = vpop.f32.mrb[0].mxu0
      %v7608 = vadd.f32 %v7447, %v7607
      %v7609 = vpop.f32.mrb[0].mxu0
      %7610 = vmatprep.mubr.bf16.mxu0 0
      %7611 = vmatmul.mubr.bf16.gmra.mrb[0].mxu0 %v5778
      %v7612 = vpop.f32.mrb[0].mxu0
      %v7613 = vadd.f32 %v7452, %v7612
      %v7614 = vpop.f32.mrb[0].mxu0
      %v7615 = vpop.f32.mrb[0].mxu0
      %v7616 = vadd.f32 %v7455, %v7615
      %v7617 = vpop.f32.mrb[0].mxu0
      %7618 = vmatprep.mubr.bf16.mxu0 0
      %7619 = vmatmul.mubr.bf16.gmra.mrb[0].mxu0 %v5779
      %v7620 = vpop.f32.mrb[0].mxu0
      %v7621 = vadd.f32 %v7460, %v7620
      %v7622 = vpop.f32.mrb[0].mxu0
      %v7623 = vpop.f32.mrb[0].mxu0
      %v7624 = vadd.f32 %v7463, %v7623
      %v7625 = vpop.f32.mrb[0].mxu0
      %7626 = vmatprep.mubr.bf16.mxu0 0
      %7627 = vmatmul.mubr.bf16.gmra.mrb[0].mxu0 %v5780
      %v7628 = vpop.f32.mrb[0].mxu0
      %v7629 = vadd.f32 %v7468, %v7628
      %v7630 = vpop.f32.mrb[0].mxu0
      %v7631 = vpop.f32.mrb[0].mxu0
      %v7632 = vadd.f32 %v7471, %v7631
      %v7633 = vpop.f32.mrb[0].mxu0
      %7634 = vmatprep.mubr.bf16.mxu0 0
      %7635 = vmatmul.mubr.bf16.gmra.mrb[0].mxu0 %v5781
      %v7636 = vpop.f32.mrb[0].mxu0
      %v7637 = vadd.f32 %v7476, %v7636
      %v7638 = vpop.f32.mrb[0].mxu0
      %v7639 = vpop.f32.mrb[0].mxu0
      %v7640 = vadd.f32 %v7479, %v7639
      %v7641 = vpop.f32.mrb[0].mxu0
      %7642 = vdwg.mxu0
      %s7643 = scalar_lea.vmem [#allocation2], 24
      %v7644 = vld [vmem:[%s7643] sm:$0xf]
      %v7645 = vld [vmem:[%s7643 + $0x4] sm:$0xf]
      %v7646 = vld [vmem:[%s7643 + $0xc] sm:$0xf]
      %v7647 = vld [vmem:[%s7643 + $0x10] sm:$0xf]
      %v7648 = vld [vmem:[%s7643 + $0x18] sm:$0xf]
      %v7649 = vld [vmem:[%s7643 + $0x1c] sm:$0xf]
      %v7650 = vld [vmem:[%s7643 + $0x24] sm:$0xf]
      %v7651 = vld [vmem:[%s7643 + $0x28] sm:$0xf]
      %v7652 = vld [vmem:[%s7643 + $0x30] sm:$0xf]
      %v7653 = vld [vmem:[%s7643 + $0x34] sm:$0xf]
      %v7654 = vld [vmem:[%s7643 + $0x3c] sm:$0xf]
      %v7655 = vld [vmem:[%s7643 + $0x40] sm:$0xf]
      %v7656 = vld [vmem:[%s7643 + $0x48] sm:$0xf]
      %v7657 = vld [vmem:[%s7643 + $0x4c] sm:$0xf]
      %v7658 = vld [vmem:[%s7643 + $0x54] sm:$0xf]
      %v7659 = vld [vmem:[%s7643 + $0x58] sm:$0xf]
      %v7660 = vld [vmem:[%s7643 + $0x60] sm:$0xf]
      %v7661 = vld [vmem:[%s7643 + $0x64] sm:$0xf]
      %v7662 = vld [vmem:[%s7643 + $0x6c] sm:$0xf]
      %v7663 = vld [vmem:[%s7643 + $0x70] sm:$0xf]
      %v7664 = vld [vmem:[%s7643 + $0x78] sm:$0xf]
      %v7665 = vld [vmem:[%s7643 + $0x7c] sm:$0xf]
      %v7666 = vld [vmem:[%s7643 + $0x84] sm:$0xf]
      %v7667 = vld [vmem:[%s7643 + $0x88] sm:$0xf]
      %v7668 = vld [vmem:[%s7643 + $0x90] sm:$0xf]
      %v7669 = vld [vmem:[%s7643 + $0x94] sm:$0xf]
      %v7670 = vld [vmem:[%s7643 + $0x9c] sm:$0xf]
      %v7671 = vld [vmem:[%s7643 + $0xa0] sm:$0xf]
      %v7672 = vld [vmem:[%s7643 + $0xa8] sm:$0xf]
      %v7673 = vld [vmem:[%s7643 + $0xac] sm:$0xf]
      %v7674 = vld [vmem:[%s7643 + $0xb4] sm:$0xf]
      %v7675 = vld [vmem:[%s7643 + $0xb8] sm:$0xf]
      %v7676 = vld [vmem:[%s7643 + $0x8] sm:$0x1]
      %v7677 = vld [vmem:[%s7643 + $0x14] sm:$0x1]
      %v7678 = vld [vmem:[%s7643 + $0x20] sm:$0x1]
      %v7679 = vld [vmem:[%s7643 + $0x2c] sm:$0x1]
      %v7680 = vld [vmem:[%s7643 + $0x38] sm:$0x1]
      %v7681 = vld [vmem:[%s7643 + $0x44] sm:$0x1]
      %v7682 = vld [vmem:[%s7643 + $0x50] sm:$0x1]
      %v7683 = vld [vmem:[%s7643 + $0x5c] sm:$0x1]
      %v7684 = vld [vmem:[%s7643 + $0x68] sm:$0x1]
      %v7685 = vld [vmem:[%s7643 + $0x74] sm:$0x1]
      %v7686 = vld [vmem:[%s7643 + $0x80] sm:$0x1]
      %v7687 = vld [vmem:[%s7643 + $0x8c] sm:$0x1]
      %v7688 = vld [vmem:[%s7643 + $0x98] sm:$0x1]
      %v7689 = vld [vmem:[%s7643 + $0xa4] sm:$0x1]
      %v7690 = vld [vmem:[%s7643 + $0xb0] sm:$0x1]
      %v7691 = vld [vmem:[%s7643 + $0xbc] sm:$0x1]
      %v7693 = vshrl.u32 %v7644, 16
      %v7695 = vrot.slane %v7693, 4
      %v7696 = vshll.u32 %v7644, 16
      %v7698 = vrot.slane %v7696, 5
      %v7699 = vor.u32 %v7695, %v7698
      %v7700 = vrot.slane %v7699, 4
      %v7702 = vshll.u32 %v7645, 16
      %v7704 = vrot.slane %v7702, 5
      %v7705 = vsel %vm276, %v7700, %v7704
      %v7706 = vshrl.u32 %v7645, 16
      %v7708 = vrot.slane %v7706, 4
      %v7709 = vor.u32 %v7708, %v7704
      %v7710 = vrot.slane %v7709, 4
      %v7712 = vshll.u32 %v7676, 16
      %v7714 = vrot.slane %v7712, 5
      %v7715 = vsel %vm276, %v7710, %v7714
      %v7717 = vshrl.u32 %v7646, 16
      %v7719 = vrot.slane %v7717, 4
      %v7720 = vshll.u32 %v7646, 16
      %v7722 = vrot.slane %v7720, 5
      %v7723 = vor.u32 %v7719, %v7722
      %v7724 = vrot.slane %v7723, 4
      %v7726 = vshll.u32 %v7647, 16
      %v7728 = vrot.slane %v7726, 5
      %v7729 = vsel %vm276, %v7724, %v7728
      %v7730 = vshrl.u32 %v7647, 16
      %v7732 = vrot.slane %v7730, 4
      %v7733 = vor.u32 %v7732, %v7728
      %v7734 = vrot.slane %v7733, 4
      %v7736 = vshll.u32 %v7677, 16
      %v7738 = vrot.slane %v7736, 5
      %v7739 = vsel %vm276, %v7734, %v7738
      %v7741 = vshrl.u32 %v7648, 16
      %v7743 = vrot.slane %v7741, 4
      %v7744 = vshll.u32 %v7648, 16
      %v7746 = vrot.slane %v7744, 5
      %v7747 = vor.u32 %v7743, %v7746
      %v7748 = vrot.slane %v7747, 4
      %v7750 = vshll.u32 %v7649, 16
      %v7752 = vrot.slane %v7750, 5
      %v7753 = vsel %vm276, %v7748, %v7752
      %v7754 = vshrl.u32 %v7649, 16
      %v7756 = vrot.slane %v7754, 4
      %v7757 = vor.u32 %v7756, %v7752
      %v7758 = vrot.slane %v7757, 4
      %v7760 = vshll.u32 %v7678, 16
      %v7762 = vrot.slane %v7760, 5
      %v7763 = vsel %vm276, %v7758, %v7762
      %v7765 = vshrl.u32 %v7650, 16
      %v7767 = vrot.slane %v7765, 4
      %v7768 = vshll.u32 %v7650, 16
      %v7770 = vrot.slane %v7768, 5
      %v7771 = vor.u32 %v7767, %v7770
      %v7772 = vrot.slane %v7771, 4
      %v7774 = vshll.u32 %v7651, 16
      %v7776 = vrot.slane %v7774, 5
      %v7777 = vsel %vm276, %v7772, %v7776
      %v7778 = vshrl.u32 %v7651, 16
      %v7780 = vrot.slane %v7778, 4
      %v7781 = vor.u32 %v7780, %v7776
      %v7782 = vrot.slane %v7781, 4
      %v7784 = vshll.u32 %v7679, 16
      %v7786 = vrot.slane %v7784, 5
      %v7787 = vsel %vm276, %v7782, %v7786
      %v7789 = vshrl.u32 %v7652, 16
      %v7791 = vrot.slane %v7789, 4
      %v7792 = vshll.u32 %v7652, 16
      %v7794 = vrot.slane %v7792, 5
      %v7795 = vor.u32 %v7791, %v7794
      %v7796 = vrot.slane %v7795, 4
      %v7798 = vshll.u32 %v7653, 16
      %v7800 = vrot.slane %v7798, 5
      %v7801 = vsel %vm276, %v7796, %v7800
      %v7802 = vshrl.u32 %v7653, 16
      %v7804 = vrot.slane %v7802, 4
      %v7805 = vor.u32 %v7804, %v7800
      %v7806 = vrot.slane %v7805, 4
      %v7808 = vshll.u32 %v7680, 16
      %v7810 = vrot.slane %v7808, 5
      %v7811 = vsel %vm276, %v7806, %v7810
      %v7813 = vshrl.u32 %v7654, 16
      %v7815 = vrot.slane %v7813, 4
      %v7816 = vshll.u32 %v7654, 16
      %v7818 = vrot.slane %v7816, 5
      %v7819 = vor.u32 %v7815, %v7818
      %v7820 = vrot.slane %v7819, 4
      %v7822 = vshll.u32 %v7655, 16
      %v7824 = vrot.slane %v7822, 5
      %v7825 = vsel %vm276, %v7820, %v7824
      %v7826 = vshrl.u32 %v7655, 16
      %v7828 = vrot.slane %v7826, 4
      %v7829 = vor.u32 %v7828, %v7824
      %v7830 = vrot.slane %v7829, 4
      %v7832 = vshll.u32 %v7681, 16
      %v7834 = vrot.slane %v7832, 5
      %v7835 = vsel %vm276, %v7830, %v7834
      %v7837 = vshrl.u32 %v7656, 16
      %v7839 = vrot.slane %v7837, 4
      %v7840 = vshll.u32 %v7656, 16
      %v7842 = vrot.slane %v7840, 5
      %v7843 = vor.u32 %v7839, %v7842
      %v7844 = vrot.slane %v7843, 4
      %v7846 = vshll.u32 %v7657, 16
      %v7848 = vrot.slane %v7846, 5
      %v7849 = vsel %vm276, %v7844, %v7848
      %v7850 = vshrl.u32 %v7657, 16
      %v7852 = vrot.slane %v7850, 4
      %v7853 = vor.u32 %v7852, %v7848
      %v7854 = vrot.slane %v7853, 4
      %v7856 = vshll.u32 %v7682, 16
      %v7858 = vrot.slane %v7856, 5
      %v7859 = vsel %vm276, %v7854, %v7858
      %v7861 = vshrl.u32 %v7658, 16
      %v7863 = vrot.slane %v7861, 4
      %v7864 = vshll.u32 %v7658, 16
      %v7866 = vrot.slane %v7864, 5
      %v7867 = vor.u32 %v7863, %v7866
      %v7868 = vrot.slane %v7867, 4
      %v7870 = vshll.u32 %v7659, 16
      %v7872 = vrot.slane %v7870, 5
      %v7873 = vsel %vm276, %v7868, %v7872
      %v7874 = vshrl.u32 %v7659, 16
      %v7876 = vrot.slane %v7874, 4
      %v7877 = vor.u32 %v7876, %v7872
      %v7878 = vrot.slane %v7877, 4
      %v7880 = vshll.u32 %v7683, 16
      %v7882 = vrot.slane %v7880, 5
      %v7883 = vsel %vm276, %v7878, %v7882
      %v7885 = vshrl.u32 %v7660, 16
      %v7887 = vrot.slane %v7885, 4
      %v7888 = vshll.u32 %v7660, 16
      %v7890 = vrot.slane %v7888, 5
      %v7891 = vor.u32 %v7887, %v7890
      %v7892 = vrot.slane %v7891, 4
      %v7894 = vshll.u32 %v7661, 16
      %v7896 = vrot.slane %v7894, 5
      %v7897 = vsel %vm276, %v7892, %v7896
      %v7898 = vshrl.u32 %v7661, 16
      %v7900 = vrot.slane %v7898, 4
      %v7901 = vor.u32 %v7900, %v7896
      %v7902 = vrot.slane %v7901, 4
      %v7904 = vshll.u32 %v7684, 16
      %v7906 = vrot.slane %v7904, 5
      %v7907 = vsel %vm276, %v7902, %v7906
      %v7909 = vshrl.u32 %v7662, 16
      %v7911 = vrot.slane %v7909, 4
      %v7912 = vshll.u32 %v7662, 16
      %v7914 = vrot.slane %v7912, 5
      %v7915 = vor.u32 %v7911, %v7914
      %v7916 = vrot.slane %v7915, 4
      %v7918 = vshll.u32 %v7663, 16
      %v7920 = vrot.slane %v7918, 5
      %v7921 = vsel %vm276, %v7916, %v7920
      %v7922 = vshrl.u32 %v7663, 16
      %v7924 = vrot.slane %v7922, 4
      %v7925 = vor.u32 %v7924, %v7920
      %v7926 = vrot.slane %v7925, 4
      %v7928 = vshll.u32 %v7685, 16
      %v7930 = vrot.slane %v7928, 5
      %v7931 = vsel %vm276, %v7926, %v7930
      %v7933 = vshrl.u32 %v7664, 16
      %v7935 = vrot.slane %v7933, 4
      %v7936 = vshll.u32 %v7664, 16
      %v7938 = vrot.slane %v7936, 5
      %v7939 = vor.u32 %v7935, %v7938
      %v7940 = vrot.slane %v7939, 4
      %v7942 = vshll.u32 %v7665, 16
      %v7944 = vrot.slane %v7942, 5
      %v7945 = vsel %vm276, %v7940, %v7944
      %v7946 = vshrl.u32 %v7665, 16
      %v7948 = vrot.slane %v7946, 4
      %v7949 = vor.u32 %v7948, %v7944
      %v7950 = vrot.slane %v7949, 4
      %v7952 = vshll.u32 %v7686, 16
      %v7954 = vrot.slane %v7952, 5
      %v7955 = vsel %vm276, %v7950, %v7954
      %v7957 = vshrl.u32 %v7666, 16
      %v7959 = vrot.slane %v7957, 4
      %v7960 = vshll.u32 %v7666, 16
      %v7962 = vrot.slane %v7960, 5
      %v7963 = vor.u32 %v7959, %v7962
      %v7964 = vrot.slane %v7963, 4
      %v7966 = vshll.u32 %v7667, 16
      %v7968 = vrot.slane %v7966, 5
      %v7969 = vsel %vm276, %v7964, %v7968
      %v7970 = vshrl.u32 %v7667, 16
      %v7972 = vrot.slane %v7970, 4
      %v7973 = vor.u32 %v7972, %v7968
      %v7974 = vrot.slane %v7973, 4
      %v7976 = vshll.u32 %v7687, 16
      %v7978 = vrot.slane %v7976, 5
      %v7979 = vsel %vm276, %v7974, %v7978
      %v7981 = vshrl.u32 %v7668, 16
      %v7983 = vrot.slane %v7981, 4
      %v7984 = vshll.u32 %v7668, 16
      %v7986 = vrot.slane %v7984, 5
      %v7987 = vor.u32 %v7983, %v7986
      %v7988 = vrot.slane %v7987, 4
      %v7990 = vshll.u32 %v7669, 16
      %v7992 = vrot.slane %v7990, 5
      %v7993 = vsel %vm276, %v7988, %v7992
      %v7994 = vshrl.u32 %v7669, 16
      %v7996 = vrot.slane %v7994, 4
      %v7997 = vor.u32 %v7996, %v7992
      %v7998 = vrot.slane %v7997, 4
      %v8000 = vshll.u32 %v7688, 16
      %v8002 = vrot.slane %v8000, 5
      %v8003 = vsel %vm276, %v7998, %v8002
      %v8005 = vshrl.u32 %v7670, 16
      %v8007 = vrot.slane %v8005, 4
      %v8008 = vshll.u32 %v7670, 16
      %v8010 = vrot.slane %v8008, 5
      %v8011 = vor.u32 %v8007, %v8010
      %v8012 = vrot.slane %v8011, 4
      %v8014 = vshll.u32 %v7671, 16
      %v8016 = vrot.slane %v8014, 5
      %v8017 = vsel %vm276, %v8012, %v8016
      %v8018 = vshrl.u32 %v7671, 16
      %v8020 = vrot.slane %v8018, 4
      %v8021 = vor.u32 %v8020, %v8016
      %v8022 = vrot.slane %v8021, 4
      %v8024 = vshll.u32 %v7689, 16
      %v8026 = vrot.slane %v8024, 5
      %v8027 = vsel %vm276, %v8022, %v8026
      %v8029 = vshrl.u32 %v7672, 16
      %v8031 = vrot.slane %v8029, 4
      %v8032 = vshll.u32 %v7672, 16
      %v8034 = vrot.slane %v8032, 5
      %v8035 = vor.u32 %v8031, %v8034
      %v8036 = vrot.slane %v8035, 4
      %v8038 = vshll.u32 %v7673, 16
      %v8040 = vrot.slane %v8038, 5
      %v8041 = vsel %vm276, %v8036, %v8040
      %v8042 = vshrl.u32 %v7673, 16
      %v8044 = vrot.slane %v8042, 4
      %v8045 = vor.u32 %v8044, %v8040
      %v8046 = vrot.slane %v8045, 4
      %v8048 = vshll.u32 %v7690, 16
      %v8050 = vrot.slane %v8048, 5
      %v8051 = vsel %vm276, %v8046, %v8050
      %v8053 = vshrl.u32 %v7674, 16
      %v8055 = vrot.slane %v8053, 4
      %v8056 = vshll.u32 %v7674, 16
      %v8058 = vrot.slane %v8056, 5
      %v8059 = vor.u32 %v8055, %v8058
      %v8060 = vrot.slane %v8059, 4
      %v8062 = vshll.u32 %v7675, 16
      %v8064 = vrot.slane %v8062, 5
      %v8065 = vsel %vm276, %v8060, %v8064
      %v8066 = vshrl.u32 %v7675, 16
      %v8068 = vrot.slane %v8066, 4
      %v8069 = vor.u32 %v8068, %v8064
      %v8070 = vrot.slane %v8069, 4
      %v8072 = vshll.u32 %v7691, 16
      %v8074 = vrot.slane %v8072, 5
      %v8075 = vsel %vm276, %v8070, %v8074
      %v8076 = vld [vmem:[%s7643] sm:$0xe]
      %v8077 = vld [vmem:[%s7643 + $0xc] sm:$0xe]
      %v8078 = vld [vmem:[%s7643 + $0x18] sm:$0xe]
      %v8079 = vld [vmem:[%s7643 + $0x24] sm:$0xe]
      %v8080 = vld [vmem:[%s7643 + $0x30] sm:$0xe]
      %v8081 = vld [vmem:[%s7643 + $0x3c] sm:$0xe]
      %v8082 = vld [vmem:[%s7643 + $0x48] sm:$0xe]
      %v8083 = vld [vmem:[%s7643 + $0x54] sm:$0xe]
      %v8084 = vld [vmem:[%s7643 + $0x60] sm:$0xe]
      %v8085 = vld [vmem:[%s7643 + $0x6c] sm:$0xe]
      %v8086 = vld [vmem:[%s7643 + $0x78] sm:$0xe]
      %v8087 = vld [vmem:[%s7643 + $0x84] sm:$0xe]
      %v8088 = vld [vmem:[%s7643 + $0x90] sm:$0xe]
      %v8089 = vld [vmem:[%s7643 + $0x9c] sm:$0xe]
      %v8090 = vld [vmem:[%s7643 + $0xa8] sm:$0xe]
      %v8091 = vld [vmem:[%s7643 + $0xb4] sm:$0xe]
      %v8140 = vrot.slane %v8076, 5
      %v8141 = vrot.slane %v8140, 4
      %v8142 = vrot.slane %v7645, 5
      %v8143 = vsel %vm727, %v8141, %v8142
      %v8144 = vrot.slane %v8142, 4
      %v8145 = vrot.slane %v7676, 5
      %v8146 = vsel %vm727, %v8144, %v8145
      %v8147 = vrot.slane %v8077, 5
      %v8148 = vrot.slane %v8147, 4
      %v8149 = vrot.slane %v7647, 5
      %v8150 = vsel %vm727, %v8148, %v8149
      %v8151 = vrot.slane %v8149, 4
      %v8152 = vrot.slane %v7677, 5
      %v8153 = vsel %vm727, %v8151, %v8152
      %v8154 = vrot.slane %v8078, 5
      %v8155 = vrot.slane %v8154, 4
      %v8156 = vrot.slane %v7649, 5
      %v8157 = vsel %vm727, %v8155, %v8156
      %v8158 = vrot.slane %v8156, 4
      %v8159 = vrot.slane %v7678, 5
      %v8160 = vsel %vm727, %v8158, %v8159
      %v8161 = vrot.slane %v8079, 5
      %v8162 = vrot.slane %v8161, 4
      %v8163 = vrot.slane %v7651, 5
      %v8164 = vsel %vm727, %v8162, %v8163
      %v8165 = vrot.slane %v8163, 4
      %v8166 = vrot.slane %v7679, 5
      %v8167 = vsel %vm727, %v8165, %v8166
      %v8168 = vrot.slane %v8080, 5
      %v8169 = vrot.slane %v8168, 4
      %v8170 = vrot.slane %v7653, 5
      %v8171 = vsel %vm727, %v8169, %v8170
      %v8172 = vrot.slane %v8170, 4
      %v8173 = vrot.slane %v7680, 5
      %v8174 = vsel %vm727, %v8172, %v8173
      %v8175 = vrot.slane %v8081, 5
      %v8176 = vrot.slane %v8175, 4
      %v8177 = vrot.slane %v7655, 5
      %v8178 = vsel %vm727, %v8176, %v8177
      %v8179 = vrot.slane %v8177, 4
      %v8180 = vrot.slane %v7681, 5
      %v8181 = vsel %vm727, %v8179, %v8180
      %v8182 = vrot.slane %v8082, 5
      %v8183 = vrot.slane %v8182, 4
      %v8184 = vrot.slane %v7657, 5
      %v8185 = vsel %vm727, %v8183, %v8184
      %v8186 = vrot.slane %v8184, 4
      %v8187 = vrot.slane %v7682, 5
      %v8188 = vsel %vm727, %v8186, %v8187
      %v8189 = vrot.slane %v8083, 5
      %v8190 = vrot.slane %v8189, 4
      %v8191 = vrot.slane %v7659, 5
      %v8192 = vsel %vm727, %v8190, %v8191
      %v8193 = vrot.slane %v8191, 4
      %v8194 = vrot.slane %v7683, 5
      %v8195 = vsel %vm727, %v8193, %v8194
      %v8196 = vrot.slane %v8084, 5
      %v8197 = vrot.slane %v8196, 4
      %v8198 = vrot.slane %v7661, 5
      %v8199 = vsel %vm727, %v8197, %v8198
      %v8200 = vrot.slane %v8198, 4
      %v8201 = vrot.slane %v7684, 5
      %v8202 = vsel %vm727, %v8200, %v8201
      %v8203 = vrot.slane %v8085, 5
      %v8204 = vrot.slane %v8203, 4
      %v8205 = vrot.slane %v7663, 5
      %v8206 = vsel %vm727, %v8204, %v8205
      %v8207 = vrot.slane %v8205, 4
      %v8208 = vrot.slane %v7685, 5
      %v8209 = vsel %vm727, %v8207, %v8208
      %v8210 = vrot.slane %v8086, 5
      %v8211 = vrot.slane %v8210, 4
      %v8212 = vrot.slane %v7665, 5
      %v8213 = vsel %vm727, %v8211, %v8212
      %v8214 = vrot.slane %v8212, 4
      %v8215 = vrot.slane %v7686, 5
      %v8216 = vsel %vm727, %v8214, %v8215
      %v8217 = vrot.slane %v8087, 5
      %v8218 = vrot.slane %v8217, 4
      %v8219 = vrot.slane %v7667, 5
      %v8220 = vsel %vm727, %v8218, %v8219
      %v8221 = vrot.slane %v8219, 4
      %v8222 = vrot.slane %v7687, 5
      %v8223 = vsel %vm727, %v8221, %v8222
      %v8224 = vrot.slane %v8088, 5
      %v8225 = vrot.slane %v8224, 4
      %v8226 = vrot.slane %v7669, 5
      %v8227 = vsel %vm727, %v8225, %v8226
      %v8228 = vrot.slane %v8226, 4
      %v8229 = vrot.slane %v7688, 5
      %v8230 = vsel %vm727, %v8228, %v8229
      %v8231 = vrot.slane %v8089, 5
      %v8232 = vrot.slane %v8231, 4
      %v8233 = vrot.slane %v7671, 5
      %v8234 = vsel %vm727, %v8232, %v8233
      %v8235 = vrot.slane %v8233, 4
      %v8236 = vrot.slane %v7689, 5
      %v8237 = vsel %vm727, %v8235, %v8236
      %v8238 = vrot.slane %v8090, 5
      %v8239 = vrot.slane %v8238, 4
      %v8240 = vrot.slane %v7673, 5
      %v8241 = vsel %vm727, %v8239, %v8240
      %v8242 = vrot.slane %v8240, 4
      %v8243 = vrot.slane %v7690, 5
      %v8244 = vsel %vm727, %v8242, %v8243
      %v8245 = vrot.slane %v8091, 5
      %v8246 = vrot.slane %v8245, 4
      %v8247 = vrot.slane %v7675, 5
      %v8248 = vsel %vm727, %v8246, %v8247
      %v8249 = vrot.slane %v8247, 4
      %v8250 = vrot.slane %v7691, 5
      %v8251 = vsel %vm727, %v8249, %v8250
      %v8268 = vunpack.c.l.b16 %v7644
      %v8269 = vunpack.c.l.b16 %v7645
      %v8270 = vunpack.c.l.b16 %v7646
      %v8271 = vunpack.c.l.b16 %v7647
      %v8272 = vunpack.c.l.b16 %v7648
      %v8273 = vunpack.c.l.b16 %v7649
      %v8274 = vunpack.c.l.b16 %v7650
      %v8275 = vunpack.c.l.b16 %v7651
      %v8276 = vunpack.c.l.b16 %v7652
      %v8277 = vunpack.c.l.b16 %v7653
      %v8278 = vunpack.c.l.b16 %v7654
      %v8279 = vunpack.c.l.b16 %v7655
      %v8280 = vunpack.c.l.b16 %v7656
      %v8281 = vunpack.c.l.b16 %v7657
      %v8282 = vunpack.c.l.b16 %v7658
      %v8283 = vunpack.c.l.b16 %v7659
      %v8284 = vunpack.c.l.b16 %v7660
      %v8285 = vunpack.c.l.b16 %v7661
      %v8286 = vunpack.c.l.b16 %v7662
      %v8287 = vunpack.c.l.b16 %v7663
      %v8288 = vunpack.c.l.b16 %v7664
      %v8289 = vunpack.c.l.b16 %v7665
      %v8290 = vunpack.c.l.b16 %v7666
      %v8291 = vunpack.c.l.b16 %v7667
      %v8292 = vunpack.c.l.b16 %v7668
      %v8293 = vunpack.c.l.b16 %v7669
      %v8294 = vunpack.c.l.b16 %v7670
      %v8295 = vunpack.c.l.b16 %v7671
      %v8296 = vunpack.c.l.b16 %v7672
      %v8297 = vunpack.c.l.b16 %v7673
      %v8298 = vunpack.c.l.b16 %v7674
      %v8299 = vunpack.c.l.b16 %v7675
      %v8300 = vpack.c.b16 %v8269, %v8268
      %v8301 = vpack.c.b16 %v8271, %v8270
      %v8302 = vpack.c.b16 %v8273, %v8272
      %v8303 = vpack.c.b16 %v8275, %v8274
      %v8304 = vpack.c.b16 %v8277, %v8276
      %v8305 = vpack.c.b16 %v8279, %v8278
      %v8306 = vpack.c.b16 %v8281, %v8280
      %v8307 = vpack.c.b16 %v8283, %v8282
      %v8308 = vpack.c.b16 %v8285, %v8284
      %v8309 = vpack.c.b16 %v8287, %v8286
      %v8310 = vpack.c.b16 %v8289, %v8288
      %v8311 = vpack.c.b16 %v8291, %v8290
      %v8312 = vpack.c.b16 %v8293, %v8292
      %v8313 = vpack.c.b16 %v8295, %v8294
      %v8314 = vpack.c.b16 %v8297, %v8296
      %v8315 = vpack.c.b16 %v8299, %v8298
      %v8332 = vunpack.c.l.b16 %v7705
      %v8333 = vunpack.c.l.b16 %v7715
      %v8334 = vunpack.c.l.b16 %v7729
      %v8335 = vunpack.c.l.b16 %v7739
      %v8336 = vunpack.c.l.b16 %v7753
      %v8337 = vunpack.c.l.b16 %v7763
      %v8338 = vunpack.c.l.b16 %v7777
      %v8339 = vunpack.c.l.b16 %v7787
      %v8340 = vunpack.c.l.b16 %v7801
      %v8341 = vunpack.c.l.b16 %v7811
      %v8342 = vunpack.c.l.b16 %v7825
      %v8343 = vunpack.c.l.b16 %v7835
      %v8344 = vunpack.c.l.b16 %v7849
      %v8345 = vunpack.c.l.b16 %v7859
      %v8346 = vunpack.c.l.b16 %v7873
      %v8347 = vunpack.c.l.b16 %v7883
      %v8348 = vunpack.c.l.b16 %v7897
      %v8349 = vunpack.c.l.b16 %v7907
      %v8350 = vunpack.c.l.b16 %v7921
      %v8351 = vunpack.c.l.b16 %v7931
      %v8352 = vunpack.c.l.b16 %v7945
      %v8353 = vunpack.c.l.b16 %v7955
      %v8354 = vunpack.c.l.b16 %v7969
      %v8355 = vunpack.c.l.b16 %v7979
      %v8356 = vunpack.c.l.b16 %v7993
      %v8357 = vunpack.c.l.b16 %v8003
      %v8358 = vunpack.c.l.b16 %v8017
      %v8359 = vunpack.c.l.b16 %v8027
      %v8360 = vunpack.c.l.b16 %v8041
      %v8361 = vunpack.c.l.b16 %v8051
      %v8362 = vunpack.c.l.b16 %v8065
      %v8363 = vunpack.c.l.b16 %v8075
      %v8364 = vpack.c.b16 %v8333, %v8332
      %v8365 = vpack.c.b16 %v8335, %v8334
      %v8366 = vpack.c.b16 %v8337, %v8336
      %v8367 = vpack.c.b16 %v8339, %v8338
      %v8368 = vpack.c.b16 %v8341, %v8340
      %v8369 = vpack.c.b16 %v8343, %v8342
      %v8370 = vpack.c.b16 %v8345, %v8344
      %v8371 = vpack.c.b16 %v8347, %v8346
      %v8372 = vpack.c.b16 %v8349, %v8348
      %v8373 = vpack.c.b16 %v8351, %v8350
      %v8374 = vpack.c.b16 %v8353, %v8352
      %v8375 = vpack.c.b16 %v8355, %v8354
      %v8376 = vpack.c.b16 %v8357, %v8356
      %v8377 = vpack.c.b16 %v8359, %v8358
      %v8378 = vpack.c.b16 %v8361, %v8360
      %v8379 = vpack.c.b16 %v8363, %v8362
      %v8396 = vunpack.c.l.b16 %v8143
      %v8397 = vunpack.c.l.b16 %v8146
      %v8398 = vunpack.c.l.b16 %v8150
      %v8399 = vunpack.c.l.b16 %v8153
      %v8400 = vunpack.c.l.b16 %v8157
      %v8401 = vunpack.c.l.b16 %v8160
      %v8402 = vunpack.c.l.b16 %v8164
      %v8403 = vunpack.c.l.b16 %v8167
      %v8404 = vunpack.c.l.b16 %v8171
      %v8405 = vunpack.c.l.b16 %v8174
      %v8406 = vunpack.c.l.b16 %v8178
      %v8407 = vunpack.c.l.b16 %v8181
      %v8408 = vunpack.c.l.b16 %v8185
      %v8409 = vunpack.c.l.b16 %v8188
      %v8410 = vunpack.c.l.b16 %v8192
      %v8411 = vunpack.c.l.b16 %v8195
      %v8412 = vunpack.c.l.b16 %v8199
      %v8413 = vunpack.c.l.b16 %v8202
      %v8414 = vunpack.c.l.b16 %v8206
      %v8415 = vunpack.c.l.b16 %v8209
      %v8416 = vunpack.c.l.b16 %v8213
      %v8417 = vunpack.c.l.b16 %v8216
      %v8418 = vunpack.c.l.b16 %v8220
      %v8419 = vunpack.c.l.b16 %v8223
      %v8420 = vunpack.c.l.b16 %v8227
      %v8421 = vunpack.c.l.b16 %v8230
      %v8422 = vunpack.c.l.b16 %v8234
      %v8423 = vunpack.c.l.b16 %v8237
      %v8424 = vunpack.c.l.b16 %v8241
      %v8425 = vunpack.c.l.b16 %v8244
      %v8426 = vunpack.c.l.b16 %v8248
      %v8427 = vunpack.c.l.b16 %v8251
      %v8428 = vpack.c.b16 %v8397, %v8396
      %v8429 = vpack.c.b16 %v8399, %v8398
      %v8430 = vpack.c.b16 %v8401, %v8400
      %v8431 = vpack.c.b16 %v8403, %v8402
      %v8432 = vpack.c.b16 %v8405, %v8404
      %v8433 = vpack.c.b16 %v8407, %v8406
      %v8434 = vpack.c.b16 %v8409, %v8408
      %v8435 = vpack.c.b16 %v8411, %v8410
      %v8436 = vpack.c.b16 %v8413, %v8412
      %v8437 = vpack.c.b16 %v8415, %v8414
      %v8438 = vpack.c.b16 %v8417, %v8416
      %v8439 = vpack.c.b16 %v8419, %v8418
      %v8440 = vpack.c.b16 %v8421, %v8420
      %v8441 = vpack.c.b16 %v8423, %v8422
      %v8442 = vpack.c.b16 %v8425, %v8424
      %v8443 = vpack.c.b16 %v8427, %v8426
      %s8460 = scalar_lea.vmem %s3, 384
      %v8461 = vld [vmem:[%s8460] sm:$0xf]
      %v8462 = vld [vmem:[%s8460 + $0x4] sm:$0xf]
      %v8463 = vld [vmem:[%s8460 + $0x8] sm:$0xf]
      %v8464 = vld [vmem:[%s8460 + $0xc] sm:$0xf]
      %v8465 = vld [vmem:[%s8460 + $0x10] sm:$0xf]
      %v8466 = vld [vmem:[%s8460 + $0x14] sm:$0xf]
      %v8467 = vld [vmem:[%s8460 + $0x18] sm:$0xf]
      %v8468 = vld [vmem:[%s8460 + $0x1c] sm:$0xf]
      %v8469 = vld [vmem:[%s8460 + $0x20] sm:$0xf]
      %v8470 = vld [vmem:[%s8460 + $0x24] sm:$0xf]
      %v8471 = vld [vmem:[%s8460 + $0x28] sm:$0xf]
      %v8472 = vld [vmem:[%s8460 + $0x2c] sm:$0xf]
      %v8473 = vld [vmem:[%s8460 + $0x30] sm:$0xf]
      %v8474 = vld [vmem:[%s8460 + $0x34] sm:$0xf]
      %v8475 = vld [vmem:[%s8460 + $0x38] sm:$0xf]
      %v8476 = vld [vmem:[%s8460 + $0x3c] sm:$0xf]
      %v8477 = vld [vmem:[%s8460 + $0x40] sm:$0xf]
      %v8478 = vld [vmem:[%s8460 + $0x44] sm:$0xf]
      %v8479 = vld [vmem:[%s8460 + $0x48] sm:$0xf]
      %v8480 = vld [vmem:[%s8460 + $0x4c] sm:$0xf]
      %v8481 = vld [vmem:[%s8460 + $0x50] sm:$0xf]
      %v8482 = vld [vmem:[%s8460 + $0x54] sm:$0xf]
      %v8483 = vld [vmem:[%s8460 + $0x58] sm:$0xf]
      %v8484 = vld [vmem:[%s8460 + $0x5c] sm:$0xf]
      %v8485 = vld [vmem:[%s8460 + $0x60] sm:$0xf]
      %v8486 = vld [vmem:[%s8460 + $0x64] sm:$0xf]
      %v8487 = vld [vmem:[%s8460 + $0x68] sm:$0xf]
      %v8488 = vld [vmem:[%s8460 + $0x6c] sm:$0xf]
      %v8489 = vld [vmem:[%s8460 + $0x70] sm:$0xf]
      %v8490 = vld [vmem:[%s8460 + $0x74] sm:$0xf]
      %v8491 = vld [vmem:[%s8460 + $0x78] sm:$0xf]
      %v8492 = vld [vmem:[%s8460 + $0x7c] sm:$0xf]
      %v8493 = vld [vmem:[%s8460 + $0x80] sm:$0xf]
      %v8494 = vld [vmem:[%s8460 + $0x84] sm:$0xf]
      %v8495 = vld [vmem:[%s8460 + $0x88] sm:$0xf]
      %v8496 = vld [vmem:[%s8460 + $0x8c] sm:$0xf]
      %v8497 = vld [vmem:[%s8460 + $0x90] sm:$0xf]
      %v8498 = vld [vmem:[%s8460 + $0x94] sm:$0xf]
      %v8499 = vld [vmem:[%s8460 + $0x98] sm:$0xf]
      %v8500 = vld [vmem:[%s8460 + $0x9c] sm:$0xf]
      %v8501 = vld [vmem:[%s8460 + $0xa0] sm:$0xf]
      %v8502 = vld [vmem:[%s8460 + $0xa4] sm:$0xf]
      %v8503 = vld [vmem:[%s8460 + $0xa8] sm:$0xf]
      %v8504 = vld [vmem:[%s8460 + $0xac] sm:$0xf]
      %v8505 = vld [vmem:[%s8460 + $0xb0] sm:$0xf]
      %v8506 = vld [vmem:[%s8460 + $0xb4] sm:$0xf]
      %v8507 = vld [vmem:[%s8460 + $0xb8] sm:$0xf]
      %v8508 = vld [vmem:[%s8460 + $0xbc] sm:$0xf]
      %v8557 = vunpack.c.l.b16 %v8461
      %v8558 = vunpack.c.l.b16 %v8462
      %v8559 = vunpack.c.l.b16 %v8463
      %v8560 = vunpack.c.l.b16 %v8464
      %v8561 = vunpack.c.l.b16 %v8465
      %v8562 = vunpack.c.l.b16 %v8466
      %v8563 = vunpack.c.l.b16 %v8467
      %v8564 = vunpack.c.l.b16 %v8468
      %v8565 = vunpack.c.l.b16 %v8469
      %v8566 = vunpack.c.l.b16 %v8470
      %v8567 = vunpack.c.l.b16 %v8471
      %v8568 = vunpack.c.l.b16 %v8472
      %v8569 = vunpack.c.l.b16 %v8473
      %v8570 = vunpack.c.l.b16 %v8474
      %v8571 = vunpack.c.l.b16 %v8475
      %v8572 = vunpack.c.l.b16 %v8476
      %v8573 = vunpack.c.l.b16 %v8477
      %v8574 = vunpack.c.l.b16 %v8478
      %v8575 = vunpack.c.l.b16 %v8479
      %v8576 = vunpack.c.l.b16 %v8480
      %v8577 = vunpack.c.l.b16 %v8481
      %v8578 = vunpack.c.l.b16 %v8482
      %v8579 = vunpack.c.l.b16 %v8483
      %v8580 = vunpack.c.l.b16 %v8484
      %v8581 = vunpack.c.l.b16 %v8485
      %v8582 = vunpack.c.l.b16 %v8486
      %v8583 = vunpack.c.l.b16 %v8487
      %v8584 = vunpack.c.l.b16 %v8488
      %v8585 = vunpack.c.l.b16 %v8489
      %v8586 = vunpack.c.l.b16 %v8490
      %v8587 = vunpack.c.l.b16 %v8491
      %v8588 = vunpack.c.l.b16 %v8492
      %v8589 = vunpack.c.l.b16 %v8493
      %v8590 = vunpack.c.l.b16 %v8494
      %v8591 = vunpack.c.l.b16 %v8495
      %v8592 = vunpack.c.l.b16 %v8496
      %v8593 = vunpack.c.l.b16 %v8497
      %v8594 = vunpack.c.l.b16 %v8498
      %v8595 = vunpack.c.l.b16 %v8499
      %v8596 = vunpack.c.l.b16 %v8500
      %v8597 = vunpack.c.l.b16 %v8501
      %v8598 = vunpack.c.l.b16 %v8502
      %v8599 = vunpack.c.l.b16 %v8503
      %v8600 = vunpack.c.l.b16 %v8504
      %v8601 = vunpack.c.l.b16 %v8505
      %v8602 = vunpack.c.l.b16 %v8506
      %v8603 = vunpack.c.l.b16 %v8507
      %v8604 = vunpack.c.l.b16 %v8508
      %v8605 = vpack.c.b16 %v8558, %v8557
      %v8606 = vpack.c.b16 %v8560, %v8559
      %v8607 = vpack.c.b16 %v8562, %v8561
      %v8608 = vpack.c.b16 %v8564, %v8563
      %v8609 = vpack.c.b16 %v8566, %v8565
      %v8610 = vpack.c.b16 %v8568, %v8567
      %v8611 = vpack.c.b16 %v8570, %v8569
      %v8612 = vpack.c.b16 %v8572, %v8571
      %v8613 = vpack.c.b16 %v8574, %v8573
      %v8614 = vpack.c.b16 %v8576, %v8575
      %v8615 = vpack.c.b16 %v8578, %v8577
      %v8616 = vpack.c.b16 %v8580, %v8579
      %v8617 = vpack.c.b16 %v8582, %v8581
      %v8618 = vpack.c.b16 %v8584, %v8583
      %v8619 = vpack.c.b16 %v8586, %v8585
      %v8620 = vpack.c.b16 %v8588, %v8587
      %v8621 = vpack.c.b16 %v8590, %v8589
      %v8622 = vpack.c.b16 %v8592, %v8591
      %v8623 = vpack.c.b16 %v8594, %v8593
      %v8624 = vpack.c.b16 %v8596, %v8595
      %v8625 = vpack.c.b16 %v8598, %v8597
      %v8626 = vpack.c.b16 %v8600, %v8599
      %v8627 = vpack.c.b16 %v8602, %v8601
      %v8628 = vpack.c.b16 %v8604, %v8603
      %8653 = vmatprep.subr.bf16.mxu0 0
      %8654 = vmatpush1.bf16.msra.mxu0 %v8605
      %8655 = vmatprep.subr.bf16.mxu0 0
      %8656 = vmatpush1.bf16.msra.mxu0 %v8606
      %8657 = vmatprep.subr.bf16.mxu0 0
      %8658 = vmatpush1.bf16.msra.mxu0 %v8607
      %8659 = vmatprep.subr.bf16.mxu0 0
      %8660 = vmatpush1.bf16.msra.mxu0 %v8608
      %8661 = vmatprep.subr.bf16.mxu0 0
      %8662 = vmatpush1.bf16.msra.mxu0 %v8609
      %8663 = vmatprep.subr.bf16.mxu0 0
      %8664 = vmatpush1.bf16.msra.mxu0 %v8610
      %8665 = vmatprep.subr.bf16.mxu0 0
      %8666 = vmatpush1.bf16.msra.mxu0 %v8611
      %8667 = vmatprep.subr.bf16.mxu0 0
      %8668 = vmatpush1.bf16.msra.mxu0 %v8612
      %8669 = vmatprep.subr.bf16.mxu0 0
      %8670 = vmatpush1.bf16.msra.mxu0 %v8613
      %8671 = vmatprep.subr.bf16.mxu0 0
      %8672 = vmatpush1.bf16.msra.mxu0 %v8614
      %8673 = vmatprep.subr.bf16.mxu0 0
      %8674 = vmatpush1.bf16.msra.mxu0 %v8615
      %8675 = vmatprep.subr.bf16.mxu0 0
      %8676 = vmatpush1.bf16.msra.mxu0 %v8616
      %8677 = vmatprep.subr.bf16.mxu0 0
      %8678 = vmatpush1.bf16.msra.mxu0 %v8617
      %8679 = vmatprep.subr.bf16.mxu0 0
      %8680 = vmatpush1.bf16.msra.mxu0 %v8618
      %8681 = vmatprep.subr.bf16.mxu0 0
      %8682 = vmatpush1.bf16.msra.mxu0 %v8619
      %8683 = vmatprep.subr.bf16.mxu0 0
      %8684 = vmatpush1.bf16.msra.mxu0 %v8620
      %8685 = vmatprep.mubr.bf16.mxu0 %v8364
      %8686 = vmatmul.mubr.bf16.gmra.mrb[0].mxu0 %v8300
      %v8687 = vpop.f32.mrb[0].mxu0
      %v8688 = vadd.f32 0.0, %v8687
      %v8689 = vpop.f32.mrb[0].mxu0
      %v8690 = vpop.f32.mrb[0].mxu0
      %v8691 = vadd.f32 0.0, %v8690
      %v8692 = vpop.f32.mrb[0].mxu0
      %8693 = vmatprep.mubr.bf16.mxu0 %v8365
      %8694 = vmatmul.mubr.bf16.gmra.mrb[0].mxu0 %v8301
      %v8695 = vpop.f32.mrb[0].mxu0
      %v8696 = vadd.f32 0.0, %v8695
      %v8697 = vpop.f32.mrb[0].mxu0
      %v8698 = vpop.f32.mrb[0].mxu0
      %v8699 = vadd.f32 0.0, %v8698
      %v8700 = vpop.f32.mrb[0].mxu0
      %8701 = vmatprep.mubr.bf16.mxu0 %v8366
      %8702 = vmatmul.mubr.bf16.gmra.mrb[0].mxu0 %v8302
      %v8703 = vpop.f32.mrb[0].mxu0
      %v8704 = vadd.f32 0.0, %v8703
      %v8705 = vpop.f32.mrb[0].mxu0
      %v8706 = vpop.f32.mrb[0].mxu0
      %v8707 = vadd.f32 0.0, %v8706
      %v8708 = vpop.f32.mrb[0].mxu0
      %8709 = vmatprep.mubr.bf16.mxu0 %v8367
      %8710 = vmatmul.mubr.bf16.gmra.mrb[0].mxu0 %v8303
      %v8711 = vpop.f32.mrb[0].mxu0
      %v8712 = vadd.f32 0.0, %v8711
      %v8713 = vpop.f32.mrb[0].mxu0
      %v8714 = vpop.f32.mrb[0].mxu0
      %v8715 = vadd.f32 0.0, %v8714
      %v8716 = vpop.f32.mrb[0].mxu0
      %8717 = vmatprep.mubr.bf16.mxu0 %v8368
      %8718 = vmatmul.mubr.bf16.gmra.mrb[0].mxu0 %v8304
      %v8719 = vpop.f32.mrb[0].mxu0
      %v8720 = vadd.f32 0.0, %v8719
      %v8721 = vpop.f32.mrb[0].mxu0
      %v8722 = vpop.f32.mrb[0].mxu0
      %v8723 = vadd.f32 0.0, %v8722
      %v8724 = vpop.f32.mrb[0].mxu0
      %8725 = vmatprep.mubr.bf16.mxu0 %v8369
      %8726 = vmatmul.mubr.bf16.gmra.mrb[0].mxu0 %v8305
      %v8727 = vpop.f32.mrb[0].mxu0
      %v8728 = vadd.f32 0.0, %v8727
      %v8729 = vpop.f32.mrb[0].mxu0
      %v8730 = vpop.f32.mrb[0].mxu0
      %v8731 = vadd.f32 0.0, %v8730
      %v8732 = vpop.f32.mrb[0].mxu0
      %8733 = vmatprep.mubr.bf16.mxu0 %v8370
      %8734 = vmatmul.mubr.bf16.gmra.mrb[0].mxu0 %v8306
      %v8735 = vpop.f32.mrb[0].mxu0
      %v8736 = vadd.f32 0.0, %v8735
      %v8737 = vpop.f32.mrb[0].mxu0
      %v8738 = vpop.f32.mrb[0].mxu0
      %v8739 = vadd.f32 0.0, %v8738
      %v8740 = vpop.f32.mrb[0].mxu0
      %8741 = vmatprep.mubr.bf16.mxu0 %v8371
      %8742 = vmatmul.mubr.bf16.gmra.mrb[0].mxu0 %v8307
      %v8743 = vpop.f32.mrb[0].mxu0
      %v8744 = vadd.f32 0.0, %v8743
      %v8745 = vpop.f32.mrb[0].mxu0
      %v8746 = vpop.f32.mrb[0].mxu0
      %v8747 = vadd.f32 0.0, %v8746
      %v8748 = vpop.f32.mrb[0].mxu0
      %8749 = vmatprep.mubr.bf16.mxu0 %v8372
      %8750 = vmatmul.mubr.bf16.gmra.mrb[0].mxu0 %v8308
      %v8751 = vpop.f32.mrb[0].mxu0
      %v8752 = vadd.f32 0.0, %v8751
      %v8753 = vpop.f32.mrb[0].mxu0
      %v8754 = vpop.f32.mrb[0].mxu0
      %v8755 = vadd.f32 0.0, %v8754
      %v8756 = vpop.f32.mrb[0].mxu0
      %8757 = vmatprep.mubr.bf16.mxu0 %v8373
      %8758 = vmatmul.mubr.bf16.gmra.mrb[0].mxu0 %v8309
      %v8759 = vpop.f32.mrb[0].mxu0
      %v8760 = vadd.f32 0.0, %v8759
      %v8761 = vpop.f32.mrb[0].mxu0
      %v8762 = vpop.f32.mrb[0].mxu0
      %v8763 = vadd.f32 0.0, %v8762
      %v8764 = vpop.f32.mrb[0].mxu0
      %8765 = vmatprep.mubr.bf16.mxu0 %v8374
      %8766 = vmatmul.mubr.bf16.gmra.mrb[0].mxu0 %v8310
      %v8767 = vpop.f32.mrb[0].mxu0
      %v8768 = vadd.f32 0.0, %v8767
      %v8769 = vpop.f32.mrb[0].mxu0
      %v8770 = vpop.f32.mrb[0].mxu0
      %v8771 = vadd.f32 0.0, %v8770
      %v8772 = vpop.f32.mrb[0].mxu0
      %8773 = vmatprep.mubr.bf16.mxu0 %v8375
      %8774 = vmatmul.mubr.bf16.gmra.mrb[0].mxu0 %v8311
      %v8775 = vpop.f32.mrb[0].mxu0
      %v8776 = vadd.f32 0.0, %v8775
      %v8777 = vpop.f32.mrb[0].mxu0
      %v8778 = vpop.f32.mrb[0].mxu0
      %v8779 = vadd.f32 0.0, %v8778
      %v8780 = vpop.f32.mrb[0].mxu0
      %8781 = vmatprep.mubr.bf16.mxu0 %v8376
      %8782 = vmatmul.mubr.bf16.gmra.mrb[0].mxu0 %v8312
      %v8783 = vpop.f32.mrb[0].mxu0
      %v8784 = vadd.f32 0.0, %v8783
      %v8785 = vpop.f32.mrb[0].mxu0
      %v8786 = vpop.f32.mrb[0].mxu0
      %v8787 = vadd.f32 0.0, %v8786
      %v8788 = vpop.f32.mrb[0].mxu0
      %8789 = vmatprep.mubr.bf16.mxu0 %v8377
      %8790 = vmatmul.mubr.bf16.gmra.mrb[0].mxu0 %v8313
      %v8791 = vpop.f32.mrb[0].mxu0
      %v8792 = vadd.f32 0.0, %v8791
      %v8793 = vpop.f32.mrb[0].mxu0
      %v8794 = vpop.f32.mrb[0].mxu0
      %v8795 = vadd.f32 0.0, %v8794
      %v8796 = vpop.f32.mrb[0].mxu0
      %8797 = vmatprep.mubr.bf16.mxu0 %v8378
      %8798 = vmatmul.mubr.bf16.gmra.mrb[0].mxu0 %v8314
      %v8799 = vpop.f32.mrb[0].mxu0
      %v8800 = vadd.f32 0.0, %v8799
      %v8801 = vpop.f32.mrb[0].mxu0
      %v8802 = vpop.f32.mrb[0].mxu0
      %v8803 = vadd.f32 0.0, %v8802
      %v8804 = vpop.f32.mrb[0].mxu0
      %8805 = vmatprep.mubr.bf16.mxu0 %v8379
      %8806 = vmatmul.mubr.bf16.gmra.mrb[0].mxu0 %v8315
      %v8807 = vpop.f32.mrb[0].mxu0
      %v8808 = vadd.f32 0.0, %v8807
      %v8809 = vpop.f32.mrb[0].mxu0
      %v8810 = vpop.f32.mrb[0].mxu0
      %v8811 = vadd.f32 0.0, %v8810
      %v8812 = vpop.f32.mrb[0].mxu0
      %8813 = vdwg.mxu0
      %8814 = vmatprep.subr.bf16.mxu0 0
      %8815 = vmatpush1.bf16.msra.mxu0 %v8621
      %8816 = vmatprep.subr.bf16.mxu0 0
      %8817 = vmatpush1.bf16.msra.mxu0 %v8622
      %8818 = vmatprep.subr.bf16.mxu0 0
      %8819 = vmatpush1.bf16.msra.mxu0 %v8623
      %8820 = vmatprep.subr.bf16.mxu0 0
      %8821 = vmatpush1.bf16.msra.mxu0 %v8624
      %8822 = vmatprep.subr.bf16.mxu0 0
      %8823 = vmatpush1.bf16.msra.mxu0 %v8625
      %8824 = vmatprep.subr.bf16.mxu0 0
      %8825 = vmatpush1.bf16.msra.mxu0 %v8626
      %8826 = vmatprep.subr.bf16.mxu0 0
      %8827 = vmatpush1.bf16.msra.mxu0 %v8627
      %8828 = vmatprep.subr.bf16.mxu0 0
      %8829 = vmatpush1.bf16.msra.mxu0 %v8628
      %8830 = vmatprep.subr.bf16.mxu0 0
      %8831 = vmatpush1.bf16.msra.mxu0 0
      %8832 = vmatprep.subr.bf16.mxu0 0
      %8833 = vmatpush1.bf16.msra.mxu0 0
      %8834 = vmatprep.subr.bf16.mxu0 0
      %8835 = vmatpush1.bf16.msra.mxu0 0
      %8836 = vmatprep.subr.bf16.mxu0 0
      %8837 = vmatpush1.bf16.msra.mxu0 0
      %8838 = vmatprep.subr.bf16.mxu0 0
      %8839 = vmatpush1.bf16.msra.mxu0 0
      %8840 = vmatprep.subr.bf16.mxu0 0
      %8841 = vmatpush1.bf16.msra.mxu0 0
      %8842 = vmatprep.subr.bf16.mxu0 0
      %8843 = vmatpush1.bf16.msra.mxu0 0
      %8844 = vmatprep.subr.bf16.mxu0 0
      %8845 = vmatpush1.bf16.msra.mxu0 0
      %8846 = vmatprep.mubr.bf16.mxu0 0
      %8847 = vmatmul.mubr.bf16.gmra.mrb[0].mxu0 %v8428
      %v8848 = vpop.f32.mrb[0].mxu0
      %v8849 = vadd.f32 %v8688, %v8848
      %v8850 = vpop.f32.mrb[0].mxu0
      %v8851 = vpop.f32.mrb[0].mxu0
      %v8852 = vadd.f32 %v8691, %v8851
      %v8853 = vpop.f32.mrb[0].mxu0
      %8854 = vmatprep.mubr.bf16.mxu0 0
      %8855 = vmatmul.mubr.bf16.gmra.mrb[0].mxu0 %v8429
      %v8856 = vpop.f32.mrb[0].mxu0
      %v8857 = vadd.f32 %v8696, %v8856
      %v8858 = vpop.f32.mrb[0].mxu0
      %v8859 = vpop.f32.mrb[0].mxu0
      %v8860 = vadd.f32 %v8699, %v8859
      %v8861 = vpop.f32.mrb[0].mxu0
      %8862 = vmatprep.mubr.bf16.mxu0 0
      %8863 = vmatmul.mubr.bf16.gmra.mrb[0].mxu0 %v8430
      %v8864 = vpop.f32.mrb[0].mxu0
      %v8865 = vadd.f32 %v8704, %v8864
      %v8866 = vpop.f32.mrb[0].mxu0
      %v8867 = vpop.f32.mrb[0].mxu0
      %v8868 = vadd.f32 %v8707, %v8867
      %v8869 = vpop.f32.mrb[0].mxu0
      %8870 = vmatprep.mubr.bf16.mxu0 0
      %8871 = vmatmul.mubr.bf16.gmra.mrb[0].mxu0 %v8431
      %v8872 = vpop.f32.mrb[0].mxu0
      %v8873 = vadd.f32 %v8712, %v8872
      %v8874 = vpop.f32.mrb[0].mxu0
      %v8875 = vpop.f32.mrb[0].mxu0
      %v8876 = vadd.f32 %v8715, %v8875
      %v8877 = vpop.f32.mrb[0].mxu0
      %8878 = vmatprep.mubr.bf16.mxu0 0
      %8879 = vmatmul.mubr.bf16.gmra.mrb[0].mxu0 %v8432
      %v8880 = vpop.f32.mrb[0].mxu0
      %v8881 = vadd.f32 %v8720, %v8880
      %v8882 = vpop.f32.mrb[0].mxu0
      %v8883 = vpop.f32.mrb[0].mxu0
      %v8884 = vadd.f32 %v8723, %v8883
      %v8885 = vpop.f32.mrb[0].mxu0
      %8886 = vmatprep.mubr.bf16.mxu0 0
      %8887 = vmatmul.mubr.bf16.gmra.mrb[0].mxu0 %v8433
      %v8888 = vpop.f32.mrb[0].mxu0
      %v8889 = vadd.f32 %v8728, %v8888
      %v8890 = vpop.f32.mrb[0].mxu0
      %v8891 = vpop.f32.mrb[0].mxu0
      %v8892 = vadd.f32 %v8731, %v8891
      %v8893 = vpop.f32.mrb[0].mxu0
      %8894 = vmatprep.mubr.bf16.mxu0 0
      %8895 = vmatmul.mubr.bf16.gmra.mrb[0].mxu0 %v8434
      %v8896 = vpop.f32.mrb[0].mxu0
      %v8897 = vadd.f32 %v8736, %v8896
      %v8898 = vpop.f32.mrb[0].mxu0
      %v8899 = vpop.f32.mrb[0].mxu0
      %v8900 = vadd.f32 %v8739, %v8899
      %v8901 = vpop.f32.mrb[0].mxu0
      %8902 = vmatprep.mubr.bf16.mxu0 0
      %8903 = vmatmul.mubr.bf16.gmra.mrb[0].mxu0 %v8435
      %v8904 = vpop.f32.mrb[0].mxu0
      %v8905 = vadd.f32 %v8744, %v8904
      %v8906 = vpop.f32.mrb[0].mxu0
      %v8907 = vpop.f32.mrb[0].mxu0
      %v8908 = vadd.f32 %v8747, %v8907
      %v8909 = vpop.f32.mrb[0].mxu0
      %8910 = vmatprep.mubr.bf16.mxu0 0
      %8911 = vmatmul.mubr.bf16.gmra.mrb[0].mxu0 %v8436
      %v8912 = vpop.f32.mrb[0].mxu0
      %v8913 = vadd.f32 %v8752, %v8912
      %v8914 = vpop.f32.mrb[0].mxu0
      %v8915 = vpop.f32.mrb[0].mxu0
      %v8916 = vadd.f32 %v8755, %v8915
      %v8917 = vpop.f32.mrb[0].mxu0
      %8918 = vmatprep.mubr.bf16.mxu0 0
      %8919 = vmatmul.mubr.bf16.gmra.mrb[0].mxu0 %v8437
      %v8920 = vpop.f32.mrb[0].mxu0
      %v8921 = vadd.f32 %v8760, %v8920
      %v8922 = vpop.f32.mrb[0].mxu0
      %v8923 = vpop.f32.mrb[0].mxu0
      %v8924 = vadd.f32 %v8763, %v8923
      %v8925 = vpop.f32.mrb[0].mxu0
      %8926 = vmatprep.mubr.bf16.mxu0 0
      %8927 = vmatmul.mubr.bf16.gmra.mrb[0].mxu0 %v8438
      %v8928 = vpop.f32.mrb[0].mxu0
      %v8929 = vadd.f32 %v8768, %v8928
      %v8930 = vpop.f32.mrb[0].mxu0
      %v8931 = vpop.f32.mrb[0].mxu0
      %v8932 = vadd.f32 %v8771, %v8931
      %v8933 = vpop.f32.mrb[0].mxu0
      %8934 = vmatprep.mubr.bf16.mxu0 0
      %8935 = vmatmul.mubr.bf16.gmra.mrb[0].mxu0 %v8439
      %v8936 = vpop.f32.mrb[0].mxu0
      %v8937 = vadd.f32 %v8776, %v8936
      %v8938 = vpop.f32.mrb[0].mxu0
      %v8939 = vpop.f32.mrb[0].mxu0
      %v8940 = vadd.f32 %v8779, %v8939
      %v8941 = vpop.f32.mrb[0].mxu0
      %8942 = vmatprep.mubr.bf16.mxu0 0
      %8943 = vmatmul.mubr.bf16.gmra.mrb[0].mxu0 %v8440
      %v8944 = vpop.f32.mrb[0].mxu0
      %v8945 = vadd.f32 %v8784, %v8944
      %v8946 = vpop.f32.mrb[0].mxu0
      %v8947 = vpop.f32.mrb[0].mxu0
      %v8948 = vadd.f32 %v8787, %v8947
      %v8949 = vpop.f32.mrb[0].mxu0
      %8950 = vmatprep.mubr.bf16.mxu0 0
      %8951 = vmatmul.mubr.bf16.gmra.mrb[0].mxu0 %v8441
      %v8952 = vpop.f32.mrb[0].mxu0
      %v8953 = vadd.f32 %v8792, %v8952
      %v8954 = vpop.f32.mrb[0].mxu0
      %v8955 = vpop.f32.mrb[0].mxu0
      %v8956 = vadd.f32 %v8795, %v8955
      %v8957 = vpop.f32.mrb[0].mxu0
      %8958 = vmatprep.mubr.bf16.mxu0 0
      %8959 = vmatmul.mubr.bf16.gmra.mrb[0].mxu0 %v8442
      %v8960 = vpop.f32.mrb[0].mxu0
      %v8961 = vadd.f32 %v8800, %v8960
      %v8962 = vpop.f32.mrb[0].mxu0
      %v8963 = vpop.f32.mrb[0].mxu0
      %v8964 = vadd.f32 %v8803, %v8963
      %v8965 = vpop.f32.mrb[0].mxu0
      %8966 = vmatprep.mubr.bf16.mxu0 0
      %8967 = vmatmul.mubr.bf16.gmra.mrb[0].mxu0 %v8443
      %v8968 = vpop.f32.mrb[0].mxu0
      %v8969 = vadd.f32 %v8808, %v8968
      %v8970 = vpop.f32.mrb[0].mxu0
      %v8971 = vpop.f32.mrb[0].mxu0
      %v8972 = vadd.f32 %v8811, %v8971
      %v8973 = vpop.f32.mrb[0].mxu0
      %8974 = vdwg.mxu0
      %v8975 = vadd.f32 %v7517, %v8849
      %v8976 = vadd.f32 %v7520, %v8852
      %v8977 = vadd.f32 %v7525, %v8857
      %v8978 = vadd.f32 %v7528, %v8860
      %v8979 = vadd.f32 %v7533, %v8865
      %v8980 = vadd.f32 %v7536, %v8868
      %v8981 = vadd.f32 %v7541, %v8873
      %v8982 = vadd.f32 %v7544, %v8876
      %v8983 = vadd.f32 %v7549, %v8881
      %v8984 = vadd.f32 %v7552, %v8884
      %v8985 = vadd.f32 %v7557, %v8889
      %v8986 = vadd.f32 %v7560, %v8892
      %v8987 = vadd.f32 %v7565, %v8897
      %v8988 = vadd.f32 %v7568, %v8900
      %v8989 = vadd.f32 %v7573, %v8905
      %v8990 = vadd.f32 %v7576, %v8908
      %v8991 = vadd.f32 %v7581, %v8913
      %v8992 = vadd.f32 %v7584, %v8916
      %v8993 = vadd.f32 %v7589, %v8921
      %v8994 = vadd.f32 %v7592, %v8924
      %v8995 = vadd.f32 %v7597, %v8929
      %v8996 = vadd.f32 %v7600, %v8932
      %v8997 = vadd.f32 %v7605, %v8937
      %v8998 = vadd.f32 %v7608, %v8940
      %v8999 = vadd.f32 %v7613, %v8945
      %v9000 = vadd.f32 %v7616, %v8948
      %v9001 = vadd.f32 %v7621, %v8953
      %v9002 = vadd.f32 %v7624, %v8956
      %v9003 = vadd.f32 %v7629, %v8961
      %v9004 = vadd.f32 %v7632, %v8964
      %v9005 = vadd.f32 %v7637, %v8969
      %v9006 = vadd.f32 %v7640, %v8972
      %v9007 = vld [vmem:[%s1096] sm:$0xf]
      %v9008 = vld [vmem:[%s1096 + $0x4] sm:$0xf]
      %v9009 = vld [vmem:[%s1096 + $0x8] sm:$0x1]
      %v9010 = vld [vmem:[%s1096 + $0xc] sm:$0xf]
      %v9011 = vld [vmem:[%s1096 + $0x10] sm:$0xf]
      %v9012 = vld [vmem:[%s1096 + $0x14] sm:$0x1]
      %v9013 = vld [vmem:[%s1096 + $0x18] sm:$0xf]
      %v9014 = vld [vmem:[%s1096 + $0x1c] sm:$0xf]
      %v9015 = vld [vmem:[%s1096 + $0x20] sm:$0x1]
      %v9016 = vld [vmem:[%s1096 + $0x24] sm:$0xf]
      %v9017 = vld [vmem:[%s1096 + $0x28] sm:$0xf]
      %v9018 = vld [vmem:[%s1096 + $0x2c] sm:$0x1]
      %v9019 = vld [vmem:[%s1096 + $0x30] sm:$0xf]
      %v9020 = vld [vmem:[%s1096 + $0x34] sm:$0xf]
      %v9021 = vld [vmem:[%s1096 + $0x38] sm:$0x1]
      %v9022 = vld [vmem:[%s1096 + $0x3c] sm:$0xf]
      %v9023 = vld [vmem:[%s1096 + $0x40] sm:$0xf]
      %v9024 = vld [vmem:[%s1096 + $0x44] sm:$0x1]
      %v9025 = vld [vmem:[%s1096 + $0x48] sm:$0xf]
      %v9026 = vld [vmem:[%s1096 + $0x4c] sm:$0xf]
      %v9027 = vld [vmem:[%s1096 + $0x50] sm:$0x1]
      %v9028 = vld [vmem:[%s1096 + $0x54] sm:$0xf]
      %v9029 = vld [vmem:[%s1096 + $0x58] sm:$0xf]
      %v9030 = vld [vmem:[%s1096 + $0x5c] sm:$0x1]
      %v9031 = vld [vmem:[%s1096 + $0x60] sm:$0xf]
      %v9032 = vld [vmem:[%s1096 + $0x64] sm:$0xf]
      %v9033 = vld [vmem:[%s1096 + $0x68] sm:$0x1]
      %v9034 = vld [vmem:[%s1096 + $0x6c] sm:$0xf]
      %v9035 = vld [vmem:[%s1096 + $0x70] sm:$0xf]
      %v9036 = vld [vmem:[%s1096 + $0x74] sm:$0x1]
      %v9037 = vld [vmem:[%s1096 + $0x78] sm:$0xf]
      %v9038 = vld [vmem:[%s1096 + $0x7c] sm:$0xf]
      %v9039 = vld [vmem:[%s1096 + $0x80] sm:$0x1]
      %v9040 = vld [vmem:[%s1096 + $0x84] sm:$0xf]
      %v9041 = vld [vmem:[%s1096 + $0x88] sm:$0xf]
      %v9042 = vld [vmem:[%s1096 + $0x8c] sm:$0x1]
      %v9043 = vld [vmem:[%s1096 + $0x90] sm:$0xf]
      %v9044 = vld [vmem:[%s1096 + $0x94] sm:$0xf]
      %v9045 = vld [vmem:[%s1096 + $0x98] sm:$0x1]
      %v9046 = vld [vmem:[%s1096 + $0x9c] sm:$0xf]
      %v9047 = vld [vmem:[%s1096 + $0xa0] sm:$0xf]
      %v9048 = vld [vmem:[%s1096 + $0xa4] sm:$0x1]
      %v9049 = vld [vmem:[%s1096 + $0xa8] sm:$0xf]
      %v9050 = vld [vmem:[%s1096 + $0xac] sm:$0xf]
      %v9051 = vld [vmem:[%s1096 + $0xb0] sm:$0x1]
      %v9052 = vld [vmem:[%s1096 + $0xb4] sm:$0xf]
      %v9053 = vld [vmem:[%s1096 + $0xb8] sm:$0xf]
      %v9054 = vld [vmem:[%s1096 + $0xbc] sm:$0x1]
      %v9055 = vunpack.c.l.bf16 %v9007
      %v9056 = vunpack.c.l.bf16 %v9008
      %v9057 = vunpack.c.l.bf16 %v9009
      %v9058 = vunpack.c.l.bf16 %v9010
      %v9059 = vunpack.c.l.bf16 %v9011
      %v9060 = vunpack.c.l.bf16 %v9012
      %v9061 = vunpack.c.l.bf16 %v9013
      %v9062 = vunpack.c.l.bf16 %v9014
      %v9063 = vunpack.c.l.bf16 %v9015
      %v9064 = vunpack.c.l.bf16 %v9016
      %v9065 = vunpack.c.l.bf16 %v9017
      %v9066 = vunpack.c.l.bf16 %v9018
      %v9067 = vunpack.c.l.bf16 %v9019
      %v9068 = vunpack.c.l.bf16 %v9020
      %v9069 = vunpack.c.l.bf16 %v9021
      %v9070 = vunpack.c.l.bf16 %v9022
      %v9071 = vunpack.c.l.bf16 %v9023
      %v9072 = vunpack.c.l.bf16 %v9024
      %v9073 = vunpack.c.l.bf16 %v9025
      %v9074 = vunpack.c.l.bf16 %v9026
      %v9075 = vunpack.c.l.bf16 %v9027
      %v9076 = vunpack.c.l.bf16 %v9028
      %v9077 = vunpack.c.l.bf16 %v9029
      %v9078 = vunpack.c.l.bf16 %v9030
      %v9079 = vunpack.c.l.bf16 %v9031
      %v9080 = vunpack.c.l.bf16 %v9032
      %v9081 = vunpack.c.l.bf16 %v9033
      %v9082 = vunpack.c.l.bf16 %v9034
      %v9083 = vunpack.c.l.bf16 %v9035
      %v9084 = vunpack.c.l.bf16 %v9036
      %v9085 = vunpack.c.l.bf16 %v9037
      %v9086 = vunpack.c.l.bf16 %v9038
      %v9087 = vunpack.c.l.bf16 %v9039
      %v9088 = vunpack.c.l.bf16 %v9040
      %v9089 = vunpack.c.l.bf16 %v9041
      %v9090 = vunpack.c.l.bf16 %v9042
      %v9091 = vunpack.c.l.bf16 %v9043
      %v9092 = vunpack.c.l.bf16 %v9044
      %v9093 = vunpack.c.l.bf16 %v9045
      %v9094 = vunpack.c.l.bf16 %v9046
      %v9095 = vunpack.c.l.bf16 %v9047
      %v9096 = vunpack.c.l.bf16 %v9048
      %v9097 = vunpack.c.l.bf16 %v9049
      %v9098 = vunpack.c.l.bf16 %v9050
      %v9099 = vunpack.c.l.bf16 %v9051
      %v9100 = vunpack.c.l.bf16 %v9052
      %v9101 = vunpack.c.l.bf16 %v9053
      %v9102 = vunpack.c.l.bf16 %v9054
      %vm9151 = vcmask 1046528
      %v9152 = vrot.slane %v9055, 1
      %v9153 = vrot.slane %v9056, 1
      %v9154 = vsel %vm9151, %v9152, %v9153
      %v9155 = vrot.slane %v9057, 1
      %v9156 = vsel %vm9151, %v9153, %v9155
      %v9157 = vrot.slane %v9058, 1
      %v9158 = vrot.slane %v9059, 1
      %v9159 = vsel %vm9151, %v9157, %v9158
      %v9160 = vrot.slane %v9060, 1
      %v9161 = vsel %vm9151, %v9158, %v9160
      %v9162 = vrot.slane %v9061, 1
      %v9163 = vrot.slane %v9062, 1
      %v9164 = vsel %vm9151, %v9162, %v9163
      %v9165 = vrot.slane %v9063, 1
      %v9166 = vsel %vm9151, %v9163, %v9165
      %v9167 = vrot.slane %v9064, 1
      %v9168 = vrot.slane %v9065, 1
      %v9169 = vsel %vm9151, %v9167, %v9168
      %v9170 = vrot.slane %v9066, 1
      %v9171 = vsel %vm9151, %v9168, %v9170
      %v9172 = vrot.slane %v9067, 1
      %v9173 = vrot.slane %v9068, 1
      %v9174 = vsel %vm9151, %v9172, %v9173
      %v9175 = vrot.slane %v9069, 1
      %v9176 = vsel %vm9151, %v9173, %v9175
      %v9177 = vrot.slane %v9070, 1
      %v9178 = vrot.slane %v9071, 1
      %v9179 = vsel %vm9151, %v9177, %v9178
      %v9180 = vrot.slane %v9072, 1
      %v9181 = vsel %vm9151, %v9178, %v9180
      %v9182 = vrot.slane %v9073, 1
      %v9183 = vrot.slane %v9074, 1
      %v9184 = vsel %vm9151, %v9182, %v9183
      %v9185 = vrot.slane %v9075, 1
      %v9186 = vsel %vm9151, %v9183, %v9185
      %v9187 = vrot.slane %v9076, 1
      %v9188 = vrot.slane %v9077, 1
      %v9189 = vsel %vm9151, %v9187, %v9188
      %v9190 = vrot.slane %v9078, 1
      %v9191 = vsel %vm9151, %v9188, %v9190
      %v9192 = vrot.slane %v9079, 1
      %v9193 = vrot.slane %v9080, 1
      %v9194 = vsel %vm9151, %v9192, %v9193
      %v9195 = vrot.slane %v9081, 1
      %v9196 = vsel %vm9151, %v9193, %v9195
      %v9197 = vrot.slane %v9082, 1
      %v9198 = vrot.slane %v9083, 1
      %v9199 = vsel %vm9151, %v9197, %v9198
      %v9200 = vrot.slane %v9084, 1
      %v9201 = vsel %vm9151, %v9198, %v9200
      %v9202 = vrot.slane %v9085, 1
      %v9203 = vrot.slane %v9086, 1
      %v9204 = vsel %vm9151, %v9202, %v9203
      %v9205 = vrot.slane %v9087, 1
      %v9206 = vsel %vm9151, %v9203, %v9205
      %v9207 = vrot.slane %v9088, 1
      %v9208 = vrot.slane %v9089, 1
      %v9209 = vsel %vm9151, %v9207, %v9208
      %v9210 = vrot.slane %v9090, 1
      %v9211 = vsel %vm9151, %v9208, %v9210
      %v9212 = vrot.slane %v9091, 1
      %v9213 = vrot.slane %v9092, 1
      %v9214 = vsel %vm9151, %v9212, %v9213
      %v9215 = vrot.slane %v9093, 1
      %v9216 = vsel %vm9151, %v9213, %v9215
      %v9217 = vrot.slane %v9094, 1
      %v9218 = vrot.slane %v9095, 1
      %v9219 = vsel %vm9151, %v9217, %v9218
      %v9220 = vrot.slane %v9096, 1
      %v9221 = vsel %vm9151, %v9218, %v9220
      %v9222 = vrot.slane %v9097, 1
      %v9223 = vrot.slane %v9098, 1
      %v9224 = vsel %vm9151, %v9222, %v9223
      %v9225 = vrot.slane %v9099, 1
      %v9226 = vsel %vm9151, %v9223, %v9225
      %v9227 = vrot.slane %v9100, 1
      %v9228 = vrot.slane %v9101, 1
      %v9229 = vsel %vm9151, %v9227, %v9228
      %v9230 = vrot.slane %v9102, 1
      %v9231 = vsel %vm9151, %v9228, %v9230
      %v9264 = vld [vmem:[%s4] sm:$0x1]
      %v9266 = vlaneseq
      %v9267 = vshrl.u32 %v9266, 7
      %v9268 = vsub.s32 0, %v9267
      %v9269 = vrot.slane %v9264, %v9268
      %v9271 = vadd.f32 %v8975, %v9269
      %v9272 = vadd.f32 %v8976, %v9269
      %v9273 = vadd.f32 %v8977, %v9269
      %v9274 = vadd.f32 %v8978, %v9269
      %v9275 = vadd.f32 %v8979, %v9269
      %v9276 = vadd.f32 %v8980, %v9269
      %v9277 = vadd.f32 %v8981, %v9269
      %v9278 = vadd.f32 %v8982, %v9269
      %v9279 = vadd.f32 %v8983, %v9269
      %v9280 = vadd.f32 %v8984, %v9269
      %v9281 = vadd.f32 %v8985, %v9269
      %v9282 = vadd.f32 %v8986, %v9269
      %v9283 = vadd.f32 %v8987, %v9269
      %v9284 = vadd.f32 %v8988, %v9269
      %v9285 = vadd.f32 %v8989, %v9269
      %v9286 = vadd.f32 %v8990, %v9269
      %v9287 = vadd.f32 %v8991, %v9269
      %v9288 = vadd.f32 %v8992, %v9269
      %v9289 = vadd.f32 %v8993, %v9269
      %v9290 = vadd.f32 %v8994, %v9269
      %v9291 = vadd.f32 %v8995, %v9269
      %v9292 = vadd.f32 %v8996, %v9269
      %v9293 = vadd.f32 %v8997, %v9269
      %v9294 = vadd.f32 %v8998, %v9269
      %v9295 = vadd.f32 %v8999, %v9269
      %v9296 = vadd.f32 %v9000, %v9269
      %v9297 = vadd.f32 %v9001, %v9269
      %v9298 = vadd.f32 %v9002, %v9269
      %v9299 = vadd.f32 %v9003, %v9269
      %v9300 = vadd.f32 %v9004, %v9269
      %v9301 = vadd.f32 %v9005, %v9269
      %v9302 = vadd.f32 %v9006, %v9269
      %v9303 = vadd.f32 %v9271, %v9154
      %v9304 = vadd.f32 %v9272, %v9156
      %v9305 = vadd.f32 %v9273, %v9159
      %v9306 = vadd.f32 %v9274, %v9161
      %v9307 = vadd.f32 %v9275, %v9164
      %v9308 = vadd.f32 %v9276, %v9166
      %v9309 = vadd.f32 %v9277, %v9169
      %v9310 = vadd.f32 %v9278, %v9171
      %v9311 = vadd.f32 %v9279, %v9174
      %v9312 = vadd.f32 %v9280, %v9176
      %v9313 = vadd.f32 %v9281, %v9179
      %v9314 = vadd.f32 %v9282, %v9181
      %v9315 = vadd.f32 %v9283, %v9184
      %v9316 = vadd.f32 %v9284, %v9186
      %v9317 = vadd.f32 %v9285, %v9189
      %v9318 = vadd.f32 %v9286, %v9191
      %v9319 = vadd.f32 %v9287, %v9194
      %v9320 = vadd.f32 %v9288, %v9196
      %v9321 = vadd.f32 %v9289, %v9199
      %v9322 = vadd.f32 %v9290, %v9201
      %v9323 = vadd.f32 %v9291, %v9204
      %v9324 = vadd.f32 %v9292, %v9206
      %v9325 = vadd.f32 %v9293, %v9209
      %v9326 = vadd.f32 %v9294, %v9211
      %v9327 = vadd.f32 %v9295, %v9214
      %v9328 = vadd.f32 %v9296, %v9216
      %v9329 = vadd.f32 %v9297, %v9219
      %v9330 = vadd.f32 %v9298, %v9221
      %v9331 = vadd.f32 %v9299, %v9224
      %v9332 = vadd.f32 %v9300, %v9226
      %v9333 = vadd.f32 %v9301, %v9229
      %v9334 = vadd.f32 %v9302, %v9231
      %v9335 = vmax.f32 %v9303, 0.0
      %v9336 = vmax.f32 %v9304, 0.0
      %v9337 = vmax.f32 %v9305, 0.0
      %v9338 = vmax.f32 %v9306, 0.0
      %v9339 = vmax.f32 %v9307, 0.0
      %v9340 = vmax.f32 %v9308, 0.0
      %v9341 = vmax.f32 %v9309, 0.0
      %v9342 = vmax.f32 %v9310, 0.0
      %v9343 = vmax.f32 %v9311, 0.0
      %v9344 = vmax.f32 %v9312, 0.0
      %v9345 = vmax.f32 %v9313, 0.0
      %v9346 = vmax.f32 %v9314, 0.0
      %v9347 = vmax.f32 %v9315, 0.0
      %v9348 = vmax.f32 %v9316, 0.0
      %v9349 = vmax.f32 %v9317, 0.0
      %v9350 = vmax.f32 %v9318, 0.0
      %v9351 = vmax.f32 %v9319, 0.0
      %v9352 = vmax.f32 %v9320, 0.0
      %v9353 = vmax.f32 %v9321, 0.0
      %v9354 = vmax.f32 %v9322, 0.0
      %v9355 = vmax.f32 %v9323, 0.0
      %v9356 = vmax.f32 %v9324, 0.0
      %v9357 = vmax.f32 %v9325, 0.0
      %v9358 = vmax.f32 %v9326, 0.0
      %v9359 = vmax.f32 %v9327, 0.0
      %v9360 = vmax.f32 %v9328, 0.0
      %v9361 = vmax.f32 %v9329, 0.0
      %v9362 = vmax.f32 %v9330, 0.0
      %v9363 = vmax.f32 %v9331, 0.0
      %v9364 = vmax.f32 %v9332, 0.0
      %v9365 = vmax.f32 %v9333, 0.0
      %v9366 = vmax.f32 %v9334, 0.0
      %v9367 = vpack.c.bf16 %v9336, %v9335
      %v9368 = vpack.c.bf16 %v9338, %v9337
      %v9369 = vpack.c.bf16 %v9340, %v9339
      %v9370 = vpack.c.bf16 %v9342, %v9341
      %v9371 = vpack.c.bf16 %v9344, %v9343
      %v9372 = vpack.c.bf16 %v9346, %v9345
      %v9373 = vpack.c.bf16 %v9348, %v9347
      %v9374 = vpack.c.bf16 %v9350, %v9349
      %v9375 = vpack.c.bf16 %v9352, %v9351
      %v9376 = vpack.c.bf16 %v9354, %v9353
      %v9377 = vpack.c.bf16 %v9356, %v9355
      %v9378 = vpack.c.bf16 %v9358, %v9357
      %v9379 = vpack.c.bf16 %v9360, %v9359
      %v9380 = vpack.c.bf16 %v9362, %v9361
      %v9381 = vpack.c.bf16 %v9364, %v9363
      %v9382 = vpack.c.bf16 %v9366, %v9365
      %v9399 = vunpack.c.l.b16 %v9367
      %v9400 = vunpack.c.h.b16 %v9367
      %v9401 = vunpack.c.l.b16 %v9368
      %v9402 = vunpack.c.h.b16 %v9368
      %v9403 = vunpack.c.l.b16 %v9369
      %v9404 = vunpack.c.h.b16 %v9369
      %v9405 = vunpack.c.l.b16 %v9370
      %v9406 = vunpack.c.h.b16 %v9370
      %v9407 = vunpack.c.l.b16 %v9371
      %v9408 = vunpack.c.h.b16 %v9371
      %v9409 = vunpack.c.l.b16 %v9372
      %v9410 = vunpack.c.h.b16 %v9372
      %v9411 = vunpack.c.l.b16 %v9373
      %v9412 = vunpack.c.h.b16 %v9373
      %v9413 = vunpack.c.l.b16 %v9374
      %v9414 = vunpack.c.h.b16 %v9374
      %v9415 = vunpack.c.l.b16 %v9375
      %v9416 = vunpack.c.h.b16 %v9375
      %v9417 = vunpack.c.l.b16 %v9376
      %v9418 = vunpack.c.h.b16 %v9376
      %v9419 = vunpack.c.l.b16 %v9377
      %v9420 = vunpack.c.h.b16 %v9377
      %v9421 = vunpack.c.l.b16 %v9378
      %v9422 = vunpack.c.h.b16 %v9378
      %v9423 = vunpack.c.l.b16 %v9379
      %v9424 = vunpack.c.h.b16 %v9379
      %v9425 = vunpack.c.l.b16 %v9380
      %v9426 = vunpack.c.h.b16 %v9380
      %v9427 = vunpack.c.l.b16 %v9381
      %v9428 = vunpack.c.h.b16 %v9381
      %v9429 = vunpack.c.l.b16 %v9382
      %v9430 = vunpack.c.h.b16 %v9382
      %v9431 = vpack.c.b16 %v9399, %v9399
      %v9432 = vpack.c.b16 %v9400, %v9400
      %v9433 = vpack.c.b16 %v9401, %v9401
      %v9434 = vpack.c.b16 %v9402, %v9402
      %v9435 = vpack.c.b16 %v9403, %v9403
      %v9436 = vpack.c.b16 %v9404, %v9404
      %v9437 = vpack.c.b16 %v9405, %v9405
      %v9438 = vpack.c.b16 %v9406, %v9406
      %v9439 = vpack.c.b16 %v9407, %v9407
      %v9440 = vpack.c.b16 %v9408, %v9408
      %v9441 = vpack.c.b16 %v9409, %v9409
      %v9442 = vpack.c.b16 %v9410, %v9410
      %v9443 = vpack.c.b16 %v9411, %v9411
      %v9444 = vpack.c.b16 %v9412, %v9412
      %v9445 = vpack.c.b16 %v9413, %v9413
      %v9446 = vpack.c.b16 %v9414, %v9414
      %v9447 = vpack.c.b16 %v9415, %v9415
      %v9448 = vpack.c.b16 %v9416, %v9416
      %v9449 = vpack.c.b16 %v9417, %v9417
      %v9450 = vpack.c.b16 %v9418, %v9418
      %v9451 = vpack.c.b16 %v9419, %v9419
      %v9452 = vpack.c.b16 %v9420, %v9420
      %v9453 = vpack.c.b16 %v9421, %v9421
      %v9454 = vpack.c.b16 %v9422, %v9422
      %v9455 = vpack.c.b16 %v9423, %v9423
      %v9456 = vpack.c.b16 %v9424, %v9424
      %v9457 = vpack.c.b16 %v9425, %v9425
      %v9458 = vpack.c.b16 %v9426, %v9426
      %v9459 = vpack.c.b16 %v9427, %v9427
      %v9460 = vpack.c.b16 %v9428, %v9428
      %v9461 = vpack.c.b16 %v9429, %v9429
      %v9462 = vpack.c.b16 %v9430, %v9430
      %9495 = vst [vmem:[%s224] sm:$0xf] %v9431
      %9496 = vst [vmem:[%s224 + $0x4] sm:$0xf] %v9432
      %9497 = vst [vmem:[%s224 + $0x8] sm:$0xf] %v9433
      %9498 = vst [vmem:[%s224 + $0xc] sm:$0xf] %v9434
      %9499 = vst [vmem:[%s224 + $0x10] sm:$0xf] %v9435
      %9500 = vst [vmem:[%s224 + $0x14] sm:$0xf] %v9436
      %9501 = vst [vmem:[%s224 + $0x18] sm:$0xf] %v9437
      %9502 = vst [vmem:[%s224 + $0x1c] sm:$0xf] %v9438
      %9503 = vst [vmem:[%s224 + $0x20] sm:$0xf] %v9439
      %9504 = vst [vmem:[%s224 + $0x24] sm:$0xf] %v9440
      %9505 = vst [vmem:[%s224 + $0x28] sm:$0xf] %v9441
      %9506 = vst [vmem:[%s224 + $0x2c] sm:$0xf] %v9442
      %9507 = vst [vmem:[%s224 + $0x30] sm:$0xf] %v9443
      %9508 = vst [vmem:[%s224 + $0x34] sm:$0xf] %v9444
      %9509 = vst [vmem:[%s224 + $0x38] sm:$0xf] %v9445
      %9510 = vst [vmem:[%s224 + $0x3c] sm:$0xf] %v9446
      %9511 = vst [vmem:[%s224 + $0x40] sm:$0xf] %v9447
      %9512 = vst [vmem:[%s224 + $0x44] sm:$0xf] %v9448
      %9513 = vst [vmem:[%s224 + $0x48] sm:$0xf] %v9449
      %9514 = vst [vmem:[%s224 + $0x4c] sm:$0xf] %v9450
      %9515 = vst [vmem:[%s224 + $0x50] sm:$0xf] %v9451
      %9516 = vst [vmem:[%s224 + $0x54] sm:$0xf] %v9452
      %9517 = vst [vmem:[%s224 + $0x58] sm:$0xf] %v9453
      %9518 = vst [vmem:[%s224 + $0x5c] sm:$0xf] %v9454
      %9519 = vst [vmem:[%s224 + $0x60] sm:$0xf] %v9455
      %9520 = vst [vmem:[%s224 + $0x64] sm:$0xf] %v9456
      %9521 = vst [vmem:[%s224 + $0x68] sm:$0xf] %v9457
      %9522 = vst [vmem:[%s224 + $0x6c] sm:$0xf] %v9458
      %9523 = vst [vmem:[%s224 + $0x70] sm:$0xf] %v9459
      %9524 = vst [vmem:[%s224 + $0x74] sm:$0xf] %v9460
      %9525 = vst [vmem:[%s224 + $0x78] sm:$0xf] %v9461
      %9526 = vst [vmem:[%s224 + $0x7c] sm:$0xf] %v9462
      %p9527 = scmp.lt.s32.totalorder %s16, 1
      %s9528 = scalar_select %p9527, %s16, 1
      %s9529 = smul.addr %s9528, 32
      %s9530 = smul.addr %s9529, 4
      %s9531 = scalar_lea.vmem %s5, %s9530
      // Predicated region
      $region41: #{basic_block_forward.1} parent=39 // pred_check
        %p9532 = pneg %p144
      $region42: #{basic_block_forward.1} parent=39 // pred_check_branch
        %9534 = sbr.rel (%p9532) target = $region44
      $region43: #{basic_block_forward.1} parent=39 // pred_region
        _
      $region44: #{basic_block_forward.1} parent=39 // pred_fallthru
        _
    $region40: #{basic_block_forward.1} parent=5 // pred_fallthru
      _
    %p9535 = scmp.le.s32.totalorder 2, %s11
    // Predicated region
    $region45: #{basic_block_forward.1} parent=5 // pred_check
      %p9536 = pneg %p9535
    $region46: #{basic_block_forward.1} parent=5 // pred_check_branch
      %9538 = sbr.rel (%p9536) target = $region48
    $region47: #{basic_block_forward.1} parent=5 // pred_region
      %s9539 = ssub.s32 %s11, 2
      // Predicated region
      $region49: #{basic_block_forward.1} parent=47 // pred_check
        %p9540 = pneg %p150
      $region50: #{basic_block_forward.1} parent=47 // pred_check_branch
        %9542 = sbr.rel (%p9540) target = $region52
      $region51: #{basic_block_forward.1} parent=47 // pred_region
        %p9543 = scmp.lt.s32.totalorder %s17, 1
        %s9544 = scalar_select %p9543, %s17, 1
        %s9545 = smul.addr %s9544, 32
        %s9546 = smul.addr %s9545, 4
        %s9547 = scalar_lea.vmem %s5, %s9546
      $region52: #{basic_block_forward.1} parent=47 // pred_fallthru
        _
    $region48: #{basic_block_forward.1} parent=5 // pred_fallthru
      _
  $region6: #{basic_block_forward.1} parent=0 // loop_footer
    %s15 = sadd.s32 1, %s11
  $region7: #{basic_block_forward.1} parent=0 // loop_footer_branch
    %10 = sbr.rel target = $region3
  $region8: #{basic_block_forward.1} parent=0 // loop_exit
    _

</llo_original>
